<compile_context>
chip_gen: v6e
topology: v6e:2x2x1
jax: 0.10.0
libtpu: 0.0.40
codegen_flags: <defaults>
</compile_context>

<pallas_src>
import functools

import jax
import jax.numpy as jnp
from jax.experimental import pallas as pl
from jax.experimental.pallas import tpu as pltpu


# ----------------------------------------------------------------------------
# Pallas kernel: fused  y = relu?(x @ W + b)  for one (branch, n-tile) step.
# ----------------------------------------------------------------------------
def _linear_kernel(x_ref, w_ref, b_ref, o_ref, *, relu):
    # x_ref: (M, K) bf16   w_ref: (K, tn) bf16   b_ref: (1, tn) f32
    acc = jnp.dot(x_ref[...], w_ref[...], preferred_element_type=jnp.float32)
    acc = acc + b_ref[...]
    if relu:
        acc = jnp.maximum(acc, 0.0)
    o_ref[...] = acc.astype(o_ref.dtype)


def stacked_linear(x, w_blocked, b, *, relu, out_dtype):
    """Per-branch fused linear: out[br] = act(x[, br] @ W[br] + b[br]).

    x:         (M, K) shared across branches, or (B, M, K) per-branch (bf16).
    w_blocked: (B, nb, K, tn) bf16 — output features pre-blocked so each grid
               step DMAs one contiguous (K, tn) slab.
    b:         (B, 1, N) f32 with N = nb * tn.
    Returns    (B, M, N) in out_dtype.
    """
    B, nb, K, tn = w_blocked.shape
    N = nb * tn
    if x.ndim == 2:
        M = x.shape[0]
        x_spec = pl.BlockSpec((M, K), lambda br, jn: (0, 0))       # broadcast to branches
    else:
        M = x.shape[1]
        x_spec = pl.BlockSpec((None, M, K), lambda br, jn: (br, 0, 0))

    out_itemsize = 2 if out_dtype == jnp.bfloat16 else 4
    cost = pl.CostEstimate(
        flops=2 * B * M * K * N,
        transcendentals=0,
        bytes_accessed=int(
            w_blocked.size * w_blocked.dtype.itemsize
            + x.size * x.dtype.itemsize
            + b.size * b.dtype.itemsize
            + B * M * N * out_itemsize
        ),
    )

    kernel = functools.partial(_linear_kernel, relu=relu)
    return pl.pallas_call(
        kernel,
        out_shape=jax.ShapeDtypeStruct((B, M, N), out_dtype),
        grid_spec=pltpu.PrefetchScalarGridSpec(
            num_scalar_prefetch=0,
            grid=(B, nb),
            in_specs=[
                x_spec,
                pl.BlockSpec((None, None, K, tn), lambda br, jn: (br, jn, 0, 0)),
                pl.BlockSpec((None, 1, tn), lambda br, jn: (br, 0, jn)),
            ],
            out_specs=pl.BlockSpec((None, M, tn), lambda br, jn: (br, 0, jn)),
        ),
        compiler_params=pltpu.CompilerParams(
            dimension_semantics=("parallel", "parallel"),
        ),
        cost_estimate=cost,
    )(x, w_blocked, b)


# ----------------------------------------------------------------------------
# Parameter construction (deterministic, mimics nn.Linear uniform init),
# then offline packing into bf16, branch-stacked, column-blocked layout.
# ----------------------------------------------------------------------------
def _init_linear(key, fan_in, fan_out, dtype=jnp.float32):
    kw, kb = jax.random.split(key)
    bound = 1.0 / (fan_in ** 0.5)
    w = jax.random.uniform(kw, (fan_in, fan_out), dtype, -bound, bound)
    b = jax.random.uniform(kb, (fan_out,), dtype, -bound, bound)
    return w, b


def init_actor_critic_raw(key, state_size, action_size):
    shapes = [
        ("shared_input", state_size, 512),
        ("actor_1", 512, 1024),
        ("actor_2", 1024, 2048),
        ("actor_3", 2048, 2048),
        ("policy_logits", 2048, action_size),
        ("critic_1", 512, 1024),
        ("critic_2", 1024, 2048),
        ("critic_3", 2048, 2048),
        ("value", 2048, 1),
    ]
    keys = jax.random.split(key, len(shapes))
    return {name: _init_linear(k, fi, fo) for k, (name, fi, fo) in zip(keys, shapes)}


HEAD_PAD = 128  # pad the (action_size) and (1)-wide heads to one lane-dense tile
TN_WIDE = 512   # output-feature tile for the wide layers


def _block_cols(w, tn):
    """(K, N) -> (N // tn, K, tn): each output-feature tile becomes contiguous."""
    K, N = w.shape
    return w.reshape(K, N // tn, tn).transpose(1, 0, 2)


def pack_actor_critic_params(raw, action_size, weight_dtype=jnp.bfloat16):
    def pack(names, tn):
        w = jnp.stack([_block_cols(raw[n][0], tn).astype(weight_dtype) for n in names])
        b = jnp.stack([raw[n][1].astype(jnp.float32).reshape(1, -1) for n in names])
        return w, b

    packed = {
        "shared": pack(["shared_input"], TN_WIDE),
        "layer1": pack(["actor_1", "critic_1"], TN_WIDE),
        "layer2": pack(["actor_2", "critic_2"], TN_WIDE),
        "layer3": pack(["actor_3", "critic_3"], TN_WIDE),
    }

    # Heads: pad policy (2048, A) and value (2048, 1) to a lane-dense 128-wide
    # output, stack them on the branch axis, slice in the wrapper.
    wp, bp = raw["policy_logits"]
    wv, bv = raw["value"]
    K = wp.shape[0]
    wph = jnp.zeros((K, HEAD_PAD), jnp.float32).at[:, :action_size].set(wp)
    bph = jnp.zeros((HEAD_PAD,), jnp.float32).at[:action_size].set(bp)
    wvh = jnp.zeros((K, HEAD_PAD), jnp.float32).at[:, :1].set(wv)
    bvh = jnp.zeros((HEAD_PAD,), jnp.float32).at[:1].set(bv)
    wh = jnp.stack([_block_cols(wph, HEAD_PAD).astype(weight_dtype),
                    _block_cols(wvh, HEAD_PAD).astype(weight_dtype)])
    bh = jnp.stack([bph.reshape(1, -1), bvh.reshape(1, -1)])
    packed["heads"] = (wh, bh)
    return packed


# ----------------------------------------------------------------------------
# Forward pass (dropout = identity in eval mode).
# ----------------------------------------------------------------------------
def actor_critic_forward(params, state, *, action_size):
    x = state.astype(jnp.bfloat16)
    x = stacked_linear(x, *params["shared"], relu=True, out_dtype=jnp.bfloat16)[0]   # (M, 512)

    # Stacked actor(0)/critic(1) branches.
    h = stacked_linear(x, *params["layer1"], relu=True, out_dtype=jnp.bfloat16)      # (2, M, 1024)
    # TODO(synk): dropout(p=0.2) would go here in training mode (identity in eval).
    h = stacked_linear(h, *params["layer2"], relu=True, out_dtype=jnp.bfloat16)      # (2, M, 2048)
    h = stacked_linear(h, *params["layer3"], relu=True, out_dtype=jnp.bfloat16)      # (2, M, 2048)
    heads = stacked_linear(h, *params["heads"], relu=False, out_dtype=jnp.float32)   # (2, M, 128)

    logits = heads[0, :, :action_size]
    value = heads[1, :, :1]
    return logits, value


if __name__ == "__main__":
    batch = 8
    state_size = 64
    action_size = 16

    key = jax.random.PRNGKey(0)
    k_params, k_state = jax.random.split(key)

    raw = init_actor_critic_raw(k_params, state_size, action_size)
    params = pack_actor_critic_params(raw, action_size)
    state = jax.random.normal(k_state, (batch, state_size), jnp.float32)

    fwd = jax.jit(functools.partial(actor_critic_forward, action_size=action_size))
    logits, value = fwd(params, state)
    jax.block_until_ready((logits, value))

    assert logits.shape == (batch, action_size), logits.shape
    assert value.shape == (batch, 1), value.shape
    assert logits.dtype == jnp.float32 and value.dtype == jnp.float32

    # Cross-check against a plain-JAX reference that uses the same bf16
    # weights and bf16 inter-layer activations with f32 accumulation.
    def ref_linear(x, w, b, relu):
        y = jnp.dot(x, w.astype(jnp.bfloat16),
                    preferred_element_type=jnp.float32) + b
        return jnp.maximum(y, 0.0) if relu else y

    xb = state.astype(jnp.bfloat16)
    xr = ref_linear(xb, *raw["shared_input"], True).astype(jnp.bfloat16)

    ar = ref_linear(xr, *raw["actor_1"], True).astype(jnp.bfloat16)
    ar = ref_linear(ar, *raw["actor_2"], True).astype(jnp.bfloat16)
    ar = ref_linear(ar, *raw["actor_3"], True).astype(jnp.bfloat16)
    logits_ref = ref_linear(ar, *raw["policy_logits"], False)

    cr = ref_linear(xr, *raw["critic_1"], True).astype(jnp.bfloat16)
    cr = ref_linear(cr, *raw["critic_2"], True).astype(jnp.bfloat16)
    cr = ref_linear(cr, *raw["critic_3"], True).astype(jnp.bfloat16)
    value_ref = ref_linear(cr, *raw["value"], False)

    assert jnp.allclose(logits, logits_ref, atol=1e-2, rtol=1e-2)
    assert jnp.allclose(value, value_ref, atol=1e-2, rtol=1e-2)

    print("KERNEL_OK")
</pallas_src>

<mosaic_0001>
module attributes {stable_mosaic.version = 11 : i64} {
  func.func @_linear_kernel(%arg0: i32, %arg1: i32, %arg2: memref<8x512xbf16, #tpu.memory_space<vmem>>, %arg3: memref<1x1x512x512xbf16, #tpu.memory_space<vmem>>, %arg4: memref<1x1x512xf32, #tpu.memory_space<vmem>>, %arg5: memref<1x8x512xbf16, #tpu.memory_space<vmem>>) attributes {dimension_semantics = [#tpu.dimension_semantics<parallel>, #tpu.dimension_semantics<parallel>], iteration_bounds = array<i64: 2, 2>, scalar_prefetch = 0 : i64, scratch_operands = 0 : i64, tpu.core_type = #tpu.core_type<tc>, window_params = [{pipeline_mode = #tpu.pipeline_mode<synchronous>, transform_indices = @transform_0, window_bounds = array<i64: 8, 512>}, {transform_indices = @transform_1, window_bounds = array<i64: 1, 1, 512, 512>}, {transform_indices = @transform_2, window_bounds = array<i64: 1, 1, 512>}, {transform_indices = @transform_3, window_bounds = array<i64: 1, 8, 512>}]} {
    %c0 = arith.constant 0 : index
    %c0_0 = arith.constant 0 : index
    %0 = vector.load %arg2[%c0, %c0_0] : memref<8x512xbf16, #tpu.memory_space<vmem>>, vector<8x512xbf16>
    %c0_1 = arith.constant 0 : index
    %c0_2 = arith.constant 0 : index
    %c0_3 = arith.constant 0 : index
    %c0_4 = arith.constant 0 : index
    %1 = vector.load %arg3[%c0_1, %c0_2, %c0_3, %c0_4] : memref<1x1x512x512xbf16, #tpu.memory_space<vmem>>, vector<1x1x512x512xbf16>
    %2 = vector.shape_cast %1 : vector<1x1x512x512xbf16> to vector<512x512xbf16>
    %cst = arith.constant dense<0.000000e+00> : vector<8x512xf32>
    %3 = tpu.matmul %0, %2, %cst {dimension_numbers = #tpu.dot_dimension_numbers<[1], [0], [0], [1], [0, 0, 1, 1], [], []>} : vector<8x512xbf16>, vector<512x512xbf16>, vector<8x512xf32> -> vector<8x512xf32>
    %c0_5 = arith.constant 0 : index
    %c0_6 = arith.constant 0 : index
    %c0_7 = arith.constant 0 : index
    %4 = vector.load %arg4[%c0_5, %c0_6, %c0_7] : memref<1x1x512xf32, #tpu.memory_space<vmem>>, vector<1x1x512xf32>
    %5 = vector.shape_cast %4 : vector<1x1x512xf32> to vector<1x512xf32>
    %6 = vector.broadcast %5 : vector<1x512xf32> to vector<8x512xf32>
    %7 = arith.addf %3, %6 : vector<8x512xf32>
    %cst_8 = arith.constant 0.000000e+00 : f32
    %8 = vector.broadcast %cst_8 : f32 to vector<8x512xf32>
    %9 = arith.maximumf %7, %8 : vector<8x512xf32>
    %10 = arith.truncf %9 : vector<8x512xf32> to vector<8x512xbf16>
    %c0_9 = arith.constant 0 : index
    %c0_10 = arith.constant 0 : index
    %c0_11 = arith.constant 0 : index
    %11 = vector.load %arg5[%c0_9, %c0_10, %c0_11] : memref<1x8x512xbf16, #tpu.memory_space<vmem>>, vector<1x8x512xbf16>
    %12 = vector.shape_cast %11 : vector<1x8x512xbf16> to vector<8x512xbf16>
    %13 = vector.shape_cast %10 : vector<8x512xbf16> to vector<1x8x512xbf16>
    tpu.vector_store %arg5[%c0_9, %c0_10, %c0_11], %13 {strides = array<i32>} : memref<1x8x512xbf16, #tpu.memory_space<vmem>>, vector<1x8x512xbf16>,
    return
  }
  func.func @transform_0(%arg0: i32, %arg1: i32) -> (i32, i32) {
    %c0_i32 = arith.constant 0 : i32
    %c0_i32_0 = arith.constant 0 : i32
    %c0_i32_1 = arith.constant 0 : i32
    return %c0_i32, %c0_i32_0 : i32, i32
  }
  func.func @transform_1(%arg0: i32, %arg1: i32) -> (i32, i32, i32, i32) {
    %c0_i32 = arith.constant 0 : i32
    %c0_i32_0 = arith.constant 0 : i32
    %c0_i32_1 = arith.constant 0 : i32
    return %arg0, %arg1, %c0_i32, %c0_i32_0 : i32, i32, i32, i32
  }
  func.func @transform_2(%arg0: i32, %arg1: i32) -> (i32, i32, i32) {
    %c0_i32 = arith.constant 0 : i32
    %c0_i32_0 = arith.constant 0 : i32
    return %arg0, %c0_i32, %arg1 : i32, i32, i32
  }
  func.func @transform_3(%arg0: i32, %arg1: i32) -> (i32, i32, i32) {
    %c0_i32 = arith.constant 0 : i32
    %c0_i32_0 = arith.constant 0 : i32
    return %arg0, %c0_i32, %arg1 : i32, i32, i32
  }
}

module attributes {stable_mosaic.version = 11 : i64} {
  func.func @_linear_kernel(%arg0: i32, %arg1: i32, %arg2: memref<8x64xbf16, #tpu.memory_space<vmem>>, %arg3: memref<1x1x64x512xbf16, #tpu.memory_space<vmem>>, %arg4: memref<1x1x512xf32, #tpu.memory_space<vmem>>, %arg5: memref<1x8x512xbf16, #tpu.memory_space<vmem>>) attributes {dimension_semantics = [#tpu.dimension_semantics<parallel>, #tpu.dimension_semantics<parallel>], iteration_bounds = array<i64: 1, 1>, scalar_prefetch = 0 : i64, scratch_operands = 0 : i64, tpu.core_type = #tpu.core_type<tc>, window_params = [{pipeline_mode = #tpu.pipeline_mode<synchronous>, transform_indices = @transform_0, window_bounds = array<i64: 8, 64>}, {transform_indices = @transform_1, window_bounds = array<i64: 1, 1, 64, 512>}, {transform_indices = @transform_2, window_bounds = array<i64: 1, 1, 512>}, {transform_indices = @transform_3, window_bounds = array<i64: 1, 8, 512>}]} {
    %c0 = arith.constant 0 : index
    %c0_0 = arith.constant 0 : index
    %0 = vector.load %arg2[%c0, %c0_0] : memref<8x64xbf16, #tpu.memory_space<vmem>>, vector<8x64xbf16>
    %c0_1 = arith.constant 0 : index
    %c0_2 = arith.constant 0 : index
    %c0_3 = arith.constant 0 : index
    %c0_4 = arith.constant 0 : index
    %1 = vector.load %arg3[%c0_1, %c0_2, %c0_3, %c0_4] : memref<1x1x64x512xbf16, #tpu.memory_space<vmem>>, vector<1x1x64x512xbf16>
    %2 = vector.shape_cast %1 : vector<1x1x64x512xbf16> to vector<64x512xbf16>
    %cst = arith.constant dense<0.000000e+00> : vector<8x512xf32>
    %3 = tpu.matmul %0, %2, %cst {dimension_numbers = #tpu.dot_dimension_numbers<[1], [0], [0], [1], [0, 0, 1, 1], [], []>} : vector<8x64xbf16>, vector<64x512xbf16>, vector<8x512xf32> -> vector<8x512xf32>
    %c0_5 = arith.constant 0 : index
    %c0_6 = arith.constant 0 : index
    %c0_7 = arith.constant 0 : index
    %4 = vector.load %arg4[%c0_5, %c0_6, %c0_7] : memref<1x1x512xf32, #tpu.memory_space<vmem>>, vector<1x1x512xf32>
    %5 = vector.shape_cast %4 : vector<1x1x512xf32> to vector<1x512xf32>
    %6 = vector.broadcast %5 : vector<1x512xf32> to vector<8x512xf32>
    %7 = arith.addf %3, %6 : vector<8x512xf32>
    %cst_8 = arith.constant 0.000000e+00 : f32
    %8 = vector.broadcast %cst_8 : f32 to vector<8x512xf32>
    %9 = arith.maximumf %7, %8 : vector<8x512xf32>
    %10 = arith.truncf %9 : vector<8x512xf32> to vector<8x512xbf16>
    %c0_9 = arith.constant 0 : index
    %c0_10 = arith.constant 0 : index
    %c0_11 = arith.constant 0 : index
    %11 = vector.load %arg5[%c0_9, %c0_10, %c0_11] : memref<1x8x512xbf16, #tpu.memory_space<vmem>>, vector<1x8x512xbf16>
    %12 = vector.shape_cast %11 : vector<1x8x512xbf16> to vector<8x512xbf16>
    %13 = vector.shape_cast %10 : vector<8x512xbf16> to vector<1x8x512xbf16>
    tpu.vector_store %arg5[%c0_9, %c0_10, %c0_11], %13 {strides = array<i32>} : memref<1x8x512xbf16, #tpu.memory_space<vmem>>, vector<1x8x512xbf16>,
    return
  }
  func.func @transform_0(%arg0: i32, %arg1: i32) -> (i32, i32) {
    %c0_i32 = arith.constant 0 : i32
    %c0_i32_0 = arith.constant 0 : i32
    %c0_i32_1 = arith.constant 0 : i32
    return %c0_i32, %c0_i32_0 : i32, i32
  }
  func.func @transform_1(%arg0: i32, %arg1: i32) -> (i32, i32, i32, i32) {
    %c0_i32 = arith.constant 0 : i32
    %c0_i32_0 = arith.constant 0 : i32
    %c0_i32_1 = arith.constant 0 : i32
    return %arg0, %arg1, %c0_i32, %c0_i32_0 : i32, i32, i32, i32
  }
  func.func @transform_2(%arg0: i32, %arg1: i32) -> (i32, i32, i32) {
    %c0_i32 = arith.constant 0 : i32
    %c0_i32_0 = arith.constant 0 : i32
    return %arg0, %c0_i32, %arg1 : i32, i32, i32
  }
  func.func @transform_3(%arg0: i32, %arg1: i32) -> (i32, i32, i32) {
    %c0_i32 = arith.constant 0 : i32
    %c0_i32_0 = arith.constant 0 : i32
    return %arg0, %c0_i32, %arg1 : i32, i32, i32
  }
}

module attributes {stable_mosaic.version = 11 : i64} {
  func.func @_linear_kernel(%arg0: i32, %arg1: i32, %arg2: memref<1x8x1024xbf16, #tpu.memory_space<vmem>>, %arg3: memref<1x1x1024x512xbf16, #tpu.memory_space<vmem>>, %arg4: memref<1x1x512xf32, #tpu.memory_space<vmem>>, %arg5: memref<1x8x512xbf16, #tpu.memory_space<vmem>>) attributes {dimension_semantics = [#tpu.dimension_semantics<parallel>, #tpu.dimension_semantics<parallel>], iteration_bounds = array<i64: 2, 4>, scalar_prefetch = 0 : i64, scratch_operands = 0 : i64, tpu.core_type = #tpu.core_type<tc>, window_params = [{transform_indices = @transform_0, window_bounds = array<i64: 1, 8, 1024>}, {transform_indices = @transform_1, window_bounds = array<i64: 1, 1, 1024, 512>}, {transform_indices = @transform_2, window_bounds = array<i64: 1, 1, 512>}, {transform_indices = @transform_3, window_bounds = array<i64: 1, 8, 512>}]} {
    %c0 = arith.constant 0 : index
    %c0_0 = arith.constant 0 : index
    %c0_1 = arith.constant 0 : index
    %0 = vector.load %arg2[%c0, %c0_0, %c0_1] : memref<1x8x1024xbf16, #tpu.memory_space<vmem>>, vector<1x8x1024xbf16>
    %1 = vector.shape_cast %0 : vector<1x8x1024xbf16> to vector<8x1024xbf16>
    %c0_2 = arith.constant 0 : index
    %c0_3 = arith.constant 0 : index
    %c0_4 = arith.constant 0 : index
    %c0_5 = arith.constant 0 : index
    %2 = vector.load %arg3[%c0_2, %c0_3, %c0_4, %c0_5] : memref<1x1x1024x512xbf16, #tpu.memory_space<vmem>>, vector<1x1x1024x512xbf16>
    %3 = vector.shape_cast %2 : vector<1x1x1024x512xbf16> to vector<1024x512xbf16>
    %cst = arith.constant dense<0.000000e+00> : vector<8x512xf32>
    %4 = tpu.matmul %1, %3, %cst {dimension_numbers = #tpu.dot_dimension_numbers<[1], [0], [0], [1], [0, 0, 1, 1], [], []>} : vector<8x1024xbf16>, vector<1024x512xbf16>, vector<8x512xf32> -> vector<8x512xf32>
    %c0_6 = arith.constant 0 : index
    %c0_7 = arith.constant 0 : index
    %c0_8 = arith.constant 0 : index
    %5 = vector.load %arg4[%c0_6, %c0_7, %c0_8] : memref<1x1x512xf32, #tpu.memory_space<vmem>>, vector<1x1x512xf32>
    %6 = vector.shape_cast %5 : vector<1x1x512xf32> to vector<1x512xf32>
    %7 = vector.broadcast %6 : vector<1x512xf32> to vector<8x512xf32>
    %8 = arith.addf %4, %7 : vector<8x512xf32>
    %cst_9 = arith.constant 0.000000e+00 : f32
    %9 = vector.broadcast %cst_9 : f32 to vector<8x512xf32>
    %10 = arith.maximumf %8, %9 : vector<8x512xf32>
    %11 = arith.truncf %10 : vector<8x512xf32> to vector<8x512xbf16>
    %c0_10 = arith.constant 0 : index
    %c0_11 = arith.constant 0 : index
    %c0_12 = arith.constant 0 : index
    %12 = vector.load %arg5[%c0_10, %c0_11, %c0_12] : memref<1x8x512xbf16, #tpu.memory_space<vmem>>, vector<1x8x512xbf16>
    %13 = vector.shape_cast %12 : vector<1x8x512xbf16> to vector<8x512xbf16>
    %14 = vector.shape_cast %11 : vector<8x512xbf16> to vector<1x8x512xbf16>
    tpu.vector_store %arg5[%c0_10, %c0_11, %c0_12], %14 {strides = array<i32>} : memref<1x8x512xbf16, #tpu.memory_space<vmem>>, vector<1x8x512xbf16>,
    return
  }
  func.func @transform_0(%arg0: i32, %arg1: i32) -> (i32, i32, i32) {
    %c0_i32 = arith.constant 0 : i32
    %c0_i32_0 = arith.constant 0 : i32
    %c0_i32_1 = arith.constant 0 : i32
    return %arg0, %c0_i32, %c0_i32_0 : i32, i32, i32
  }
  func.func @transform_1(%arg0: i32, %arg1: i32) -> (i32, i32, i32, i32) {
    %c0_i32 = arith.constant 0 : i32
    %c0_i32_0 = arith.constant 0 : i32
    %c0_i32_1 = arith.constant 0 : i32
    return %arg0, %arg1, %c0_i32, %c0_i32_0 : i32, i32, i32, i32
  }
  func.func @transform_2(%arg0: i32, %arg1: i32) -> (i32, i32, i32) {
    %c0_i32 = arith.constant 0 : i32
    %c0_i32_0 = arith.constant 0 : i32
    return %arg0, %c0_i32, %arg1 : i32, i32, i32
  }
  func.func @transform_3(%arg0: i32, %arg1: i32) -> (i32, i32, i32) {
    %c0_i32 = arith.constant 0 : i32
    %c0_i32_0 = arith.constant 0 : i32
    return %arg0, %c0_i32, %arg1 : i32, i32, i32
  }
}

module attributes {stable_mosaic.version = 11 : i64} {
  func.func @_linear_kernel(%arg0: i32, %arg1: i32, %arg2: memref<1x8x2048xbf16, #tpu.memory_space<vmem>>, %arg3: memref<1x1x2048x512xbf16, #tpu.memory_space<vmem>>, %arg4: memref<1x1x512xf32, #tpu.memory_space<vmem>>, %arg5: memref<1x8x512xbf16, #tpu.memory_space<vmem>>) attributes {dimension_semantics = [#tpu.dimension_semantics<parallel>, #tpu.dimension_semantics<parallel>], iteration_bounds = array<i64: 2, 4>, scalar_prefetch = 0 : i64, scratch_operands = 0 : i64, tpu.core_type = #tpu.core_type<tc>, window_params = [{transform_indices = @transform_0, window_bounds = array<i64: 1, 8, 2048>}, {transform_indices = @transform_1, window_bounds = array<i64: 1, 1, 2048, 512>}, {transform_indices = @transform_2, window_bounds = array<i64: 1, 1, 512>}, {transform_indices = @transform_3, window_bounds = array<i64: 1, 8, 512>}]} {
    %c0 = arith.constant 0 : index
    %c0_0 = arith.constant 0 : index
    %c0_1 = arith.constant 0 : index
    %0 = vector.load %arg2[%c0, %c0_0, %c0_1] : memref<1x8x2048xbf16, #tpu.memory_space<vmem>>, vector<1x8x2048xbf16>
    %1 = vector.shape_cast %0 : vector<1x8x2048xbf16> to vector<8x2048xbf16>
    %c0_2 = arith.constant 0 : index
    %c0_3 = arith.constant 0 : index
    %c0_4 = arith.constant 0 : index
    %c0_5 = arith.constant 0 : index
    %2 = vector.load %arg3[%c0_2, %c0_3, %c0_4, %c0_5] : memref<1x1x2048x512xbf16, #tpu.memory_space<vmem>>, vector<1x1x2048x512xbf16>
    %3 = vector.shape_cast %2 : vector<1x1x2048x512xbf16> to vector<2048x512xbf16>
    %cst = arith.constant dense<0.000000e+00> : vector<8x512xf32>
    %4 = tpu.matmul %1, %3, %cst {dimension_numbers = #tpu.dot_dimension_numbers<[1], [0], [0], [1], [0, 0, 1, 1], [], []>} : vector<8x2048xbf16>, vector<2048x512xbf16>, vector<8x512xf32> -> vector<8x512xf32>
    %c0_6 = arith.constant 0 : index
    %c0_7 = arith.constant 0 : index
    %c0_8 = arith.constant 0 : index
    %5 = vector.load %arg4[%c0_6, %c0_7, %c0_8] : memref<1x1x512xf32, #tpu.memory_space<vmem>>, vector<1x1x512xf32>
    %6 = vector.shape_cast %5 : vector<1x1x512xf32> to vector<1x512xf32>
    %7 = vector.broadcast %6 : vector<1x512xf32> to vector<8x512xf32>
    %8 = arith.addf %4, %7 : vector<8x512xf32>
    %cst_9 = arith.constant 0.000000e+00 : f32
    %9 = vector.broadcast %cst_9 : f32 to vector<8x512xf32>
    %10 = arith.maximumf %8, %9 : vector<8x512xf32>
    %11 = arith.truncf %10 : vector<8x512xf32> to vector<8x512xbf16>
    %c0_10 = arith.constant 0 : index
    %c0_11 = arith.constant 0 : index
    %c0_12 = arith.constant 0 : index
    %12 = vector.load %arg5[%c0_10, %c0_11, %c0_12] : memref<1x8x512xbf16, #tpu.memory_space<vmem>>, vector<1x8x512xbf16>
    %13 = vector.shape_cast %12 : vector<1x8x512xbf16> to vector<8x512xbf16>
    %14 = vector.shape_cast %11 : vector<8x512xbf16> to vector<1x8x512xbf16>
    tpu.vector_store %arg5[%c0_10, %c0_11, %c0_12], %14 {strides = array<i32>} : memref<1x8x512xbf16, #tpu.memory_space<vmem>>, vector<1x8x512xbf16>,
    return
  }
  func.func @transform_0(%arg0: i32, %arg1: i32) -> (i32, i32, i32) {
    %c0_i32 = arith.constant 0 : i32
    %c0_i32_0 = arith.constant 0 : i32
    %c0_i32_1 = arith.constant 0 : i32
    return %arg0, %c0_i32, %c0_i32_0 : i32, i32, i32
  }
  func.func @transform_1(%arg0: i32, %arg1: i32) -> (i32, i32, i32, i32) {
    %c0_i32 = arith.constant 0 : i32
    %c0_i32_0 = arith.constant 0 : i32
    %c0_i32_1 = arith.constant 0 : i32
    return %arg0, %arg1, %c0_i32, %c0_i32_0 : i32, i32, i32, i32
  }
  func.func @transform_2(%arg0: i32, %arg1: i32) -> (i32, i32, i32) {
    %c0_i32 = arith.constant 0 : i32
    %c0_i32_0 = arith.constant 0 : i32
    return %arg0, %c0_i32, %arg1 : i32, i32, i32
  }
  func.func @transform_3(%arg0: i32, %arg1: i32) -> (i32, i32, i32) {
    %c0_i32 = arith.constant 0 : i32
    %c0_i32_0 = arith.constant 0 : i32
    return %arg0, %c0_i32, %arg1 : i32, i32, i32
  }
}

module attributes {stable_mosaic.version = 11 : i64} {
  func.func @_linear_kernel(%arg0: i32, %arg1: i32, %arg2: memref<1x8x2048xbf16, #tpu.memory_space<vmem>>, %arg3: memref<1x1x2048x128xbf16, #tpu.memory_space<vmem>>, %arg4: memref<1x1x128xf32, #tpu.memory_space<vmem>>, %arg5: memref<1x8x128xf32, #tpu.memory_space<vmem>>) attributes {dimension_semantics = [#tpu.dimension_semantics<parallel>, #tpu.dimension_semantics<parallel>], iteration_bounds = array<i64: 2, 1>, scalar_prefetch = 0 : i64, scratch_operands = 0 : i64, tpu.core_type = #tpu.core_type<tc>, window_params = [{transform_indices = @transform_0, window_bounds = array<i64: 1, 8, 2048>}, {transform_indices = @transform_1, window_bounds = array<i64: 1, 1, 2048, 128>}, {transform_indices = @transform_2, window_bounds = array<i64: 1, 1, 128>}, {transform_indices = @transform_3, window_bounds = array<i64: 1, 8, 128>}]} {
    %c0 = arith.constant 0 : index
    %c0_0 = arith.constant 0 : index
    %c0_1 = arith.constant 0 : index
    %0 = vector.load %arg2[%c0, %c0_0, %c0_1] : memref<1x8x2048xbf16, #tpu.memory_space<vmem>>, vector<1x8x2048xbf16>
    %1 = vector.shape_cast %0 : vector<1x8x2048xbf16> to vector<8x2048xbf16>
    %c0_2 = arith.constant 0 : index
    %c0_3 = arith.constant 0 : index
    %c0_4 = arith.constant 0 : index
    %c0_5 = arith.constant 0 : index
    %2 = vector.load %arg3[%c0_2, %c0_3, %c0_4, %c0_5] : memref<1x1x2048x128xbf16, #tpu.memory_space<vmem>>, vector<1x1x2048x128xbf16>
    %3 = vector.shape_cast %2 : vector<1x1x2048x128xbf16> to vector<2048x128xbf16>
    %cst = arith.constant dense<0.000000e+00> : vector<8x128xf32>
    %4 = tpu.matmul %1, %3, %cst {dimension_numbers = #tpu.dot_dimension_numbers<[1], [0], [0], [1], [0, 0, 1, 1], [], []>} : vector<8x2048xbf16>, vector<2048x128xbf16>, vector<8x128xf32> -> vector<8x128xf32>
    %c0_6 = arith.constant 0 : index
    %c0_7 = arith.constant 0 : index
    %c0_8 = arith.constant 0 : index
    %5 = vector.load %arg4[%c0_6, %c0_7, %c0_8] : memref<1x1x128xf32, #tpu.memory_space<vmem>>, vector<1x1x128xf32>
    %6 = vector.shape_cast %5 : vector<1x1x128xf32> to vector<1x128xf32>
    %7 = vector.broadcast %6 : vector<1x128xf32> to vector<8x128xf32>
    %8 = arith.addf %4, %7 : vector<8x128xf32>
    %c0_9 = arith.constant 0 : index
    %c0_10 = arith.constant 0 : index
    %c0_11 = arith.constant 0 : index
    %9 = vector.load %arg5[%c0_9, %c0_10, %c0_11] : memref<1x8x128xf32, #tpu.memory_space<vmem>>, vector<1x8x128xf32>
    %10 = vector.shape_cast %9 : vector<1x8x128xf32> to vector<8x128xf32>
    %11 = vector.shape_cast %8 : vector<8x128xf32> to vector<1x8x128xf32>
    tpu.vector_store %arg5[%c0_9, %c0_10, %c0_11], %11 {strides = array<i32>} : memref<1x8x128xf32, #tpu.memory_space<vmem>>, vector<1x8x128xf32>,
    return
  }
  func.func @transform_0(%arg0: i32, %arg1: i32) -> (i32, i32, i32) {
    %c0_i32 = arith.constant 0 : i32
    %c0_i32_0 = arith.constant 0 : i32
    %c0_i32_1 = arith.constant 0 : i32
    return %arg0, %c0_i32, %c0_i32_0 : i32, i32, i32
  }
  func.func @transform_1(%arg0: i32, %arg1: i32) -> (i32, i32, i32, i32) {
    %c0_i32 = arith.constant 0 : i32
    %c0_i32_0 = arith.constant 0 : i32
    %c0_i32_1 = arith.constant 0 : i32
    return %arg0, %arg1, %c0_i32, %c0_i32_0 : i32, i32, i32, i32
  }
  func.func @transform_2(%arg0: i32, %arg1: i32) -> (i32, i32, i32) {
    %c0_i32 = arith.constant 0 : i32
    %c0_i32_0 = arith.constant 0 : i32
    return %arg0, %c0_i32, %arg1 : i32, i32, i32
  }
  func.func @transform_3(%arg0: i32, %arg1: i32) -> (i32, i32, i32) {
    %c0_i32 = arith.constant 0 : i32
    %c0_i32_0 = arith.constant 0 : i32
    return %arg0, %c0_i32, %arg1 : i32, i32, i32
  }
}

</mosaic_0001>

<llo_original>
// kernel: actor_critic_forward.5
$region0: #{actor_critic_forward.5}
  #allocation0 [shape = 'u32[]', space=smem, size = 0x4, offset = 0x4, fixed_abs, tag = 'smem constant byte address 0x4 - core index']
  #allocation1 [shape = 'u32[144,128]{1,0:T(1,128)}', space=vmem, size = 0x12000, scoped, tag = 'internal scratch']
  %s0 = inlined_call_operand.vmem [shape: bf16[8,64], index: 0, kind: input, shape index: {}]
  %s1 = inlined_call_operand.hbm [shape: bf16[1,1,64,512], index: 1, kind: input, shape index: {}]
  %s2 = inlined_call_operand.hbm [shape: f32[1,1,512], index: 2, kind: input, shape index: {}]
  %s3 = inlined_call_operand.vmem [shape: bf16[1,8,512], index: 3, kind: output, shape index: {}]
  %s4 = sld [smem:[#allocation0]]
  $region30: #{actor_critic_forward.5} parent=0
    _
  %s6 = ssub.s32 1, %s4
  %s7 = scalar_select 0, %s6, %s4
  $region1: #{actor_critic_forward.5} parent=0
    #allocation2 [shape = 'u8[65536]{0}', space=vmem, size = 0x10000, scoped, tag = 'input window, operand 1, single buffered']
    #allocation3 [shape = 's32[1]{0}', space=sflag, size = 0x4, scoped, tag = 'scoped memory for actor_critic_forward.5']
    #allocation4 [shape = 'u8[2048]{0}', space=vmem, size = 0x800, scoped, tag = 'input window, operand 2, single buffered']
    #allocation5 [shape = 's32[1]{0}', space=sflag, size = 0x4, scoped, tag = 'scoped memory for actor_critic_forward.5']
    %8 = vsyncpa [#allocation3], 0
    %9 = vsyncpa [#allocation5], 0
    // Predicated region
    $region2: #{actor_critic_forward.5} parent=1 // pred_check
      _
    $region3: #{actor_critic_forward.5} parent=1 // pred_check_branch
      %11 = sbr.rel (0) target = $region5
    $region4: #{actor_critic_forward.5} parent=1 // pred_region
      _
    $region5: #{actor_critic_forward.5} parent=1 // pred_fallthru
      _
    // Predicated region
    $region6: #{actor_critic_forward.5} parent=1 // pred_check
      _
    $region7: #{actor_critic_forward.5} parent=1 // pred_check_branch
      %13 = sbr.rel (0) target = $region9
    $region8: #{actor_critic_forward.5} parent=1 // pred_region
      %s15 = ssub.s32 2048, 2048
      %16 = vsyncadd [#allocation3], %s15
      %s17 = sshll.u32 [#allocation2], 4
      %s18 = int_to_ptr.vmem [resolvable:$true] %s17
      %23 = dma.hbm_to_vmem [thread:$0]  %s1, 2048, %s18, [#allocation3], 256, 256, 16
    $region9: #{actor_critic_forward.5} parent=1 // pred_fallthru
      _
    // Predicated region
    $region10: #{actor_critic_forward.5} parent=1 // pred_check
      _
    $region11: #{actor_critic_forward.5} parent=1 // pred_check_branch
      %25 = sbr.rel (0) target = $region13
    $region12: #{actor_critic_forward.5} parent=1 // pred_region
      %s27 = ssub.s32 64, 64
      %28 = vsyncadd [#allocation5], %s27
      %s30 = sshll.u32 [#allocation4], 4
      %s31 = int_to_ptr.vmem [resolvable:$true] %s30
      %33 = dma.hbm_to_vmem [thread:$0]  %s2, 64, %s31, [#allocation5]
    $region13: #{actor_critic_forward.5} parent=1 // pred_fallthru
      _
    // Predicated region
    $region14: #{actor_critic_forward.5} parent=1 // pred_check
      _
    $region15: #{actor_critic_forward.5} parent=1 // pred_check_branch
      %35 = sbr.rel (0) target = $region17
    $region16: #{actor_critic_forward.5} parent=1 // pred_region
      %36 = dma.done [#allocation3], 2048
    $region17: #{actor_critic_forward.5} parent=1 // pred_fallthru
      _
    // Predicated region
    $region18: #{actor_critic_forward.5} parent=1 // pred_check
      _
    $region19: #{actor_critic_forward.5} parent=1 // pred_check_branch
      %38 = sbr.rel (0) target = $region21
    $region20: #{actor_critic_forward.5} parent=1 // pred_region
      %39 = dma.done [#allocation5], 64
    $region21: #{actor_critic_forward.5} parent=1 // pred_fallthru
      _
    %v41 = vld [vmem:[%s0] sm:$0xf]
    %v42 = vld [vmem:[#allocation2] sm:$0xff]
    %v43 = vld [vmem:[#allocation2 + $0x8] sm:$0xff]
    %v44 = vld [vmem:[#allocation2 + $0x10] sm:$0xff]
    %v45 = vld [vmem:[#allocation2 + $0x18] sm:$0xff]
    %v46 = vld [vmem:[#allocation2 + $0x20] sm:$0xff]
    %v47 = vld [vmem:[#allocation2 + $0x28] sm:$0xff]
    %v48 = vld [vmem:[#allocation2 + $0x30] sm:$0xff]
    %v49 = vld [vmem:[#allocation2 + $0x38] sm:$0xff]
    %v50 = vld [vmem:[#allocation2 + $0x40] sm:$0xff]
    %v51 = vld [vmem:[#allocation2 + $0x48] sm:$0xff]
    %v52 = vld [vmem:[#allocation2 + $0x50] sm:$0xff]
    %v53 = vld [vmem:[#allocation2 + $0x58] sm:$0xff]
    %v54 = vld [vmem:[#allocation2 + $0x60] sm:$0xff]
    %v55 = vld [vmem:[#allocation2 + $0x68] sm:$0xff]
    %v56 = vld [vmem:[#allocation2 + $0x70] sm:$0xff]
    %v57 = vld [vmem:[#allocation2 + $0x78] sm:$0xff]
    %v58 = vld [vmem:[#allocation4] sm:$0xf]
    %v60 = vlaneseq
    %v61 = vshrl.u32 %v60, 7
    %v62 = vsub.s32 0, %v61
    %v63 = vrot.slane %v58, %v62
    %v64 = vlaneseq
    %v65 = vshrl.u32 %v64, 7
    %v66 = vsub.s32 1, %v65
    %v67 = vrot.slane %v58, %v66
    %v68 = vlaneseq
    %v69 = vshrl.u32 %v68, 7
    %v70 = vsub.s32 2, %v69
    %v71 = vrot.slane %v58, %v70
    %v72 = vlaneseq
    %v73 = vshrl.u32 %v72, 7
    %v74 = vsub.s32 3, %v73
    %v75 = vrot.slane %v58, %v74
    %v96 = vunpack.c.l.b16 %v42
    %v97 = vunpack.c.h.b16 %v42
    %v98 = vunpack.c.l.b16 %v43
    %v99 = vunpack.c.h.b16 %v43
    %v100 = vunpack.c.l.b16 %v44
    %v101 = vunpack.c.h.b16 %v44
    %v102 = vunpack.c.l.b16 %v45
    %v103 = vunpack.c.h.b16 %v45
    %v104 = vunpack.c.l.b16 %v46
    %v105 = vunpack.c.h.b16 %v46
    %v106 = vunpack.c.l.b16 %v47
    %v107 = vunpack.c.h.b16 %v47
    %v108 = vunpack.c.l.b16 %v48
    %v109 = vunpack.c.h.b16 %v48
    %v110 = vunpack.c.l.b16 %v49
    %v111 = vunpack.c.h.b16 %v49
    %v112 = vunpack.c.l.b16 %v50
    %v113 = vunpack.c.h.b16 %v50
    %v114 = vunpack.c.l.b16 %v51
    %v115 = vunpack.c.h.b16 %v51
    %v116 = vunpack.c.l.b16 %v52
    %v117 = vunpack.c.h.b16 %v52
    %v118 = vunpack.c.l.b16 %v53
    %v119 = vunpack.c.h.b16 %v53
    %v120 = vunpack.c.l.b16 %v54
    %v121 = vunpack.c.h.b16 %v54
    %v122 = vunpack.c.l.b16 %v55
    %v123 = vunpack.c.h.b16 %v55
    %v124 = vunpack.c.l.b16 %v56
    %v125 = vunpack.c.h.b16 %v56
    %v126 = vunpack.c.l.b16 %v57
    %v127 = vunpack.c.h.b16 %v57
    %v128 = vpack.c.b16 %v100, %v96
    %v129 = vpack.c.b16 %v101, %v97
    %v130 = vpack.c.b16 %v102, %v98
    %v131 = vpack.c.b16 %v103, %v99
    %v132 = vpack.c.b16 %v108, %v104
    %v133 = vpack.c.b16 %v109, %v105
    %v134 = vpack.c.b16 %v110, %v106
    %v135 = vpack.c.b16 %v111, %v107
    %v136 = vpack.c.b16 %v116, %v112
    %v137 = vpack.c.b16 %v117, %v113
    %v138 = vpack.c.b16 %v118, %v114
    %v139 = vpack.c.b16 %v119, %v115
    %v140 = vpack.c.b16 %v124, %v120
    %v141 = vpack.c.b16 %v125, %v121
    %v142 = vpack.c.b16 %v126, %v122
    %v143 = vpack.c.b16 %v127, %v123
    %vm160 = vcmask 523264
    %v162 = vsel %vm160, %v41, 0
    %164 = vmatprep.subr.bf16.mxu0 0
    %165 = vmatpush1.bf16.msra.mxu0 0
    %166 = vmatprep.subr.bf16.mxu0 0
    %167 = vmatpush1.bf16.msra.mxu0 0
    %168 = vmatprep.subr.bf16.mxu0 0
    %169 = vmatpush1.bf16.msra.mxu0 0
    %170 = vmatprep.subr.bf16.mxu0 0
    %171 = vmatpush1.bf16.msra.mxu0 0
    %172 = vmatprep.subr.bf16.mxu0 %v141
    %173 = vmatpush1.bf16.msra.mxu0 %v140
    %174 = vmatprep.subr.bf16.mxu0 %v137
    %175 = vmatpush1.bf16.msra.mxu0 %v136
    %176 = vmatprep.subr.bf16.mxu0 %v133
    %177 = vmatpush1.bf16.msra.mxu0 %v132
    %178 = vmatprep.subr.bf16.mxu0 %v129
    %179 = vmatpush1.bf16.msra.mxu0 %v128
    %180 = vmatprep.subr.bf16.mxu0 0
    %181 = vmatpush2.bf16.msra.mxu0 0
    %182 = vmatprep.subr.bf16.mxu0 0
    %183 = vmatpush2.bf16.msra.mxu0 0
    %184 = vmatprep.subr.bf16.mxu0 0
    %185 = vmatpush2.bf16.msra.mxu0 0
    %186 = vmatprep.subr.bf16.mxu0 0
    %187 = vmatpush2.bf16.msra.mxu0 0
    %188 = vmatprep.subr.bf16.mxu0 0
    %189 = vmatpush2.bf16.msra.mxu0 0
    %190 = vmatprep.subr.bf16.mxu0 0
    %191 = vmatpush2.bf16.msra.mxu0 0
    %192 = vmatprep.subr.bf16.mxu0 0
    %193 = vmatpush2.bf16.msra.mxu0 0
    %194 = vmatprep.subr.bf16.mxu0 0
    %195 = vmatpush2.bf16.msra.mxu0 0
    %196 = vmatprep.mubr.bf16.mxu0 0
    %197 = vmatmul.mubr.bf16.gmra.mxu0 %v162
    %v198 = vpop.f32.mrf.mxu0
    %v199 = vadd.f32 %v63, %v198
    %v200 = vpop.f32.mrf.mxu0
    %v201 = vadd.f32 %v67, %v200
    %v202 = vpop.f32.mrf.mxu0
    %v203 = vpop.f32.mrf.mxu0
    %204 = vdwg.mxu0
    %205 = vmatprep.subr.bf16.mxu0 0
    %206 = vmatpush1.bf16.msra.mxu0 0
    %207 = vmatprep.subr.bf16.mxu0 0
    %208 = vmatpush1.bf16.msra.mxu0 0
    %209 = vmatprep.subr.bf16.mxu0 0
    %210 = vmatpush1.bf16.msra.mxu0 0
    %211 = vmatprep.subr.bf16.mxu0 0
    %212 = vmatpush1.bf16.msra.mxu0 0
    %213 = vmatprep.subr.bf16.mxu0 %v143
    %214 = vmatpush1.bf16.msra.mxu0 %v142
    %215 = vmatprep.subr.bf16.mxu0 %v139
    %216 = vmatpush1.bf16.msra.mxu0 %v138
    %217 = vmatprep.subr.bf16.mxu0 %v135
    %218 = vmatpush1.bf16.msra.mxu0 %v134
    %219 = vmatprep.subr.bf16.mxu0 %v131
    %220 = vmatpush1.bf16.msra.mxu0 %v130
    %221 = vmatprep.subr.bf16.mxu0 0
    %222 = vmatpush2.bf16.msra.mxu0 0
    %223 = vmatprep.subr.bf16.mxu0 0
    %224 = vmatpush2.bf16.msra.mxu0 0
    %225 = vmatprep.subr.bf16.mxu0 0
    %226 = vmatpush2.bf16.msra.mxu0 0
    %227 = vmatprep.subr.bf16.mxu0 0
    %228 = vmatpush2.bf16.msra.mxu0 0
    %229 = vmatprep.subr.bf16.mxu0 0
    %230 = vmatpush2.bf16.msra.mxu0 0
    %231 = vmatprep.subr.bf16.mxu0 0
    %232 = vmatpush2.bf16.msra.mxu0 0
    %233 = vmatprep.subr.bf16.mxu0 0
    %234 = vmatpush2.bf16.msra.mxu0 0
    %235 = vmatprep.subr.bf16.mxu0 0
    %236 = vmatpush2.bf16.msra.mxu0 0
    %237 = vmatprep.mubr.bf16.mxu0 0
    %238 = vmatmul.mubr.bf16.gmra.mxu0 %v162
    %v239 = vpop.f32.mrf.mxu0
    %v240 = vadd.f32 %v71, %v239
    %v241 = vpop.f32.mrf.mxu0
    %v242 = vadd.f32 %v75, %v241
    %v243 = vpop.f32.mrf.mxu0
    %v244 = vpop.f32.mrf.mxu0
    %245 = vdwg.mxu0
    %v246 = vmax.f32 %v199, 0.0
    %v247 = vmax.f32 %v201, 0.0
    %v248 = vmax.f32 %v240, 0.0
    %v249 = vmax.f32 %v242, 0.0
    %v250 = vpack.c.bf16 %v246, %v246
    %v251 = vpack.c.bf16 %v247, %v247
    %v252 = vpack.c.bf16 %v248, %v248
    %v253 = vpack.c.bf16 %v249, %v249
    %v258 = vunpack.c.l.b16 %v250
    %v259 = vunpack.c.l.b16 %v251
    %v260 = vunpack.c.l.b16 %v252
    %v261 = vunpack.c.l.b16 %v253
    %v262 = vpack.c.b16 %v259, %v258
    %v263 = vpack.c.b16 %v261, %v260
    %266 = vst [vmem:[%s3] sm:$0xff] %v262
    %267 = vst [vmem:[%s3 + $0x8] sm:$0xff] %v263
    // Predicated region
    $region22: #{actor_critic_forward.5} parent=1 // pred_check
      _
    $region23: #{actor_critic_forward.5} parent=1 // pred_check_branch
      %269 = sbr.rel (0) target = $region25
    $region24: #{actor_critic_forward.5} parent=1 // pred_region
      _
    $region25: #{actor_critic_forward.5} parent=1 // pred_fallthru
      _
    // Predicated region
    $region26: #{actor_critic_forward.5} parent=1 // pred_check
      _
    $region27: #{actor_critic_forward.5} parent=1 // pred_check_branch
      %271 = sbr.rel (0) target = $region29
    $region28: #{actor_critic_forward.5} parent=1 // pred_region
      _
    $region29: #{actor_critic_forward.5} parent=1 // pred_fallthru
      _
    %272 = vsyncpa [#allocation3], 1
    %273 = vsyncpa [#allocation5], 1

// kernel: actor_critic_forward.6
$region0: #{actor_critic_forward.6}
  #allocation0 [shape = 'u32[]', space=smem, size = 0x4, offset = 0x4, fixed_abs, tag = 'smem constant byte address 0x4 - core index']
  #allocation1 [shape = 'u32[144,128]{1,0:T(1,128)}', space=vmem, size = 0x12000, scoped, tag = 'internal scratch']
  %s0 = inlined_call_operand.vmem [shape: bf16[8,512], index: 0, kind: input, shape index: {}]
  %s1 = inlined_call_operand.hbm [shape: bf16[2,2,512,512], index: 1, kind: input, shape index: {}]
  %s2 = inlined_call_operand.hbm [shape: f32[2,1,1024], index: 2, kind: input, shape index: {}]
  %s3 = inlined_call_operand.vmem [shape: bf16[2,8,1024], index: 3, kind: output, shape index: {}]
  %s4 = sld [smem:[#allocation0]]
  $region53: #{actor_critic_forward.6} parent=0
    _
  %s6 = ssub.s32 1, %s4
  %s7 = scalar_select 0, %s6, %s4
  $region1: #{actor_critic_forward.6} parent=0
    #allocation2 [shape = 'u8[1048576]{0}', space=vmem, size = 0x100000, scoped, tag = 'input window, operand 1']
    #allocation3 [shape = 's32[2]{0}', space=sflag, size = 0x8, scoped, tag = 'scoped memory for actor_critic_forward.6']
    #allocation4 [shape = 'u8[4096]{0}', space=vmem, size = 0x1000, scoped, tag = 'input window, operand 2']
    #allocation5 [shape = 's32[2]{0}', space=sflag, size = 0x8, scoped, tag = 'scoped memory for actor_critic_forward.6']
    %8 = vsyncpa [#allocation3], 0
    %s9 = scalar_lea.sflag [#allocation3], 1
    %10 = vsyncpa %s9, 0
    %11 = vsyncpa [#allocation5], 0
    %s12 = scalar_lea.sflag [#allocation5], 1
    %13 = vsyncpa %s12, 0
    loop: start=0, step=1, limit=6
    $region2: #{actor_critic_forward.6} parent=1 // loop_pre_header
      _
    $region3: #{actor_critic_forward.6} parent=1 // loop_header
      %s15 = sphi 0, %s19
      %p16 = scmp.ge.s32.totalorder %s15, 6
      %s22 = sphi 0, %s34
      %s23 = sphi 0, %s30
      %s24 = sphi 0, %s22
      %s25 = sphi 0, %s23
      %s26 = sphi 0, %s24
      %s27 = sphi 0, %s25
      %s35 = sphi 0, %s35
      %s37 = sphi 0, %s35
      %s38 = sphi 0, %s37
      %s52 = sphi 0, %s38
      %s60 = sphi 0, %s62
      %s63 = sphi 0, %s60
      %s64 = sphi 0, %s63
      %s80 = sphi 0, %s64
      %s88 = sphi 0, %s90
      %s91 = sphi 0, %s88
      %s92 = sphi 0, %s91
      %s108 = sphi 0, %s92
      %s116 = sphi 0, %s118
      %s119 = sphi 0, %s116
      %s120 = sphi 0, %s119
      %s136 = sphi 0, %s120
    $region4: #{actor_critic_forward.6} parent=1 // loop_header_branch
      %18 = sbr.rel (%p16) target = $region8
    $region5: #{actor_critic_forward.6} parent=1 // loop_body
      %s20 = ssub.s32 %s15, 1
      %s21 = ssub.s32 %s15, 2
      %s28 = sadd.s32 1, %s23
      %p29 = scmp.ge.s32.totalorder %s28, 2
      %s30 = scalar_select %p29, 0, %s28
      %s31 = sadd.s32 1, %s22
      %s32 = scalar_select %p29, %s31, %s22
      %p33 = scmp.ge.s32.totalorder %s32, 2
      %s34 = scalar_select %p33, 0, %s32
      %s36 = sadd.s32 %s35, 1
      %p39 = scmp.eq.s32.totalorder %s15, 3
      %p40 = scmp.ne.s32.totalorder %s35, %s37
      %p41 = scmp.eq.s32.totalorder %s15, 0
      %p42 = por %p40, %p41
      %p43 = scmp.ne.s32.totalorder %s35, %s37
      %p44 = scmp.eq.s32.totalorder %s20, 3
      %p45 = por %p43, %p44
      %p46 = scmp.ne.s32.totalorder %s37, %s38
      %p47 = scmp.eq.s32.totalorder %s20, 0
      %p48 = por %p46, %p47
      %p49 = scmp.ne.s32.totalorder %s37, %s38
      %p50 = scmp.eq.s32.totalorder %s21, 3
      %p51 = por %p49, %p50
      %p53 = scmp.ne.s32.totalorder %s38, %s52
      %p54 = scmp.eq.s32.totalorder %s21, 0
      %p55 = por %p53, %p54
      %s56 = ssub.s32 %s22, %s34
      %s57 = ssub.s32 %s23, %s30
      %s58 = sor.u32 %s56, %s57
      %p59 = scmp.eq.s32.totalorder %s58, 0
      %s61 = sadd.s32 %s60, 1
      %s62 = scalar_select %p59, %s60, %s61
      %p65 = pneg %p59
      %p66 = scmp.eq.s32.totalorder %s15, 3
      %p67 = por %p65, %p66
      %p68 = scmp.ne.s32.totalorder %s60, %s63
      %p69 = scmp.eq.s32.totalorder %s15, 0
      %p70 = por %p68, %p69
      %p71 = scmp.ne.s32.totalorder %s60, %s63
      %p72 = scmp.eq.s32.totalorder %s20, 3
      %p73 = por %p71, %p72
      %p74 = scmp.ne.s32.totalorder %s63, %s64
      %p75 = scmp.eq.s32.totalorder %s20, 0
      %p76 = por %p74, %p75
      %p77 = scmp.ne.s32.totalorder %s63, %s64
      %p78 = scmp.eq.s32.totalorder %s21, 3
      %p79 = por %p77, %p78
      %p81 = scmp.ne.s32.totalorder %s64, %s80
      %p82 = scmp.eq.s32.totalorder %s21, 0
      %p83 = por %p81, %p82
      %s84 = ssub.s32 %s22, %s34
      %s85 = ssub.s32 %s23, %s30
      %s86 = sor.u32 %s84, %s85
      %p87 = scmp.eq.s32.totalorder %s86, 0
      %s89 = sadd.s32 %s88, 1
      %s90 = scalar_select %p87, %s88, %s89
      %p93 = pneg %p87
      %p94 = scmp.eq.s32.totalorder %s15, 3
      %p95 = por %p93, %p94
      %p96 = scmp.ne.s32.totalorder %s88, %s91
      %p97 = scmp.eq.s32.totalorder %s15, 0
      %p98 = por %p96, %p97
      %p99 = scmp.ne.s32.totalorder %s88, %s91
      %p100 = scmp.eq.s32.totalorder %s20, 3
      %p101 = por %p99, %p100
      %p102 = scmp.ne.s32.totalorder %s91, %s92
      %p103 = scmp.eq.s32.totalorder %s20, 0
      %p104 = por %p102, %p103
      %p105 = scmp.ne.s32.totalorder %s91, %s92
      %p106 = scmp.eq.s32.totalorder %s21, 3
      %p107 = por %p105, %p106
      %p109 = scmp.ne.s32.totalorder %s92, %s108
      %p110 = scmp.eq.s32.totalorder %s21, 0
      %p111 = por %p109, %p110
      %s112 = ssub.s32 %s22, %s34
      %s113 = ssub.s32 %s23, %s30
      %s114 = sor.u32 %s112, %s113
      %p115 = scmp.eq.s32.totalorder %s114, 0
      %s117 = sadd.s32 %s116, 1
      %s118 = scalar_select %p115, %s116, %s117
      %p121 = pneg %p115
      %p122 = scmp.eq.s32.totalorder %s15, 3
      %p123 = por %p121, %p122
      %p124 = scmp.ne.s32.totalorder %s116, %s119
      %p125 = scmp.eq.s32.totalorder %s15, 0
      %p126 = por %p124, %p125
      %p127 = scmp.ne.s32.totalorder %s116, %s119
      %p128 = scmp.eq.s32.totalorder %s20, 3
      %p129 = por %p127, %p128
      %p130 = scmp.ne.s32.totalorder %s119, %s120
      %p131 = scmp.eq.s32.totalorder %s20, 0
      %p132 = por %p130, %p131
      %p133 = scmp.ne.s32.totalorder %s119, %s120
      %p134 = scmp.eq.s32.totalorder %s21, 3
      %p135 = por %p133, %p134
      %p137 = scmp.ne.s32.totalorder %s120, %s136
      %p138 = scmp.eq.s32.totalorder %s21, 0
      %p139 = por %p137, %p138
      %p140 = scmp.le.s32.totalorder 1, %s15
      %p141 = scmp.lt.s32.totalorder %s15, 5
      %p142 = pnand %p140, %p141
      %p143 = pneg %p142
      // Predicated region
      $region9: #{actor_critic_forward.6} parent=5 // pred_check
        _
      $region10: #{actor_critic_forward.6} parent=5 // pred_check_branch
        %145 = sbr.rel (%p142) target = $region12
      $region11: #{actor_critic_forward.6} parent=5 // pred_region
        %s146 = ssub.s32 %s15, 1
        // Predicated region
        $region13: #{actor_critic_forward.6} parent=11 // pred_check
          %p147 = pneg %p48
        $region14: #{actor_critic_forward.6} parent=11 // pred_check_branch
          %149 = sbr.rel (%p147) target = $region16
        $region15: #{actor_critic_forward.6} parent=11 // pred_region
          _
        $region16: #{actor_critic_forward.6} parent=11 // pred_fallthru
          _
      $region12: #{actor_critic_forward.6} parent=5 // pred_fallthru
        _
      %p150 = scmp.lt.s32.totalorder %s15, 4
      // Predicated region
      $region17: #{actor_critic_forward.6} parent=5 // pred_check
        %p151 = pneg %p150
      $region18: #{actor_critic_forward.6} parent=5 // pred_check_branch
        %153 = sbr.rel (%p151) target = $region20
      $region19: #{actor_critic_forward.6} parent=5 // pred_region
        // Predicated region
        $region21: #{actor_critic_forward.6} parent=19 // pred_check
          %p154 = pneg %p70
        $region22: #{actor_critic_forward.6} parent=19 // pred_check_branch
          %156 = sbr.rel (%p154) target = $region24
        $region23: #{actor_critic_forward.6} parent=19 // pred_region
          %s157 = sand.u32 %s60, 1
          %s158 = scalar_lea.sflag [#allocation3], %s157
          %s159 = sand.u32 %s60, 1
          %s160 = smul.addr %s159, 1024
          %s161 = scalar_lea.vmem [#allocation2], %s160
          %s163 = ssub.s32 16384, 16384
          %164 = vsyncadd %s158, %s163
          %s165 = smul.addr %s23, 256
          %s166 = smul.addr %s22, 512
          %s167 = sadd.s32 %s165, %s166
          %s168 = smul.addr %s167, 64
          %s169 = scalar_lea.hbm %s1, %s168
          %s170 = sshll.u32 %s161, 4
          %s171 = int_to_ptr.vmem [resolvable:$true] %s170
          %176 = dma.hbm_to_vmem [thread:$0]  %s169, 16384, %s171, %s158, 256, 256, 16
        $region24: #{actor_critic_forward.6} parent=19 // pred_fallthru
          _
        // Predicated region
        $region25: #{actor_critic_forward.6} parent=19 // pred_check
          %p177 = pneg %p98
        $region26: #{actor_critic_forward.6} parent=19 // pred_check_branch
          %179 = sbr.rel (%p177) target = $region28
        $region27: #{actor_critic_forward.6} parent=19 // pred_region
          %s180 = sand.u32 %s88, 1
          %s181 = scalar_lea.sflag [#allocation5], %s180
          %s182 = sand.u32 %s88, 1
          %s183 = smul.addr %s182, 4
          %s184 = scalar_lea.vmem [#allocation4], %s183
          %s185 = smul.u32 4, %s23
          %s187 = ssub.s32 64, 64
          %188 = vsyncadd %s181, %s187
          %s189 = smul.addr %s22, 8
          %s190 = sadd.s32 %s185, %s189
          %s191 = smul.addr %s190, 16
          %s192 = scalar_lea.hbm %s2, %s191
          %s194 = sshll.u32 %s184, 4
          %s195 = int_to_ptr.vmem [resolvable:$true] %s194
          %197 = dma.hbm_to_vmem [thread:$0]  %s192, 64, %s195, %s181
        $region28: #{actor_critic_forward.6} parent=19 // pred_fallthru
          _
      $region20: #{actor_critic_forward.6} parent=5 // pred_fallthru
        _
      %p198 = scmp.le.s32.totalorder 1, %s15
      %p199 = scmp.lt.s32.totalorder %s15, 5
      %p200 = pnand %p198, %p199
      %p201 = pneg %p200
      // Predicated region
      $region29: #{actor_critic_forward.6} parent=5 // pred_check
        _
      $region30: #{actor_critic_forward.6} parent=5 // pred_check_branch
        %203 = sbr.rel (%p200) target = $region32
      $region31: #{actor_critic_forward.6} parent=5 // pred_region
        %s204 = ssub.s32 %s15, 1
        %s205 = sand.u32 %s63, 1
        %s206 = scalar_lea.sflag [#allocation3], %s205
        %s207 = sand.u32 %s63, 1
        %s208 = smul.addr %s207, 1024
        %s209 = scalar_lea.vmem [#allocation2], %s208
        // Predicated region
        $region33: #{actor_critic_forward.6} parent=31 // pred_check
          %p210 = pneg %p76
        $region34: #{actor_critic_forward.6} parent=31 // pred_check_branch
          %212 = sbr.rel (%p210) target = $region36
        $region35: #{actor_critic_forward.6} parent=31 // pred_region
          %213 = dma.done %s206, 16384
        $region36: #{actor_critic_forward.6} parent=31 // pred_fallthru
          _
        %s214 = sand.u32 %s91, 1
        %s215 = scalar_lea.sflag [#allocation5], %s214
        %s216 = sand.u32 %s91, 1
        %s217 = smul.addr %s216, 4
        %s218 = scalar_lea.vmem [#allocation4], %s217
        // Predicated region
        $region37: #{actor_critic_forward.6} parent=31 // pred_check
          %p219 = pneg %p104
        $region38: #{actor_critic_forward.6} parent=31 // pred_check_branch
          %221 = sbr.rel (%p219) target = $region40
        $region39: #{actor_critic_forward.6} parent=31 // pred_region
          %222 = dma.done %s215, 64
        $region40: #{actor_critic_forward.6} parent=31 // pred_fallthru
          _
        %p223 = pneg %p48
        %p224 = pneg %p45
        %s225 = sand.u32 %s63, 1
        %s226 = scalar_lea.sflag [#allocation3], %s225
        %s227 = sand.u32 %s63, 1
        %s228 = smul.addr %s227, 1024
        %s229 = scalar_lea.vmem [#allocation2], %s228
        %p230 = pneg %p76
        %p231 = pneg %p73
        %s232 = sand.u32 %s91, 1
        %s233 = scalar_lea.sflag [#allocation5], %s232
        %s234 = sand.u32 %s91, 1
        %s235 = smul.addr %s234, 4
        %s236 = scalar_lea.vmem [#allocation4], %s235
        %p237 = pneg %p104
        %p238 = pneg %p101
        %p239 = pneg %p132
        %p240 = pneg %p129
        %s241 = smul.u32 4, %s25
        %p242 = scmp.lt.s32.totalorder %s24, 1
        %s243 = scalar_select %p242, %s24, 1
        %p244 = scmp.lt.s32.totalorder %s241, 7
        %s245 = scalar_select %p244, %s241, 7
        %s246 = smul.addr %s243, 8
        %s247 = sadd.s32 %s245, %s246
        %s248 = smul.addr %s247, 4
        %s249 = scalar_lea.vmem %s3, %s248
        %s250 = smul.u32 4, %s25
        %s251 = smul.u32 4, %s25
        %p252 = scmp.lt.s32.totalorder %s24, 1
        %s253 = scalar_select %p252, %s24, 1
        %p254 = scmp.lt.s32.totalorder %s251, 7
        %s255 = scalar_select %p254, %s251, 7
        %s256 = smul.addr %s253, 8
        %s257 = sadd.s32 %s255, %s256
        %s258 = smul.addr %s257, 4
        %s259 = scalar_lea.vmem %s3, %s258
        %s260 = smul.u32 4, %s25
        %v261 = vld [vmem:[%s0] sm:$0xff]
        %v262 = vld [vmem:[%s0 + $0x8] sm:$0xff]
        %v263 = vld [vmem:[%s209] sm:$0xff]
        %v264 = vld [vmem:[%s209 + $0x8] sm:$0xff]
        %v265 = vld [vmem:[%s209 + $0x10] sm:$0xff]
        %v266 = vld [vmem:[%s209 + $0x18] sm:$0xff]
        %v267 = vld [vmem:[%s209 + $0x20] sm:$0xff]
        %v268 = vld [vmem:[%s209 + $0x28] sm:$0xff]
        %v269 = vld [vmem:[%s209 + $0x30] sm:$0xff]
        %v270 = vld [vmem:[%s209 + $0x38] sm:$0xff]
        %v271 = vld [vmem:[%s209 + $0x40] sm:$0xff]
        %v272 = vld [vmem:[%s209 + $0x48] sm:$0xff]
        %v273 = vld [vmem:[%s209 + $0x50] sm:$0xff]
        %v274 = vld [vmem:[%s209 + $0x58] sm:$0xff]
        %v275 = vld [vmem:[%s209 + $0x60] sm:$0xff]
        %v276 = vld [vmem:[%s209 + $0x68] sm:$0xff]
        %v277 = vld [vmem:[%s209 + $0x70] sm:$0xff]
        %v278 = vld [vmem:[%s209 + $0x78] sm:$0xff]
        %v279 = vld [vmem:[%s209 + $0x80] sm:$0xff]
        %v280 = vld [vmem:[%s209 + $0x88] sm:$0xff]
        %v281 = vld [vmem:[%s209 + $0x90] sm:$0xff]
        %v282 = vld [vmem:[%s209 + $0x98] sm:$0xff]
        %v283 = vld [vmem:[%s209 + $0xa0] sm:$0xff]
        %v284 = vld [vmem:[%s209 + $0xa8] sm:$0xff]
        %v285 = vld [vmem:[%s209 + $0xb0] sm:$0xff]
        %v286 = vld [vmem:[%s209 + $0xb8] sm:$0xff]
        %v287 = vld [vmem:[%s209 + $0xc0] sm:$0xff]
        %v288 = vld [vmem:[%s209 + $0xc8] sm:$0xff]
        %v289 = vld [vmem:[%s209 + $0xd0] sm:$0xff]
        %v290 = vld [vmem:[%s209 + $0xd8] sm:$0xff]
        %v291 = vld [vmem:[%s209 + $0xe0] sm:$0xff]
        %v292 = vld [vmem:[%s209 + $0xe8] sm:$0xff]
        %v293 = vld [vmem:[%s209 + $0xf0] sm:$0xff]
        %v294 = vld [vmem:[%s209 + $0xf8] sm:$0xff]
        %v295 = vld [vmem:[%s209 + $0x100] sm:$0xff]
        %v296 = vld [vmem:[%s209 + $0x108] sm:$0xff]
        %v297 = vld [vmem:[%s209 + $0x110] sm:$0xff]
        %v298 = vld [vmem:[%s209 + $0x118] sm:$0xff]
        %v299 = vld [vmem:[%s209 + $0x120] sm:$0xff]
        %v300 = vld [vmem:[%s209 + $0x128] sm:$0xff]
        %v301 = vld [vmem:[%s209 + $0x130] sm:$0xff]
        %v302 = vld [vmem:[%s209 + $0x138] sm:$0xff]
        %v303 = vld [vmem:[%s209 + $0x140] sm:$0xff]
        %v304 = vld [vmem:[%s209 + $0x148] sm:$0xff]
        %v305 = vld [vmem:[%s209 + $0x150] sm:$0xff]
        %v306 = vld [vmem:[%s209 + $0x158] sm:$0xff]
        %v307 = vld [vmem:[%s209 + $0x160] sm:$0xff]
        %v308 = vld [vmem:[%s209 + $0x168] sm:$0xff]
        %v309 = vld [vmem:[%s209 + $0x170] sm:$0xff]
        %v310 = vld [vmem:[%s209 + $0x178] sm:$0xff]
        %v311 = vld [vmem:[%s209 + $0x180] sm:$0xff]
        %v312 = vld [vmem:[%s209 + $0x188] sm:$0xff]
        %v313 = vld [vmem:[%s209 + $0x190] sm:$0xff]
        %v314 = vld [vmem:[%s209 + $0x198] sm:$0xff]
        %v315 = vld [vmem:[%s209 + $0x1a0] sm:$0xff]
        %v316 = vld [vmem:[%s209 + $0x1a8] sm:$0xff]
        %v317 = vld [vmem:[%s209 + $0x1b0] sm:$0xff]
        %v318 = vld [vmem:[%s209 + $0x1b8] sm:$0xff]
        %v319 = vld [vmem:[%s209 + $0x1c0] sm:$0xff]
        %v320 = vld [vmem:[%s209 + $0x1c8] sm:$0xff]
        %v321 = vld [vmem:[%s209 + $0x1d0] sm:$0xff]
        %v322 = vld [vmem:[%s209 + $0x1d8] sm:$0xff]
        %v323 = vld [vmem:[%s209 + $0x1e0] sm:$0xff]
        %v324 = vld [vmem:[%s209 + $0x1e8] sm:$0xff]
        %v325 = vld [vmem:[%s209 + $0x1f0] sm:$0xff]
        %v326 = vld [vmem:[%s209 + $0x1f8] sm:$0xff]
        %v327 = vld [vmem:[%s209 + $0x200] sm:$0xff]
        %v328 = vld [vmem:[%s209 + $0x208] sm:$0xff]
        %v329 = vld [vmem:[%s209 + $0x210] sm:$0xff]
        %v330 = vld [vmem:[%s209 + $0x218] sm:$0xff]
        %v331 = vld [vmem:[%s209 + $0x220] sm:$0xff]
        %v332 = vld [vmem:[%s209 + $0x228] sm:$0xff]
        %v333 = vld [vmem:[%s209 + $0x230] sm:$0xff]
        %v334 = vld [vmem:[%s209 + $0x238] sm:$0xff]
        %v335 = vld [vmem:[%s209 + $0x240] sm:$0xff]
        %v336 = vld [vmem:[%s209 + $0x248] sm:$0xff]
        %v337 = vld [vmem:[%s209 + $0x250] sm:$0xff]
        %v338 = vld [vmem:[%s209 + $0x258] sm:$0xff]
        %v339 = vld [vmem:[%s209 + $0x260] sm:$0xff]
        %v340 = vld [vmem:[%s209 + $0x268] sm:$0xff]
        %v341 = vld [vmem:[%s209 + $0x270] sm:$0xff]
        %v342 = vld [vmem:[%s209 + $0x278] sm:$0xff]
        %v343 = vld [vmem:[%s209 + $0x280] sm:$0xff]
        %v344 = vld [vmem:[%s209 + $0x288] sm:$0xff]
        %v345 = vld [vmem:[%s209 + $0x290] sm:$0xff]
        %v346 = vld [vmem:[%s209 + $0x298] sm:$0xff]
        %v347 = vld [vmem:[%s209 + $0x2a0] sm:$0xff]
        %v348 = vld [vmem:[%s209 + $0x2a8] sm:$0xff]
        %v349 = vld [vmem:[%s209 + $0x2b0] sm:$0xff]
        %v350 = vld [vmem:[%s209 + $0x2b8] sm:$0xff]
        %v351 = vld [vmem:[%s209 + $0x2c0] sm:$0xff]
        %v352 = vld [vmem:[%s209 + $0x2c8] sm:$0xff]
        %v353 = vld [vmem:[%s209 + $0x2d0] sm:$0xff]
        %v354 = vld [vmem:[%s209 + $0x2d8] sm:$0xff]
        %v355 = vld [vmem:[%s209 + $0x2e0] sm:$0xff]
        %v356 = vld [vmem:[%s209 + $0x2e8] sm:$0xff]
        %v357 = vld [vmem:[%s209 + $0x2f0] sm:$0xff]
        %v358 = vld [vmem:[%s209 + $0x2f8] sm:$0xff]
        %v359 = vld [vmem:[%s209 + $0x300] sm:$0xff]
        %v360 = vld [vmem:[%s209 + $0x308] sm:$0xff]
        %v361 = vld [vmem:[%s209 + $0x310] sm:$0xff]
        %v362 = vld [vmem:[%s209 + $0x318] sm:$0xff]
        %v363 = vld [vmem:[%s209 + $0x320] sm:$0xff]
        %v364 = vld [vmem:[%s209 + $0x328] sm:$0xff]
        %v365 = vld [vmem:[%s209 + $0x330] sm:$0xff]
        %v366 = vld [vmem:[%s209 + $0x338] sm:$0xff]
        %v367 = vld [vmem:[%s209 + $0x340] sm:$0xff]
        %v368 = vld [vmem:[%s209 + $0x348] sm:$0xff]
        %v369 = vld [vmem:[%s209 + $0x350] sm:$0xff]
        %v370 = vld [vmem:[%s209 + $0x358] sm:$0xff]
        %v371 = vld [vmem:[%s209 + $0x360] sm:$0xff]
        %v372 = vld [vmem:[%s209 + $0x368] sm:$0xff]
        %v373 = vld [vmem:[%s209 + $0x370] sm:$0xff]
        %v374 = vld [vmem:[%s209 + $0x378] sm:$0xff]
        %v375 = vld [vmem:[%s209 + $0x380] sm:$0xff]
        %v376 = vld [vmem:[%s209 + $0x388] sm:$0xff]
        %v377 = vld [vmem:[%s209 + $0x390] sm:$0xff]
        %v378 = vld [vmem:[%s209 + $0x398] sm:$0xff]
        %v379 = vld [vmem:[%s209 + $0x3a0] sm:$0xff]
        %v380 = vld [vmem:[%s209 + $0x3a8] sm:$0xff]
        %v381 = vld [vmem:[%s209 + $0x3b0] sm:$0xff]
        %v382 = vld [vmem:[%s209 + $0x3b8] sm:$0xff]
        %v383 = vld [vmem:[%s209 + $0x3c0] sm:$0xff]
        %v384 = vld [vmem:[%s209 + $0x3c8] sm:$0xff]
        %v385 = vld [vmem:[%s209 + $0x3d0] sm:$0xff]
        %v386 = vld [vmem:[%s209 + $0x3d8] sm:$0xff]
        %v387 = vld [vmem:[%s209 + $0x3e0] sm:$0xff]
        %v388 = vld [vmem:[%s209 + $0x3e8] sm:$0xff]
        %v389 = vld [vmem:[%s209 + $0x3f0] sm:$0xff]
        %v390 = vld [vmem:[%s209 + $0x3f8] sm:$0xff]
        %v391 = vld [vmem:[%s218] sm:$0xf]
        %v393 = vlaneseq
        %v394 = vshrl.u32 %v393, 7
        %v395 = vsub.s32 0, %v394
        %v396 = vrot.slane %v391, %v395
        %v397 = vlaneseq
        %v398 = vshrl.u32 %v397, 7
        %v399 = vsub.s32 1, %v398
        %v400 = vrot.slane %v391, %v399
        %v401 = vlaneseq
        %v402 = vshrl.u32 %v401, 7
        %v403 = vsub.s32 2, %v402
        %v404 = vrot.slane %v391, %v403
        %v405 = vlaneseq
        %v406 = vshrl.u32 %v405, 7
        %v407 = vsub.s32 3, %v406
        %v408 = vrot.slane %v391, %v407
        %v415 = vunpack.c.l.b16 %v261
        %v416 = vunpack.c.h.b16 %v261
        %v417 = vunpack.c.l.b16 %v262
        %v418 = vunpack.c.h.b16 %v262
        %v419 = vpack.c.b16 %v415, %v415
        %v420 = vpack.c.b16 %v416, %v416
        %v421 = vpack.c.b16 %v417, %v417
        %v422 = vpack.c.b16 %v418, %v418
        %v555 = vunpack.c.l.b16 %v263
        %v556 = vunpack.c.h.b16 %v263
        %v557 = vunpack.c.l.b16 %v264
        %v558 = vunpack.c.h.b16 %v264
        %v559 = vunpack.c.l.b16 %v265
        %v560 = vunpack.c.h.b16 %v265
        %v561 = vunpack.c.l.b16 %v266
        %v562 = vunpack.c.h.b16 %v266
        %v563 = vunpack.c.l.b16 %v267
        %v564 = vunpack.c.h.b16 %v267
        %v565 = vunpack.c.l.b16 %v268
        %v566 = vunpack.c.h.b16 %v268
        %v567 = vunpack.c.l.b16 %v269
        %v568 = vunpack.c.h.b16 %v269
        %v569 = vunpack.c.l.b16 %v270
        %v570 = vunpack.c.h.b16 %v270
        %v571 = vunpack.c.l.b16 %v271
        %v572 = vunpack.c.h.b16 %v271
        %v573 = vunpack.c.l.b16 %v272
        %v574 = vunpack.c.h.b16 %v272
        %v575 = vunpack.c.l.b16 %v273
        %v576 = vunpack.c.h.b16 %v273
        %v577 = vunpack.c.l.b16 %v274
        %v578 = vunpack.c.h.b16 %v274
        %v579 = vunpack.c.l.b16 %v275
        %v580 = vunpack.c.h.b16 %v275
        %v581 = vunpack.c.l.b16 %v276
        %v582 = vunpack.c.h.b16 %v276
        %v583 = vunpack.c.l.b16 %v277
        %v584 = vunpack.c.h.b16 %v277
        %v585 = vunpack.c.l.b16 %v278
        %v586 = vunpack.c.h.b16 %v278
        %v587 = vunpack.c.l.b16 %v279
        %v588 = vunpack.c.h.b16 %v279
        %v589 = vunpack.c.l.b16 %v280
        %v590 = vunpack.c.h.b16 %v280
        %v591 = vunpack.c.l.b16 %v281
        %v592 = vunpack.c.h.b16 %v281
        %v593 = vunpack.c.l.b16 %v282
        %v594 = vunpack.c.h.b16 %v282
        %v595 = vunpack.c.l.b16 %v283
        %v596 = vunpack.c.h.b16 %v283
        %v597 = vunpack.c.l.b16 %v284
        %v598 = vunpack.c.h.b16 %v284
        %v599 = vunpack.c.l.b16 %v285
        %v600 = vunpack.c.h.b16 %v285
        %v601 = vunpack.c.l.b16 %v286
        %v602 = vunpack.c.h.b16 %v286
        %v603 = vunpack.c.l.b16 %v287
        %v604 = vunpack.c.h.b16 %v287
        %v605 = vunpack.c.l.b16 %v288
        %v606 = vunpack.c.h.b16 %v288
        %v607 = vunpack.c.l.b16 %v289
        %v608 = vunpack.c.h.b16 %v289
        %v609 = vunpack.c.l.b16 %v290
        %v610 = vunpack.c.h.b16 %v290
        %v611 = vunpack.c.l.b16 %v291
        %v612 = vunpack.c.h.b16 %v291
        %v613 = vunpack.c.l.b16 %v292
        %v614 = vunpack.c.h.b16 %v292
        %v615 = vunpack.c.l.b16 %v293
        %v616 = vunpack.c.h.b16 %v293
        %v617 = vunpack.c.l.b16 %v294
        %v618 = vunpack.c.h.b16 %v294
        %v619 = vunpack.c.l.b16 %v295
        %v620 = vunpack.c.h.b16 %v295
        %v621 = vunpack.c.l.b16 %v296
        %v622 = vunpack.c.h.b16 %v296
        %v623 = vunpack.c.l.b16 %v297
        %v624 = vunpack.c.h.b16 %v297
        %v625 = vunpack.c.l.b16 %v298
        %v626 = vunpack.c.h.b16 %v298
        %v627 = vunpack.c.l.b16 %v299
        %v628 = vunpack.c.h.b16 %v299
        %v629 = vunpack.c.l.b16 %v300
        %v630 = vunpack.c.h.b16 %v300
        %v631 = vunpack.c.l.b16 %v301
        %v632 = vunpack.c.h.b16 %v301
        %v633 = vunpack.c.l.b16 %v302
        %v634 = vunpack.c.h.b16 %v302
        %v635 = vunpack.c.l.b16 %v303
        %v636 = vunpack.c.h.b16 %v303
        %v637 = vunpack.c.l.b16 %v304
        %v638 = vunpack.c.h.b16 %v304
        %v639 = vunpack.c.l.b16 %v305
        %v640 = vunpack.c.h.b16 %v305
        %v641 = vunpack.c.l.b16 %v306
        %v642 = vunpack.c.h.b16 %v306
        %v643 = vunpack.c.l.b16 %v307
        %v644 = vunpack.c.h.b16 %v307
        %v645 = vunpack.c.l.b16 %v308
        %v646 = vunpack.c.h.b16 %v308
        %v647 = vunpack.c.l.b16 %v309
        %v648 = vunpack.c.h.b16 %v309
        %v649 = vunpack.c.l.b16 %v310
        %v650 = vunpack.c.h.b16 %v310
        %v651 = vunpack.c.l.b16 %v311
        %v652 = vunpack.c.h.b16 %v311
        %v653 = vunpack.c.l.b16 %v312
        %v654 = vunpack.c.h.b16 %v312
        %v655 = vunpack.c.l.b16 %v313
        %v656 = vunpack.c.h.b16 %v313
        %v657 = vunpack.c.l.b16 %v314
        %v658 = vunpack.c.h.b16 %v314
        %v659 = vunpack.c.l.b16 %v315
        %v660 = vunpack.c.h.b16 %v315
        %v661 = vunpack.c.l.b16 %v316
        %v662 = vunpack.c.h.b16 %v316
        %v663 = vunpack.c.l.b16 %v317
        %v664 = vunpack.c.h.b16 %v317
        %v665 = vunpack.c.l.b16 %v318
        %v666 = vunpack.c.h.b16 %v318
        %v667 = vunpack.c.l.b16 %v319
        %v668 = vunpack.c.h.b16 %v319
        %v669 = vunpack.c.l.b16 %v320
        %v670 = vunpack.c.h.b16 %v320
        %v671 = vunpack.c.l.b16 %v321
        %v672 = vunpack.c.h.b16 %v321
        %v673 = vunpack.c.l.b16 %v322
        %v674 = vunpack.c.h.b16 %v322
        %v675 = vunpack.c.l.b16 %v323
        %v676 = vunpack.c.h.b16 %v323
        %v677 = vunpack.c.l.b16 %v324
        %v678 = vunpack.c.h.b16 %v324
        %v679 = vunpack.c.l.b16 %v325
        %v680 = vunpack.c.h.b16 %v325
        %v681 = vunpack.c.l.b16 %v326
        %v682 = vunpack.c.h.b16 %v326
        %v683 = vunpack.c.l.b16 %v327
        %v684 = vunpack.c.h.b16 %v327
        %v685 = vunpack.c.l.b16 %v328
        %v686 = vunpack.c.h.b16 %v328
        %v687 = vunpack.c.l.b16 %v329
        %v688 = vunpack.c.h.b16 %v329
        %v689 = vunpack.c.l.b16 %v330
        %v690 = vunpack.c.h.b16 %v330
        %v691 = vunpack.c.l.b16 %v331
        %v692 = vunpack.c.h.b16 %v331
        %v693 = vunpack.c.l.b16 %v332
        %v694 = vunpack.c.h.b16 %v332
        %v695 = vunpack.c.l.b16 %v333
        %v696 = vunpack.c.h.b16 %v333
        %v697 = vunpack.c.l.b16 %v334
        %v698 = vunpack.c.h.b16 %v334
        %v699 = vunpack.c.l.b16 %v335
        %v700 = vunpack.c.h.b16 %v335
        %v701 = vunpack.c.l.b16 %v336
        %v702 = vunpack.c.h.b16 %v336
        %v703 = vunpack.c.l.b16 %v337
        %v704 = vunpack.c.h.b16 %v337
        %v705 = vunpack.c.l.b16 %v338
        %v706 = vunpack.c.h.b16 %v338
        %v707 = vunpack.c.l.b16 %v339
        %v708 = vunpack.c.h.b16 %v339
        %v709 = vunpack.c.l.b16 %v340
        %v710 = vunpack.c.h.b16 %v340
        %v711 = vunpack.c.l.b16 %v341
        %v712 = vunpack.c.h.b16 %v341
        %v713 = vunpack.c.l.b16 %v342
        %v714 = vunpack.c.h.b16 %v342
        %v715 = vunpack.c.l.b16 %v343
        %v716 = vunpack.c.h.b16 %v343
        %v717 = vunpack.c.l.b16 %v344
        %v718 = vunpack.c.h.b16 %v344
        %v719 = vunpack.c.l.b16 %v345
        %v720 = vunpack.c.h.b16 %v345
        %v721 = vunpack.c.l.b16 %v346
        %v722 = vunpack.c.h.b16 %v346
        %v723 = vunpack.c.l.b16 %v347
        %v724 = vunpack.c.h.b16 %v347
        %v725 = vunpack.c.l.b16 %v348
        %v726 = vunpack.c.h.b16 %v348
        %v727 = vunpack.c.l.b16 %v349
        %v728 = vunpack.c.h.b16 %v349
        %v729 = vunpack.c.l.b16 %v350
        %v730 = vunpack.c.h.b16 %v350
        %v731 = vunpack.c.l.b16 %v351
        %v732 = vunpack.c.h.b16 %v351
        %v733 = vunpack.c.l.b16 %v352
        %v734 = vunpack.c.h.b16 %v352
        %v735 = vunpack.c.l.b16 %v353
        %v736 = vunpack.c.h.b16 %v353
        %v737 = vunpack.c.l.b16 %v354
        %v738 = vunpack.c.h.b16 %v354
        %v739 = vunpack.c.l.b16 %v355
        %v740 = vunpack.c.h.b16 %v355
        %v741 = vunpack.c.l.b16 %v356
        %v742 = vunpack.c.h.b16 %v356
        %v743 = vunpack.c.l.b16 %v357
        %v744 = vunpack.c.h.b16 %v357
        %v745 = vunpack.c.l.b16 %v358
        %v746 = vunpack.c.h.b16 %v358
        %v747 = vunpack.c.l.b16 %v359
        %v748 = vunpack.c.h.b16 %v359
        %v749 = vunpack.c.l.b16 %v360
        %v750 = vunpack.c.h.b16 %v360
        %v751 = vunpack.c.l.b16 %v361
        %v752 = vunpack.c.h.b16 %v361
        %v753 = vunpack.c.l.b16 %v362
        %v754 = vunpack.c.h.b16 %v362
        %v755 = vunpack.c.l.b16 %v363
        %v756 = vunpack.c.h.b16 %v363
        %v757 = vunpack.c.l.b16 %v364
        %v758 = vunpack.c.h.b16 %v364
        %v759 = vunpack.c.l.b16 %v365
        %v760 = vunpack.c.h.b16 %v365
        %v761 = vunpack.c.l.b16 %v366
        %v762 = vunpack.c.h.b16 %v366
        %v763 = vunpack.c.l.b16 %v367
        %v764 = vunpack.c.h.b16 %v367
        %v765 = vunpack.c.l.b16 %v368
        %v766 = vunpack.c.h.b16 %v368
        %v767 = vunpack.c.l.b16 %v369
        %v768 = vunpack.c.h.b16 %v369
        %v769 = vunpack.c.l.b16 %v370
        %v770 = vunpack.c.h.b16 %v370
        %v771 = vunpack.c.l.b16 %v371
        %v772 = vunpack.c.h.b16 %v371
        %v773 = vunpack.c.l.b16 %v372
        %v774 = vunpack.c.h.b16 %v372
        %v775 = vunpack.c.l.b16 %v373
        %v776 = vunpack.c.h.b16 %v373
        %v777 = vunpack.c.l.b16 %v374
        %v778 = vunpack.c.h.b16 %v374
        %v779 = vunpack.c.l.b16 %v375
        %v780 = vunpack.c.h.b16 %v375
        %v781 = vunpack.c.l.b16 %v376
        %v782 = vunpack.c.h.b16 %v376
        %v783 = vunpack.c.l.b16 %v377
        %v784 = vunpack.c.h.b16 %v377
        %v785 = vunpack.c.l.b16 %v378
        %v786 = vunpack.c.h.b16 %v378
        %v787 = vunpack.c.l.b16 %v379
        %v788 = vunpack.c.h.b16 %v379
        %v789 = vunpack.c.l.b16 %v380
        %v790 = vunpack.c.h.b16 %v380
        %v791 = vunpack.c.l.b16 %v381
        %v792 = vunpack.c.h.b16 %v381
        %v793 = vunpack.c.l.b16 %v382
        %v794 = vunpack.c.h.b16 %v382
        %v795 = vunpack.c.l.b16 %v383
        %v796 = vunpack.c.h.b16 %v383
        %v797 = vunpack.c.l.b16 %v384
        %v798 = vunpack.c.h.b16 %v384
        %v799 = vunpack.c.l.b16 %v385
        %v800 = vunpack.c.h.b16 %v385
        %v801 = vunpack.c.l.b16 %v386
        %v802 = vunpack.c.h.b16 %v386
        %v803 = vunpack.c.l.b16 %v387
        %v804 = vunpack.c.h.b16 %v387
        %v805 = vunpack.c.l.b16 %v388
        %v806 = vunpack.c.h.b16 %v388
        %v807 = vunpack.c.l.b16 %v389
        %v808 = vunpack.c.h.b16 %v389
        %v809 = vunpack.c.l.b16 %v390
        %v810 = vunpack.c.h.b16 %v390
        %v811 = vpack.c.b16 %v559, %v555
        %v812 = vpack.c.b16 %v560, %v556
        %v813 = vpack.c.b16 %v561, %v557
        %v814 = vpack.c.b16 %v562, %v558
        %v815 = vpack.c.b16 %v567, %v563
        %v816 = vpack.c.b16 %v568, %v564
        %v817 = vpack.c.b16 %v569, %v565
        %v818 = vpack.c.b16 %v570, %v566
        %v819 = vpack.c.b16 %v575, %v571
        %v820 = vpack.c.b16 %v576, %v572
        %v821 = vpack.c.b16 %v577, %v573
        %v822 = vpack.c.b16 %v578, %v574
        %v823 = vpack.c.b16 %v583, %v579
        %v824 = vpack.c.b16 %v584, %v580
        %v825 = vpack.c.b16 %v585, %v581
        %v826 = vpack.c.b16 %v586, %v582
        %v827 = vpack.c.b16 %v591, %v587
        %v828 = vpack.c.b16 %v592, %v588
        %v829 = vpack.c.b16 %v593, %v589
        %v830 = vpack.c.b16 %v594, %v590
        %v831 = vpack.c.b16 %v599, %v595
        %v832 = vpack.c.b16 %v600, %v596
        %v833 = vpack.c.b16 %v601, %v597
        %v834 = vpack.c.b16 %v602, %v598
        %v835 = vpack.c.b16 %v607, %v603
        %v836 = vpack.c.b16 %v608, %v604
        %v837 = vpack.c.b16 %v609, %v605
        %v838 = vpack.c.b16 %v610, %v606
        %v839 = vpack.c.b16 %v615, %v611
        %v840 = vpack.c.b16 %v616, %v612
        %v841 = vpack.c.b16 %v617, %v613
        %v842 = vpack.c.b16 %v618, %v614
        %v843 = vpack.c.b16 %v623, %v619
        %v844 = vpack.c.b16 %v624, %v620
        %v845 = vpack.c.b16 %v625, %v621
        %v846 = vpack.c.b16 %v626, %v622
        %v847 = vpack.c.b16 %v631, %v627
        %v848 = vpack.c.b16 %v632, %v628
        %v849 = vpack.c.b16 %v633, %v629
        %v850 = vpack.c.b16 %v634, %v630
        %v851 = vpack.c.b16 %v639, %v635
        %v852 = vpack.c.b16 %v640, %v636
        %v853 = vpack.c.b16 %v641, %v637
        %v854 = vpack.c.b16 %v642, %v638
        %v855 = vpack.c.b16 %v647, %v643
        %v856 = vpack.c.b16 %v648, %v644
        %v857 = vpack.c.b16 %v649, %v645
        %v858 = vpack.c.b16 %v650, %v646
        %v859 = vpack.c.b16 %v655, %v651
        %v860 = vpack.c.b16 %v656, %v652
        %v861 = vpack.c.b16 %v657, %v653
        %v862 = vpack.c.b16 %v658, %v654
        %v863 = vpack.c.b16 %v663, %v659
        %v864 = vpack.c.b16 %v664, %v660
        %v865 = vpack.c.b16 %v665, %v661
        %v866 = vpack.c.b16 %v666, %v662
        %v867 = vpack.c.b16 %v671, %v667
        %v868 = vpack.c.b16 %v672, %v668
        %v869 = vpack.c.b16 %v673, %v669
        %v870 = vpack.c.b16 %v674, %v670
        %v871 = vpack.c.b16 %v679, %v675
        %v872 = vpack.c.b16 %v680, %v676
        %v873 = vpack.c.b16 %v681, %v677
        %v874 = vpack.c.b16 %v682, %v678
        %v875 = vpack.c.b16 %v687, %v683
        %v876 = vpack.c.b16 %v688, %v684
        %v877 = vpack.c.b16 %v689, %v685
        %v878 = vpack.c.b16 %v690, %v686
        %v879 = vpack.c.b16 %v695, %v691
        %v880 = vpack.c.b16 %v696, %v692
        %v881 = vpack.c.b16 %v697, %v693
        %v882 = vpack.c.b16 %v698, %v694
        %v883 = vpack.c.b16 %v703, %v699
        %v884 = vpack.c.b16 %v704, %v700
        %v885 = vpack.c.b16 %v705, %v701
        %v886 = vpack.c.b16 %v706, %v702
        %v887 = vpack.c.b16 %v711, %v707
        %v888 = vpack.c.b16 %v712, %v708
        %v889 = vpack.c.b16 %v713, %v709
        %v890 = vpack.c.b16 %v714, %v710
        %v891 = vpack.c.b16 %v719, %v715
        %v892 = vpack.c.b16 %v720, %v716
        %v893 = vpack.c.b16 %v721, %v717
        %v894 = vpack.c.b16 %v722, %v718
        %v895 = vpack.c.b16 %v727, %v723
        %v896 = vpack.c.b16 %v728, %v724
        %v897 = vpack.c.b16 %v729, %v725
        %v898 = vpack.c.b16 %v730, %v726
        %v899 = vpack.c.b16 %v735, %v731
        %v900 = vpack.c.b16 %v736, %v732
        %v901 = vpack.c.b16 %v737, %v733
        %v902 = vpack.c.b16 %v738, %v734
        %v903 = vpack.c.b16 %v743, %v739
        %v904 = vpack.c.b16 %v744, %v740
        %v905 = vpack.c.b16 %v745, %v741
        %v906 = vpack.c.b16 %v746, %v742
        %v907 = vpack.c.b16 %v751, %v747
        %v908 = vpack.c.b16 %v752, %v748
        %v909 = vpack.c.b16 %v753, %v749
        %v910 = vpack.c.b16 %v754, %v750
        %v911 = vpack.c.b16 %v759, %v755
        %v912 = vpack.c.b16 %v760, %v756
        %v913 = vpack.c.b16 %v761, %v757
        %v914 = vpack.c.b16 %v762, %v758
        %v915 = vpack.c.b16 %v767, %v763
        %v916 = vpack.c.b16 %v768, %v764
        %v917 = vpack.c.b16 %v769, %v765
        %v918 = vpack.c.b16 %v770, %v766
        %v919 = vpack.c.b16 %v775, %v771
        %v920 = vpack.c.b16 %v776, %v772
        %v921 = vpack.c.b16 %v777, %v773
        %v922 = vpack.c.b16 %v778, %v774
        %v923 = vpack.c.b16 %v783, %v779
        %v924 = vpack.c.b16 %v784, %v780
        %v925 = vpack.c.b16 %v785, %v781
        %v926 = vpack.c.b16 %v786, %v782
        %v927 = vpack.c.b16 %v791, %v787
        %v928 = vpack.c.b16 %v792, %v788
        %v929 = vpack.c.b16 %v793, %v789
        %v930 = vpack.c.b16 %v794, %v790
        %v931 = vpack.c.b16 %v799, %v795
        %v932 = vpack.c.b16 %v800, %v796
        %v933 = vpack.c.b16 %v801, %v797
        %v934 = vpack.c.b16 %v802, %v798
        %v935 = vpack.c.b16 %v807, %v803
        %v936 = vpack.c.b16 %v808, %v804
        %v937 = vpack.c.b16 %v809, %v805
        %v938 = vpack.c.b16 %v810, %v806
        %1067 = vmatprep.subr.bf16.mxu0 %v840
        %1068 = vmatpush1.bf16.msra.mxu0 %v839
        %1069 = vmatprep.subr.bf16.mxu0 %v836
        %1070 = vmatpush1.bf16.msra.mxu0 %v835
        %1071 = vmatprep.subr.bf16.mxu0 %v832
        %1072 = vmatpush1.bf16.msra.mxu0 %v831
        %1073 = vmatprep.subr.bf16.mxu0 %v828
        %1074 = vmatpush1.bf16.msra.mxu0 %v827
        %1075 = vmatprep.subr.bf16.mxu0 %v824
        %1076 = vmatpush1.bf16.msra.mxu0 %v823
        %1077 = vmatprep.subr.bf16.mxu0 %v820
        %1078 = vmatpush1.bf16.msra.mxu0 %v819
        %1079 = vmatprep.subr.bf16.mxu0 %v816
        %1080 = vmatpush1.bf16.msra.mxu0 %v815
        %1081 = vmatprep.subr.bf16.mxu0 %v812
        %1082 = vmatpush1.bf16.msra.mxu0 %v811
        %1083 = vmatprep.subr.bf16.mxu0 %v872
        %1084 = vmatpush2.bf16.msra.mxu0 %v871
        %1085 = vmatprep.subr.bf16.mxu0 %v868
        %1086 = vmatpush2.bf16.msra.mxu0 %v867
        %1087 = vmatprep.subr.bf16.mxu0 %v864
        %1088 = vmatpush2.bf16.msra.mxu0 %v863
        %1089 = vmatprep.subr.bf16.mxu0 %v860
        %1090 = vmatpush2.bf16.msra.mxu0 %v859
        %1091 = vmatprep.subr.bf16.mxu0 %v856
        %1092 = vmatpush2.bf16.msra.mxu0 %v855
        %1093 = vmatprep.subr.bf16.mxu0 %v852
        %1094 = vmatpush2.bf16.msra.mxu0 %v851
        %1095 = vmatprep.subr.bf16.mxu0 %v848
        %1096 = vmatpush2.bf16.msra.mxu0 %v847
        %1097 = vmatprep.subr.bf16.mxu0 %v844
        %1098 = vmatpush2.bf16.msra.mxu0 %v843
        %1099 = vmatprep.mubr.bf16.mxu0 %v420
        %1100 = vmatmul.mubr.bf16.gmra.mxu0 %v419
        %v1101 = vpop.f32.mrf.mxu0
        %v1102 = vadd.f32 %v396, %v1101
        %v1103 = vpop.f32.mrf.mxu0
        %v1104 = vadd.f32 %v400, %v1103
        %v1105 = vpop.f32.mrf.mxu0
        %v1106 = vpop.f32.mrf.mxu0
        %1107 = vdwg.mxu0
        %1108 = vmatprep.subr.bf16.mxu0 %v904
        %1109 = vmatpush1.bf16.msra.mxu0 %v903
        %1110 = vmatprep.subr.bf16.mxu0 %v900
        %1111 = vmatpush1.bf16.msra.mxu0 %v899
        %1112 = vmatprep.subr.bf16.mxu0 %v896
        %1113 = vmatpush1.bf16.msra.mxu0 %v895
        %1114 = vmatprep.subr.bf16.mxu0 %v892
        %1115 = vmatpush1.bf16.msra.mxu0 %v891
        %1116 = vmatprep.subr.bf16.mxu0 %v888
        %1117 = vmatpush1.bf16.msra.mxu0 %v887
        %1118 = vmatprep.subr.bf16.mxu0 %v884
        %1119 = vmatpush1.bf16.msra.mxu0 %v883
        %1120 = vmatprep.subr.bf16.mxu0 %v880
        %1121 = vmatpush1.bf16.msra.mxu0 %v879
        %1122 = vmatprep.subr.bf16.mxu0 %v876
        %1123 = vmatpush1.bf16.msra.mxu0 %v875
        %1124 = vmatprep.subr.bf16.mxu0 %v936
        %1125 = vmatpush2.bf16.msra.mxu0 %v935
        %1126 = vmatprep.subr.bf16.mxu0 %v932
        %1127 = vmatpush2.bf16.msra.mxu0 %v931
        %1128 = vmatprep.subr.bf16.mxu0 %v928
        %1129 = vmatpush2.bf16.msra.mxu0 %v927
        %1130 = vmatprep.subr.bf16.mxu0 %v924
        %1131 = vmatpush2.bf16.msra.mxu0 %v923
        %1132 = vmatprep.subr.bf16.mxu0 %v920
        %1133 = vmatpush2.bf16.msra.mxu0 %v919
        %1134 = vmatprep.subr.bf16.mxu0 %v916
        %1135 = vmatpush2.bf16.msra.mxu0 %v915
        %1136 = vmatprep.subr.bf16.mxu0 %v912
        %1137 = vmatpush2.bf16.msra.mxu0 %v911
        %1138 = vmatprep.subr.bf16.mxu0 %v908
        %1139 = vmatpush2.bf16.msra.mxu0 %v907
        %1140 = vmatprep.mubr.bf16.mxu0 %v422
        %1141 = vmatmul.mubr.bf16.gmra.mxu0 %v421
        %v1142 = vpop.f32.mrf.mxu0
        %v1143 = vadd.f32 %v1102, %v1142
        %v1144 = vpop.f32.mrf.mxu0
        %v1145 = vadd.f32 %v1104, %v1144
        %v1146 = vpop.f32.mrf.mxu0
        %v1147 = vpop.f32.mrf.mxu0
        %1148 = vdwg.mxu0
        %1149 = vmatprep.subr.bf16.mxu0 %v842
        %1150 = vmatpush1.bf16.msra.mxu0 %v841
        %1151 = vmatprep.subr.bf16.mxu0 %v838
        %1152 = vmatpush1.bf16.msra.mxu0 %v837
        %1153 = vmatprep.subr.bf16.mxu0 %v834
        %1154 = vmatpush1.bf16.msra.mxu0 %v833
        %1155 = vmatprep.subr.bf16.mxu0 %v830
        %1156 = vmatpush1.bf16.msra.mxu0 %v829
        %1157 = vmatprep.subr.bf16.mxu0 %v826
        %1158 = vmatpush1.bf16.msra.mxu0 %v825
        %1159 = vmatprep.subr.bf16.mxu0 %v822
        %1160 = vmatpush1.bf16.msra.mxu0 %v821
        %1161 = vmatprep.subr.bf16.mxu0 %v818
        %1162 = vmatpush1.bf16.msra.mxu0 %v817
        %1163 = vmatprep.subr.bf16.mxu0 %v814
        %1164 = vmatpush1.bf16.msra.mxu0 %v813
        %1165 = vmatprep.subr.bf16.mxu0 %v874
        %1166 = vmatpush2.bf16.msra.mxu0 %v873
        %1167 = vmatprep.subr.bf16.mxu0 %v870
        %1168 = vmatpush2.bf16.msra.mxu0 %v869
        %1169 = vmatprep.subr.bf16.mxu0 %v866
        %1170 = vmatpush2.bf16.msra.mxu0 %v865
        %1171 = vmatprep.subr.bf16.mxu0 %v862
        %1172 = vmatpush2.bf16.msra.mxu0 %v861
        %1173 = vmatprep.subr.bf16.mxu0 %v858
        %1174 = vmatpush2.bf16.msra.mxu0 %v857
        %1175 = vmatprep.subr.bf16.mxu0 %v854
        %1176 = vmatpush2.bf16.msra.mxu0 %v853
        %1177 = vmatprep.subr.bf16.mxu0 %v850
        %1178 = vmatpush2.bf16.msra.mxu0 %v849
        %1179 = vmatprep.subr.bf16.mxu0 %v846
        %1180 = vmatpush2.bf16.msra.mxu0 %v845
        %1181 = vmatprep.mubr.bf16.mxu0 %v420
        %1182 = vmatmul.mubr.bf16.gmra.mxu0 %v419
        %v1183 = vpop.f32.mrf.mxu0
        %v1184 = vadd.f32 %v404, %v1183
        %v1185 = vpop.f32.mrf.mxu0
        %v1186 = vadd.f32 %v408, %v1185
        %v1187 = vpop.f32.mrf.mxu0
        %v1188 = vpop.f32.mrf.mxu0
        %1189 = vdwg.mxu0
        %1190 = vmatprep.subr.bf16.mxu0 %v906
        %1191 = vmatpush1.bf16.msra.mxu0 %v905
        %1192 = vmatprep.subr.bf16.mxu0 %v902
        %1193 = vmatpush1.bf16.msra.mxu0 %v901
        %1194 = vmatprep.subr.bf16.mxu0 %v898
        %1195 = vmatpush1.bf16.msra.mxu0 %v897
        %1196 = vmatprep.subr.bf16.mxu0 %v894
        %1197 = vmatpush1.bf16.msra.mxu0 %v893
        %1198 = vmatprep.subr.bf16.mxu0 %v890
        %1199 = vmatpush1.bf16.msra.mxu0 %v889
        %1200 = vmatprep.subr.bf16.mxu0 %v886
        %1201 = vmatpush1.bf16.msra.mxu0 %v885
        %1202 = vmatprep.subr.bf16.mxu0 %v882
        %1203 = vmatpush1.bf16.msra.mxu0 %v881
        %1204 = vmatprep.subr.bf16.mxu0 %v878
        %1205 = vmatpush1.bf16.msra.mxu0 %v877
        %1206 = vmatprep.subr.bf16.mxu0 %v938
        %1207 = vmatpush2.bf16.msra.mxu0 %v937
        %1208 = vmatprep.subr.bf16.mxu0 %v934
        %1209 = vmatpush2.bf16.msra.mxu0 %v933
        %1210 = vmatprep.subr.bf16.mxu0 %v930
        %1211 = vmatpush2.bf16.msra.mxu0 %v929
        %1212 = vmatprep.subr.bf16.mxu0 %v926
        %1213 = vmatpush2.bf16.msra.mxu0 %v925
        %1214 = vmatprep.subr.bf16.mxu0 %v922
        %1215 = vmatpush2.bf16.msra.mxu0 %v921
        %1216 = vmatprep.subr.bf16.mxu0 %v918
        %1217 = vmatpush2.bf16.msra.mxu0 %v917
        %1218 = vmatprep.subr.bf16.mxu0 %v914
        %1219 = vmatpush2.bf16.msra.mxu0 %v913
        %1220 = vmatprep.subr.bf16.mxu0 %v910
        %1221 = vmatpush2.bf16.msra.mxu0 %v909
        %1222 = vmatprep.mubr.bf16.mxu0 %v422
        %1223 = vmatmul.mubr.bf16.gmra.mxu0 %v421
        %v1224 = vpop.f32.mrf.mxu0
        %v1225 = vadd.f32 %v1184, %v1224
        %v1226 = vpop.f32.mrf.mxu0
        %v1227 = vadd.f32 %v1186, %v1226
        %v1228 = vpop.f32.mrf.mxu0
        %v1229 = vpop.f32.mrf.mxu0
        %1230 = vdwg.mxu0
        %v1231 = vmax.f32 %v1143, 0.0
        %v1232 = vmax.f32 %v1145, 0.0
        %v1233 = vmax.f32 %v1225, 0.0
        %v1234 = vmax.f32 %v1227, 0.0
        %v1235 = vpack.c.bf16 %v1231, %v1231
        %v1236 = vpack.c.bf16 %v1232, %v1232
        %v1237 = vpack.c.bf16 %v1233, %v1233
        %v1238 = vpack.c.bf16 %v1234, %v1234
        %v1243 = vunpack.c.l.b16 %v1235
        %v1244 = vunpack.c.l.b16 %v1236
        %v1245 = vunpack.c.l.b16 %v1237
        %v1246 = vunpack.c.l.b16 %v1238
        %v1247 = vpack.c.b16 %v1244, %v1243
        %v1248 = vpack.c.b16 %v1246, %v1245
        %1251 = vst [vmem:[%s259] sm:$0xff] %v1247
        %1252 = vst [vmem:[%s259 + $0x8] sm:$0xff] %v1248
        %s1253 = smul.u32 4, %s25
        %p1254 = scmp.lt.s32.totalorder %s24, 1
        %s1255 = scalar_select %p1254, %s24, 1
        %p1256 = scmp.lt.s32.totalorder %s1253, 7
        %s1257 = scalar_select %p1256, %s1253, 7
        %s1258 = smul.addr %s1255, 8
        %s1259 = sadd.s32 %s1257, %s1258
        %s1260 = smul.addr %s1259, 4
        %s1261 = scalar_lea.vmem %s3, %s1260
        // Predicated region
        $region41: #{actor_critic_forward.6} parent=31 // pred_check
          %p1262 = pneg %p129
        $region42: #{actor_critic_forward.6} parent=31 // pred_check_branch
          %1264 = sbr.rel (%p1262) target = $region44
        $region43: #{actor_critic_forward.6} parent=31 // pred_region
          %s1265 = smul.u32 4, %s25
        $region44: #{actor_critic_forward.6} parent=31 // pred_fallthru
          _
      $region32: #{actor_critic_forward.6} parent=5 // pred_fallthru
        _
      %p1266 = scmp.le.s32.totalorder 2, %s15
      // Predicated region
      $region45: #{actor_critic_forward.6} parent=5 // pred_check
        %p1267 = pneg %p1266
      $region46: #{actor_critic_forward.6} parent=5 // pred_check_branch
        %1269 = sbr.rel (%p1267) target = $region48
      $region47: #{actor_critic_forward.6} parent=5 // pred_region
        %s1270 = ssub.s32 %s15, 2
        // Predicated region
        $region49: #{actor_critic_forward.6} parent=47 // pred_check
          %p1271 = pneg %p135
        $region50: #{actor_critic_forward.6} parent=47 // pred_check_branch
          %1273 = sbr.rel (%p1271) target = $region52
        $region51: #{actor_critic_forward.6} parent=47 // pred_region
          %s1274 = smul.u32 4, %s27
          %p1275 = scmp.lt.s32.totalorder %s26, 1
          %s1276 = scalar_select %p1275, %s26, 1
          %p1277 = scmp.lt.s32.totalorder %s1274, 7
          %s1278 = scalar_select %p1277, %s1274, 7
          %s1279 = smul.addr %s1276, 8
          %s1280 = sadd.s32 %s1278, %s1279
          %s1281 = smul.addr %s1280, 4
          %s1282 = scalar_lea.vmem %s3, %s1281
        $region52: #{actor_critic_forward.6} parent=47 // pred_fallthru
          _
      $region48: #{actor_critic_forward.6} parent=5 // pred_fallthru
        _
    $region6: #{actor_critic_forward.6} parent=1 // loop_footer
      %s19 = sadd.s32 1, %s15
    $region7: #{actor_critic_forward.6} parent=1 // loop_footer_branch
      %14 = sbr.rel target = $region3
    $region8: #{actor_critic_forward.6} parent=1 // loop_exit
      _
    %1283 = vsyncpa [#allocation3], 1
    %s1284 = scalar_lea.sflag [#allocation3], 1
    %1285 = vsyncpa %s1284, 1
    %1286 = vsyncpa [#allocation5], 1
    %s1287 = scalar_lea.sflag [#allocation5], 1
    %1288 = vsyncpa %s1287, 1

// kernel: actor_critic_forward.9
$region0: #{actor_critic_forward.9}
  #allocation0 [shape = 'u32[]', space=smem, size = 0x4, offset = 0x4, fixed_abs, tag = 'smem constant byte address 0x4 - core index']
  #allocation1 [shape = 'u32[144,128]{1,0:T(1,128)}', space=vmem, size = 0x12000, scoped, tag = 'internal scratch']
  %s0 = inlined_call_operand.vmem [shape: bf16[2,8,2048], index: 0, kind: input, shape index: {}]
  %s1 = inlined_call_operand.vmem [shape: bf16[2,1,2048,128], index: 1, kind: input, shape index: {}]
  %s2 = inlined_call_operand.vmem [shape: f32[2,1,128], index: 2, kind: input, shape index: {}]
  %s3 = inlined_call_operand.vmem [shape: f32[2,8,128], index: 3, kind: output, shape index: {}]
  %s4 = sld [smem:[#allocation0]]
  $region45: #{actor_critic_forward.9} parent=0
    _
  %s6 = ssub.s32 1, %s4
  %s7 = scalar_select 0, %s6, %s4
  loop: start=0, step=1, limit=4
  $region2: #{actor_critic_forward.9} parent=0 // loop_pre_header
    _
  $region3: #{actor_critic_forward.9} parent=0 // loop_header
    %s9 = sphi 0, %s13
    %p10 = scmp.ge.s32.totalorder %s9, 4
    %s16 = sphi 0, %s28
    %s17 = sphi 0, %s24
    %s18 = sphi 0, %s16
    %s19 = sphi 0, %s17
    %s20 = sphi 0, %s18
    %s21 = sphi 0, %s19
    %s31 = sphi 0, %s33
    %s34 = sphi 0, %s31
    %s35 = sphi 0, %s34
    %s51 = sphi 0, %s35
    %s59 = sphi 0, %s61
    %s62 = sphi 0, %s59
    %s63 = sphi 0, %s62
    %s79 = sphi 0, %s63
    %s87 = sphi 0, %s89
    %s90 = sphi 0, %s87
    %s91 = sphi 0, %s90
    %s107 = sphi 0, %s91
    %s115 = sphi 0, %s117
    %s118 = sphi 0, %s115
    %s119 = sphi 0, %s118
    %s135 = sphi 0, %s119
  $region4: #{actor_critic_forward.9} parent=0 // loop_header_branch
    %12 = sbr.rel (%p10) target = $region8
  $region5: #{actor_critic_forward.9} parent=0 // loop_body
    %s14 = ssub.s32 %s9, 1
    %s15 = ssub.s32 %s9, 2
    %s22 = sadd.s32 1, %s17
    %p23 = scmp.ge.s32.totalorder %s22, 1
    %s24 = scalar_select %p23, 0, %s22
    %s25 = sadd.s32 1, %s16
    %s26 = scalar_select %p23, %s25, %s16
    %p27 = scmp.ge.s32.totalorder %s26, 2
    %s28 = scalar_select %p27, 0, %s26
    %s29 = ssub.s32 %s16, %s28
    %p30 = scmp.eq.s32.totalorder %s29, 0
    %s32 = sadd.s32 %s31, 1
    %s33 = scalar_select %p30, %s31, %s32
    %p36 = pneg %p30
    %p37 = scmp.eq.s32.totalorder %s9, 1
    %p38 = por %p36, %p37
    %p39 = scmp.ne.s32.totalorder %s31, %s34
    %p40 = scmp.eq.s32.totalorder %s9, 0
    %p41 = por %p39, %p40
    %p42 = scmp.ne.s32.totalorder %s31, %s34
    %p43 = scmp.eq.s32.totalorder %s14, 1
    %p44 = por %p42, %p43
    %p45 = scmp.ne.s32.totalorder %s34, %s35
    %p46 = scmp.eq.s32.totalorder %s14, 0
    %p47 = por %p45, %p46
    %p48 = scmp.ne.s32.totalorder %s34, %s35
    %p49 = scmp.eq.s32.totalorder %s15, 1
    %p50 = por %p48, %p49
    %p52 = scmp.ne.s32.totalorder %s35, %s51
    %p53 = scmp.eq.s32.totalorder %s15, 0
    %p54 = por %p52, %p53
    %s55 = ssub.s32 %s16, %s28
    %s56 = ssub.s32 %s17, %s24
    %s57 = sor.u32 %s55, %s56
    %p58 = scmp.eq.s32.totalorder %s57, 0
    %s60 = sadd.s32 %s59, 1
    %s61 = scalar_select %p58, %s59, %s60
    %p64 = pneg %p58
    %p65 = scmp.eq.s32.totalorder %s9, 1
    %p66 = por %p64, %p65
    %p67 = scmp.ne.s32.totalorder %s59, %s62
    %p68 = scmp.eq.s32.totalorder %s9, 0
    %p69 = por %p67, %p68
    %p70 = scmp.ne.s32.totalorder %s59, %s62
    %p71 = scmp.eq.s32.totalorder %s14, 1
    %p72 = por %p70, %p71
    %p73 = scmp.ne.s32.totalorder %s62, %s63
    %p74 = scmp.eq.s32.totalorder %s14, 0
    %p75 = por %p73, %p74
    %p76 = scmp.ne.s32.totalorder %s62, %s63
    %p77 = scmp.eq.s32.totalorder %s15, 1
    %p78 = por %p76, %p77
    %p80 = scmp.ne.s32.totalorder %s63, %s79
    %p81 = scmp.eq.s32.totalorder %s15, 0
    %p82 = por %p80, %p81
    %s83 = ssub.s32 %s16, %s28
    %s84 = ssub.s32 %s17, %s24
    %s85 = sor.u32 %s83, %s84
    %p86 = scmp.eq.s32.totalorder %s85, 0
    %s88 = sadd.s32 %s87, 1
    %s89 = scalar_select %p86, %s87, %s88
    %p92 = pneg %p86
    %p93 = scmp.eq.s32.totalorder %s9, 1
    %p94 = por %p92, %p93
    %p95 = scmp.ne.s32.totalorder %s87, %s90
    %p96 = scmp.eq.s32.totalorder %s9, 0
    %p97 = por %p95, %p96
    %p98 = scmp.ne.s32.totalorder %s87, %s90
    %p99 = scmp.eq.s32.totalorder %s14, 1
    %p100 = por %p98, %p99
    %p101 = scmp.ne.s32.totalorder %s90, %s91
    %p102 = scmp.eq.s32.totalorder %s14, 0
    %p103 = por %p101, %p102
    %p104 = scmp.ne.s32.totalorder %s90, %s91
    %p105 = scmp.eq.s32.totalorder %s15, 1
    %p106 = por %p104, %p105
    %p108 = scmp.ne.s32.totalorder %s91, %s107
    %p109 = scmp.eq.s32.totalorder %s15, 0
    %p110 = por %p108, %p109
    %s111 = ssub.s32 %s16, %s28
    %s112 = ssub.s32 %s17, %s24
    %s113 = sor.u32 %s111, %s112
    %p114 = scmp.eq.s32.totalorder %s113, 0
    %s116 = sadd.s32 %s115, 1
    %s117 = scalar_select %p114, %s115, %s116
    %p120 = pneg %p114
    %p121 = scmp.eq.s32.totalorder %s9, 1
    %p122 = por %p120, %p121
    %p123 = scmp.ne.s32.totalorder %s115, %s118
    %p124 = scmp.eq.s32.totalorder %s9, 0
    %p125 = por %p123, %p124
    %p126 = scmp.ne.s32.totalorder %s115, %s118
    %p127 = scmp.eq.s32.totalorder %s14, 1
    %p128 = por %p126, %p127
    %p129 = scmp.ne.s32.totalorder %s118, %s119
    %p130 = scmp.eq.s32.totalorder %s14, 0
    %p131 = por %p129, %p130
    %p132 = scmp.ne.s32.totalorder %s118, %s119
    %p133 = scmp.eq.s32.totalorder %s15, 1
    %p134 = por %p132, %p133
    %p136 = scmp.ne.s32.totalorder %s119, %s135
    %p137 = scmp.eq.s32.totalorder %s15, 0
    %p138 = por %p136, %p137
    %p139 = scmp.le.s32.totalorder 1, %s9
    %p140 = scmp.lt.s32.totalorder %s9, 3
    %p141 = pnand %p139, %p140
    %p142 = pneg %p141
    // Predicated region
    $region9: #{actor_critic_forward.9} parent=5 // pred_check
      _
    $region10: #{actor_critic_forward.9} parent=5 // pred_check_branch
      %144 = sbr.rel (%p141) target = $region12
    $region11: #{actor_critic_forward.9} parent=5 // pred_region
      %s145 = ssub.s32 %s9, 1
    $region12: #{actor_critic_forward.9} parent=5 // pred_fallthru
      _
    %p146 = scmp.lt.s32.totalorder %s9, 2
    // Predicated region
    $region13: #{actor_critic_forward.9} parent=5 // pred_check
      %p147 = pneg %p146
    $region14: #{actor_critic_forward.9} parent=5 // pred_check_branch
      %149 = sbr.rel (%p147) target = $region16
    $region15: #{actor_critic_forward.9} parent=5 // pred_region
      // Predicated region
      $region17: #{actor_critic_forward.9} parent=15 // pred_check
        %p150 = pneg %p41
      $region18: #{actor_critic_forward.9} parent=15 // pred_check_branch
        %152 = sbr.rel (%p150) target = $region20
      $region19: #{actor_critic_forward.9} parent=15 // pred_region
        %p153 = scmp.lt.s32.totalorder %s16, 1
        %s154 = scalar_select %p153, %s16, 1
        %s155 = smul.addr %s154, 16
        %s156 = smul.addr %s155, 4
        %s157 = scalar_lea.vmem %s0, %s156
      $region20: #{actor_critic_forward.9} parent=15 // pred_fallthru
        _
      // Predicated region
      $region21: #{actor_critic_forward.9} parent=15 // pred_check
        %p158 = pneg %p69
      $region22: #{actor_critic_forward.9} parent=15 // pred_check_branch
        %160 = sbr.rel (%p158) target = $region24
      $region23: #{actor_critic_forward.9} parent=15 // pred_region
        %p161 = scmp.lt.s32.totalorder %s16, 1
        %s162 = scalar_select %p161, %s16, 1
        %p163 = scmp.lt.s32.totalorder %s17, 0
        %s164 = scalar_select %p163, %s17, 0
        %s165 = smul.addr %s164, 256
        %s166 = smul.addr %s162, 256
        %s167 = sadd.s32 %s165, %s166
        %s168 = smul.addr %s167, 4
        %s169 = scalar_lea.vmem %s1, %s168
      $region24: #{actor_critic_forward.9} parent=15 // pred_fallthru
        _
      // Predicated region
      $region25: #{actor_critic_forward.9} parent=15 // pred_check
        %p170 = pneg %p97
      $region26: #{actor_critic_forward.9} parent=15 // pred_check_branch
        %172 = sbr.rel (%p170) target = $region28
      $region27: #{actor_critic_forward.9} parent=15 // pred_region
        %p173 = scmp.lt.s32.totalorder %s16, 1
        %s174 = scalar_select %p173, %s16, 1
        %p175 = scmp.lt.s32.totalorder %s17, 0
        %s176 = scalar_select %p175, %s17, 0
        %s177 = sadd.s32 %s176, %s174
        %s178 = scalar_lea.vmem %s2, %s177
      $region28: #{actor_critic_forward.9} parent=15 // pred_fallthru
        _
    $region16: #{actor_critic_forward.9} parent=5 // pred_fallthru
      _
    %p179 = scmp.le.s32.totalorder 1, %s9
    %p180 = scmp.lt.s32.totalorder %s9, 3
    %p181 = pnand %p179, %p180
    %p182 = pneg %p181
    // Predicated region
    $region29: #{actor_critic_forward.9} parent=5 // pred_check
      _
    $region30: #{actor_critic_forward.9} parent=5 // pred_check_branch
      %184 = sbr.rel (%p181) target = $region32
    $region31: #{actor_critic_forward.9} parent=5 // pred_region
      %s185 = ssub.s32 %s9, 1
      %p186 = scmp.lt.s32.totalorder %s18, 1
      %s187 = scalar_select %p186, %s18, 1
      %s188 = smul.addr %s187, 16
      %s189 = smul.addr %s188, 4
      %s190 = scalar_lea.vmem %s0, %s189
      %p191 = pneg %p47
      %p192 = pneg %p44
      %p193 = scmp.lt.s32.totalorder %s18, 1
      %s194 = scalar_select %p193, %s18, 1
      %p195 = scmp.lt.s32.totalorder %s19, 0
      %s196 = scalar_select %p195, %s19, 0
      %s197 = smul.addr %s196, 256
      %s198 = smul.addr %s194, 256
      %s199 = sadd.s32 %s197, %s198
      %s200 = smul.addr %s199, 4
      %s201 = scalar_lea.vmem %s1, %s200
      %p202 = pneg %p75
      %p203 = pneg %p72
      %p204 = scmp.lt.s32.totalorder %s18, 1
      %s205 = scalar_select %p204, %s18, 1
      %p206 = scmp.lt.s32.totalorder %s19, 0
      %s207 = scalar_select %p206, %s19, 0
      %s208 = sadd.s32 %s207, %s205
      %s209 = scalar_lea.vmem %s2, %s208
      %p210 = pneg %p103
      %p211 = pneg %p100
      %p212 = pneg %p131
      %p213 = pneg %p128
      %p214 = scmp.lt.s32.totalorder %s18, 1
      %s215 = scalar_select %p214, %s18, 1
      %p216 = scmp.lt.s32.totalorder %s19, 0
      %s217 = scalar_select %p216, %s19, 0
      %s218 = sadd.s32 %s217, %s215
      %s219 = smul.addr %s218, 8
      %s220 = scalar_lea.vmem %s3, %s219
      %p221 = scmp.lt.s32.totalorder %s18, 1
      %s222 = scalar_select %p221, %s18, 1
      %s223 = smul.addr %s222, 16
      %s224 = smul.addr %s223, 4
      %s225 = scalar_lea.vmem %s0, %s224
      %p226 = scmp.lt.s32.totalorder %s18, 1
      %s227 = scalar_select %p226, %s18, 1
      %p228 = scmp.lt.s32.totalorder %s19, 0
      %s229 = scalar_select %p228, %s19, 0
      %s230 = smul.addr %s229, 256
      %s231 = smul.addr %s227, 256
      %s232 = sadd.s32 %s230, %s231
      %s233 = smul.addr %s232, 4
      %s234 = scalar_lea.vmem %s1, %s233
      %p235 = scmp.lt.s32.totalorder %s18, 1
      %s236 = scalar_select %p235, %s18, 1
      %p237 = scmp.lt.s32.totalorder %s19, 0
      %s238 = scalar_select %p237, %s19, 0
      %s239 = sadd.s32 %s238, %s236
      %s240 = scalar_lea.vmem %s2, %s239
      %p241 = scmp.lt.s32.totalorder %s18, 1
      %s242 = scalar_select %p241, %s18, 1
      %p243 = scmp.lt.s32.totalorder %s19, 0
      %s244 = scalar_select %p243, %s19, 0
      %s245 = sadd.s32 %s244, %s242
      %s246 = smul.addr %s245, 8
      %s247 = scalar_lea.vmem %s3, %s246
      %v249 = vld [vmem:[%s225] sm:$0xff]
      %v250 = vld [vmem:[%s225 + $0x8] sm:$0xff]
      %v251 = vld [vmem:[%s225 + $0x10] sm:$0xff]
      %v252 = vld [vmem:[%s225 + $0x18] sm:$0xff]
      %v253 = vld [vmem:[%s225 + $0x20] sm:$0xff]
      %v254 = vld [vmem:[%s225 + $0x28] sm:$0xff]
      %v255 = vld [vmem:[%s225 + $0x30] sm:$0xff]
      %v256 = vld [vmem:[%s225 + $0x38] sm:$0xff]
      %v257 = vld [vmem:[%s234] sm:$0xf]
      %v258 = vld [vmem:[%s234 + $0x4] sm:$0xf]
      %v259 = vld [vmem:[%s234 + $0x8] sm:$0xf]
      %v260 = vld [vmem:[%s234 + $0xc] sm:$0xf]
      %v261 = vld [vmem:[%s234 + $0x10] sm:$0xf]
      %v262 = vld [vmem:[%s234 + $0x14] sm:$0xf]
      %v263 = vld [vmem:[%s234 + $0x18] sm:$0xf]
      %v264 = vld [vmem:[%s234 + $0x1c] sm:$0xf]
      %v265 = vld [vmem:[%s234 + $0x20] sm:$0xf]
      %v266 = vld [vmem:[%s234 + $0x24] sm:$0xf]
      %v267 = vld [vmem:[%s234 + $0x28] sm:$0xf]
      %v268 = vld [vmem:[%s234 + $0x2c] sm:$0xf]
      %v269 = vld [vmem:[%s234 + $0x30] sm:$0xf]
      %v270 = vld [vmem:[%s234 + $0x34] sm:$0xf]
      %v271 = vld [vmem:[%s234 + $0x38] sm:$0xf]
      %v272 = vld [vmem:[%s234 + $0x3c] sm:$0xf]
      %v273 = vld [vmem:[%s234 + $0x40] sm:$0xf]
      %v274 = vld [vmem:[%s234 + $0x44] sm:$0xf]
      %v275 = vld [vmem:[%s234 + $0x48] sm:$0xf]
      %v276 = vld [vmem:[%s234 + $0x4c] sm:$0xf]
      %v277 = vld [vmem:[%s234 + $0x50] sm:$0xf]
      %v278 = vld [vmem:[%s234 + $0x54] sm:$0xf]
      %v279 = vld [vmem:[%s234 + $0x58] sm:$0xf]
      %v280 = vld [vmem:[%s234 + $0x5c] sm:$0xf]
      %v281 = vld [vmem:[%s234 + $0x60] sm:$0xf]
      %v282 = vld [vmem:[%s234 + $0x64] sm:$0xf]
      %v283 = vld [vmem:[%s234 + $0x68] sm:$0xf]
      %v284 = vld [vmem:[%s234 + $0x6c] sm:$0xf]
      %v285 = vld [vmem:[%s234 + $0x70] sm:$0xf]
      %v286 = vld [vmem:[%s234 + $0x74] sm:$0xf]
      %v287 = vld [vmem:[%s234 + $0x78] sm:$0xf]
      %v288 = vld [vmem:[%s234 + $0x7c] sm:$0xf]
      %v289 = vld [vmem:[%s234 + $0x80] sm:$0xf]
      %v290 = vld [vmem:[%s234 + $0x84] sm:$0xf]
      %v291 = vld [vmem:[%s234 + $0x88] sm:$0xf]
      %v292 = vld [vmem:[%s234 + $0x8c] sm:$0xf]
      %v293 = vld [vmem:[%s234 + $0x90] sm:$0xf]
      %v294 = vld [vmem:[%s234 + $0x94] sm:$0xf]
      %v295 = vld [vmem:[%s234 + $0x98] sm:$0xf]
      %v296 = vld [vmem:[%s234 + $0x9c] sm:$0xf]
      %v297 = vld [vmem:[%s234 + $0xa0] sm:$0xf]
      %v298 = vld [vmem:[%s234 + $0xa4] sm:$0xf]
      %v299 = vld [vmem:[%s234 + $0xa8] sm:$0xf]
      %v300 = vld [vmem:[%s234 + $0xac] sm:$0xf]
      %v301 = vld [vmem:[%s234 + $0xb0] sm:$0xf]
      %v302 = vld [vmem:[%s234 + $0xb4] sm:$0xf]
      %v303 = vld [vmem:[%s234 + $0xb8] sm:$0xf]
      %v304 = vld [vmem:[%s234 + $0xbc] sm:$0xf]
      %v305 = vld [vmem:[%s234 + $0xc0] sm:$0xf]
      %v306 = vld [vmem:[%s234 + $0xc4] sm:$0xf]
      %v307 = vld [vmem:[%s234 + $0xc8] sm:$0xf]
      %v308 = vld [vmem:[%s234 + $0xcc] sm:$0xf]
      %v309 = vld [vmem:[%s234 + $0xd0] sm:$0xf]
      %v310 = vld [vmem:[%s234 + $0xd4] sm:$0xf]
      %v311 = vld [vmem:[%s234 + $0xd8] sm:$0xf]
      %v312 = vld [vmem:[%s234 + $0xdc] sm:$0xf]
      %v313 = vld [vmem:[%s234 + $0xe0] sm:$0xf]
      %v314 = vld [vmem:[%s234 + $0xe4] sm:$0xf]
      %v315 = vld [vmem:[%s234 + $0xe8] sm:$0xf]
      %v316 = vld [vmem:[%s234 + $0xec] sm:$0xf]
      %v317 = vld [vmem:[%s234 + $0xf0] sm:$0xf]
      %v318 = vld [vmem:[%s234 + $0xf4] sm:$0xf]
      %v319 = vld [vmem:[%s234 + $0xf8] sm:$0xf]
      %v320 = vld [vmem:[%s234 + $0xfc] sm:$0xf]
      %v321 = vld [vmem:[%s234 + $0x100] sm:$0xf]
      %v322 = vld [vmem:[%s234 + $0x104] sm:$0xf]
      %v323 = vld [vmem:[%s234 + $0x108] sm:$0xf]
      %v324 = vld [vmem:[%s234 + $0x10c] sm:$0xf]
      %v325 = vld [vmem:[%s234 + $0x110] sm:$0xf]
      %v326 = vld [vmem:[%s234 + $0x114] sm:$0xf]
      %v327 = vld [vmem:[%s234 + $0x118] sm:$0xf]
      %v328 = vld [vmem:[%s234 + $0x11c] sm:$0xf]
      %v329 = vld [vmem:[%s234 + $0x120] sm:$0xf]
      %v330 = vld [vmem:[%s234 + $0x124] sm:$0xf]
      %v331 = vld [vmem:[%s234 + $0x128] sm:$0xf]
      %v332 = vld [vmem:[%s234 + $0x12c] sm:$0xf]
      %v333 = vld [vmem:[%s234 + $0x130] sm:$0xf]
      %v334 = vld [vmem:[%s234 + $0x134] sm:$0xf]
      %v335 = vld [vmem:[%s234 + $0x138] sm:$0xf]
      %v336 = vld [vmem:[%s234 + $0x13c] sm:$0xf]
      %v337 = vld [vmem:[%s234 + $0x140] sm:$0xf]
      %v338 = vld [vmem:[%s234 + $0x144] sm:$0xf]
      %v339 = vld [vmem:[%s234 + $0x148] sm:$0xf]
      %v340 = vld [vmem:[%s234 + $0x14c] sm:$0xf]
      %v341 = vld [vmem:[%s234 + $0x150] sm:$0xf]
      %v342 = vld [vmem:[%s234 + $0x154] sm:$0xf]
      %v343 = vld [vmem:[%s234 + $0x158] sm:$0xf]
      %v344 = vld [vmem:[%s234 + $0x15c] sm:$0xf]
      %v345 = vld [vmem:[%s234 + $0x160] sm:$0xf]
      %v346 = vld [vmem:[%s234 + $0x164] sm:$0xf]
      %v347 = vld [vmem:[%s234 + $0x168] sm:$0xf]
      %v348 = vld [vmem:[%s234 + $0x16c] sm:$0xf]
      %v349 = vld [vmem:[%s234 + $0x170] sm:$0xf]
      %v350 = vld [vmem:[%s234 + $0x174] sm:$0xf]
      %v351 = vld [vmem:[%s234 + $0x178] sm:$0xf]
      %v352 = vld [vmem:[%s234 + $0x17c] sm:$0xf]
      %v353 = vld [vmem:[%s234 + $0x180] sm:$0xf]
      %v354 = vld [vmem:[%s234 + $0x184] sm:$0xf]
      %v355 = vld [vmem:[%s234 + $0x188] sm:$0xf]
      %v356 = vld [vmem:[%s234 + $0x18c] sm:$0xf]
      %v357 = vld [vmem:[%s234 + $0x190] sm:$0xf]
      %v358 = vld [vmem:[%s234 + $0x194] sm:$0xf]
      %v359 = vld [vmem:[%s234 + $0x198] sm:$0xf]
      %v360 = vld [vmem:[%s234 + $0x19c] sm:$0xf]
      %v361 = vld [vmem:[%s234 + $0x1a0] sm:$0xf]
      %v362 = vld [vmem:[%s234 + $0x1a4] sm:$0xf]
      %v363 = vld [vmem:[%s234 + $0x1a8] sm:$0xf]
      %v364 = vld [vmem:[%s234 + $0x1ac] sm:$0xf]
      %v365 = vld [vmem:[%s234 + $0x1b0] sm:$0xf]
      %v366 = vld [vmem:[%s234 + $0x1b4] sm:$0xf]
      %v367 = vld [vmem:[%s234 + $0x1b8] sm:$0xf]
      %v368 = vld [vmem:[%s234 + $0x1bc] sm:$0xf]
      %v369 = vld [vmem:[%s234 + $0x1c0] sm:$0xf]
      %v370 = vld [vmem:[%s234 + $0x1c4] sm:$0xf]
      %v371 = vld [vmem:[%s234 + $0x1c8] sm:$0xf]
      %v372 = vld [vmem:[%s234 + $0x1cc] sm:$0xf]
      %v373 = vld [vmem:[%s234 + $0x1d0] sm:$0xf]
      %v374 = vld [vmem:[%s234 + $0x1d4] sm:$0xf]
      %v375 = vld [vmem:[%s234 + $0x1d8] sm:$0xf]
      %v376 = vld [vmem:[%s234 + $0x1dc] sm:$0xf]
      %v377 = vld [vmem:[%s234 + $0x1e0] sm:$0xf]
      %v378 = vld [vmem:[%s234 + $0x1e4] sm:$0xf]
      %v379 = vld [vmem:[%s234 + $0x1e8] sm:$0xf]
      %v380 = vld [vmem:[%s234 + $0x1ec] sm:$0xf]
      %v381 = vld [vmem:[%s234 + $0x1f0] sm:$0xf]
      %v382 = vld [vmem:[%s234 + $0x1f4] sm:$0xf]
      %v383 = vld [vmem:[%s234 + $0x1f8] sm:$0xf]
      %v384 = vld [vmem:[%s234 + $0x1fc] sm:$0xf]
      %v385 = vld [vmem:[%s234 + $0x200] sm:$0xf]
      %v386 = vld [vmem:[%s234 + $0x204] sm:$0xf]
      %v387 = vld [vmem:[%s234 + $0x208] sm:$0xf]
      %v388 = vld [vmem:[%s234 + $0x20c] sm:$0xf]
      %v389 = vld [vmem:[%s234 + $0x210] sm:$0xf]
      %v390 = vld [vmem:[%s234 + $0x214] sm:$0xf]
      %v391 = vld [vmem:[%s234 + $0x218] sm:$0xf]
      %v392 = vld [vmem:[%s234 + $0x21c] sm:$0xf]
      %v393 = vld [vmem:[%s234 + $0x220] sm:$0xf]
      %v394 = vld [vmem:[%s234 + $0x224] sm:$0xf]
      %v395 = vld [vmem:[%s234 + $0x228] sm:$0xf]
      %v396 = vld [vmem:[%s234 + $0x22c] sm:$0xf]
      %v397 = vld [vmem:[%s234 + $0x230] sm:$0xf]
      %v398 = vld [vmem:[%s234 + $0x234] sm:$0xf]
      %v399 = vld [vmem:[%s234 + $0x238] sm:$0xf]
      %v400 = vld [vmem:[%s234 + $0x23c] sm:$0xf]
      %v401 = vld [vmem:[%s234 + $0x240] sm:$0xf]
      %v402 = vld [vmem:[%s234 + $0x244] sm:$0xf]
      %v403 = vld [vmem:[%s234 + $0x248] sm:$0xf]
      %v404 = vld [vmem:[%s234 + $0x24c] sm:$0xf]
      %v405 = vld [vmem:[%s234 + $0x250] sm:$0xf]
      %v406 = vld [vmem:[%s234 + $0x254] sm:$0xf]
      %v407 = vld [vmem:[%s234 + $0x258] sm:$0xf]
      %v408 = vld [vmem:[%s234 + $0x25c] sm:$0xf]
      %v409 = vld [vmem:[%s234 + $0x260] sm:$0xf]
      %v410 = vld [vmem:[%s234 + $0x264] sm:$0xf]
      %v411 = vld [vmem:[%s234 + $0x268] sm:$0xf]
      %v412 = vld [vmem:[%s234 + $0x26c] sm:$0xf]
      %v413 = vld [vmem:[%s234 + $0x270] sm:$0xf]
      %v414 = vld [vmem:[%s234 + $0x274] sm:$0xf]
      %v415 = vld [vmem:[%s234 + $0x278] sm:$0xf]
      %v416 = vld [vmem:[%s234 + $0x27c] sm:$0xf]
      %v417 = vld [vmem:[%s234 + $0x280] sm:$0xf]
      %v418 = vld [vmem:[%s234 + $0x284] sm:$0xf]
      %v419 = vld [vmem:[%s234 + $0x288] sm:$0xf]
      %v420 = vld [vmem:[%s234 + $0x28c] sm:$0xf]
      %v421 = vld [vmem:[%s234 + $0x290] sm:$0xf]
      %v422 = vld [vmem:[%s234 + $0x294] sm:$0xf]
      %v423 = vld [vmem:[%s234 + $0x298] sm:$0xf]
      %v424 = vld [vmem:[%s234 + $0x29c] sm:$0xf]
      %v425 = vld [vmem:[%s234 + $0x2a0] sm:$0xf]
      %v426 = vld [vmem:[%s234 + $0x2a4] sm:$0xf]
      %v427 = vld [vmem:[%s234 + $0x2a8] sm:$0xf]
      %v428 = vld [vmem:[%s234 + $0x2ac] sm:$0xf]
      %v429 = vld [vmem:[%s234 + $0x2b0] sm:$0xf]
      %v430 = vld [vmem:[%s234 + $0x2b4] sm:$0xf]
      %v431 = vld [vmem:[%s234 + $0x2b8] sm:$0xf]
      %v432 = vld [vmem:[%s234 + $0x2bc] sm:$0xf]
      %v433 = vld [vmem:[%s234 + $0x2c0] sm:$0xf]
      %v434 = vld [vmem:[%s234 + $0x2c4] sm:$0xf]
      %v435 = vld [vmem:[%s234 + $0x2c8] sm:$0xf]
      %v436 = vld [vmem:[%s234 + $0x2cc] sm:$0xf]
      %v437 = vld [vmem:[%s234 + $0x2d0] sm:$0xf]
      %v438 = vld [vmem:[%s234 + $0x2d4] sm:$0xf]
      %v439 = vld [vmem:[%s234 + $0x2d8] sm:$0xf]
      %v440 = vld [vmem:[%s234 + $0x2dc] sm:$0xf]
      %v441 = vld [vmem:[%s234 + $0x2e0] sm:$0xf]
      %v442 = vld [vmem:[%s234 + $0x2e4] sm:$0xf]
      %v443 = vld [vmem:[%s234 + $0x2e8] sm:$0xf]
      %v444 = vld [vmem:[%s234 + $0x2ec] sm:$0xf]
      %v445 = vld [vmem:[%s234 + $0x2f0] sm:$0xf]
      %v446 = vld [vmem:[%s234 + $0x2f4] sm:$0xf]
      %v447 = vld [vmem:[%s234 + $0x2f8] sm:$0xf]
      %v448 = vld [vmem:[%s234 + $0x2fc] sm:$0xf]
      %v449 = vld [vmem:[%s234 + $0x300] sm:$0xf]
      %v450 = vld [vmem:[%s234 + $0x304] sm:$0xf]
      %v451 = vld [vmem:[%s234 + $0x308] sm:$0xf]
      %v452 = vld [vmem:[%s234 + $0x30c] sm:$0xf]
      %v453 = vld [vmem:[%s234 + $0x310] sm:$0xf]
      %v454 = vld [vmem:[%s234 + $0x314] sm:$0xf]
      %v455 = vld [vmem:[%s234 + $0x318] sm:$0xf]
      %v456 = vld [vmem:[%s234 + $0x31c] sm:$0xf]
      %v457 = vld [vmem:[%s234 + $0x320] sm:$0xf]
      %v458 = vld [vmem:[%s234 + $0x324] sm:$0xf]
      %v459 = vld [vmem:[%s234 + $0x328] sm:$0xf]
      %v460 = vld [vmem:[%s234 + $0x32c] sm:$0xf]
      %v461 = vld [vmem:[%s234 + $0x330] sm:$0xf]
      %v462 = vld [vmem:[%s234 + $0x334] sm:$0xf]
      %v463 = vld [vmem:[%s234 + $0x338] sm:$0xf]
      %v464 = vld [vmem:[%s234 + $0x33c] sm:$0xf]
      %v465 = vld [vmem:[%s234 + $0x340] sm:$0xf]
      %v466 = vld [vmem:[%s234 + $0x344] sm:$0xf]
      %v467 = vld [vmem:[%s234 + $0x348] sm:$0xf]
      %v468 = vld [vmem:[%s234 + $0x34c] sm:$0xf]
      %v469 = vld [vmem:[%s234 + $0x350] sm:$0xf]
      %v470 = vld [vmem:[%s234 + $0x354] sm:$0xf]
      %v471 = vld [vmem:[%s234 + $0x358] sm:$0xf]
      %v472 = vld [vmem:[%s234 + $0x35c] sm:$0xf]
      %v473 = vld [vmem:[%s234 + $0x360] sm:$0xf]
      %v474 = vld [vmem:[%s234 + $0x364] sm:$0xf]
      %v475 = vld [vmem:[%s234 + $0x368] sm:$0xf]
      %v476 = vld [vmem:[%s234 + $0x36c] sm:$0xf]
      %v477 = vld [vmem:[%s234 + $0x370] sm:$0xf]
      %v478 = vld [vmem:[%s234 + $0x374] sm:$0xf]
      %v479 = vld [vmem:[%s234 + $0x378] sm:$0xf]
      %v480 = vld [vmem:[%s234 + $0x37c] sm:$0xf]
      %v481 = vld [vmem:[%s234 + $0x380] sm:$0xf]
      %v482 = vld [vmem:[%s234 + $0x384] sm:$0xf]
      %v483 = vld [vmem:[%s234 + $0x388] sm:$0xf]
      %v484 = vld [vmem:[%s234 + $0x38c] sm:$0xf]
      %v485 = vld [vmem:[%s234 + $0x390] sm:$0xf]
      %v486 = vld [vmem:[%s234 + $0x394] sm:$0xf]
      %v487 = vld [vmem:[%s234 + $0x398] sm:$0xf]
      %v488 = vld [vmem:[%s234 + $0x39c] sm:$0xf]
      %v489 = vld [vmem:[%s234 + $0x3a0] sm:$0xf]
      %v490 = vld [vmem:[%s234 + $0x3a4] sm:$0xf]
      %v491 = vld [vmem:[%s234 + $0x3a8] sm:$0xf]
      %v492 = vld [vmem:[%s234 + $0x3ac] sm:$0xf]
      %v493 = vld [vmem:[%s234 + $0x3b0] sm:$0xf]
      %v494 = vld [vmem:[%s234 + $0x3b4] sm:$0xf]
      %v495 = vld [vmem:[%s234 + $0x3b8] sm:$0xf]
      %v496 = vld [vmem:[%s234 + $0x3bc] sm:$0xf]
      %v497 = vld [vmem:[%s234 + $0x3c0] sm:$0xf]
      %v498 = vld [vmem:[%s234 + $0x3c4] sm:$0xf]
      %v499 = vld [vmem:[%s234 + $0x3c8] sm:$0xf]
      %v500 = vld [vmem:[%s234 + $0x3cc] sm:$0xf]
      %v501 = vld [vmem:[%s234 + $0x3d0] sm:$0xf]
      %v502 = vld [vmem:[%s234 + $0x3d4] sm:$0xf]
      %v503 = vld [vmem:[%s234 + $0x3d8] sm:$0xf]
      %v504 = vld [vmem:[%s234 + $0x3dc] sm:$0xf]
      %v505 = vld [vmem:[%s234 + $0x3e0] sm:$0xf]
      %v506 = vld [vmem:[%s234 + $0x3e4] sm:$0xf]
      %v507 = vld [vmem:[%s234 + $0x3e8] sm:$0xf]
      %v508 = vld [vmem:[%s234 + $0x3ec] sm:$0xf]
      %v509 = vld [vmem:[%s234 + $0x3f0] sm:$0xf]
      %v510 = vld [vmem:[%s234 + $0x3f4] sm:$0xf]
      %v511 = vld [vmem:[%s234 + $0x3f8] sm:$0xf]
      %v512 = vld [vmem:[%s234 + $0x3fc] sm:$0xf]
      %v513 = vld [vmem:[%s240] sm:$0x1]
      %v515 = vlaneseq
      %v516 = vshrl.u32 %v515, 7
      %v517 = vsub.s32 0, %v516
      %v518 = vrot.slane %v513, %v517
      %v528 = vunpack.c.l.b16 %v249
      %v529 = vunpack.c.h.b16 %v249
      %v530 = vunpack.c.l.b16 %v250
      %v531 = vunpack.c.h.b16 %v250
      %v532 = vunpack.c.l.b16 %v251
      %v533 = vunpack.c.h.b16 %v251
      %v534 = vunpack.c.l.b16 %v252
      %v535 = vunpack.c.h.b16 %v252
      %v536 = vunpack.c.l.b16 %v253
      %v537 = vunpack.c.h.b16 %v253
      %v538 = vunpack.c.l.b16 %v254
      %v539 = vunpack.c.h.b16 %v254
      %v540 = vunpack.c.l.b16 %v255
      %v541 = vunpack.c.h.b16 %v255
      %v542 = vunpack.c.l.b16 %v256
      %v543 = vunpack.c.h.b16 %v256
      %v544 = vpack.c.b16 %v528, %v528
      %v545 = vpack.c.b16 %v529, %v529
      %v546 = vpack.c.b16 %v530, %v530
      %v547 = vpack.c.b16 %v531, %v531
      %v548 = vpack.c.b16 %v532, %v532
      %v549 = vpack.c.b16 %v533, %v533
      %v550 = vpack.c.b16 %v534, %v534
      %v551 = vpack.c.b16 %v535, %v535
      %v552 = vpack.c.b16 %v536, %v536
      %v553 = vpack.c.b16 %v537, %v537
      %v554 = vpack.c.b16 %v538, %v538
      %v555 = vpack.c.b16 %v539, %v539
      %v556 = vpack.c.b16 %v540, %v540
      %v557 = vpack.c.b16 %v541, %v541
      %v558 = vpack.c.b16 %v542, %v542
      %v559 = vpack.c.b16 %v543, %v543
      %v832 = vunpack.c.l.b16 %v257
      %v833 = vunpack.c.l.b16 %v258
      %v834 = vunpack.c.l.b16 %v259
      %v835 = vunpack.c.l.b16 %v260
      %v836 = vunpack.c.l.b16 %v261
      %v837 = vunpack.c.l.b16 %v262
      %v838 = vunpack.c.l.b16 %v263
      %v839 = vunpack.c.l.b16 %v264
      %v840 = vunpack.c.l.b16 %v265
      %v841 = vunpack.c.l.b16 %v266
      %v842 = vunpack.c.l.b16 %v267
      %v843 = vunpack.c.l.b16 %v268
      %v844 = vunpack.c.l.b16 %v269
      %v845 = vunpack.c.l.b16 %v270
      %v846 = vunpack.c.l.b16 %v271
      %v847 = vunpack.c.l.b16 %v272
      %v848 = vunpack.c.l.b16 %v273
      %v849 = vunpack.c.l.b16 %v274
      %v850 = vunpack.c.l.b16 %v275
      %v851 = vunpack.c.l.b16 %v276
      %v852 = vunpack.c.l.b16 %v277
      %v853 = vunpack.c.l.b16 %v278
      %v854 = vunpack.c.l.b16 %v279
      %v855 = vunpack.c.l.b16 %v280
      %v856 = vunpack.c.l.b16 %v281
      %v857 = vunpack.c.l.b16 %v282
      %v858 = vunpack.c.l.b16 %v283
      %v859 = vunpack.c.l.b16 %v284
      %v860 = vunpack.c.l.b16 %v285
      %v861 = vunpack.c.l.b16 %v286
      %v862 = vunpack.c.l.b16 %v287
      %v863 = vunpack.c.l.b16 %v288
      %v864 = vunpack.c.l.b16 %v289
      %v865 = vunpack.c.l.b16 %v290
      %v866 = vunpack.c.l.b16 %v291
      %v867 = vunpack.c.l.b16 %v292
      %v868 = vunpack.c.l.b16 %v293
      %v869 = vunpack.c.l.b16 %v294
      %v870 = vunpack.c.l.b16 %v295
      %v871 = vunpack.c.l.b16 %v296
      %v872 = vunpack.c.l.b16 %v297
      %v873 = vunpack.c.l.b16 %v298
      %v874 = vunpack.c.l.b16 %v299
      %v875 = vunpack.c.l.b16 %v300
      %v876 = vunpack.c.l.b16 %v301
      %v877 = vunpack.c.l.b16 %v302
      %v878 = vunpack.c.l.b16 %v303
      %v879 = vunpack.c.l.b16 %v304
      %v880 = vunpack.c.l.b16 %v305
      %v881 = vunpack.c.l.b16 %v306
      %v882 = vunpack.c.l.b16 %v307
      %v883 = vunpack.c.l.b16 %v308
      %v884 = vunpack.c.l.b16 %v309
      %v885 = vunpack.c.l.b16 %v310
      %v886 = vunpack.c.l.b16 %v311
      %v887 = vunpack.c.l.b16 %v312
      %v888 = vunpack.c.l.b16 %v313
      %v889 = vunpack.c.l.b16 %v314
      %v890 = vunpack.c.l.b16 %v315
      %v891 = vunpack.c.l.b16 %v316
      %v892 = vunpack.c.l.b16 %v317
      %v893 = vunpack.c.l.b16 %v318
      %v894 = vunpack.c.l.b16 %v319
      %v895 = vunpack.c.l.b16 %v320
      %v896 = vunpack.c.l.b16 %v321
      %v897 = vunpack.c.l.b16 %v322
      %v898 = vunpack.c.l.b16 %v323
      %v899 = vunpack.c.l.b16 %v324
      %v900 = vunpack.c.l.b16 %v325
      %v901 = vunpack.c.l.b16 %v326
      %v902 = vunpack.c.l.b16 %v327
      %v903 = vunpack.c.l.b16 %v328
      %v904 = vunpack.c.l.b16 %v329
      %v905 = vunpack.c.l.b16 %v330
      %v906 = vunpack.c.l.b16 %v331
      %v907 = vunpack.c.l.b16 %v332
      %v908 = vunpack.c.l.b16 %v333
      %v909 = vunpack.c.l.b16 %v334
      %v910 = vunpack.c.l.b16 %v335
      %v911 = vunpack.c.l.b16 %v336
      %v912 = vunpack.c.l.b16 %v337
      %v913 = vunpack.c.l.b16 %v338
      %v914 = vunpack.c.l.b16 %v339
      %v915 = vunpack.c.l.b16 %v340
      %v916 = vunpack.c.l.b16 %v341
      %v917 = vunpack.c.l.b16 %v342
      %v918 = vunpack.c.l.b16 %v343
      %v919 = vunpack.c.l.b16 %v344
      %v920 = vunpack.c.l.b16 %v345
      %v921 = vunpack.c.l.b16 %v346
      %v922 = vunpack.c.l.b16 %v347
      %v923 = vunpack.c.l.b16 %v348
      %v924 = vunpack.c.l.b16 %v349
      %v925 = vunpack.c.l.b16 %v350
      %v926 = vunpack.c.l.b16 %v351
      %v927 = vunpack.c.l.b16 %v352
      %v928 = vunpack.c.l.b16 %v353
      %v929 = vunpack.c.l.b16 %v354
      %v930 = vunpack.c.l.b16 %v355
      %v931 = vunpack.c.l.b16 %v356
      %v932 = vunpack.c.l.b16 %v357
      %v933 = vunpack.c.l.b16 %v358
      %v934 = vunpack.c.l.b16 %v359
      %v935 = vunpack.c.l.b16 %v360
      %v936 = vunpack.c.l.b16 %v361
      %v937 = vunpack.c.l.b16 %v362
      %v938 = vunpack.c.l.b16 %v363
      %v939 = vunpack.c.l.b16 %v364
      %v940 = vunpack.c.l.b16 %v365
      %v941 = vunpack.c.l.b16 %v366
      %v942 = vunpack.c.l.b16 %v367
      %v943 = vunpack.c.l.b16 %v368
      %v944 = vunpack.c.l.b16 %v369
      %v945 = vunpack.c.l.b16 %v370
      %v946 = vunpack.c.l.b16 %v371
      %v947 = vunpack.c.l.b16 %v372
      %v948 = vunpack.c.l.b16 %v373
      %v949 = vunpack.c.l.b16 %v374
      %v950 = vunpack.c.l.b16 %v375
      %v951 = vunpack.c.l.b16 %v376
      %v952 = vunpack.c.l.b16 %v377
      %v953 = vunpack.c.l.b16 %v378
      %v954 = vunpack.c.l.b16 %v379
      %v955 = vunpack.c.l.b16 %v380
      %v956 = vunpack.c.l.b16 %v381
      %v957 = vunpack.c.l.b16 %v382
      %v958 = vunpack.c.l.b16 %v383
      %v959 = vunpack.c.l.b16 %v384
      %v960 = vunpack.c.l.b16 %v385
      %v961 = vunpack.c.l.b16 %v386
      %v962 = vunpack.c.l.b16 %v387
      %v963 = vunpack.c.l.b16 %v388
      %v964 = vunpack.c.l.b16 %v389
      %v965 = vunpack.c.l.b16 %v390
      %v966 = vunpack.c.l.b16 %v391
      %v967 = vunpack.c.l.b16 %v392
      %v968 = vunpack.c.l.b16 %v393
      %v969 = vunpack.c.l.b16 %v394
      %v970 = vunpack.c.l.b16 %v395
      %v971 = vunpack.c.l.b16 %v396
      %v972 = vunpack.c.l.b16 %v397
      %v973 = vunpack.c.l.b16 %v398
      %v974 = vunpack.c.l.b16 %v399
      %v975 = vunpack.c.l.b16 %v400
      %v976 = vunpack.c.l.b16 %v401
      %v977 = vunpack.c.l.b16 %v402
      %v978 = vunpack.c.l.b16 %v403
      %v979 = vunpack.c.l.b16 %v404
      %v980 = vunpack.c.l.b16 %v405
      %v981 = vunpack.c.l.b16 %v406
      %v982 = vunpack.c.l.b16 %v407
      %v983 = vunpack.c.l.b16 %v408
      %v984 = vunpack.c.l.b16 %v409
      %v985 = vunpack.c.l.b16 %v410
      %v986 = vunpack.c.l.b16 %v411
      %v987 = vunpack.c.l.b16 %v412
      %v988 = vunpack.c.l.b16 %v413
      %v989 = vunpack.c.l.b16 %v414
      %v990 = vunpack.c.l.b16 %v415
      %v991 = vunpack.c.l.b16 %v416
      %v992 = vunpack.c.l.b16 %v417
      %v993 = vunpack.c.l.b16 %v418
      %v994 = vunpack.c.l.b16 %v419
      %v995 = vunpack.c.l.b16 %v420
      %v996 = vunpack.c.l.b16 %v421
      %v997 = vunpack.c.l.b16 %v422
      %v998 = vunpack.c.l.b16 %v423
      %v999 = vunpack.c.l.b16 %v424
      %v1000 = vunpack.c.l.b16 %v425
      %v1001 = vunpack.c.l.b16 %v426
      %v1002 = vunpack.c.l.b16 %v427
      %v1003 = vunpack.c.l.b16 %v428
      %v1004 = vunpack.c.l.b16 %v429
      %v1005 = vunpack.c.l.b16 %v430
      %v1006 = vunpack.c.l.b16 %v431
      %v1007 = vunpack.c.l.b16 %v432
      %v1008 = vunpack.c.l.b16 %v433
      %v1009 = vunpack.c.l.b16 %v434
      %v1010 = vunpack.c.l.b16 %v435
      %v1011 = vunpack.c.l.b16 %v436
      %v1012 = vunpack.c.l.b16 %v437
      %v1013 = vunpack.c.l.b16 %v438
      %v1014 = vunpack.c.l.b16 %v439
      %v1015 = vunpack.c.l.b16 %v440
      %v1016 = vunpack.c.l.b16 %v441
      %v1017 = vunpack.c.l.b16 %v442
      %v1018 = vunpack.c.l.b16 %v443
      %v1019 = vunpack.c.l.b16 %v444
      %v1020 = vunpack.c.l.b16 %v445
      %v1021 = vunpack.c.l.b16 %v446
      %v1022 = vunpack.c.l.b16 %v447
      %v1023 = vunpack.c.l.b16 %v448
      %v1024 = vunpack.c.l.b16 %v449
      %v1025 = vunpack.c.l.b16 %v450
      %v1026 = vunpack.c.l.b16 %v451
      %v1027 = vunpack.c.l.b16 %v452
      %v1028 = vunpack.c.l.b16 %v453
      %v1029 = vunpack.c.l.b16 %v454
      %v1030 = vunpack.c.l.b16 %v455
      %v1031 = vunpack.c.l.b16 %v456
      %v1032 = vunpack.c.l.b16 %v457
      %v1033 = vunpack.c.l.b16 %v458
      %v1034 = vunpack.c.l.b16 %v459
      %v1035 = vunpack.c.l.b16 %v460
      %v1036 = vunpack.c.l.b16 %v461
      %v1037 = vunpack.c.l.b16 %v462
      %v1038 = vunpack.c.l.b16 %v463
      %v1039 = vunpack.c.l.b16 %v464
      %v1040 = vunpack.c.l.b16 %v465
      %v1041 = vunpack.c.l.b16 %v466
      %v1042 = vunpack.c.l.b16 %v467
      %v1043 = vunpack.c.l.b16 %v468
      %v1044 = vunpack.c.l.b16 %v469
      %v1045 = vunpack.c.l.b16 %v470
      %v1046 = vunpack.c.l.b16 %v471
      %v1047 = vunpack.c.l.b16 %v472
      %v1048 = vunpack.c.l.b16 %v473
      %v1049 = vunpack.c.l.b16 %v474
      %v1050 = vunpack.c.l.b16 %v475
      %v1051 = vunpack.c.l.b16 %v476
      %v1052 = vunpack.c.l.b16 %v477
      %v1053 = vunpack.c.l.b16 %v478
      %v1054 = vunpack.c.l.b16 %v479
      %v1055 = vunpack.c.l.b16 %v480
      %v1056 = vunpack.c.l.b16 %v481
      %v1057 = vunpack.c.l.b16 %v482
      %v1058 = vunpack.c.l.b16 %v483
      %v1059 = vunpack.c.l.b16 %v484
      %v1060 = vunpack.c.l.b16 %v485
      %v1061 = vunpack.c.l.b16 %v486
      %v1062 = vunpack.c.l.b16 %v487
      %v1063 = vunpack.c.l.b16 %v488
      %v1064 = vunpack.c.l.b16 %v489
      %v1065 = vunpack.c.l.b16 %v490
      %v1066 = vunpack.c.l.b16 %v491
      %v1067 = vunpack.c.l.b16 %v492
      %v1068 = vunpack.c.l.b16 %v493
      %v1069 = vunpack.c.l.b16 %v494
      %v1070 = vunpack.c.l.b16 %v495
      %v1071 = vunpack.c.l.b16 %v496
      %v1072 = vunpack.c.l.b16 %v497
      %v1073 = vunpack.c.l.b16 %v498
      %v1074 = vunpack.c.l.b16 %v499
      %v1075 = vunpack.c.l.b16 %v500
      %v1076 = vunpack.c.l.b16 %v501
      %v1077 = vunpack.c.l.b16 %v502
      %v1078 = vunpack.c.l.b16 %v503
      %v1079 = vunpack.c.l.b16 %v504
      %v1080 = vunpack.c.l.b16 %v505
      %v1081 = vunpack.c.l.b16 %v506
      %v1082 = vunpack.c.l.b16 %v507
      %v1083 = vunpack.c.l.b16 %v508
      %v1084 = vunpack.c.l.b16 %v509
      %v1085 = vunpack.c.l.b16 %v510
      %v1086 = vunpack.c.l.b16 %v511
      %v1087 = vunpack.c.l.b16 %v512
      %v1088 = vpack.c.b16 %v833, %v832
      %v1089 = vpack.c.b16 %v835, %v834
      %v1090 = vpack.c.b16 %v837, %v836
      %v1091 = vpack.c.b16 %v839, %v838
      %v1092 = vpack.c.b16 %v841, %v840
      %v1093 = vpack.c.b16 %v843, %v842
      %v1094 = vpack.c.b16 %v845, %v844
      %v1095 = vpack.c.b16 %v847, %v846
      %v1096 = vpack.c.b16 %v849, %v848
      %v1097 = vpack.c.b16 %v851, %v850
      %v1098 = vpack.c.b16 %v853, %v852
      %v1099 = vpack.c.b16 %v855, %v854
      %v1100 = vpack.c.b16 %v857, %v856
      %v1101 = vpack.c.b16 %v859, %v858
      %v1102 = vpack.c.b16 %v861, %v860
      %v1103 = vpack.c.b16 %v863, %v862
      %v1104 = vpack.c.b16 %v865, %v864
      %v1105 = vpack.c.b16 %v867, %v866
      %v1106 = vpack.c.b16 %v869, %v868
      %v1107 = vpack.c.b16 %v871, %v870
      %v1108 = vpack.c.b16 %v873, %v872
      %v1109 = vpack.c.b16 %v875, %v874
      %v1110 = vpack.c.b16 %v877, %v876
      %v1111 = vpack.c.b16 %v879, %v878
      %v1112 = vpack.c.b16 %v881, %v880
      %v1113 = vpack.c.b16 %v883, %v882
      %v1114 = vpack.c.b16 %v885, %v884
      %v1115 = vpack.c.b16 %v887, %v886
      %v1116 = vpack.c.b16 %v889, %v888
      %v1117 = vpack.c.b16 %v891, %v890
      %v1118 = vpack.c.b16 %v893, %v892
      %v1119 = vpack.c.b16 %v895, %v894
      %v1120 = vpack.c.b16 %v897, %v896
      %v1121 = vpack.c.b16 %v899, %v898
      %v1122 = vpack.c.b16 %v901, %v900
      %v1123 = vpack.c.b16 %v903, %v902
      %v1124 = vpack.c.b16 %v905, %v904
      %v1125 = vpack.c.b16 %v907, %v906
      %v1126 = vpack.c.b16 %v909, %v908
      %v1127 = vpack.c.b16 %v911, %v910
      %v1128 = vpack.c.b16 %v913, %v912
      %v1129 = vpack.c.b16 %v915, %v914
      %v1130 = vpack.c.b16 %v917, %v916
      %v1131 = vpack.c.b16 %v919, %v918
      %v1132 = vpack.c.b16 %v921, %v920
      %v1133 = vpack.c.b16 %v923, %v922
      %v1134 = vpack.c.b16 %v925, %v924
      %v1135 = vpack.c.b16 %v927, %v926
      %v1136 = vpack.c.b16 %v929, %v928
      %v1137 = vpack.c.b16 %v931, %v930
      %v1138 = vpack.c.b16 %v933, %v932
      %v1139 = vpack.c.b16 %v935, %v934
      %v1140 = vpack.c.b16 %v937, %v936
      %v1141 = vpack.c.b16 %v939, %v938
      %v1142 = vpack.c.b16 %v941, %v940
      %v1143 = vpack.c.b16 %v943, %v942
      %v1144 = vpack.c.b16 %v945, %v944
      %v1145 = vpack.c.b16 %v947, %v946
      %v1146 = vpack.c.b16 %v949, %v948
      %v1147 = vpack.c.b16 %v951, %v950
      %v1148 = vpack.c.b16 %v953, %v952
      %v1149 = vpack.c.b16 %v955, %v954
      %v1150 = vpack.c.b16 %v957, %v956
      %v1151 = vpack.c.b16 %v959, %v958
      %v1152 = vpack.c.b16 %v961, %v960
      %v1153 = vpack.c.b16 %v963, %v962
      %v1154 = vpack.c.b16 %v965, %v964
      %v1155 = vpack.c.b16 %v967, %v966
      %v1156 = vpack.c.b16 %v969, %v968
      %v1157 = vpack.c.b16 %v971, %v970
      %v1158 = vpack.c.b16 %v973, %v972
      %v1159 = vpack.c.b16 %v975, %v974
      %v1160 = vpack.c.b16 %v977, %v976
      %v1161 = vpack.c.b16 %v979, %v978
      %v1162 = vpack.c.b16 %v981, %v980
      %v1163 = vpack.c.b16 %v983, %v982
      %v1164 = vpack.c.b16 %v985, %v984
      %v1165 = vpack.c.b16 %v987, %v986
      %v1166 = vpack.c.b16 %v989, %v988
      %v1167 = vpack.c.b16 %v991, %v990
      %v1168 = vpack.c.b16 %v993, %v992
      %v1169 = vpack.c.b16 %v995, %v994
      %v1170 = vpack.c.b16 %v997, %v996
      %v1171 = vpack.c.b16 %v999, %v998
      %v1172 = vpack.c.b16 %v1001, %v1000
      %v1173 = vpack.c.b16 %v1003, %v1002
      %v1174 = vpack.c.b16 %v1005, %v1004
      %v1175 = vpack.c.b16 %v1007, %v1006
      %v1176 = vpack.c.b16 %v1009, %v1008
      %v1177 = vpack.c.b16 %v1011, %v1010
      %v1178 = vpack.c.b16 %v1013, %v1012
      %v1179 = vpack.c.b16 %v1015, %v1014
      %v1180 = vpack.c.b16 %v1017, %v1016
      %v1181 = vpack.c.b16 %v1019, %v1018
      %v1182 = vpack.c.b16 %v1021, %v1020
      %v1183 = vpack.c.b16 %v1023, %v1022
      %v1184 = vpack.c.b16 %v1025, %v1024
      %v1185 = vpack.c.b16 %v1027, %v1026
      %v1186 = vpack.c.b16 %v1029, %v1028
      %v1187 = vpack.c.b16 %v1031, %v1030
      %v1188 = vpack.c.b16 %v1033, %v1032
      %v1189 = vpack.c.b16 %v1035, %v1034
      %v1190 = vpack.c.b16 %v1037, %v1036
      %v1191 = vpack.c.b16 %v1039, %v1038
      %v1192 = vpack.c.b16 %v1041, %v1040
      %v1193 = vpack.c.b16 %v1043, %v1042
      %v1194 = vpack.c.b16 %v1045, %v1044
      %v1195 = vpack.c.b16 %v1047, %v1046
      %v1196 = vpack.c.b16 %v1049, %v1048
      %v1197 = vpack.c.b16 %v1051, %v1050
      %v1198 = vpack.c.b16 %v1053, %v1052
      %v1199 = vpack.c.b16 %v1055, %v1054
      %v1200 = vpack.c.b16 %v1057, %v1056
      %v1201 = vpack.c.b16 %v1059, %v1058
      %v1202 = vpack.c.b16 %v1061, %v1060
      %v1203 = vpack.c.b16 %v1063, %v1062
      %v1204 = vpack.c.b16 %v1065, %v1064
      %v1205 = vpack.c.b16 %v1067, %v1066
      %v1206 = vpack.c.b16 %v1069, %v1068
      %v1207 = vpack.c.b16 %v1071, %v1070
      %v1208 = vpack.c.b16 %v1073, %v1072
      %v1209 = vpack.c.b16 %v1075, %v1074
      %v1210 = vpack.c.b16 %v1077, %v1076
      %v1211 = vpack.c.b16 %v1079, %v1078
      %v1212 = vpack.c.b16 %v1081, %v1080
      %v1213 = vpack.c.b16 %v1083, %v1082
      %v1214 = vpack.c.b16 %v1085, %v1084
      %v1215 = vpack.c.b16 %v1087, %v1086
      %1344 = vmatprep.subr.bf16.mxu0 0
      %1345 = vmatpush1.bf16.msra.mxu0 %v1095
      %1346 = vmatprep.subr.bf16.mxu0 0
      %1347 = vmatpush1.bf16.msra.mxu0 %v1094
      %1348 = vmatprep.subr.bf16.mxu0 0
      %1349 = vmatpush1.bf16.msra.mxu0 %v1093
      %1350 = vmatprep.subr.bf16.mxu0 0
      %1351 = vmatpush1.bf16.msra.mxu0 %v1092
      %1352 = vmatprep.subr.bf16.mxu0 0
      %1353 = vmatpush1.bf16.msra.mxu0 %v1091
      %1354 = vmatprep.subr.bf16.mxu0 0
      %1355 = vmatpush1.bf16.msra.mxu0 %v1090
      %1356 = vmatprep.subr.bf16.mxu0 0
      %1357 = vmatpush1.bf16.msra.mxu0 %v1089
      %1358 = vmatprep.subr.bf16.mxu0 0
      %1359 = vmatpush1.bf16.msra.mxu0 %v1088
      %1360 = vmatprep.subr.bf16.mxu0 0
      %1361 = vmatpush2.bf16.msra.mxu0 %v1103
      %1362 = vmatprep.subr.bf16.mxu0 0
      %1363 = vmatpush2.bf16.msra.mxu0 %v1102
      %1364 = vmatprep.subr.bf16.mxu0 0
      %1365 = vmatpush2.bf16.msra.mxu0 %v1101
      %1366 = vmatprep.subr.bf16.mxu0 0
      %1367 = vmatpush2.bf16.msra.mxu0 %v1100
      %1368 = vmatprep.subr.bf16.mxu0 0
      %1369 = vmatpush2.bf16.msra.mxu0 %v1099
      %1370 = vmatprep.subr.bf16.mxu0 0
      %1371 = vmatpush2.bf16.msra.mxu0 %v1098
      %1372 = vmatprep.subr.bf16.mxu0 0
      %1373 = vmatpush2.bf16.msra.mxu0 %v1097
      %1374 = vmatprep.subr.bf16.mxu0 0
      %1375 = vmatpush2.bf16.msra.mxu0 %v1096
      %1376 = vmatprep.mubr.bf16.mxu0 %v545
      %1377 = vmatmul.mubr.bf16.gmra.mxu0 %v544
      %v1378 = vpop.f32.mrf.mxu0
      %v1379 = vadd.f32 %v518, %v1378
      %v1380 = vpop.f32.mrf.mxu0
      %v1381 = vpop.f32.mrf.mxu0
      %v1382 = vpop.f32.mrf.mxu0
      %1383 = vdwg.mxu0
      %1384 = vmatprep.subr.bf16.mxu0 0
      %1385 = vmatpush1.bf16.msra.mxu0 %v1111
      %1386 = vmatprep.subr.bf16.mxu0 0
      %1387 = vmatpush1.bf16.msra.mxu0 %v1110
      %1388 = vmatprep.subr.bf16.mxu0 0
      %1389 = vmatpush1.bf16.msra.mxu0 %v1109
      %1390 = vmatprep.subr.bf16.mxu0 0
      %1391 = vmatpush1.bf16.msra.mxu0 %v1108
      %1392 = vmatprep.subr.bf16.mxu0 0
      %1393 = vmatpush1.bf16.msra.mxu0 %v1107
      %1394 = vmatprep.subr.bf16.mxu0 0
      %1395 = vmatpush1.bf16.msra.mxu0 %v1106
      %1396 = vmatprep.subr.bf16.mxu0 0
      %1397 = vmatpush1.bf16.msra.mxu0 %v1105
      %1398 = vmatprep.subr.bf16.mxu0 0
      %1399 = vmatpush1.bf16.msra.mxu0 %v1104
      %1400 = vmatprep.subr.bf16.mxu0 0
      %1401 = vmatpush2.bf16.msra.mxu0 %v1119
      %1402 = vmatprep.subr.bf16.mxu0 0
      %1403 = vmatpush2.bf16.msra.mxu0 %v1118
      %1404 = vmatprep.subr.bf16.mxu0 0
      %1405 = vmatpush2.bf16.msra.mxu0 %v1117
      %1406 = vmatprep.subr.bf16.mxu0 0
      %1407 = vmatpush2.bf16.msra.mxu0 %v1116
      %1408 = vmatprep.subr.bf16.mxu0 0
      %1409 = vmatpush2.bf16.msra.mxu0 %v1115
      %1410 = vmatprep.subr.bf16.mxu0 0
      %1411 = vmatpush2.bf16.msra.mxu0 %v1114
      %1412 = vmatprep.subr.bf16.mxu0 0
      %1413 = vmatpush2.bf16.msra.mxu0 %v1113
      %1414 = vmatprep.subr.bf16.mxu0 0
      %1415 = vmatpush2.bf16.msra.mxu0 %v1112
      %1416 = vmatprep.mubr.bf16.mxu0 %v547
      %1417 = vmatmul.mubr.bf16.gmra.mxu0 %v546
      %v1418 = vpop.f32.mrf.mxu0
      %v1419 = vadd.f32 %v1379, %v1418
      %v1420 = vpop.f32.mrf.mxu0
      %v1421 = vpop.f32.mrf.mxu0
      %v1422 = vpop.f32.mrf.mxu0
      %1423 = vdwg.mxu0
      %1424 = vmatprep.subr.bf16.mxu0 0
      %1425 = vmatpush1.bf16.msra.mxu0 %v1127
      %1426 = vmatprep.subr.bf16.mxu0 0
      %1427 = vmatpush1.bf16.msra.mxu0 %v1126
      %1428 = vmatprep.subr.bf16.mxu0 0
      %1429 = vmatpush1.bf16.msra.mxu0 %v1125
      %1430 = vmatprep.subr.bf16.mxu0 0
      %1431 = vmatpush1.bf16.msra.mxu0 %v1124
      %1432 = vmatprep.subr.bf16.mxu0 0
      %1433 = vmatpush1.bf16.msra.mxu0 %v1123
      %1434 = vmatprep.subr.bf16.mxu0 0
      %1435 = vmatpush1.bf16.msra.mxu0 %v1122
      %1436 = vmatprep.subr.bf16.mxu0 0
      %1437 = vmatpush1.bf16.msra.mxu0 %v1121
      %1438 = vmatprep.subr.bf16.mxu0 0
      %1439 = vmatpush1.bf16.msra.mxu0 %v1120
      %1440 = vmatprep.subr.bf16.mxu0 0
      %1441 = vmatpush2.bf16.msra.mxu0 %v1135
      %1442 = vmatprep.subr.bf16.mxu0 0
      %1443 = vmatpush2.bf16.msra.mxu0 %v1134
      %1444 = vmatprep.subr.bf16.mxu0 0
      %1445 = vmatpush2.bf16.msra.mxu0 %v1133
      %1446 = vmatprep.subr.bf16.mxu0 0
      %1447 = vmatpush2.bf16.msra.mxu0 %v1132
      %1448 = vmatprep.subr.bf16.mxu0 0
      %1449 = vmatpush2.bf16.msra.mxu0 %v1131
      %1450 = vmatprep.subr.bf16.mxu0 0
      %1451 = vmatpush2.bf16.msra.mxu0 %v1130
      %1452 = vmatprep.subr.bf16.mxu0 0
      %1453 = vmatpush2.bf16.msra.mxu0 %v1129
      %1454 = vmatprep.subr.bf16.mxu0 0
      %1455 = vmatpush2.bf16.msra.mxu0 %v1128
      %1456 = vmatprep.mubr.bf16.mxu0 %v549
      %1457 = vmatmul.mubr.bf16.gmra.mxu0 %v548
      %v1458 = vpop.f32.mrf.mxu0
      %v1459 = vadd.f32 %v1419, %v1458
      %v1460 = vpop.f32.mrf.mxu0
      %v1461 = vpop.f32.mrf.mxu0
      %v1462 = vpop.f32.mrf.mxu0
      %1463 = vdwg.mxu0
      %1464 = vmatprep.subr.bf16.mxu0 0
      %1465 = vmatpush1.bf16.msra.mxu0 %v1143
      %1466 = vmatprep.subr.bf16.mxu0 0
      %1467 = vmatpush1.bf16.msra.mxu0 %v1142
      %1468 = vmatprep.subr.bf16.mxu0 0
      %1469 = vmatpush1.bf16.msra.mxu0 %v1141
      %1470 = vmatprep.subr.bf16.mxu0 0
      %1471 = vmatpush1.bf16.msra.mxu0 %v1140
      %1472 = vmatprep.subr.bf16.mxu0 0
      %1473 = vmatpush1.bf16.msra.mxu0 %v1139
      %1474 = vmatprep.subr.bf16.mxu0 0
      %1475 = vmatpush1.bf16.msra.mxu0 %v1138
      %1476 = vmatprep.subr.bf16.mxu0 0
      %1477 = vmatpush1.bf16.msra.mxu0 %v1137
      %1478 = vmatprep.subr.bf16.mxu0 0
      %1479 = vmatpush1.bf16.msra.mxu0 %v1136
      %1480 = vmatprep.subr.bf16.mxu0 0
      %1481 = vmatpush2.bf16.msra.mxu0 %v1151
      %1482 = vmatprep.subr.bf16.mxu0 0
      %1483 = vmatpush2.bf16.msra.mxu0 %v1150
      %1484 = vmatprep.subr.bf16.mxu0 0
      %1485 = vmatpush2.bf16.msra.mxu0 %v1149
      %1486 = vmatprep.subr.bf16.mxu0 0
      %1487 = vmatpush2.bf16.msra.mxu0 %v1148
      %1488 = vmatprep.subr.bf16.mxu0 0
      %1489 = vmatpush2.bf16.msra.mxu0 %v1147
      %1490 = vmatprep.subr.bf16.mxu0 0
      %1491 = vmatpush2.bf16.msra.mxu0 %v1146
      %1492 = vmatprep.subr.bf16.mxu0 0
      %1493 = vmatpush2.bf16.msra.mxu0 %v1145
      %1494 = vmatprep.subr.bf16.mxu0 0
      %1495 = vmatpush2.bf16.msra.mxu0 %v1144
      %1496 = vmatprep.mubr.bf16.mxu0 %v551
      %1497 = vmatmul.mubr.bf16.gmra.mxu0 %v550
      %v1498 = vpop.f32.mrf.mxu0
      %v1499 = vadd.f32 %v1459, %v1498
      %v1500 = vpop.f32.mrf.mxu0
      %v1501 = vpop.f32.mrf.mxu0
      %v1502 = vpop.f32.mrf.mxu0
      %1503 = vdwg.mxu0
      %1504 = vmatprep.subr.bf16.mxu0 0
      %1505 = vmatpush1.bf16.msra.mxu0 %v1159
      %1506 = vmatprep.subr.bf16.mxu0 0
      %1507 = vmatpush1.bf16.msra.mxu0 %v1158
      %1508 = vmatprep.subr.bf16.mxu0 0
      %1509 = vmatpush1.bf16.msra.mxu0 %v1157
      %1510 = vmatprep.subr.bf16.mxu0 0
      %1511 = vmatpush1.bf16.msra.mxu0 %v1156
      %1512 = vmatprep.subr.bf16.mxu0 0
      %1513 = vmatpush1.bf16.msra.mxu0 %v1155
      %1514 = vmatprep.subr.bf16.mxu0 0
      %1515 = vmatpush1.bf16.msra.mxu0 %v1154
      %1516 = vmatprep.subr.bf16.mxu0 0
      %1517 = vmatpush1.bf16.msra.mxu0 %v1153
      %1518 = vmatprep.subr.bf16.mxu0 0
      %1519 = vmatpush1.bf16.msra.mxu0 %v1152
      %1520 = vmatprep.subr.bf16.mxu0 0
      %1521 = vmatpush2.bf16.msra.mxu0 %v1167
      %1522 = vmatprep.subr.bf16.mxu0 0
      %1523 = vmatpush2.bf16.msra.mxu0 %v1166
      %1524 = vmatprep.subr.bf16.mxu0 0
      %1525 = vmatpush2.bf16.msra.mxu0 %v1165
      %1526 = vmatprep.subr.bf16.mxu0 0
      %1527 = vmatpush2.bf16.msra.mxu0 %v1164
      %1528 = vmatprep.subr.bf16.mxu0 0
      %1529 = vmatpush2.bf16.msra.mxu0 %v1163
      %1530 = vmatprep.subr.bf16.mxu0 0
      %1531 = vmatpush2.bf16.msra.mxu0 %v1162
      %1532 = vmatprep.subr.bf16.mxu0 0
      %1533 = vmatpush2.bf16.msra.mxu0 %v1161
      %1534 = vmatprep.subr.bf16.mxu0 0
      %1535 = vmatpush2.bf16.msra.mxu0 %v1160
      %1536 = vmatprep.mubr.bf16.mxu0 %v553
      %1537 = vmatmul.mubr.bf16.gmra.mxu0 %v552
      %v1538 = vpop.f32.mrf.mxu0
      %v1539 = vadd.f32 %v1499, %v1538
      %v1540 = vpop.f32.mrf.mxu0
      %v1541 = vpop.f32.mrf.mxu0
      %v1542 = vpop.f32.mrf.mxu0
      %1543 = vdwg.mxu0
      %1544 = vmatprep.subr.bf16.mxu0 0
      %1545 = vmatpush1.bf16.msra.mxu0 %v1175
      %1546 = vmatprep.subr.bf16.mxu0 0
      %1547 = vmatpush1.bf16.msra.mxu0 %v1174
      %1548 = vmatprep.subr.bf16.mxu0 0
      %1549 = vmatpush1.bf16.msra.mxu0 %v1173
      %1550 = vmatprep.subr.bf16.mxu0 0
      %1551 = vmatpush1.bf16.msra.mxu0 %v1172
      %1552 = vmatprep.subr.bf16.mxu0 0
      %1553 = vmatpush1.bf16.msra.mxu0 %v1171
      %1554 = vmatprep.subr.bf16.mxu0 0
      %1555 = vmatpush1.bf16.msra.mxu0 %v1170
      %1556 = vmatprep.subr.bf16.mxu0 0
      %1557 = vmatpush1.bf16.msra.mxu0 %v1169
      %1558 = vmatprep.subr.bf16.mxu0 0
      %1559 = vmatpush1.bf16.msra.mxu0 %v1168
      %1560 = vmatprep.subr.bf16.mxu0 0
      %1561 = vmatpush2.bf16.msra.mxu0 %v1183
      %1562 = vmatprep.subr.bf16.mxu0 0
      %1563 = vmatpush2.bf16.msra.mxu0 %v1182
      %1564 = vmatprep.subr.bf16.mxu0 0
      %1565 = vmatpush2.bf16.msra.mxu0 %v1181
      %1566 = vmatprep.subr.bf16.mxu0 0
      %1567 = vmatpush2.bf16.msra.mxu0 %v1180
      %1568 = vmatprep.subr.bf16.mxu0 0
      %1569 = vmatpush2.bf16.msra.mxu0 %v1179
      %1570 = vmatprep.subr.bf16.mxu0 0
      %1571 = vmatpush2.bf16.msra.mxu0 %v1178
      %1572 = vmatprep.subr.bf16.mxu0 0
      %1573 = vmatpush2.bf16.msra.mxu0 %v1177
      %1574 = vmatprep.subr.bf16.mxu0 0
      %1575 = vmatpush2.bf16.msra.mxu0 %v1176
      %1576 = vmatprep.mubr.bf16.mxu0 %v555
      %1577 = vmatmul.mubr.bf16.gmra.mxu0 %v554
      %v1578 = vpop.f32.mrf.mxu0
      %v1579 = vadd.f32 %v1539, %v1578
      %v1580 = vpop.f32.mrf.mxu0
      %v1581 = vpop.f32.mrf.mxu0
      %v1582 = vpop.f32.mrf.mxu0
      %1583 = vdwg.mxu0
      %1584 = vmatprep.subr.bf16.mxu0 0
      %1585 = vmatpush1.bf16.msra.mxu0 %v1191
      %1586 = vmatprep.subr.bf16.mxu0 0
      %1587 = vmatpush1.bf16.msra.mxu0 %v1190
      %1588 = vmatprep.subr.bf16.mxu0 0
      %1589 = vmatpush1.bf16.msra.mxu0 %v1189
      %1590 = vmatprep.subr.bf16.mxu0 0
      %1591 = vmatpush1.bf16.msra.mxu0 %v1188
      %1592 = vmatprep.subr.bf16.mxu0 0
      %1593 = vmatpush1.bf16.msra.mxu0 %v1187
      %1594 = vmatprep.subr.bf16.mxu0 0
      %1595 = vmatpush1.bf16.msra.mxu0 %v1186
      %1596 = vmatprep.subr.bf16.mxu0 0
      %1597 = vmatpush1.bf16.msra.mxu0 %v1185
      %1598 = vmatprep.subr.bf16.mxu0 0
      %1599 = vmatpush1.bf16.msra.mxu0 %v1184
      %1600 = vmatprep.subr.bf16.mxu0 0
      %1601 = vmatpush2.bf16.msra.mxu0 %v1199
      %1602 = vmatprep.subr.bf16.mxu0 0
      %1603 = vmatpush2.bf16.msra.mxu0 %v1198
      %1604 = vmatprep.subr.bf16.mxu0 0
      %1605 = vmatpush2.bf16.msra.mxu0 %v1197
      %1606 = vmatprep.subr.bf16.mxu0 0
      %1607 = vmatpush2.bf16.msra.mxu0 %v1196
      %1608 = vmatprep.subr.bf16.mxu0 0
      %1609 = vmatpush2.bf16.msra.mxu0 %v1195
      %1610 = vmatprep.subr.bf16.mxu0 0
      %1611 = vmatpush2.bf16.msra.mxu0 %v1194
      %1612 = vmatprep.subr.bf16.mxu0 0
      %1613 = vmatpush2.bf16.msra.mxu0 %v1193
      %1614 = vmatprep.subr.bf16.mxu0 0
      %1615 = vmatpush2.bf16.msra.mxu0 %v1192
      %1616 = vmatprep.mubr.bf16.mxu0 %v557
      %1617 = vmatmul.mubr.bf16.gmra.mxu0 %v556
      %v1618 = vpop.f32.mrf.mxu0
      %v1619 = vadd.f32 %v1579, %v1618
      %v1620 = vpop.f32.mrf.mxu0
      %v1621 = vpop.f32.mrf.mxu0
      %v1622 = vpop.f32.mrf.mxu0
      %1623 = vdwg.mxu0
      %1624 = vmatprep.subr.bf16.mxu0 0
      %1625 = vmatpush1.bf16.msra.mxu0 %v1207
      %1626 = vmatprep.subr.bf16.mxu0 0
      %1627 = vmatpush1.bf16.msra.mxu0 %v1206
      %1628 = vmatprep.subr.bf16.mxu0 0
      %1629 = vmatpush1.bf16.msra.mxu0 %v1205
      %1630 = vmatprep.subr.bf16.mxu0 0
      %1631 = vmatpush1.bf16.msra.mxu0 %v1204
      %1632 = vmatprep.subr.bf16.mxu0 0
      %1633 = vmatpush1.bf16.msra.mxu0 %v1203
      %1634 = vmatprep.subr.bf16.mxu0 0
      %1635 = vmatpush1.bf16.msra.mxu0 %v1202
      %1636 = vmatprep.subr.bf16.mxu0 0
      %1637 = vmatpush1.bf16.msra.mxu0 %v1201
      %1638 = vmatprep.subr.bf16.mxu0 0
      %1639 = vmatpush1.bf16.msra.mxu0 %v1200
      %1640 = vmatprep.subr.bf16.mxu0 0
      %1641 = vmatpush2.bf16.msra.mxu0 %v1215
      %1642 = vmatprep.subr.bf16.mxu0 0
      %1643 = vmatpush2.bf16.msra.mxu0 %v1214
      %1644 = vmatprep.subr.bf16.mxu0 0
      %1645 = vmatpush2.bf16.msra.mxu0 %v1213
      %1646 = vmatprep.subr.bf16.mxu0 0
      %1647 = vmatpush2.bf16.msra.mxu0 %v1212
      %1648 = vmatprep.subr.bf16.mxu0 0
      %1649 = vmatpush2.bf16.msra.mxu0 %v1211
      %1650 = vmatprep.subr.bf16.mxu0 0
      %1651 = vmatpush2.bf16.msra.mxu0 %v1210
      %1652 = vmatprep.subr.bf16.mxu0 0
      %1653 = vmatpush2.bf16.msra.mxu0 %v1209
      %1654 = vmatprep.subr.bf16.mxu0 0
      %1655 = vmatpush2.bf16.msra.mxu0 %v1208
      %1656 = vmatprep.mubr.bf16.mxu0 %v559
      %1657 = vmatmul.mubr.bf16.gmra.mxu0 %v558
      %v1658 = vpop.f32.mrf.mxu0
      %v1659 = vadd.f32 %v1619, %v1658
      %v1660 = vpop.f32.mrf.mxu0
      %v1661 = vpop.f32.mrf.mxu0
      %v1662 = vpop.f32.mrf.mxu0
      %1663 = vdwg.mxu0
      %1664 = vst [vmem:[%s247] sm:$0xff] %v1659
      %p1665 = scmp.lt.s32.totalorder %s18, 1
      %s1666 = scalar_select %p1665, %s18, 1
      %p1667 = scmp.lt.s32.totalorder %s19, 0
      %s1668 = scalar_select %p1667, %s19, 0
      %s1669 = sadd.s32 %s1668, %s1666
      %s1670 = smul.addr %s1669, 8
      %s1671 = scalar_lea.vmem %s3, %s1670
      // Predicated region
      $region33: #{actor_critic_forward.9} parent=31 // pred_check
        %p1672 = pneg %p128
      $region34: #{actor_critic_forward.9} parent=31 // pred_check_branch
        %1674 = sbr.rel (%p1672) target = $region36
      $region35: #{actor_critic_forward.9} parent=31 // pred_region
        _
      $region36: #{actor_critic_forward.9} parent=31 // pred_fallthru
        _
    $region32: #{actor_critic_forward.9} parent=5 // pred_fallthru
      _
    %p1675 = scmp.le.s32.totalorder 2, %s9
    // Predicated region
    $region37: #{actor_critic_forward.9} parent=5 // pred_check
      %p1676 = pneg %p1675
    $region38: #{actor_critic_forward.9} parent=5 // pred_check_branch
      %1678 = sbr.rel (%p1676) target = $region40
    $region39: #{actor_critic_forward.9} parent=5 // pred_region
      %s1679 = ssub.s32 %s9, 2
      // Predicated region
      $region41: #{actor_critic_forward.9} parent=39 // pred_check
        %p1680 = pneg %p134
      $region42: #{actor_critic_forward.9} parent=39 // pred_check_branch
        %1682 = sbr.rel (%p1680) target = $region44
      $region43: #{actor_critic_forward.9} parent=39 // pred_region
        %p1683 = scmp.lt.s32.totalorder %s20, 1
        %s1684 = scalar_select %p1683, %s20, 1
        %p1685 = scmp.lt.s32.totalorder %s21, 0
        %s1686 = scalar_select %p1685, %s21, 0
        %s1687 = sadd.s32 %s1686, %s1684
        %s1688 = smul.addr %s1687, 8
        %s1689 = scalar_lea.vmem %s3, %s1688
      $region44: #{actor_critic_forward.9} parent=39 // pred_fallthru
        _
    $region40: #{actor_critic_forward.9} parent=5 // pred_fallthru
      _
  $region6: #{actor_critic_forward.9} parent=0 // loop_footer
    %s13 = sadd.s32 1, %s9
  $region7: #{actor_critic_forward.9} parent=0 // loop_footer_branch
    %8 = sbr.rel target = $region3
  $region8: #{actor_critic_forward.9} parent=0 // loop_exit
    _

// kernel: actor_critic_forward.7
$region0: #{actor_critic_forward.7}
  #allocation0 [shape = 'u32[]', space=smem, size = 0x4, offset = 0x4, fixed_abs, tag = 'smem constant byte address 0x4 - core index']
  #allocation1 [shape = 'u32[144,128]{1,0:T(1,128)}', space=vmem, size = 0x12000, scoped, tag = 'internal scratch']
  %s0 = inlined_call_operand.vmem [shape: bf16[2,8,1024], index: 0, kind: input, shape index: {}]
  %s1 = inlined_call_operand.hbm [shape: bf16[2,4,1024,512], index: 1, kind: input, shape index: {}]
  %s2 = inlined_call_operand.hbm [shape: f32[2,1,2048], index: 2, kind: input, shape index: {}]
  %s3 = inlined_call_operand.vmem [shape: bf16[2,8,2048], index: 3, kind: output, shape index: {}]
  %s4 = sld [smem:[#allocation0]]
  $region53: #{actor_critic_forward.7} parent=0
    _
  %s6 = ssub.s32 1, %s4
  %s7 = scalar_select 0, %s6, %s4
  $region1: #{actor_critic_forward.7} parent=0
    #allocation2 [shape = 'u8[2097152]{0}', space=vmem, size = 0x200000, scoped, tag = 'input window, operand 1']
    #allocation3 [shape = 's32[2]{0}', space=sflag, size = 0x8, scoped, tag = 'scoped memory for actor_critic_forward.7']
    #allocation4 [shape = 'u8[4096]{0}', space=vmem, size = 0x1000, scoped, tag = 'input window, operand 2']
    #allocation5 [shape = 's32[2]{0}', space=sflag, size = 0x8, scoped, tag = 'scoped memory for actor_critic_forward.7']
    %8 = vsyncpa [#allocation3], 0
    %s9 = scalar_lea.sflag [#allocation3], 1
    %10 = vsyncpa %s9, 0
    %11 = vsyncpa [#allocation5], 0
    %s12 = scalar_lea.sflag [#allocation5], 1
    %13 = vsyncpa %s12, 0
    loop: start=0, step=1, limit=10
    $region2: #{actor_critic_forward.7} parent=1 // loop_pre_header
      _
    $region3: #{actor_critic_forward.7} parent=1 // loop_header
      %s15 = sphi 0, %s19
      %p16 = scmp.ge.s32.totalorder %s15, 10
      %s22 = sphi 0, %s34
      %s23 = sphi 0, %s30
      %s24 = sphi 0, %s22
      %s25 = sphi 0, %s23
      %s26 = sphi 0, %s24
      %s27 = sphi 0, %s25
      %s37 = sphi 0, %s39
      %s40 = sphi 0, %s37
      %s41 = sphi 0, %s40
      %s57 = sphi 0, %s41
      %s65 = sphi 0, %s67
      %s68 = sphi 0, %s65
      %s69 = sphi 0, %s68
      %s85 = sphi 0, %s69
      %s93 = sphi 0, %s95
      %s96 = sphi 0, %s93
      %s97 = sphi 0, %s96
      %s113 = sphi 0, %s97
      %s121 = sphi 0, %s123
      %s124 = sphi 0, %s121
      %s125 = sphi 0, %s124
      %s141 = sphi 0, %s125
    $region4: #{actor_critic_forward.7} parent=1 // loop_header_branch
      %18 = sbr.rel (%p16) target = $region8
    $region5: #{actor_critic_forward.7} parent=1 // loop_body
      %s20 = ssub.s32 %s15, 1
      %s21 = ssub.s32 %s15, 2
      %s28 = sadd.s32 1, %s23
      %p29 = scmp.ge.s32.totalorder %s28, 4
      %s30 = scalar_select %p29, 0, %s28
      %s31 = sadd.s32 1, %s22
      %s32 = scalar_select %p29, %s31, %s22
      %p33 = scmp.ge.s32.totalorder %s32, 2
      %s34 = scalar_select %p33, 0, %s32
      %s35 = ssub.s32 %s22, %s34
      %p36 = scmp.eq.s32.totalorder %s35, 0
      %s38 = sadd.s32 %s37, 1
      %s39 = scalar_select %p36, %s37, %s38
      %p42 = pneg %p36
      %p43 = scmp.eq.s32.totalorder %s15, 7
      %p44 = por %p42, %p43
      %p45 = scmp.ne.s32.totalorder %s37, %s40
      %p46 = scmp.eq.s32.totalorder %s15, 0
      %p47 = por %p45, %p46
      %p48 = scmp.ne.s32.totalorder %s37, %s40
      %p49 = scmp.eq.s32.totalorder %s20, 7
      %p50 = por %p48, %p49
      %p51 = scmp.ne.s32.totalorder %s40, %s41
      %p52 = scmp.eq.s32.totalorder %s20, 0
      %p53 = por %p51, %p52
      %p54 = scmp.ne.s32.totalorder %s40, %s41
      %p55 = scmp.eq.s32.totalorder %s21, 7
      %p56 = por %p54, %p55
      %p58 = scmp.ne.s32.totalorder %s41, %s57
      %p59 = scmp.eq.s32.totalorder %s21, 0
      %p60 = por %p58, %p59
      %s61 = ssub.s32 %s22, %s34
      %s62 = ssub.s32 %s23, %s30
      %s63 = sor.u32 %s61, %s62
      %p64 = scmp.eq.s32.totalorder %s63, 0
      %s66 = sadd.s32 %s65, 1
      %s67 = scalar_select %p64, %s65, %s66
      %p70 = pneg %p64
      %p71 = scmp.eq.s32.totalorder %s15, 7
      %p72 = por %p70, %p71
      %p73 = scmp.ne.s32.totalorder %s65, %s68
      %p74 = scmp.eq.s32.totalorder %s15, 0
      %p75 = por %p73, %p74
      %p76 = scmp.ne.s32.totalorder %s65, %s68
      %p77 = scmp.eq.s32.totalorder %s20, 7
      %p78 = por %p76, %p77
      %p79 = scmp.ne.s32.totalorder %s68, %s69
      %p80 = scmp.eq.s32.totalorder %s20, 0
      %p81 = por %p79, %p80
      %p82 = scmp.ne.s32.totalorder %s68, %s69
      %p83 = scmp.eq.s32.totalorder %s21, 7
      %p84 = por %p82, %p83
      %p86 = scmp.ne.s32.totalorder %s69, %s85
      %p87 = scmp.eq.s32.totalorder %s21, 0
      %p88 = por %p86, %p87
      %s89 = ssub.s32 %s22, %s34
      %s90 = ssub.s32 %s23, %s30
      %s91 = sor.u32 %s89, %s90
      %p92 = scmp.eq.s32.totalorder %s91, 0
      %s94 = sadd.s32 %s93, 1
      %s95 = scalar_select %p92, %s93, %s94
      %p98 = pneg %p92
      %p99 = scmp.eq.s32.totalorder %s15, 7
      %p100 = por %p98, %p99
      %p101 = scmp.ne.s32.totalorder %s93, %s96
      %p102 = scmp.eq.s32.totalorder %s15, 0
      %p103 = por %p101, %p102
      %p104 = scmp.ne.s32.totalorder %s93, %s96
      %p105 = scmp.eq.s32.totalorder %s20, 7
      %p106 = por %p104, %p105
      %p107 = scmp.ne.s32.totalorder %s96, %s97
      %p108 = scmp.eq.s32.totalorder %s20, 0
      %p109 = por %p107, %p108
      %p110 = scmp.ne.s32.totalorder %s96, %s97
      %p111 = scmp.eq.s32.totalorder %s21, 7
      %p112 = por %p110, %p111
      %p114 = scmp.ne.s32.totalorder %s97, %s113
      %p115 = scmp.eq.s32.totalorder %s21, 0
      %p116 = por %p114, %p115
      %s117 = ssub.s32 %s22, %s34
      %s118 = ssub.s32 %s23, %s30
      %s119 = sor.u32 %s117, %s118
      %p120 = scmp.eq.s32.totalorder %s119, 0
      %s122 = sadd.s32 %s121, 1
      %s123 = scalar_select %p120, %s121, %s122
      %p126 = pneg %p120
      %p127 = scmp.eq.s32.totalorder %s15, 7
      %p128 = por %p126, %p127
      %p129 = scmp.ne.s32.totalorder %s121, %s124
      %p130 = scmp.eq.s32.totalorder %s15, 0
      %p131 = por %p129, %p130
      %p132 = scmp.ne.s32.totalorder %s121, %s124
      %p133 = scmp.eq.s32.totalorder %s20, 7
      %p134 = por %p132, %p133
      %p135 = scmp.ne.s32.totalorder %s124, %s125
      %p136 = scmp.eq.s32.totalorder %s20, 0
      %p137 = por %p135, %p136
      %p138 = scmp.ne.s32.totalorder %s124, %s125
      %p139 = scmp.eq.s32.totalorder %s21, 7
      %p140 = por %p138, %p139
      %p142 = scmp.ne.s32.totalorder %s125, %s141
      %p143 = scmp.eq.s32.totalorder %s21, 0
      %p144 = por %p142, %p143
      %p145 = scmp.le.s32.totalorder 1, %s15
      %p146 = scmp.lt.s32.totalorder %s15, 9
      %p147 = pnand %p145, %p146
      %p148 = pneg %p147
      // Predicated region
      $region9: #{actor_critic_forward.7} parent=5 // pred_check
        _
      $region10: #{actor_critic_forward.7} parent=5 // pred_check_branch
        %150 = sbr.rel (%p147) target = $region12
      $region11: #{actor_critic_forward.7} parent=5 // pred_region
        %s151 = ssub.s32 %s15, 1
      $region12: #{actor_critic_forward.7} parent=5 // pred_fallthru
        _
      %p152 = scmp.lt.s32.totalorder %s15, 8
      // Predicated region
      $region13: #{actor_critic_forward.7} parent=5 // pred_check
        %p153 = pneg %p152
      $region14: #{actor_critic_forward.7} parent=5 // pred_check_branch
        %155 = sbr.rel (%p153) target = $region16
      $region15: #{actor_critic_forward.7} parent=5 // pred_region
        // Predicated region
        $region17: #{actor_critic_forward.7} parent=15 // pred_check
          %p156 = pneg %p47
        $region18: #{actor_critic_forward.7} parent=15 // pred_check_branch
          %158 = sbr.rel (%p156) target = $region20
        $region19: #{actor_critic_forward.7} parent=15 // pred_region
          %p159 = scmp.lt.s32.totalorder %s22, 1
          %s160 = scalar_select %p159, %s22, 1
          %s161 = smul.addr %s160, 8
          %s162 = smul.addr %s161, 4
          %s163 = scalar_lea.vmem %s0, %s162
        $region20: #{actor_critic_forward.7} parent=15 // pred_fallthru
          _
        // Predicated region
        $region21: #{actor_critic_forward.7} parent=15 // pred_check
          %p164 = pneg %p75
        $region22: #{actor_critic_forward.7} parent=15 // pred_check_branch
          %166 = sbr.rel (%p164) target = $region24
        $region23: #{actor_critic_forward.7} parent=15 // pred_region
          %s167 = sand.u32 %s65, 1
          %s168 = scalar_lea.sflag [#allocation3], %s167
          %s169 = sand.u32 %s65, 1
          %s170 = smul.addr %s169, 2048
          %s171 = scalar_lea.vmem [#allocation2], %s170
          %s173 = ssub.s32 32768, 32768
          %174 = vsyncadd %s168, %s173
          %s175 = smul.addr %s23, 512
          %s176 = smul.addr %s22, 2048
          %s177 = sadd.s32 %s175, %s176
          %s178 = smul.addr %s177, 64
          %s179 = scalar_lea.hbm %s1, %s178
          %s180 = sshll.u32 %s171, 4
          %s181 = int_to_ptr.vmem [resolvable:$true] %s180
          %186 = dma.hbm_to_vmem [thread:$0]  %s179, 32768, %s181, %s168, 256, 256, 16
        $region24: #{actor_critic_forward.7} parent=15 // pred_fallthru
          _
        // Predicated region
        $region25: #{actor_critic_forward.7} parent=15 // pred_check
          %p187 = pneg %p103
        $region26: #{actor_critic_forward.7} parent=15 // pred_check_branch
          %189 = sbr.rel (%p187) target = $region28
        $region27: #{actor_critic_forward.7} parent=15 // pred_region
          %s190 = sand.u32 %s93, 1
          %s191 = scalar_lea.sflag [#allocation5], %s190
          %s192 = sand.u32 %s93, 1
          %s193 = smul.addr %s192, 4
          %s194 = scalar_lea.vmem [#allocation4], %s193
          %s195 = smul.u32 4, %s23
          %s197 = ssub.s32 64, 64
          %198 = vsyncadd %s191, %s197
          %s199 = smul.addr %s22, 16
          %s200 = sadd.s32 %s195, %s199
          %s201 = smul.addr %s200, 16
          %s202 = scalar_lea.hbm %s2, %s201
          %s204 = sshll.u32 %s194, 4
          %s205 = int_to_ptr.vmem [resolvable:$true] %s204
          %207 = dma.hbm_to_vmem [thread:$0]  %s202, 64, %s205, %s191
        $region28: #{actor_critic_forward.7} parent=15 // pred_fallthru
          _
      $region16: #{actor_critic_forward.7} parent=5 // pred_fallthru
        _
      %p208 = scmp.le.s32.totalorder 1, %s15
      %p209 = scmp.lt.s32.totalorder %s15, 9
      %p210 = pnand %p208, %p209
      %p211 = pneg %p210
      // Predicated region
      $region29: #{actor_critic_forward.7} parent=5 // pred_check
        _
      $region30: #{actor_critic_forward.7} parent=5 // pred_check_branch
        %213 = sbr.rel (%p210) target = $region32
      $region31: #{actor_critic_forward.7} parent=5 // pred_region
        %s214 = ssub.s32 %s15, 1
        %s215 = sand.u32 %s68, 1
        %s216 = scalar_lea.sflag [#allocation3], %s215
        %s217 = sand.u32 %s68, 1
        %s218 = smul.addr %s217, 2048
        %s219 = scalar_lea.vmem [#allocation2], %s218
        // Predicated region
        $region33: #{actor_critic_forward.7} parent=31 // pred_check
          %p220 = pneg %p81
        $region34: #{actor_critic_forward.7} parent=31 // pred_check_branch
          %222 = sbr.rel (%p220) target = $region36
        $region35: #{actor_critic_forward.7} parent=31 // pred_region
          %223 = dma.done %s216, 32768
        $region36: #{actor_critic_forward.7} parent=31 // pred_fallthru
          _
        %s224 = sand.u32 %s96, 1
        %s225 = scalar_lea.sflag [#allocation5], %s224
        %s226 = sand.u32 %s96, 1
        %s227 = smul.addr %s226, 4
        %s228 = scalar_lea.vmem [#allocation4], %s227
        // Predicated region
        $region37: #{actor_critic_forward.7} parent=31 // pred_check
          %p229 = pneg %p109
        $region38: #{actor_critic_forward.7} parent=31 // pred_check_branch
          %231 = sbr.rel (%p229) target = $region40
        $region39: #{actor_critic_forward.7} parent=31 // pred_region
          %232 = dma.done %s225, 64
        $region40: #{actor_critic_forward.7} parent=31 // pred_fallthru
          _
        %p233 = scmp.lt.s32.totalorder %s24, 1
        %s234 = scalar_select %p233, %s24, 1
        %s235 = smul.addr %s234, 8
        %s236 = smul.addr %s235, 4
        %s237 = scalar_lea.vmem %s0, %s236
        %p238 = pneg %p53
        %p239 = pneg %p50
        %s240 = sand.u32 %s68, 1
        %s241 = scalar_lea.sflag [#allocation3], %s240
        %s242 = sand.u32 %s68, 1
        %s243 = smul.addr %s242, 2048
        %s244 = scalar_lea.vmem [#allocation2], %s243
        %p245 = pneg %p81
        %p246 = pneg %p78
        %s247 = sand.u32 %s96, 1
        %s248 = scalar_lea.sflag [#allocation5], %s247
        %s249 = sand.u32 %s96, 1
        %s250 = smul.addr %s249, 4
        %s251 = scalar_lea.vmem [#allocation4], %s250
        %p252 = pneg %p109
        %p253 = pneg %p106
        %p254 = pneg %p137
        %p255 = pneg %p134
        %s256 = smul.u32 4, %s25
        %p257 = scmp.lt.s32.totalorder %s24, 1
        %s258 = scalar_select %p257, %s24, 1
        %p259 = scmp.lt.s32.totalorder %s256, 15
        %s260 = scalar_select %p259, %s256, 15
        %s261 = smul.addr %s258, 16
        %s262 = sadd.s32 %s260, %s261
        %s263 = smul.addr %s262, 4
        %s264 = scalar_lea.vmem %s3, %s263
        %p265 = scmp.lt.s32.totalorder %s24, 1
        %s266 = scalar_select %p265, %s24, 1
        %s267 = smul.addr %s266, 8
        %s268 = smul.addr %s267, 4
        %s269 = scalar_lea.vmem %s0, %s268
        %s270 = smul.u32 4, %s25
        %s271 = smul.u32 4, %s25
        %p272 = scmp.lt.s32.totalorder %s24, 1
        %s273 = scalar_select %p272, %s24, 1
        %p274 = scmp.lt.s32.totalorder %s271, 15
        %s275 = scalar_select %p274, %s271, 15
        %s276 = smul.addr %s273, 16
        %s277 = sadd.s32 %s275, %s276
        %s278 = smul.addr %s277, 4
        %s279 = scalar_lea.vmem %s3, %s278
        %s280 = smul.u32 4, %s25
        %v281 = vld [vmem:[%s269] sm:$0xff]
        %v282 = vld [vmem:[%s269 + $0x8] sm:$0xff]
        %v283 = vld [vmem:[%s269 + $0x10] sm:$0xff]
        %v284 = vld [vmem:[%s269 + $0x18] sm:$0xff]
        %v285 = vld [vmem:[%s219] sm:$0xff]
        %v286 = vld [vmem:[%s219 + $0x8] sm:$0xff]
        %v287 = vld [vmem:[%s219 + $0x10] sm:$0xff]
        %v288 = vld [vmem:[%s219 + $0x18] sm:$0xff]
        %v289 = vld [vmem:[%s219 + $0x20] sm:$0xff]
        %v290 = vld [vmem:[%s219 + $0x28] sm:$0xff]
        %v291 = vld [vmem:[%s219 + $0x30] sm:$0xff]
        %v292 = vld [vmem:[%s219 + $0x38] sm:$0xff]
        %v293 = vld [vmem:[%s219 + $0x40] sm:$0xff]
        %v294 = vld [vmem:[%s219 + $0x48] sm:$0xff]
        %v295 = vld [vmem:[%s219 + $0x50] sm:$0xff]
        %v296 = vld [vmem:[%s219 + $0x58] sm:$0xff]
        %v297 = vld [vmem:[%s219 + $0x60] sm:$0xff]
        %v298 = vld [vmem:[%s219 + $0x68] sm:$0xff]
        %v299 = vld [vmem:[%s219 + $0x70] sm:$0xff]
        %v300 = vld [vmem:[%s219 + $0x78] sm:$0xff]
        %v301 = vld [vmem:[%s219 + $0x80] sm:$0xff]
        %v302 = vld [vmem:[%s219 + $0x88] sm:$0xff]
        %v303 = vld [vmem:[%s219 + $0x90] sm:$0xff]
        %v304 = vld [vmem:[%s219 + $0x98] sm:$0xff]
        %v305 = vld [vmem:[%s219 + $0xa0] sm:$0xff]
        %v306 = vld [vmem:[%s219 + $0xa8] sm:$0xff]
        %v307 = vld [vmem:[%s219 + $0xb0] sm:$0xff]
        %v308 = vld [vmem:[%s219 + $0xb8] sm:$0xff]
        %v309 = vld [vmem:[%s219 + $0xc0] sm:$0xff]
        %v310 = vld [vmem:[%s219 + $0xc8] sm:$0xff]
        %v311 = vld [vmem:[%s219 + $0xd0] sm:$0xff]
        %v312 = vld [vmem:[%s219 + $0xd8] sm:$0xff]
        %v313 = vld [vmem:[%s219 + $0xe0] sm:$0xff]
        %v314 = vld [vmem:[%s219 + $0xe8] sm:$0xff]
        %v315 = vld [vmem:[%s219 + $0xf0] sm:$0xff]
        %v316 = vld [vmem:[%s219 + $0xf8] sm:$0xff]
        %v317 = vld [vmem:[%s219 + $0x100] sm:$0xff]
        %v318 = vld [vmem:[%s219 + $0x108] sm:$0xff]
        %v319 = vld [vmem:[%s219 + $0x110] sm:$0xff]
        %v320 = vld [vmem:[%s219 + $0x118] sm:$0xff]
        %v321 = vld [vmem:[%s219 + $0x120] sm:$0xff]
        %v322 = vld [vmem:[%s219 + $0x128] sm:$0xff]
        %v323 = vld [vmem:[%s219 + $0x130] sm:$0xff]
        %v324 = vld [vmem:[%s219 + $0x138] sm:$0xff]
        %v325 = vld [vmem:[%s219 + $0x140] sm:$0xff]
        %v326 = vld [vmem:[%s219 + $0x148] sm:$0xff]
        %v327 = vld [vmem:[%s219 + $0x150] sm:$0xff]
        %v328 = vld [vmem:[%s219 + $0x158] sm:$0xff]
        %v329 = vld [vmem:[%s219 + $0x160] sm:$0xff]
        %v330 = vld [vmem:[%s219 + $0x168] sm:$0xff]
        %v331 = vld [vmem:[%s219 + $0x170] sm:$0xff]
        %v332 = vld [vmem:[%s219 + $0x178] sm:$0xff]
        %v333 = vld [vmem:[%s219 + $0x180] sm:$0xff]
        %v334 = vld [vmem:[%s219 + $0x188] sm:$0xff]
        %v335 = vld [vmem:[%s219 + $0x190] sm:$0xff]
        %v336 = vld [vmem:[%s219 + $0x198] sm:$0xff]
        %v337 = vld [vmem:[%s219 + $0x1a0] sm:$0xff]
        %v338 = vld [vmem:[%s219 + $0x1a8] sm:$0xff]
        %v339 = vld [vmem:[%s219 + $0x1b0] sm:$0xff]
        %v340 = vld [vmem:[%s219 + $0x1b8] sm:$0xff]
        %v341 = vld [vmem:[%s219 + $0x1c0] sm:$0xff]
        %v342 = vld [vmem:[%s219 + $0x1c8] sm:$0xff]
        %v343 = vld [vmem:[%s219 + $0x1d0] sm:$0xff]
        %v344 = vld [vmem:[%s219 + $0x1d8] sm:$0xff]
        %v345 = vld [vmem:[%s219 + $0x1e0] sm:$0xff]
        %v346 = vld [vmem:[%s219 + $0x1e8] sm:$0xff]
        %v347 = vld [vmem:[%s219 + $0x1f0] sm:$0xff]
        %v348 = vld [vmem:[%s219 + $0x1f8] sm:$0xff]
        %v349 = vld [vmem:[%s219 + $0x200] sm:$0xff]
        %v350 = vld [vmem:[%s219 + $0x208] sm:$0xff]
        %v351 = vld [vmem:[%s219 + $0x210] sm:$0xff]
        %v352 = vld [vmem:[%s219 + $0x218] sm:$0xff]
        %v353 = vld [vmem:[%s219 + $0x220] sm:$0xff]
        %v354 = vld [vmem:[%s219 + $0x228] sm:$0xff]
        %v355 = vld [vmem:[%s219 + $0x230] sm:$0xff]
        %v356 = vld [vmem:[%s219 + $0x238] sm:$0xff]
        %v357 = vld [vmem:[%s219 + $0x240] sm:$0xff]
        %v358 = vld [vmem:[%s219 + $0x248] sm:$0xff]
        %v359 = vld [vmem:[%s219 + $0x250] sm:$0xff]
        %v360 = vld [vmem:[%s219 + $0x258] sm:$0xff]
        %v361 = vld [vmem:[%s219 + $0x260] sm:$0xff]
        %v362 = vld [vmem:[%s219 + $0x268] sm:$0xff]
        %v363 = vld [vmem:[%s219 + $0x270] sm:$0xff]
        %v364 = vld [vmem:[%s219 + $0x278] sm:$0xff]
        %v365 = vld [vmem:[%s219 + $0x280] sm:$0xff]
        %v366 = vld [vmem:[%s219 + $0x288] sm:$0xff]
        %v367 = vld [vmem:[%s219 + $0x290] sm:$0xff]
        %v368 = vld [vmem:[%s219 + $0x298] sm:$0xff]
        %v369 = vld [vmem:[%s219 + $0x2a0] sm:$0xff]
        %v370 = vld [vmem:[%s219 + $0x2a8] sm:$0xff]
        %v371 = vld [vmem:[%s219 + $0x2b0] sm:$0xff]
        %v372 = vld [vmem:[%s219 + $0x2b8] sm:$0xff]
        %v373 = vld [vmem:[%s219 + $0x2c0] sm:$0xff]
        %v374 = vld [vmem:[%s219 + $0x2c8] sm:$0xff]
        %v375 = vld [vmem:[%s219 + $0x2d0] sm:$0xff]
        %v376 = vld [vmem:[%s219 + $0x2d8] sm:$0xff]
        %v377 = vld [vmem:[%s219 + $0x2e0] sm:$0xff]
        %v378 = vld [vmem:[%s219 + $0x2e8] sm:$0xff]
        %v379 = vld [vmem:[%s219 + $0x2f0] sm:$0xff]
        %v380 = vld [vmem:[%s219 + $0x2f8] sm:$0xff]
        %v381 = vld [vmem:[%s219 + $0x300] sm:$0xff]
        %v382 = vld [vmem:[%s219 + $0x308] sm:$0xff]
        %v383 = vld [vmem:[%s219 + $0x310] sm:$0xff]
        %v384 = vld [vmem:[%s219 + $0x318] sm:$0xff]
        %v385 = vld [vmem:[%s219 + $0x320] sm:$0xff]
        %v386 = vld [vmem:[%s219 + $0x328] sm:$0xff]
        %v387 = vld [vmem:[%s219 + $0x330] sm:$0xff]
        %v388 = vld [vmem:[%s219 + $0x338] sm:$0xff]
        %v389 = vld [vmem:[%s219 + $0x340] sm:$0xff]
        %v390 = vld [vmem:[%s219 + $0x348] sm:$0xff]
        %v391 = vld [vmem:[%s219 + $0x350] sm:$0xff]
        %v392 = vld [vmem:[%s219 + $0x358] sm:$0xff]
        %v393 = vld [vmem:[%s219 + $0x360] sm:$0xff]
        %v394 = vld [vmem:[%s219 + $0x368] sm:$0xff]
        %v395 = vld [vmem:[%s219 + $0x370] sm:$0xff]
        %v396 = vld [vmem:[%s219 + $0x378] sm:$0xff]
        %v397 = vld [vmem:[%s219 + $0x380] sm:$0xff]
        %v398 = vld [vmem:[%s219 + $0x388] sm:$0xff]
        %v399 = vld [vmem:[%s219 + $0x390] sm:$0xff]
        %v400 = vld [vmem:[%s219 + $0x398] sm:$0xff]
        %v401 = vld [vmem:[%s219 + $0x3a0] sm:$0xff]
        %v402 = vld [vmem:[%s219 + $0x3a8] sm:$0xff]
        %v403 = vld [vmem:[%s219 + $0x3b0] sm:$0xff]
        %v404 = vld [vmem:[%s219 + $0x3b8] sm:$0xff]
        %v405 = vld [vmem:[%s219 + $0x3c0] sm:$0xff]
        %v406 = vld [vmem:[%s219 + $0x3c8] sm:$0xff]
        %v407 = vld [vmem:[%s219 + $0x3d0] sm:$0xff]
        %v408 = vld [vmem:[%s219 + $0x3d8] sm:$0xff]
        %v409 = vld [vmem:[%s219 + $0x3e0] sm:$0xff]
        %v410 = vld [vmem:[%s219 + $0x3e8] sm:$0xff]
        %v411 = vld [vmem:[%s219 + $0x3f0] sm:$0xff]
        %v412 = vld [vmem:[%s219 + $0x3f8] sm:$0xff]
        %v413 = vld [vmem:[%s219 + $0x400] sm:$0xff]
        %v414 = vld [vmem:[%s219 + $0x408] sm:$0xff]
        %v415 = vld [vmem:[%s219 + $0x410] sm:$0xff]
        %v416 = vld [vmem:[%s219 + $0x418] sm:$0xff]
        %v417 = vld [vmem:[%s219 + $0x420] sm:$0xff]
        %v418 = vld [vmem:[%s219 + $0x428] sm:$0xff]
        %v419 = vld [vmem:[%s219 + $0x430] sm:$0xff]
        %v420 = vld [vmem:[%s219 + $0x438] sm:$0xff]
        %v421 = vld [vmem:[%s219 + $0x440] sm:$0xff]
        %v422 = vld [vmem:[%s219 + $0x448] sm:$0xff]
        %v423 = vld [vmem:[%s219 + $0x450] sm:$0xff]
        %v424 = vld [vmem:[%s219 + $0x458] sm:$0xff]
        %v425 = vld [vmem:[%s219 + $0x460] sm:$0xff]
        %v426 = vld [vmem:[%s219 + $0x468] sm:$0xff]
        %v427 = vld [vmem:[%s219 + $0x470] sm:$0xff]
        %v428 = vld [vmem:[%s219 + $0x478] sm:$0xff]
        %v429 = vld [vmem:[%s219 + $0x480] sm:$0xff]
        %v430 = vld [vmem:[%s219 + $0x488] sm:$0xff]
        %v431 = vld [vmem:[%s219 + $0x490] sm:$0xff]
        %v432 = vld [vmem:[%s219 + $0x498] sm:$0xff]
        %v433 = vld [vmem:[%s219 + $0x4a0] sm:$0xff]
        %v434 = vld [vmem:[%s219 + $0x4a8] sm:$0xff]
        %v435 = vld [vmem:[%s219 + $0x4b0] sm:$0xff]
        %v436 = vld [vmem:[%s219 + $0x4b8] sm:$0xff]
        %v437 = vld [vmem:[%s219 + $0x4c0] sm:$0xff]
        %v438 = vld [vmem:[%s219 + $0x4c8] sm:$0xff]
        %v439 = vld [vmem:[%s219 + $0x4d0] sm:$0xff]
        %v440 = vld [vmem:[%s219 + $0x4d8] sm:$0xff]
        %v441 = vld [vmem:[%s219 + $0x4e0] sm:$0xff]
        %v442 = vld [vmem:[%s219 + $0x4e8] sm:$0xff]
        %v443 = vld [vmem:[%s219 + $0x4f0] sm:$0xff]
        %v444 = vld [vmem:[%s219 + $0x4f8] sm:$0xff]
        %v445 = vld [vmem:[%s219 + $0x500] sm:$0xff]
        %v446 = vld [vmem:[%s219 + $0x508] sm:$0xff]
        %v447 = vld [vmem:[%s219 + $0x510] sm:$0xff]
        %v448 = vld [vmem:[%s219 + $0x518] sm:$0xff]
        %v449 = vld [vmem:[%s219 + $0x520] sm:$0xff]
        %v450 = vld [vmem:[%s219 + $0x528] sm:$0xff]
        %v451 = vld [vmem:[%s219 + $0x530] sm:$0xff]
        %v452 = vld [vmem:[%s219 + $0x538] sm:$0xff]
        %v453 = vld [vmem:[%s219 + $0x540] sm:$0xff]
        %v454 = vld [vmem:[%s219 + $0x548] sm:$0xff]
        %v455 = vld [vmem:[%s219 + $0x550] sm:$0xff]
        %v456 = vld [vmem:[%s219 + $0x558] sm:$0xff]
        %v457 = vld [vmem:[%s219 + $0x560] sm:$0xff]
        %v458 = vld [vmem:[%s219 + $0x568] sm:$0xff]
        %v459 = vld [vmem:[%s219 + $0x570] sm:$0xff]
        %v460 = vld [vmem:[%s219 + $0x578] sm:$0xff]
        %v461 = vld [vmem:[%s219 + $0x580] sm:$0xff]
        %v462 = vld [vmem:[%s219 + $0x588] sm:$0xff]
        %v463 = vld [vmem:[%s219 + $0x590] sm:$0xff]
        %v464 = vld [vmem:[%s219 + $0x598] sm:$0xff]
        %v465 = vld [vmem:[%s219 + $0x5a0] sm:$0xff]
        %v466 = vld [vmem:[%s219 + $0x5a8] sm:$0xff]
        %v467 = vld [vmem:[%s219 + $0x5b0] sm:$0xff]
        %v468 = vld [vmem:[%s219 + $0x5b8] sm:$0xff]
        %v469 = vld [vmem:[%s219 + $0x5c0] sm:$0xff]
        %v470 = vld [vmem:[%s219 + $0x5c8] sm:$0xff]
        %v471 = vld [vmem:[%s219 + $0x5d0] sm:$0xff]
        %v472 = vld [vmem:[%s219 + $0x5d8] sm:$0xff]
        %v473 = vld [vmem:[%s219 + $0x5e0] sm:$0xff]
        %v474 = vld [vmem:[%s219 + $0x5e8] sm:$0xff]
        %v475 = vld [vmem:[%s219 + $0x5f0] sm:$0xff]
        %v476 = vld [vmem:[%s219 + $0x5f8] sm:$0xff]
        %v477 = vld [vmem:[%s219 + $0x600] sm:$0xff]
        %v478 = vld [vmem:[%s219 + $0x608] sm:$0xff]
        %v479 = vld [vmem:[%s219 + $0x610] sm:$0xff]
        %v480 = vld [vmem:[%s219 + $0x618] sm:$0xff]
        %v481 = vld [vmem:[%s219 + $0x620] sm:$0xff]
        %v482 = vld [vmem:[%s219 + $0x628] sm:$0xff]
        %v483 = vld [vmem:[%s219 + $0x630] sm:$0xff]
        %v484 = vld [vmem:[%s219 + $0x638] sm:$0xff]
        %v485 = vld [vmem:[%s219 + $0x640] sm:$0xff]
        %v486 = vld [vmem:[%s219 + $0x648] sm:$0xff]
        %v487 = vld [vmem:[%s219 + $0x650] sm:$0xff]
        %v488 = vld [vmem:[%s219 + $0x658] sm:$0xff]
        %v489 = vld [vmem:[%s219 + $0x660] sm:$0xff]
        %v490 = vld [vmem:[%s219 + $0x668] sm:$0xff]
        %v491 = vld [vmem:[%s219 + $0x670] sm:$0xff]
        %v492 = vld [vmem:[%s219 + $0x678] sm:$0xff]
        %v493 = vld [vmem:[%s219 + $0x680] sm:$0xff]
        %v494 = vld [vmem:[%s219 + $0x688] sm:$0xff]
        %v495 = vld [vmem:[%s219 + $0x690] sm:$0xff]
        %v496 = vld [vmem:[%s219 + $0x698] sm:$0xff]
        %v497 = vld [vmem:[%s219 + $0x6a0] sm:$0xff]
        %v498 = vld [vmem:[%s219 + $0x6a8] sm:$0xff]
        %v499 = vld [vmem:[%s219 + $0x6b0] sm:$0xff]
        %v500 = vld [vmem:[%s219 + $0x6b8] sm:$0xff]
        %v501 = vld [vmem:[%s219 + $0x6c0] sm:$0xff]
        %v502 = vld [vmem:[%s219 + $0x6c8] sm:$0xff]
        %v503 = vld [vmem:[%s219 + $0x6d0] sm:$0xff]
        %v504 = vld [vmem:[%s219 + $0x6d8] sm:$0xff]
        %v505 = vld [vmem:[%s219 + $0x6e0] sm:$0xff]
        %v506 = vld [vmem:[%s219 + $0x6e8] sm:$0xff]
        %v507 = vld [vmem:[%s219 + $0x6f0] sm:$0xff]
        %v508 = vld [vmem:[%s219 + $0x6f8] sm:$0xff]
        %v509 = vld [vmem:[%s219 + $0x700] sm:$0xff]
        %v510 = vld [vmem:[%s219 + $0x708] sm:$0xff]
        %v511 = vld [vmem:[%s219 + $0x710] sm:$0xff]
        %v512 = vld [vmem:[%s219 + $0x718] sm:$0xff]
        %v513 = vld [vmem:[%s219 + $0x720] sm:$0xff]
        %v514 = vld [vmem:[%s219 + $0x728] sm:$0xff]
        %v515 = vld [vmem:[%s219 + $0x730] sm:$0xff]
        %v516 = vld [vmem:[%s219 + $0x738] sm:$0xff]
        %v517 = vld [vmem:[%s219 + $0x740] sm:$0xff]
        %v518 = vld [vmem:[%s219 + $0x748] sm:$0xff]
        %v519 = vld [vmem:[%s219 + $0x750] sm:$0xff]
        %v520 = vld [vmem:[%s219 + $0x758] sm:$0xff]
        %v521 = vld [vmem:[%s219 + $0x760] sm:$0xff]
        %v522 = vld [vmem:[%s219 + $0x768] sm:$0xff]
        %v523 = vld [vmem:[%s219 + $0x770] sm:$0xff]
        %v524 = vld [vmem:[%s219 + $0x778] sm:$0xff]
        %v525 = vld [vmem:[%s219 + $0x780] sm:$0xff]
        %v526 = vld [vmem:[%s219 + $0x788] sm:$0xff]
        %v527 = vld [vmem:[%s219 + $0x790] sm:$0xff]
        %v528 = vld [vmem:[%s219 + $0x798] sm:$0xff]
        %v529 = vld [vmem:[%s219 + $0x7a0] sm:$0xff]
        %v530 = vld [vmem:[%s219 + $0x7a8] sm:$0xff]
        %v531 = vld [vmem:[%s219 + $0x7b0] sm:$0xff]
        %v532 = vld [vmem:[%s219 + $0x7b8] sm:$0xff]
        %v533 = vld [vmem:[%s219 + $0x7c0] sm:$0xff]
        %v534 = vld [vmem:[%s219 + $0x7c8] sm:$0xff]
        %v535 = vld [vmem:[%s219 + $0x7d0] sm:$0xff]
        %v536 = vld [vmem:[%s219 + $0x7d8] sm:$0xff]
        %v537 = vld [vmem:[%s219 + $0x7e0] sm:$0xff]
        %v538 = vld [vmem:[%s219 + $0x7e8] sm:$0xff]
        %v539 = vld [vmem:[%s219 + $0x7f0] sm:$0xff]
        %v540 = vld [vmem:[%s219 + $0x7f8] sm:$0xff]
        %v541 = vld [vmem:[%s228] sm:$0xf]
        %v543 = vlaneseq
        %v544 = vshrl.u32 %v543, 7
        %v545 = vsub.s32 0, %v544
        %v546 = vrot.slane %v541, %v545
        %v547 = vlaneseq
        %v548 = vshrl.u32 %v547, 7
        %v549 = vsub.s32 1, %v548
        %v550 = vrot.slane %v541, %v549
        %v551 = vlaneseq
        %v552 = vshrl.u32 %v551, 7
        %v553 = vsub.s32 2, %v552
        %v554 = vrot.slane %v541, %v553
        %v555 = vlaneseq
        %v556 = vshrl.u32 %v555, 7
        %v557 = vsub.s32 3, %v556
        %v558 = vrot.slane %v541, %v557
        %v567 = vunpack.c.l.b16 %v281
        %v568 = vunpack.c.h.b16 %v281
        %v569 = vunpack.c.l.b16 %v282
        %v570 = vunpack.c.h.b16 %v282
        %v571 = vunpack.c.l.b16 %v283
        %v572 = vunpack.c.h.b16 %v283
        %v573 = vunpack.c.l.b16 %v284
        %v574 = vunpack.c.h.b16 %v284
        %v575 = vpack.c.b16 %v567, %v567
        %v576 = vpack.c.b16 %v568, %v568
        %v577 = vpack.c.b16 %v569, %v569
        %v578 = vpack.c.b16 %v570, %v570
        %v579 = vpack.c.b16 %v571, %v571
        %v580 = vpack.c.b16 %v572, %v572
        %v581 = vpack.c.b16 %v573, %v573
        %v582 = vpack.c.b16 %v574, %v574
        %v847 = vunpack.c.l.b16 %v285
        %v848 = vunpack.c.h.b16 %v285
        %v849 = vunpack.c.l.b16 %v286
        %v850 = vunpack.c.h.b16 %v286
        %v851 = vunpack.c.l.b16 %v287
        %v852 = vunpack.c.h.b16 %v287
        %v853 = vunpack.c.l.b16 %v288
        %v854 = vunpack.c.h.b16 %v288
        %v855 = vunpack.c.l.b16 %v289
        %v856 = vunpack.c.h.b16 %v289
        %v857 = vunpack.c.l.b16 %v290
        %v858 = vunpack.c.h.b16 %v290
        %v859 = vunpack.c.l.b16 %v291
        %v860 = vunpack.c.h.b16 %v291
        %v861 = vunpack.c.l.b16 %v292
        %v862 = vunpack.c.h.b16 %v292
        %v863 = vunpack.c.l.b16 %v293
        %v864 = vunpack.c.h.b16 %v293
        %v865 = vunpack.c.l.b16 %v294
        %v866 = vunpack.c.h.b16 %v294
        %v867 = vunpack.c.l.b16 %v295
        %v868 = vunpack.c.h.b16 %v295
        %v869 = vunpack.c.l.b16 %v296
        %v870 = vunpack.c.h.b16 %v296
        %v871 = vunpack.c.l.b16 %v297
        %v872 = vunpack.c.h.b16 %v297
        %v873 = vunpack.c.l.b16 %v298
        %v874 = vunpack.c.h.b16 %v298
        %v875 = vunpack.c.l.b16 %v299
        %v876 = vunpack.c.h.b16 %v299
        %v877 = vunpack.c.l.b16 %v300
        %v878 = vunpack.c.h.b16 %v300
        %v879 = vunpack.c.l.b16 %v301
        %v880 = vunpack.c.h.b16 %v301
        %v881 = vunpack.c.l.b16 %v302
        %v882 = vunpack.c.h.b16 %v302
        %v883 = vunpack.c.l.b16 %v303
        %v884 = vunpack.c.h.b16 %v303
        %v885 = vunpack.c.l.b16 %v304
        %v886 = vunpack.c.h.b16 %v304
        %v887 = vunpack.c.l.b16 %v305
        %v888 = vunpack.c.h.b16 %v305
        %v889 = vunpack.c.l.b16 %v306
        %v890 = vunpack.c.h.b16 %v306
        %v891 = vunpack.c.l.b16 %v307
        %v892 = vunpack.c.h.b16 %v307
        %v893 = vunpack.c.l.b16 %v308
        %v894 = vunpack.c.h.b16 %v308
        %v895 = vunpack.c.l.b16 %v309
        %v896 = vunpack.c.h.b16 %v309
        %v897 = vunpack.c.l.b16 %v310
        %v898 = vunpack.c.h.b16 %v310
        %v899 = vunpack.c.l.b16 %v311
        %v900 = vunpack.c.h.b16 %v311
        %v901 = vunpack.c.l.b16 %v312
        %v902 = vunpack.c.h.b16 %v312
        %v903 = vunpack.c.l.b16 %v313
        %v904 = vunpack.c.h.b16 %v313
        %v905 = vunpack.c.l.b16 %v314
        %v906 = vunpack.c.h.b16 %v314
        %v907 = vunpack.c.l.b16 %v315
        %v908 = vunpack.c.h.b16 %v315
        %v909 = vunpack.c.l.b16 %v316
        %v910 = vunpack.c.h.b16 %v316
        %v911 = vunpack.c.l.b16 %v317
        %v912 = vunpack.c.h.b16 %v317
        %v913 = vunpack.c.l.b16 %v318
        %v914 = vunpack.c.h.b16 %v318
        %v915 = vunpack.c.l.b16 %v319
        %v916 = vunpack.c.h.b16 %v319
        %v917 = vunpack.c.l.b16 %v320
        %v918 = vunpack.c.h.b16 %v320
        %v919 = vunpack.c.l.b16 %v321
        %v920 = vunpack.c.h.b16 %v321
        %v921 = vunpack.c.l.b16 %v322
        %v922 = vunpack.c.h.b16 %v322
        %v923 = vunpack.c.l.b16 %v323
        %v924 = vunpack.c.h.b16 %v323
        %v925 = vunpack.c.l.b16 %v324
        %v926 = vunpack.c.h.b16 %v324
        %v927 = vunpack.c.l.b16 %v325
        %v928 = vunpack.c.h.b16 %v325
        %v929 = vunpack.c.l.b16 %v326
        %v930 = vunpack.c.h.b16 %v326
        %v931 = vunpack.c.l.b16 %v327
        %v932 = vunpack.c.h.b16 %v327
        %v933 = vunpack.c.l.b16 %v328
        %v934 = vunpack.c.h.b16 %v328
        %v935 = vunpack.c.l.b16 %v329
        %v936 = vunpack.c.h.b16 %v329
        %v937 = vunpack.c.l.b16 %v330
        %v938 = vunpack.c.h.b16 %v330
        %v939 = vunpack.c.l.b16 %v331
        %v940 = vunpack.c.h.b16 %v331
        %v941 = vunpack.c.l.b16 %v332
        %v942 = vunpack.c.h.b16 %v332
        %v943 = vunpack.c.l.b16 %v333
        %v944 = vunpack.c.h.b16 %v333
        %v945 = vunpack.c.l.b16 %v334
        %v946 = vunpack.c.h.b16 %v334
        %v947 = vunpack.c.l.b16 %v335
        %v948 = vunpack.c.h.b16 %v335
        %v949 = vunpack.c.l.b16 %v336
        %v950 = vunpack.c.h.b16 %v336
        %v951 = vunpack.c.l.b16 %v337
        %v952 = vunpack.c.h.b16 %v337
        %v953 = vunpack.c.l.b16 %v338
        %v954 = vunpack.c.h.b16 %v338
        %v955 = vunpack.c.l.b16 %v339
        %v956 = vunpack.c.h.b16 %v339
        %v957 = vunpack.c.l.b16 %v340
        %v958 = vunpack.c.h.b16 %v340
        %v959 = vunpack.c.l.b16 %v341
        %v960 = vunpack.c.h.b16 %v341
        %v961 = vunpack.c.l.b16 %v342
        %v962 = vunpack.c.h.b16 %v342
        %v963 = vunpack.c.l.b16 %v343
        %v964 = vunpack.c.h.b16 %v343
        %v965 = vunpack.c.l.b16 %v344
        %v966 = vunpack.c.h.b16 %v344
        %v967 = vunpack.c.l.b16 %v345
        %v968 = vunpack.c.h.b16 %v345
        %v969 = vunpack.c.l.b16 %v346
        %v970 = vunpack.c.h.b16 %v346
        %v971 = vunpack.c.l.b16 %v347
        %v972 = vunpack.c.h.b16 %v347
        %v973 = vunpack.c.l.b16 %v348
        %v974 = vunpack.c.h.b16 %v348
        %v975 = vunpack.c.l.b16 %v349
        %v976 = vunpack.c.h.b16 %v349
        %v977 = vunpack.c.l.b16 %v350
        %v978 = vunpack.c.h.b16 %v350
        %v979 = vunpack.c.l.b16 %v351
        %v980 = vunpack.c.h.b16 %v351
        %v981 = vunpack.c.l.b16 %v352
        %v982 = vunpack.c.h.b16 %v352
        %v983 = vunpack.c.l.b16 %v353
        %v984 = vunpack.c.h.b16 %v353
        %v985 = vunpack.c.l.b16 %v354
        %v986 = vunpack.c.h.b16 %v354
        %v987 = vunpack.c.l.b16 %v355
        %v988 = vunpack.c.h.b16 %v355
        %v989 = vunpack.c.l.b16 %v356
        %v990 = vunpack.c.h.b16 %v356
        %v991 = vunpack.c.l.b16 %v357
        %v992 = vunpack.c.h.b16 %v357
        %v993 = vunpack.c.l.b16 %v358
        %v994 = vunpack.c.h.b16 %v358
        %v995 = vunpack.c.l.b16 %v359
        %v996 = vunpack.c.h.b16 %v359
        %v997 = vunpack.c.l.b16 %v360
        %v998 = vunpack.c.h.b16 %v360
        %v999 = vunpack.c.l.b16 %v361
        %v1000 = vunpack.c.h.b16 %v361
        %v1001 = vunpack.c.l.b16 %v362
        %v1002 = vunpack.c.h.b16 %v362
        %v1003 = vunpack.c.l.b16 %v363
        %v1004 = vunpack.c.h.b16 %v363
        %v1005 = vunpack.c.l.b16 %v364
        %v1006 = vunpack.c.h.b16 %v364
        %v1007 = vunpack.c.l.b16 %v365
        %v1008 = vunpack.c.h.b16 %v365
        %v1009 = vunpack.c.l.b16 %v366
        %v1010 = vunpack.c.h.b16 %v366
        %v1011 = vunpack.c.l.b16 %v367
        %v1012 = vunpack.c.h.b16 %v367
        %v1013 = vunpack.c.l.b16 %v368
        %v1014 = vunpack.c.h.b16 %v368
        %v1015 = vunpack.c.l.b16 %v369
        %v1016 = vunpack.c.h.b16 %v369
        %v1017 = vunpack.c.l.b16 %v370
        %v1018 = vunpack.c.h.b16 %v370
        %v1019 = vunpack.c.l.b16 %v371
        %v1020 = vunpack.c.h.b16 %v371
        %v1021 = vunpack.c.l.b16 %v372
        %v1022 = vunpack.c.h.b16 %v372
        %v1023 = vunpack.c.l.b16 %v373
        %v1024 = vunpack.c.h.b16 %v373
        %v1025 = vunpack.c.l.b16 %v374
        %v1026 = vunpack.c.h.b16 %v374
        %v1027 = vunpack.c.l.b16 %v375
        %v1028 = vunpack.c.h.b16 %v375
        %v1029 = vunpack.c.l.b16 %v376
        %v1030 = vunpack.c.h.b16 %v376
        %v1031 = vunpack.c.l.b16 %v377
        %v1032 = vunpack.c.h.b16 %v377
        %v1033 = vunpack.c.l.b16 %v378
        %v1034 = vunpack.c.h.b16 %v378
        %v1035 = vunpack.c.l.b16 %v379
        %v1036 = vunpack.c.h.b16 %v379
        %v1037 = vunpack.c.l.b16 %v380
        %v1038 = vunpack.c.h.b16 %v380
        %v1039 = vunpack.c.l.b16 %v381
        %v1040 = vunpack.c.h.b16 %v381
        %v1041 = vunpack.c.l.b16 %v382
        %v1042 = vunpack.c.h.b16 %v382
        %v1043 = vunpack.c.l.b16 %v383
        %v1044 = vunpack.c.h.b16 %v383
        %v1045 = vunpack.c.l.b16 %v384
        %v1046 = vunpack.c.h.b16 %v384
        %v1047 = vunpack.c.l.b16 %v385
        %v1048 = vunpack.c.h.b16 %v385
        %v1049 = vunpack.c.l.b16 %v386
        %v1050 = vunpack.c.h.b16 %v386
        %v1051 = vunpack.c.l.b16 %v387
        %v1052 = vunpack.c.h.b16 %v387
        %v1053 = vunpack.c.l.b16 %v388
        %v1054 = vunpack.c.h.b16 %v388
        %v1055 = vunpack.c.l.b16 %v389
        %v1056 = vunpack.c.h.b16 %v389
        %v1057 = vunpack.c.l.b16 %v390
        %v1058 = vunpack.c.h.b16 %v390
        %v1059 = vunpack.c.l.b16 %v391
        %v1060 = vunpack.c.h.b16 %v391
        %v1061 = vunpack.c.l.b16 %v392
        %v1062 = vunpack.c.h.b16 %v392
        %v1063 = vunpack.c.l.b16 %v393
        %v1064 = vunpack.c.h.b16 %v393
        %v1065 = vunpack.c.l.b16 %v394
        %v1066 = vunpack.c.h.b16 %v394
        %v1067 = vunpack.c.l.b16 %v395
        %v1068 = vunpack.c.h.b16 %v395
        %v1069 = vunpack.c.l.b16 %v396
        %v1070 = vunpack.c.h.b16 %v396
        %v1071 = vunpack.c.l.b16 %v397
        %v1072 = vunpack.c.h.b16 %v397
        %v1073 = vunpack.c.l.b16 %v398
        %v1074 = vunpack.c.h.b16 %v398
        %v1075 = vunpack.c.l.b16 %v399
        %v1076 = vunpack.c.h.b16 %v399
        %v1077 = vunpack.c.l.b16 %v400
        %v1078 = vunpack.c.h.b16 %v400
        %v1079 = vunpack.c.l.b16 %v401
        %v1080 = vunpack.c.h.b16 %v401
        %v1081 = vunpack.c.l.b16 %v402
        %v1082 = vunpack.c.h.b16 %v402
        %v1083 = vunpack.c.l.b16 %v403
        %v1084 = vunpack.c.h.b16 %v403
        %v1085 = vunpack.c.l.b16 %v404
        %v1086 = vunpack.c.h.b16 %v404
        %v1087 = vunpack.c.l.b16 %v405
        %v1088 = vunpack.c.h.b16 %v405
        %v1089 = vunpack.c.l.b16 %v406
        %v1090 = vunpack.c.h.b16 %v406
        %v1091 = vunpack.c.l.b16 %v407
        %v1092 = vunpack.c.h.b16 %v407
        %v1093 = vunpack.c.l.b16 %v408
        %v1094 = vunpack.c.h.b16 %v408
        %v1095 = vunpack.c.l.b16 %v409
        %v1096 = vunpack.c.h.b16 %v409
        %v1097 = vunpack.c.l.b16 %v410
        %v1098 = vunpack.c.h.b16 %v410
        %v1099 = vunpack.c.l.b16 %v411
        %v1100 = vunpack.c.h.b16 %v411
        %v1101 = vunpack.c.l.b16 %v412
        %v1102 = vunpack.c.h.b16 %v412
        %v1103 = vunpack.c.l.b16 %v413
        %v1104 = vunpack.c.h.b16 %v413
        %v1105 = vunpack.c.l.b16 %v414
        %v1106 = vunpack.c.h.b16 %v414
        %v1107 = vunpack.c.l.b16 %v415
        %v1108 = vunpack.c.h.b16 %v415
        %v1109 = vunpack.c.l.b16 %v416
        %v1110 = vunpack.c.h.b16 %v416
        %v1111 = vunpack.c.l.b16 %v417
        %v1112 = vunpack.c.h.b16 %v417
        %v1113 = vunpack.c.l.b16 %v418
        %v1114 = vunpack.c.h.b16 %v418
        %v1115 = vunpack.c.l.b16 %v419
        %v1116 = vunpack.c.h.b16 %v419
        %v1117 = vunpack.c.l.b16 %v420
        %v1118 = vunpack.c.h.b16 %v420
        %v1119 = vunpack.c.l.b16 %v421
        %v1120 = vunpack.c.h.b16 %v421
        %v1121 = vunpack.c.l.b16 %v422
        %v1122 = vunpack.c.h.b16 %v422
        %v1123 = vunpack.c.l.b16 %v423
        %v1124 = vunpack.c.h.b16 %v423
        %v1125 = vunpack.c.l.b16 %v424
        %v1126 = vunpack.c.h.b16 %v424
        %v1127 = vunpack.c.l.b16 %v425
        %v1128 = vunpack.c.h.b16 %v425
        %v1129 = vunpack.c.l.b16 %v426
        %v1130 = vunpack.c.h.b16 %v426
        %v1131 = vunpack.c.l.b16 %v427
        %v1132 = vunpack.c.h.b16 %v427
        %v1133 = vunpack.c.l.b16 %v428
        %v1134 = vunpack.c.h.b16 %v428
        %v1135 = vunpack.c.l.b16 %v429
        %v1136 = vunpack.c.h.b16 %v429
        %v1137 = vunpack.c.l.b16 %v430
        %v1138 = vunpack.c.h.b16 %v430
        %v1139 = vunpack.c.l.b16 %v431
        %v1140 = vunpack.c.h.b16 %v431
        %v1141 = vunpack.c.l.b16 %v432
        %v1142 = vunpack.c.h.b16 %v432
        %v1143 = vunpack.c.l.b16 %v433
        %v1144 = vunpack.c.h.b16 %v433
        %v1145 = vunpack.c.l.b16 %v434
        %v1146 = vunpack.c.h.b16 %v434
        %v1147 = vunpack.c.l.b16 %v435
        %v1148 = vunpack.c.h.b16 %v435
        %v1149 = vunpack.c.l.b16 %v436
        %v1150 = vunpack.c.h.b16 %v436
        %v1151 = vunpack.c.l.b16 %v437
        %v1152 = vunpack.c.h.b16 %v437
        %v1153 = vunpack.c.l.b16 %v438
        %v1154 = vunpack.c.h.b16 %v438
        %v1155 = vunpack.c.l.b16 %v439
        %v1156 = vunpack.c.h.b16 %v439
        %v1157 = vunpack.c.l.b16 %v440
        %v1158 = vunpack.c.h.b16 %v440
        %v1159 = vunpack.c.l.b16 %v441
        %v1160 = vunpack.c.h.b16 %v441
        %v1161 = vunpack.c.l.b16 %v442
        %v1162 = vunpack.c.h.b16 %v442
        %v1163 = vunpack.c.l.b16 %v443
        %v1164 = vunpack.c.h.b16 %v443
        %v1165 = vunpack.c.l.b16 %v444
        %v1166 = vunpack.c.h.b16 %v444
        %v1167 = vunpack.c.l.b16 %v445
        %v1168 = vunpack.c.h.b16 %v445
        %v1169 = vunpack.c.l.b16 %v446
        %v1170 = vunpack.c.h.b16 %v446
        %v1171 = vunpack.c.l.b16 %v447
        %v1172 = vunpack.c.h.b16 %v447
        %v1173 = vunpack.c.l.b16 %v448
        %v1174 = vunpack.c.h.b16 %v448
        %v1175 = vunpack.c.l.b16 %v449
        %v1176 = vunpack.c.h.b16 %v449
        %v1177 = vunpack.c.l.b16 %v450
        %v1178 = vunpack.c.h.b16 %v450
        %v1179 = vunpack.c.l.b16 %v451
        %v1180 = vunpack.c.h.b16 %v451
        %v1181 = vunpack.c.l.b16 %v452
        %v1182 = vunpack.c.h.b16 %v452
        %v1183 = vunpack.c.l.b16 %v453
        %v1184 = vunpack.c.h.b16 %v453
        %v1185 = vunpack.c.l.b16 %v454
        %v1186 = vunpack.c.h.b16 %v454
        %v1187 = vunpack.c.l.b16 %v455
        %v1188 = vunpack.c.h.b16 %v455
        %v1189 = vunpack.c.l.b16 %v456
        %v1190 = vunpack.c.h.b16 %v456
        %v1191 = vunpack.c.l.b16 %v457
        %v1192 = vunpack.c.h.b16 %v457
        %v1193 = vunpack.c.l.b16 %v458
        %v1194 = vunpack.c.h.b16 %v458
        %v1195 = vunpack.c.l.b16 %v459
        %v1196 = vunpack.c.h.b16 %v459
        %v1197 = vunpack.c.l.b16 %v460
        %v1198 = vunpack.c.h.b16 %v460
        %v1199 = vunpack.c.l.b16 %v461
        %v1200 = vunpack.c.h.b16 %v461
        %v1201 = vunpack.c.l.b16 %v462
        %v1202 = vunpack.c.h.b16 %v462
        %v1203 = vunpack.c.l.b16 %v463
        %v1204 = vunpack.c.h.b16 %v463
        %v1205 = vunpack.c.l.b16 %v464
        %v1206 = vunpack.c.h.b16 %v464
        %v1207 = vunpack.c.l.b16 %v465
        %v1208 = vunpack.c.h.b16 %v465
        %v1209 = vunpack.c.l.b16 %v466
        %v1210 = vunpack.c.h.b16 %v466
        %v1211 = vunpack.c.l.b16 %v467
        %v1212 = vunpack.c.h.b16 %v467
        %v1213 = vunpack.c.l.b16 %v468
        %v1214 = vunpack.c.h.b16 %v468
        %v1215 = vunpack.c.l.b16 %v469
        %v1216 = vunpack.c.h.b16 %v469
        %v1217 = vunpack.c.l.b16 %v470
        %v1218 = vunpack.c.h.b16 %v470
        %v1219 = vunpack.c.l.b16 %v471
        %v1220 = vunpack.c.h.b16 %v471
        %v1221 = vunpack.c.l.b16 %v472
        %v1222 = vunpack.c.h.b16 %v472
        %v1223 = vunpack.c.l.b16 %v473
        %v1224 = vunpack.c.h.b16 %v473
        %v1225 = vunpack.c.l.b16 %v474
        %v1226 = vunpack.c.h.b16 %v474
        %v1227 = vunpack.c.l.b16 %v475
        %v1228 = vunpack.c.h.b16 %v475
        %v1229 = vunpack.c.l.b16 %v476
        %v1230 = vunpack.c.h.b16 %v476
        %v1231 = vunpack.c.l.b16 %v477
        %v1232 = vunpack.c.h.b16 %v477
        %v1233 = vunpack.c.l.b16 %v478
        %v1234 = vunpack.c.h.b16 %v478
        %v1235 = vunpack.c.l.b16 %v479
        %v1236 = vunpack.c.h.b16 %v479
        %v1237 = vunpack.c.l.b16 %v480
        %v1238 = vunpack.c.h.b16 %v480
        %v1239 = vunpack.c.l.b16 %v481
        %v1240 = vunpack.c.h.b16 %v481
        %v1241 = vunpack.c.l.b16 %v482
        %v1242 = vunpack.c.h.b16 %v482
        %v1243 = vunpack.c.l.b16 %v483
        %v1244 = vunpack.c.h.b16 %v483
        %v1245 = vunpack.c.l.b16 %v484
        %v1246 = vunpack.c.h.b16 %v484
        %v1247 = vunpack.c.l.b16 %v485
        %v1248 = vunpack.c.h.b16 %v485
        %v1249 = vunpack.c.l.b16 %v486
        %v1250 = vunpack.c.h.b16 %v486
        %v1251 = vunpack.c.l.b16 %v487
        %v1252 = vunpack.c.h.b16 %v487
        %v1253 = vunpack.c.l.b16 %v488
        %v1254 = vunpack.c.h.b16 %v488
        %v1255 = vunpack.c.l.b16 %v489
        %v1256 = vunpack.c.h.b16 %v489
        %v1257 = vunpack.c.l.b16 %v490
        %v1258 = vunpack.c.h.b16 %v490
        %v1259 = vunpack.c.l.b16 %v491
        %v1260 = vunpack.c.h.b16 %v491
        %v1261 = vunpack.c.l.b16 %v492
        %v1262 = vunpack.c.h.b16 %v492
        %v1263 = vunpack.c.l.b16 %v493
        %v1264 = vunpack.c.h.b16 %v493
        %v1265 = vunpack.c.l.b16 %v494
        %v1266 = vunpack.c.h.b16 %v494
        %v1267 = vunpack.c.l.b16 %v495
        %v1268 = vunpack.c.h.b16 %v495
        %v1269 = vunpack.c.l.b16 %v496
        %v1270 = vunpack.c.h.b16 %v496
        %v1271 = vunpack.c.l.b16 %v497
        %v1272 = vunpack.c.h.b16 %v497
        %v1273 = vunpack.c.l.b16 %v498
        %v1274 = vunpack.c.h.b16 %v498
        %v1275 = vunpack.c.l.b16 %v499
        %v1276 = vunpack.c.h.b16 %v499
        %v1277 = vunpack.c.l.b16 %v500
        %v1278 = vunpack.c.h.b16 %v500
        %v1279 = vunpack.c.l.b16 %v501
        %v1280 = vunpack.c.h.b16 %v501
        %v1281 = vunpack.c.l.b16 %v502
        %v1282 = vunpack.c.h.b16 %v502
        %v1283 = vunpack.c.l.b16 %v503
        %v1284 = vunpack.c.h.b16 %v503
        %v1285 = vunpack.c.l.b16 %v504
        %v1286 = vunpack.c.h.b16 %v504
        %v1287 = vunpack.c.l.b16 %v505
        %v1288 = vunpack.c.h.b16 %v505
        %v1289 = vunpack.c.l.b16 %v506
        %v1290 = vunpack.c.h.b16 %v506
        %v1291 = vunpack.c.l.b16 %v507
        %v1292 = vunpack.c.h.b16 %v507
        %v1293 = vunpack.c.l.b16 %v508
        %v1294 = vunpack.c.h.b16 %v508
        %v1295 = vunpack.c.l.b16 %v509
        %v1296 = vunpack.c.h.b16 %v509
        %v1297 = vunpack.c.l.b16 %v510
        %v1298 = vunpack.c.h.b16 %v510
        %v1299 = vunpack.c.l.b16 %v511
        %v1300 = vunpack.c.h.b16 %v511
        %v1301 = vunpack.c.l.b16 %v512
        %v1302 = vunpack.c.h.b16 %v512
        %v1303 = vunpack.c.l.b16 %v513
        %v1304 = vunpack.c.h.b16 %v513
        %v1305 = vunpack.c.l.b16 %v514
        %v1306 = vunpack.c.h.b16 %v514
        %v1307 = vunpack.c.l.b16 %v515
        %v1308 = vunpack.c.h.b16 %v515
        %v1309 = vunpack.c.l.b16 %v516
        %v1310 = vunpack.c.h.b16 %v516
        %v1311 = vunpack.c.l.b16 %v517
        %v1312 = vunpack.c.h.b16 %v517
        %v1313 = vunpack.c.l.b16 %v518
        %v1314 = vunpack.c.h.b16 %v518
        %v1315 = vunpack.c.l.b16 %v519
        %v1316 = vunpack.c.h.b16 %v519
        %v1317 = vunpack.c.l.b16 %v520
        %v1318 = vunpack.c.h.b16 %v520
        %v1319 = vunpack.c.l.b16 %v521
        %v1320 = vunpack.c.h.b16 %v521
        %v1321 = vunpack.c.l.b16 %v522
        %v1322 = vunpack.c.h.b16 %v522
        %v1323 = vunpack.c.l.b16 %v523
        %v1324 = vunpack.c.h.b16 %v523
        %v1325 = vunpack.c.l.b16 %v524
        %v1326 = vunpack.c.h.b16 %v524
        %v1327 = vunpack.c.l.b16 %v525
        %v1328 = vunpack.c.h.b16 %v525
        %v1329 = vunpack.c.l.b16 %v526
        %v1330 = vunpack.c.h.b16 %v526
        %v1331 = vunpack.c.l.b16 %v527
        %v1332 = vunpack.c.h.b16 %v527
        %v1333 = vunpack.c.l.b16 %v528
        %v1334 = vunpack.c.h.b16 %v528
        %v1335 = vunpack.c.l.b16 %v529
        %v1336 = vunpack.c.h.b16 %v529
        %v1337 = vunpack.c.l.b16 %v530
        %v1338 = vunpack.c.h.b16 %v530
        %v1339 = vunpack.c.l.b16 %v531
        %v1340 = vunpack.c.h.b16 %v531
        %v1341 = vunpack.c.l.b16 %v532
        %v1342 = vunpack.c.h.b16 %v532
        %v1343 = vunpack.c.l.b16 %v533
        %v1344 = vunpack.c.h.b16 %v533
        %v1345 = vunpack.c.l.b16 %v534
        %v1346 = vunpack.c.h.b16 %v534
        %v1347 = vunpack.c.l.b16 %v535
        %v1348 = vunpack.c.h.b16 %v535
        %v1349 = vunpack.c.l.b16 %v536
        %v1350 = vunpack.c.h.b16 %v536
        %v1351 = vunpack.c.l.b16 %v537
        %v1352 = vunpack.c.h.b16 %v537
        %v1353 = vunpack.c.l.b16 %v538
        %v1354 = vunpack.c.h.b16 %v538
        %v1355 = vunpack.c.l.b16 %v539
        %v1356 = vunpack.c.h.b16 %v539
        %v1357 = vunpack.c.l.b16 %v540
        %v1358 = vunpack.c.h.b16 %v540
        %v1359 = vpack.c.b16 %v851, %v847
        %v1360 = vpack.c.b16 %v852, %v848
        %v1361 = vpack.c.b16 %v853, %v849
        %v1362 = vpack.c.b16 %v854, %v850
        %v1363 = vpack.c.b16 %v859, %v855
        %v1364 = vpack.c.b16 %v860, %v856
        %v1365 = vpack.c.b16 %v861, %v857
        %v1366 = vpack.c.b16 %v862, %v858
        %v1367 = vpack.c.b16 %v867, %v863
        %v1368 = vpack.c.b16 %v868, %v864
        %v1369 = vpack.c.b16 %v869, %v865
        %v1370 = vpack.c.b16 %v870, %v866
        %v1371 = vpack.c.b16 %v875, %v871
        %v1372 = vpack.c.b16 %v876, %v872
        %v1373 = vpack.c.b16 %v877, %v873
        %v1374 = vpack.c.b16 %v878, %v874
        %v1375 = vpack.c.b16 %v883, %v879
        %v1376 = vpack.c.b16 %v884, %v880
        %v1377 = vpack.c.b16 %v885, %v881
        %v1378 = vpack.c.b16 %v886, %v882
        %v1379 = vpack.c.b16 %v891, %v887
        %v1380 = vpack.c.b16 %v892, %v888
        %v1381 = vpack.c.b16 %v893, %v889
        %v1382 = vpack.c.b16 %v894, %v890
        %v1383 = vpack.c.b16 %v899, %v895
        %v1384 = vpack.c.b16 %v900, %v896
        %v1385 = vpack.c.b16 %v901, %v897
        %v1386 = vpack.c.b16 %v902, %v898
        %v1387 = vpack.c.b16 %v907, %v903
        %v1388 = vpack.c.b16 %v908, %v904
        %v1389 = vpack.c.b16 %v909, %v905
        %v1390 = vpack.c.b16 %v910, %v906
        %v1391 = vpack.c.b16 %v915, %v911
        %v1392 = vpack.c.b16 %v916, %v912
        %v1393 = vpack.c.b16 %v917, %v913
        %v1394 = vpack.c.b16 %v918, %v914
        %v1395 = vpack.c.b16 %v923, %v919
        %v1396 = vpack.c.b16 %v924, %v920
        %v1397 = vpack.c.b16 %v925, %v921
        %v1398 = vpack.c.b16 %v926, %v922
        %v1399 = vpack.c.b16 %v931, %v927
        %v1400 = vpack.c.b16 %v932, %v928
        %v1401 = vpack.c.b16 %v933, %v929
        %v1402 = vpack.c.b16 %v934, %v930
        %v1403 = vpack.c.b16 %v939, %v935
        %v1404 = vpack.c.b16 %v940, %v936
        %v1405 = vpack.c.b16 %v941, %v937
        %v1406 = vpack.c.b16 %v942, %v938
        %v1407 = vpack.c.b16 %v947, %v943
        %v1408 = vpack.c.b16 %v948, %v944
        %v1409 = vpack.c.b16 %v949, %v945
        %v1410 = vpack.c.b16 %v950, %v946
        %v1411 = vpack.c.b16 %v955, %v951
        %v1412 = vpack.c.b16 %v956, %v952
        %v1413 = vpack.c.b16 %v957, %v953
        %v1414 = vpack.c.b16 %v958, %v954
        %v1415 = vpack.c.b16 %v963, %v959
        %v1416 = vpack.c.b16 %v964, %v960
        %v1417 = vpack.c.b16 %v965, %v961
        %v1418 = vpack.c.b16 %v966, %v962
        %v1419 = vpack.c.b16 %v971, %v967
        %v1420 = vpack.c.b16 %v972, %v968
        %v1421 = vpack.c.b16 %v973, %v969
        %v1422 = vpack.c.b16 %v974, %v970
        %v1423 = vpack.c.b16 %v979, %v975
        %v1424 = vpack.c.b16 %v980, %v976
        %v1425 = vpack.c.b16 %v981, %v977
        %v1426 = vpack.c.b16 %v982, %v978
        %v1427 = vpack.c.b16 %v987, %v983
        %v1428 = vpack.c.b16 %v988, %v984
        %v1429 = vpack.c.b16 %v989, %v985
        %v1430 = vpack.c.b16 %v990, %v986
        %v1431 = vpack.c.b16 %v995, %v991
        %v1432 = vpack.c.b16 %v996, %v992
        %v1433 = vpack.c.b16 %v997, %v993
        %v1434 = vpack.c.b16 %v998, %v994
        %v1435 = vpack.c.b16 %v1003, %v999
        %v1436 = vpack.c.b16 %v1004, %v1000
        %v1437 = vpack.c.b16 %v1005, %v1001
        %v1438 = vpack.c.b16 %v1006, %v1002
        %v1439 = vpack.c.b16 %v1011, %v1007
        %v1440 = vpack.c.b16 %v1012, %v1008
        %v1441 = vpack.c.b16 %v1013, %v1009
        %v1442 = vpack.c.b16 %v1014, %v1010
        %v1443 = vpack.c.b16 %v1019, %v1015
        %v1444 = vpack.c.b16 %v1020, %v1016
        %v1445 = vpack.c.b16 %v1021, %v1017
        %v1446 = vpack.c.b16 %v1022, %v1018
        %v1447 = vpack.c.b16 %v1027, %v1023
        %v1448 = vpack.c.b16 %v1028, %v1024
        %v1449 = vpack.c.b16 %v1029, %v1025
        %v1450 = vpack.c.b16 %v1030, %v1026
        %v1451 = vpack.c.b16 %v1035, %v1031
        %v1452 = vpack.c.b16 %v1036, %v1032
        %v1453 = vpack.c.b16 %v1037, %v1033
        %v1454 = vpack.c.b16 %v1038, %v1034
        %v1455 = vpack.c.b16 %v1043, %v1039
        %v1456 = vpack.c.b16 %v1044, %v1040
        %v1457 = vpack.c.b16 %v1045, %v1041
        %v1458 = vpack.c.b16 %v1046, %v1042
        %v1459 = vpack.c.b16 %v1051, %v1047
        %v1460 = vpack.c.b16 %v1052, %v1048
        %v1461 = vpack.c.b16 %v1053, %v1049
        %v1462 = vpack.c.b16 %v1054, %v1050
        %v1463 = vpack.c.b16 %v1059, %v1055
        %v1464 = vpack.c.b16 %v1060, %v1056
        %v1465 = vpack.c.b16 %v1061, %v1057
        %v1466 = vpack.c.b16 %v1062, %v1058
        %v1467 = vpack.c.b16 %v1067, %v1063
        %v1468 = vpack.c.b16 %v1068, %v1064
        %v1469 = vpack.c.b16 %v1069, %v1065
        %v1470 = vpack.c.b16 %v1070, %v1066
        %v1471 = vpack.c.b16 %v1075, %v1071
        %v1472 = vpack.c.b16 %v1076, %v1072
        %v1473 = vpack.c.b16 %v1077, %v1073
        %v1474 = vpack.c.b16 %v1078, %v1074
        %v1475 = vpack.c.b16 %v1083, %v1079
        %v1476 = vpack.c.b16 %v1084, %v1080
        %v1477 = vpack.c.b16 %v1085, %v1081
        %v1478 = vpack.c.b16 %v1086, %v1082
        %v1479 = vpack.c.b16 %v1091, %v1087
        %v1480 = vpack.c.b16 %v1092, %v1088
        %v1481 = vpack.c.b16 %v1093, %v1089
        %v1482 = vpack.c.b16 %v1094, %v1090
        %v1483 = vpack.c.b16 %v1099, %v1095
        %v1484 = vpack.c.b16 %v1100, %v1096
        %v1485 = vpack.c.b16 %v1101, %v1097
        %v1486 = vpack.c.b16 %v1102, %v1098
        %v1487 = vpack.c.b16 %v1107, %v1103
        %v1488 = vpack.c.b16 %v1108, %v1104
        %v1489 = vpack.c.b16 %v1109, %v1105
        %v1490 = vpack.c.b16 %v1110, %v1106
        %v1491 = vpack.c.b16 %v1115, %v1111
        %v1492 = vpack.c.b16 %v1116, %v1112
        %v1493 = vpack.c.b16 %v1117, %v1113
        %v1494 = vpack.c.b16 %v1118, %v1114
        %v1495 = vpack.c.b16 %v1123, %v1119
        %v1496 = vpack.c.b16 %v1124, %v1120
        %v1497 = vpack.c.b16 %v1125, %v1121
        %v1498 = vpack.c.b16 %v1126, %v1122
        %v1499 = vpack.c.b16 %v1131, %v1127
        %v1500 = vpack.c.b16 %v1132, %v1128
        %v1501 = vpack.c.b16 %v1133, %v1129
        %v1502 = vpack.c.b16 %v1134, %v1130
        %v1503 = vpack.c.b16 %v1139, %v1135
        %v1504 = vpack.c.b16 %v1140, %v1136
        %v1505 = vpack.c.b16 %v1141, %v1137
        %v1506 = vpack.c.b16 %v1142, %v1138
        %v1507 = vpack.c.b16 %v1147, %v1143
        %v1508 = vpack.c.b16 %v1148, %v1144
        %v1509 = vpack.c.b16 %v1149, %v1145
        %v1510 = vpack.c.b16 %v1150, %v1146
        %v1511 = vpack.c.b16 %v1155, %v1151
        %v1512 = vpack.c.b16 %v1156, %v1152
        %v1513 = vpack.c.b16 %v1157, %v1153
        %v1514 = vpack.c.b16 %v1158, %v1154
        %v1515 = vpack.c.b16 %v1163, %v1159
        %v1516 = vpack.c.b16 %v1164, %v1160
        %v1517 = vpack.c.b16 %v1165, %v1161
        %v1518 = vpack.c.b16 %v1166, %v1162
        %v1519 = vpack.c.b16 %v1171, %v1167
        %v1520 = vpack.c.b16 %v1172, %v1168
        %v1521 = vpack.c.b16 %v1173, %v1169
        %v1522 = vpack.c.b16 %v1174, %v1170
        %v1523 = vpack.c.b16 %v1179, %v1175
        %v1524 = vpack.c.b16 %v1180, %v1176
        %v1525 = vpack.c.b16 %v1181, %v1177
        %v1526 = vpack.c.b16 %v1182, %v1178
        %v1527 = vpack.c.b16 %v1187, %v1183
        %v1528 = vpack.c.b16 %v1188, %v1184
        %v1529 = vpack.c.b16 %v1189, %v1185
        %v1530 = vpack.c.b16 %v1190, %v1186
        %v1531 = vpack.c.b16 %v1195, %v1191
        %v1532 = vpack.c.b16 %v1196, %v1192
        %v1533 = vpack.c.b16 %v1197, %v1193
        %v1534 = vpack.c.b16 %v1198, %v1194
        %v1535 = vpack.c.b16 %v1203, %v1199
        %v1536 = vpack.c.b16 %v1204, %v1200
        %v1537 = vpack.c.b16 %v1205, %v1201
        %v1538 = vpack.c.b16 %v1206, %v1202
        %v1539 = vpack.c.b16 %v1211, %v1207
        %v1540 = vpack.c.b16 %v1212, %v1208
        %v1541 = vpack.c.b16 %v1213, %v1209
        %v1542 = vpack.c.b16 %v1214, %v1210
        %v1543 = vpack.c.b16 %v1219, %v1215
        %v1544 = vpack.c.b16 %v1220, %v1216
        %v1545 = vpack.c.b16 %v1221, %v1217
        %v1546 = vpack.c.b16 %v1222, %v1218
        %v1547 = vpack.c.b16 %v1227, %v1223
        %v1548 = vpack.c.b16 %v1228, %v1224
        %v1549 = vpack.c.b16 %v1229, %v1225
        %v1550 = vpack.c.b16 %v1230, %v1226
        %v1551 = vpack.c.b16 %v1235, %v1231
        %v1552 = vpack.c.b16 %v1236, %v1232
        %v1553 = vpack.c.b16 %v1237, %v1233
        %v1554 = vpack.c.b16 %v1238, %v1234
        %v1555 = vpack.c.b16 %v1243, %v1239
        %v1556 = vpack.c.b16 %v1244, %v1240
        %v1557 = vpack.c.b16 %v1245, %v1241
        %v1558 = vpack.c.b16 %v1246, %v1242
        %v1559 = vpack.c.b16 %v1251, %v1247
        %v1560 = vpack.c.b16 %v1252, %v1248
        %v1561 = vpack.c.b16 %v1253, %v1249
        %v1562 = vpack.c.b16 %v1254, %v1250
        %v1563 = vpack.c.b16 %v1259, %v1255
        %v1564 = vpack.c.b16 %v1260, %v1256
        %v1565 = vpack.c.b16 %v1261, %v1257
        %v1566 = vpack.c.b16 %v1262, %v1258
        %v1567 = vpack.c.b16 %v1267, %v1263
        %v1568 = vpack.c.b16 %v1268, %v1264
        %v1569 = vpack.c.b16 %v1269, %v1265
        %v1570 = vpack.c.b16 %v1270, %v1266
        %v1571 = vpack.c.b16 %v1275, %v1271
        %v1572 = vpack.c.b16 %v1276, %v1272
        %v1573 = vpack.c.b16 %v1277, %v1273
        %v1574 = vpack.c.b16 %v1278, %v1274
        %v1575 = vpack.c.b16 %v1283, %v1279
        %v1576 = vpack.c.b16 %v1284, %v1280
        %v1577 = vpack.c.b16 %v1285, %v1281
        %v1578 = vpack.c.b16 %v1286, %v1282
        %v1579 = vpack.c.b16 %v1291, %v1287
        %v1580 = vpack.c.b16 %v1292, %v1288
        %v1581 = vpack.c.b16 %v1293, %v1289
        %v1582 = vpack.c.b16 %v1294, %v1290
        %v1583 = vpack.c.b16 %v1299, %v1295
        %v1584 = vpack.c.b16 %v1300, %v1296
        %v1585 = vpack.c.b16 %v1301, %v1297
        %v1586 = vpack.c.b16 %v1302, %v1298
        %v1587 = vpack.c.b16 %v1307, %v1303
        %v1588 = vpack.c.b16 %v1308, %v1304
        %v1589 = vpack.c.b16 %v1309, %v1305
        %v1590 = vpack.c.b16 %v1310, %v1306
        %v1591 = vpack.c.b16 %v1315, %v1311
        %v1592 = vpack.c.b16 %v1316, %v1312
        %v1593 = vpack.c.b16 %v1317, %v1313
        %v1594 = vpack.c.b16 %v1318, %v1314
        %v1595 = vpack.c.b16 %v1323, %v1319
        %v1596 = vpack.c.b16 %v1324, %v1320
        %v1597 = vpack.c.b16 %v1325, %v1321
        %v1598 = vpack.c.b16 %v1326, %v1322
        %v1599 = vpack.c.b16 %v1331, %v1327
        %v1600 = vpack.c.b16 %v1332, %v1328
        %v1601 = vpack.c.b16 %v1333, %v1329
        %v1602 = vpack.c.b16 %v1334, %v1330
        %v1603 = vpack.c.b16 %v1339, %v1335
        %v1604 = vpack.c.b16 %v1340, %v1336
        %v1605 = vpack.c.b16 %v1341, %v1337
        %v1606 = vpack.c.b16 %v1342, %v1338
        %v1607 = vpack.c.b16 %v1347, %v1343
        %v1608 = vpack.c.b16 %v1348, %v1344
        %v1609 = vpack.c.b16 %v1349, %v1345
        %v1610 = vpack.c.b16 %v1350, %v1346
        %v1611 = vpack.c.b16 %v1355, %v1351
        %v1612 = vpack.c.b16 %v1356, %v1352
        %v1613 = vpack.c.b16 %v1357, %v1353
        %v1614 = vpack.c.b16 %v1358, %v1354
        %1871 = vmatprep.subr.bf16.mxu0 %v1388
        %1872 = vmatpush1.bf16.msra.mxu0 %v1387
        %1873 = vmatprep.subr.bf16.mxu0 %v1384
        %1874 = vmatpush1.bf16.msra.mxu0 %v1383
        %1875 = vmatprep.subr.bf16.mxu0 %v1380
        %1876 = vmatpush1.bf16.msra.mxu0 %v1379
        %1877 = vmatprep.subr.bf16.mxu0 %v1376
        %1878 = vmatpush1.bf16.msra.mxu0 %v1375
        %1879 = vmatprep.subr.bf16.mxu0 %v1372
        %1880 = vmatpush1.bf16.msra.mxu0 %v1371
        %1881 = vmatprep.subr.bf16.mxu0 %v1368
        %1882 = vmatpush1.bf16.msra.mxu0 %v1367
        %1883 = vmatprep.subr.bf16.mxu0 %v1364
        %1884 = vmatpush1.bf16.msra.mxu0 %v1363
        %1885 = vmatprep.subr.bf16.mxu0 %v1360
        %1886 = vmatpush1.bf16.msra.mxu0 %v1359
        %1887 = vmatprep.subr.bf16.mxu0 %v1420
        %1888 = vmatpush2.bf16.msra.mxu0 %v1419
        %1889 = vmatprep.subr.bf16.mxu0 %v1416
        %1890 = vmatpush2.bf16.msra.mxu0 %v1415
        %1891 = vmatprep.subr.bf16.mxu0 %v1412
        %1892 = vmatpush2.bf16.msra.mxu0 %v1411
        %1893 = vmatprep.subr.bf16.mxu0 %v1408
        %1894 = vmatpush2.bf16.msra.mxu0 %v1407
        %1895 = vmatprep.subr.bf16.mxu0 %v1404
        %1896 = vmatpush2.bf16.msra.mxu0 %v1403
        %1897 = vmatprep.subr.bf16.mxu0 %v1400
        %1898 = vmatpush2.bf16.msra.mxu0 %v1399
        %1899 = vmatprep.subr.bf16.mxu0 %v1396
        %1900 = vmatpush2.bf16.msra.mxu0 %v1395
        %1901 = vmatprep.subr.bf16.mxu0 %v1392
        %1902 = vmatpush2.bf16.msra.mxu0 %v1391
        %1903 = vmatprep.mubr.bf16.mxu0 %v576
        %1904 = vmatmul.mubr.bf16.gmra.mxu0 %v575
        %v1905 = vpop.f32.mrf.mxu0
        %v1906 = vadd.f32 %v546, %v1905
        %v1907 = vpop.f32.mrf.mxu0
        %v1908 = vadd.f32 %v550, %v1907
        %v1909 = vpop.f32.mrf.mxu0
        %v1910 = vpop.f32.mrf.mxu0
        %1911 = vdwg.mxu0
        %1912 = vmatprep.subr.bf16.mxu0 %v1452
        %1913 = vmatpush1.bf16.msra.mxu0 %v1451
        %1914 = vmatprep.subr.bf16.mxu0 %v1448
        %1915 = vmatpush1.bf16.msra.mxu0 %v1447
        %1916 = vmatprep.subr.bf16.mxu0 %v1444
        %1917 = vmatpush1.bf16.msra.mxu0 %v1443
        %1918 = vmatprep.subr.bf16.mxu0 %v1440
        %1919 = vmatpush1.bf16.msra.mxu0 %v1439
        %1920 = vmatprep.subr.bf16.mxu0 %v1436
        %1921 = vmatpush1.bf16.msra.mxu0 %v1435
        %1922 = vmatprep.subr.bf16.mxu0 %v1432
        %1923 = vmatpush1.bf16.msra.mxu0 %v1431
        %1924 = vmatprep.subr.bf16.mxu0 %v1428
        %1925 = vmatpush1.bf16.msra.mxu0 %v1427
        %1926 = vmatprep.subr.bf16.mxu0 %v1424
        %1927 = vmatpush1.bf16.msra.mxu0 %v1423
        %1928 = vmatprep.subr.bf16.mxu0 %v1484
        %1929 = vmatpush2.bf16.msra.mxu0 %v1483
        %1930 = vmatprep.subr.bf16.mxu0 %v1480
        %1931 = vmatpush2.bf16.msra.mxu0 %v1479
        %1932 = vmatprep.subr.bf16.mxu0 %v1476
        %1933 = vmatpush2.bf16.msra.mxu0 %v1475
        %1934 = vmatprep.subr.bf16.mxu0 %v1472
        %1935 = vmatpush2.bf16.msra.mxu0 %v1471
        %1936 = vmatprep.subr.bf16.mxu0 %v1468
        %1937 = vmatpush2.bf16.msra.mxu0 %v1467
        %1938 = vmatprep.subr.bf16.mxu0 %v1464
        %1939 = vmatpush2.bf16.msra.mxu0 %v1463
        %1940 = vmatprep.subr.bf16.mxu0 %v1460
        %1941 = vmatpush2.bf16.msra.mxu0 %v1459
        %1942 = vmatprep.subr.bf16.mxu0 %v1456
        %1943 = vmatpush2.bf16.msra.mxu0 %v1455
        %1944 = vmatprep.mubr.bf16.mxu0 %v578
        %1945 = vmatmul.mubr.bf16.gmra.mxu0 %v577
        %v1946 = vpop.f32.mrf.mxu0
        %v1947 = vadd.f32 %v1906, %v1946
        %v1948 = vpop.f32.mrf.mxu0
        %v1949 = vadd.f32 %v1908, %v1948
        %v1950 = vpop.f32.mrf.mxu0
        %v1951 = vpop.f32.mrf.mxu0
        %1952 = vdwg.mxu0
        %1953 = vmatprep.subr.bf16.mxu0 %v1516
        %1954 = vmatpush1.bf16.msra.mxu0 %v1515
        %1955 = vmatprep.subr.bf16.mxu0 %v1512
        %1956 = vmatpush1.bf16.msra.mxu0 %v1511
        %1957 = vmatprep.subr.bf16.mxu0 %v1508
        %1958 = vmatpush1.bf16.msra.mxu0 %v1507
        %1959 = vmatprep.subr.bf16.mxu0 %v1504
        %1960 = vmatpush1.bf16.msra.mxu0 %v1503
        %1961 = vmatprep.subr.bf16.mxu0 %v1500
        %1962 = vmatpush1.bf16.msra.mxu0 %v1499
        %1963 = vmatprep.subr.bf16.mxu0 %v1496
        %1964 = vmatpush1.bf16.msra.mxu0 %v1495
        %1965 = vmatprep.subr.bf16.mxu0 %v1492
        %1966 = vmatpush1.bf16.msra.mxu0 %v1491
        %1967 = vmatprep.subr.bf16.mxu0 %v1488
        %1968 = vmatpush1.bf16.msra.mxu0 %v1487
        %1969 = vmatprep.subr.bf16.mxu0 %v1548
        %1970 = vmatpush2.bf16.msra.mxu0 %v1547
        %1971 = vmatprep.subr.bf16.mxu0 %v1544
        %1972 = vmatpush2.bf16.msra.mxu0 %v1543
        %1973 = vmatprep.subr.bf16.mxu0 %v1540
        %1974 = vmatpush2.bf16.msra.mxu0 %v1539
        %1975 = vmatprep.subr.bf16.mxu0 %v1536
        %1976 = vmatpush2.bf16.msra.mxu0 %v1535
        %1977 = vmatprep.subr.bf16.mxu0 %v1532
        %1978 = vmatpush2.bf16.msra.mxu0 %v1531
        %1979 = vmatprep.subr.bf16.mxu0 %v1528
        %1980 = vmatpush2.bf16.msra.mxu0 %v1527
        %1981 = vmatprep.subr.bf16.mxu0 %v1524
        %1982 = vmatpush2.bf16.msra.mxu0 %v1523
        %1983 = vmatprep.subr.bf16.mxu0 %v1520
        %1984 = vmatpush2.bf16.msra.mxu0 %v1519
        %1985 = vmatprep.mubr.bf16.mxu0 %v580
        %1986 = vmatmul.mubr.bf16.gmra.mxu0 %v579
        %v1987 = vpop.f32.mrf.mxu0
        %v1988 = vadd.f32 %v1947, %v1987
        %v1989 = vpop.f32.mrf.mxu0
        %v1990 = vadd.f32 %v1949, %v1989
        %v1991 = vpop.f32.mrf.mxu0
        %v1992 = vpop.f32.mrf.mxu0
        %1993 = vdwg.mxu0
        %1994 = vmatprep.subr.bf16.mxu0 %v1580
        %1995 = vmatpush1.bf16.msra.mxu0 %v1579
        %1996 = vmatprep.subr.bf16.mxu0 %v1576
        %1997 = vmatpush1.bf16.msra.mxu0 %v1575
        %1998 = vmatprep.subr.bf16.mxu0 %v1572
        %1999 = vmatpush1.bf16.msra.mxu0 %v1571
        %2000 = vmatprep.subr.bf16.mxu0 %v1568
        %2001 = vmatpush1.bf16.msra.mxu0 %v1567
        %2002 = vmatprep.subr.bf16.mxu0 %v1564
        %2003 = vmatpush1.bf16.msra.mxu0 %v1563
        %2004 = vmatprep.subr.bf16.mxu0 %v1560
        %2005 = vmatpush1.bf16.msra.mxu0 %v1559
        %2006 = vmatprep.subr.bf16.mxu0 %v1556
        %2007 = vmatpush1.bf16.msra.mxu0 %v1555
        %2008 = vmatprep.subr.bf16.mxu0 %v1552
        %2009 = vmatpush1.bf16.msra.mxu0 %v1551
        %2010 = vmatprep.subr.bf16.mxu0 %v1612
        %2011 = vmatpush2.bf16.msra.mxu0 %v1611
        %2012 = vmatprep.subr.bf16.mxu0 %v1608
        %2013 = vmatpush2.bf16.msra.mxu0 %v1607
        %2014 = vmatprep.subr.bf16.mxu0 %v1604
        %2015 = vmatpush2.bf16.msra.mxu0 %v1603
        %2016 = vmatprep.subr.bf16.mxu0 %v1600
        %2017 = vmatpush2.bf16.msra.mxu0 %v1599
        %2018 = vmatprep.subr.bf16.mxu0 %v1596
        %2019 = vmatpush2.bf16.msra.mxu0 %v1595
        %2020 = vmatprep.subr.bf16.mxu0 %v1592
        %2021 = vmatpush2.bf16.msra.mxu0 %v1591
        %2022 = vmatprep.subr.bf16.mxu0 %v1588
        %2023 = vmatpush2.bf16.msra.mxu0 %v1587
        %2024 = vmatprep.subr.bf16.mxu0 %v1584
        %2025 = vmatpush2.bf16.msra.mxu0 %v1583
        %2026 = vmatprep.mubr.bf16.mxu0 %v582
        %2027 = vmatmul.mubr.bf16.gmra.mxu0 %v581
        %v2028 = vpop.f32.mrf.mxu0
        %v2029 = vadd.f32 %v1988, %v2028
        %v2030 = vpop.f32.mrf.mxu0
        %v2031 = vadd.f32 %v1990, %v2030
        %v2032 = vpop.f32.mrf.mxu0
        %v2033 = vpop.f32.mrf.mxu0
        %2034 = vdwg.mxu0
        %2035 = vmatprep.subr.bf16.mxu0 %v1390
        %2036 = vmatpush1.bf16.msra.mxu0 %v1389
        %2037 = vmatprep.subr.bf16.mxu0 %v1386
        %2038 = vmatpush1.bf16.msra.mxu0 %v1385
        %2039 = vmatprep.subr.bf16.mxu0 %v1382
        %2040 = vmatpush1.bf16.msra.mxu0 %v1381
        %2041 = vmatprep.subr.bf16.mxu0 %v1378
        %2042 = vmatpush1.bf16.msra.mxu0 %v1377
        %2043 = vmatprep.subr.bf16.mxu0 %v1374
        %2044 = vmatpush1.bf16.msra.mxu0 %v1373
        %2045 = vmatprep.subr.bf16.mxu0 %v1370
        %2046 = vmatpush1.bf16.msra.mxu0 %v1369
        %2047 = vmatprep.subr.bf16.mxu0 %v1366
        %2048 = vmatpush1.bf16.msra.mxu0 %v1365
        %2049 = vmatprep.subr.bf16.mxu0 %v1362
        %2050 = vmatpush1.bf16.msra.mxu0 %v1361
        %2051 = vmatprep.subr.bf16.mxu0 %v1422
        %2052 = vmatpush2.bf16.msra.mxu0 %v1421
        %2053 = vmatprep.subr.bf16.mxu0 %v1418
        %2054 = vmatpush2.bf16.msra.mxu0 %v1417
        %2055 = vmatprep.subr.bf16.mxu0 %v1414
        %2056 = vmatpush2.bf16.msra.mxu0 %v1413
        %2057 = vmatprep.subr.bf16.mxu0 %v1410
        %2058 = vmatpush2.bf16.msra.mxu0 %v1409
        %2059 = vmatprep.subr.bf16.mxu0 %v1406
        %2060 = vmatpush2.bf16.msra.mxu0 %v1405
        %2061 = vmatprep.subr.bf16.mxu0 %v1402
        %2062 = vmatpush2.bf16.msra.mxu0 %v1401
        %2063 = vmatprep.subr.bf16.mxu0 %v1398
        %2064 = vmatpush2.bf16.msra.mxu0 %v1397
        %2065 = vmatprep.subr.bf16.mxu0 %v1394
        %2066 = vmatpush2.bf16.msra.mxu0 %v1393
        %2067 = vmatprep.mubr.bf16.mxu0 %v576
        %2068 = vmatmul.mubr.bf16.gmra.mxu0 %v575
        %v2069 = vpop.f32.mrf.mxu0
        %v2070 = vadd.f32 %v554, %v2069
        %v2071 = vpop.f32.mrf.mxu0
        %v2072 = vadd.f32 %v558, %v2071
        %v2073 = vpop.f32.mrf.mxu0
        %v2074 = vpop.f32.mrf.mxu0
        %2075 = vdwg.mxu0
        %2076 = vmatprep.subr.bf16.mxu0 %v1454
        %2077 = vmatpush1.bf16.msra.mxu0 %v1453
        %2078 = vmatprep.subr.bf16.mxu0 %v1450
        %2079 = vmatpush1.bf16.msra.mxu0 %v1449
        %2080 = vmatprep.subr.bf16.mxu0 %v1446
        %2081 = vmatpush1.bf16.msra.mxu0 %v1445
        %2082 = vmatprep.subr.bf16.mxu0 %v1442
        %2083 = vmatpush1.bf16.msra.mxu0 %v1441
        %2084 = vmatprep.subr.bf16.mxu0 %v1438
        %2085 = vmatpush1.bf16.msra.mxu0 %v1437
        %2086 = vmatprep.subr.bf16.mxu0 %v1434
        %2087 = vmatpush1.bf16.msra.mxu0 %v1433
        %2088 = vmatprep.subr.bf16.mxu0 %v1430
        %2089 = vmatpush1.bf16.msra.mxu0 %v1429
        %2090 = vmatprep.subr.bf16.mxu0 %v1426
        %2091 = vmatpush1.bf16.msra.mxu0 %v1425
        %2092 = vmatprep.subr.bf16.mxu0 %v1486
        %2093 = vmatpush2.bf16.msra.mxu0 %v1485
        %2094 = vmatprep.subr.bf16.mxu0 %v1482
        %2095 = vmatpush2.bf16.msra.mxu0 %v1481
        %2096 = vmatprep.subr.bf16.mxu0 %v1478
        %2097 = vmatpush2.bf16.msra.mxu0 %v1477
        %2098 = vmatprep.subr.bf16.mxu0 %v1474
        %2099 = vmatpush2.bf16.msra.mxu0 %v1473
        %2100 = vmatprep.subr.bf16.mxu0 %v1470
        %2101 = vmatpush2.bf16.msra.mxu0 %v1469
        %2102 = vmatprep.subr.bf16.mxu0 %v1466
        %2103 = vmatpush2.bf16.msra.mxu0 %v1465
        %2104 = vmatprep.subr.bf16.mxu0 %v1462
        %2105 = vmatpush2.bf16.msra.mxu0 %v1461
        %2106 = vmatprep.subr.bf16.mxu0 %v1458
        %2107 = vmatpush2.bf16.msra.mxu0 %v1457
        %2108 = vmatprep.mubr.bf16.mxu0 %v578
        %2109 = vmatmul.mubr.bf16.gmra.mxu0 %v577
        %v2110 = vpop.f32.mrf.mxu0
        %v2111 = vadd.f32 %v2070, %v2110
        %v2112 = vpop.f32.mrf.mxu0
        %v2113 = vadd.f32 %v2072, %v2112
        %v2114 = vpop.f32.mrf.mxu0
        %v2115 = vpop.f32.mrf.mxu0
        %2116 = vdwg.mxu0
        %2117 = vmatprep.subr.bf16.mxu0 %v1518
        %2118 = vmatpush1.bf16.msra.mxu0 %v1517
        %2119 = vmatprep.subr.bf16.mxu0 %v1514
        %2120 = vmatpush1.bf16.msra.mxu0 %v1513
        %2121 = vmatprep.subr.bf16.mxu0 %v1510
        %2122 = vmatpush1.bf16.msra.mxu0 %v1509
        %2123 = vmatprep.subr.bf16.mxu0 %v1506
        %2124 = vmatpush1.bf16.msra.mxu0 %v1505
        %2125 = vmatprep.subr.bf16.mxu0 %v1502
        %2126 = vmatpush1.bf16.msra.mxu0 %v1501
        %2127 = vmatprep.subr.bf16.mxu0 %v1498
        %2128 = vmatpush1.bf16.msra.mxu0 %v1497
        %2129 = vmatprep.subr.bf16.mxu0 %v1494
        %2130 = vmatpush1.bf16.msra.mxu0 %v1493
        %2131 = vmatprep.subr.bf16.mxu0 %v1490
        %2132 = vmatpush1.bf16.msra.mxu0 %v1489
        %2133 = vmatprep.subr.bf16.mxu0 %v1550
        %2134 = vmatpush2.bf16.msra.mxu0 %v1549
        %2135 = vmatprep.subr.bf16.mxu0 %v1546
        %2136 = vmatpush2.bf16.msra.mxu0 %v1545
        %2137 = vmatprep.subr.bf16.mxu0 %v1542
        %2138 = vmatpush2.bf16.msra.mxu0 %v1541
        %2139 = vmatprep.subr.bf16.mxu0 %v1538
        %2140 = vmatpush2.bf16.msra.mxu0 %v1537
        %2141 = vmatprep.subr.bf16.mxu0 %v1534
        %2142 = vmatpush2.bf16.msra.mxu0 %v1533
        %2143 = vmatprep.subr.bf16.mxu0 %v1530
        %2144 = vmatpush2.bf16.msra.mxu0 %v1529
        %2145 = vmatprep.subr.bf16.mxu0 %v1526
        %2146 = vmatpush2.bf16.msra.mxu0 %v1525
        %2147 = vmatprep.subr.bf16.mxu0 %v1522
        %2148 = vmatpush2.bf16.msra.mxu0 %v1521
        %2149 = vmatprep.mubr.bf16.mxu0 %v580
        %2150 = vmatmul.mubr.bf16.gmra.mxu0 %v579
        %v2151 = vpop.f32.mrf.mxu0
        %v2152 = vadd.f32 %v2111, %v2151
        %v2153 = vpop.f32.mrf.mxu0
        %v2154 = vadd.f32 %v2113, %v2153
        %v2155 = vpop.f32.mrf.mxu0
        %v2156 = vpop.f32.mrf.mxu0
        %2157 = vdwg.mxu0
        %2158 = vmatprep.subr.bf16.mxu0 %v1582
        %2159 = vmatpush1.bf16.msra.mxu0 %v1581
        %2160 = vmatprep.subr.bf16.mxu0 %v1578
        %2161 = vmatpush1.bf16.msra.mxu0 %v1577
        %2162 = vmatprep.subr.bf16.mxu0 %v1574
        %2163 = vmatpush1.bf16.msra.mxu0 %v1573
        %2164 = vmatprep.subr.bf16.mxu0 %v1570
        %2165 = vmatpush1.bf16.msra.mxu0 %v1569
        %2166 = vmatprep.subr.bf16.mxu0 %v1566
        %2167 = vmatpush1.bf16.msra.mxu0 %v1565
        %2168 = vmatprep.subr.bf16.mxu0 %v1562
        %2169 = vmatpush1.bf16.msra.mxu0 %v1561
        %2170 = vmatprep.subr.bf16.mxu0 %v1558
        %2171 = vmatpush1.bf16.msra.mxu0 %v1557
        %2172 = vmatprep.subr.bf16.mxu0 %v1554
        %2173 = vmatpush1.bf16.msra.mxu0 %v1553
        %2174 = vmatprep.subr.bf16.mxu0 %v1614
        %2175 = vmatpush2.bf16.msra.mxu0 %v1613
        %2176 = vmatprep.subr.bf16.mxu0 %v1610
        %2177 = vmatpush2.bf16.msra.mxu0 %v1609
        %2178 = vmatprep.subr.bf16.mxu0 %v1606
        %2179 = vmatpush2.bf16.msra.mxu0 %v1605
        %2180 = vmatprep.subr.bf16.mxu0 %v1602
        %2181 = vmatpush2.bf16.msra.mxu0 %v1601
        %2182 = vmatprep.subr.bf16.mxu0 %v1598
        %2183 = vmatpush2.bf16.msra.mxu0 %v1597
        %2184 = vmatprep.subr.bf16.mxu0 %v1594
        %2185 = vmatpush2.bf16.msra.mxu0 %v1593
        %2186 = vmatprep.subr.bf16.mxu0 %v1590
        %2187 = vmatpush2.bf16.msra.mxu0 %v1589
        %2188 = vmatprep.subr.bf16.mxu0 %v1586
        %2189 = vmatpush2.bf16.msra.mxu0 %v1585
        %2190 = vmatprep.mubr.bf16.mxu0 %v582
        %2191 = vmatmul.mubr.bf16.gmra.mxu0 %v581
        %v2192 = vpop.f32.mrf.mxu0
        %v2193 = vadd.f32 %v2152, %v2192
        %v2194 = vpop.f32.mrf.mxu0
        %v2195 = vadd.f32 %v2154, %v2194
        %v2196 = vpop.f32.mrf.mxu0
        %v2197 = vpop.f32.mrf.mxu0
        %2198 = vdwg.mxu0
        %v2199 = vmax.f32 %v2029, 0.0
        %v2200 = vmax.f32 %v2031, 0.0
        %v2201 = vmax.f32 %v2193, 0.0
        %v2202 = vmax.f32 %v2195, 0.0
        %v2203 = vpack.c.bf16 %v2199, %v2199
        %v2204 = vpack.c.bf16 %v2200, %v2200
        %v2205 = vpack.c.bf16 %v2201, %v2201
        %v2206 = vpack.c.bf16 %v2202, %v2202
        %v2211 = vunpack.c.l.b16 %v2203
        %v2212 = vunpack.c.l.b16 %v2204
        %v2213 = vunpack.c.l.b16 %v2205
        %v2214 = vunpack.c.l.b16 %v2206
        %v2215 = vpack.c.b16 %v2212, %v2211
        %v2216 = vpack.c.b16 %v2214, %v2213
        %2219 = vst [vmem:[%s279] sm:$0xff] %v2215
        %2220 = vst [vmem:[%s279 + $0x8] sm:$0xff] %v2216
        %s2221 = smul.u32 4, %s25
        %p2222 = scmp.lt.s32.totalorder %s24, 1
        %s2223 = scalar_select %p2222, %s24, 1
        %p2224 = scmp.lt.s32.totalorder %s2221, 15
        %s2225 = scalar_select %p2224, %s2221, 15
        %s2226 = smul.addr %s2223, 16
        %s2227 = sadd.s32 %s2225, %s2226
        %s2228 = smul.addr %s2227, 4
        %s2229 = scalar_lea.vmem %s3, %s2228
        // Predicated region
        $region41: #{actor_critic_forward.7} parent=31 // pred_check
          %p2230 = pneg %p134
        $region42: #{actor_critic_forward.7} parent=31 // pred_check_branch
          %2232 = sbr.rel (%p2230) target = $region44
        $region43: #{actor_critic_forward.7} parent=31 // pred_region
          %s2233 = smul.u32 4, %s25
        $region44: #{actor_critic_forward.7} parent=31 // pred_fallthru
          _
      $region32: #{actor_critic_forward.7} parent=5 // pred_fallthru
        _
      %p2234 = scmp.le.s32.totalorder 2, %s15
      // Predicated region
      $region45: #{actor_critic_forward.7} parent=5 // pred_check
        %p2235 = pneg %p2234
      $region46: #{actor_critic_forward.7} parent=5 // pred_check_branch
        %2237 = sbr.rel (%p2235) target = $region48
      $region47: #{actor_critic_forward.7} parent=5 // pred_region
        %s2238 = ssub.s32 %s15, 2
        // Predicated region
        $region49: #{actor_critic_forward.7} parent=47 // pred_check
          %p2239 = pneg %p140
        $region50: #{actor_critic_forward.7} parent=47 // pred_check_branch
          %2241 = sbr.rel (%p2239) target = $region52
        $region51: #{actor_critic_forward.7} parent=47 // pred_region
          %s2242 = smul.u32 4, %s27
          %p2243 = scmp.lt.s32.totalorder %s26, 1
          %s2244 = scalar_select %p2243, %s26, 1
          %p2245 = scmp.lt.s32.totalorder %s2242, 15
          %s2246 = scalar_select %p2245, %s2242, 15
          %s2247 = smul.addr %s2244, 16
          %s2248 = sadd.s32 %s2246, %s2247
          %s2249 = smul.addr %s2248, 4
          %s2250 = scalar_lea.vmem %s3, %s2249
        $region52: #{actor_critic_forward.7} parent=47 // pred_fallthru
          _
      $region48: #{actor_critic_forward.7} parent=5 // pred_fallthru
        _
    $region6: #{actor_critic_forward.7} parent=1 // loop_footer
      %s19 = sadd.s32 1, %s15
    $region7: #{actor_critic_forward.7} parent=1 // loop_footer_branch
      %14 = sbr.rel target = $region3
    $region8: #{actor_critic_forward.7} parent=1 // loop_exit
      _
    %2251 = vsyncpa [#allocation3], 1
    %s2252 = scalar_lea.sflag [#allocation3], 1
    %2253 = vsyncpa %s2252, 1
    %2254 = vsyncpa [#allocation5], 1
    %s2255 = scalar_lea.sflag [#allocation5], 1
    %2256 = vsyncpa %s2255, 1

// kernel: actor_critic_forward.8
$region0: #{actor_critic_forward.8}
  #allocation0 [shape = 'u32[]', space=smem, size = 0x4, offset = 0x4, fixed_abs, tag = 'smem constant byte address 0x4 - core index']
  #allocation1 [shape = 'u32[144,128]{1,0:T(1,128)}', space=vmem, size = 0x12000, scoped, tag = 'internal scratch']
  %s0 = inlined_call_operand.vmem [shape: bf16[2,8,2048], index: 0, kind: input, shape index: {}]
  %s1 = inlined_call_operand.hbm [shape: bf16[2,4,2048,512], index: 1, kind: input, shape index: {}]
  %s2 = inlined_call_operand.vmem [shape: f32[2,1,2048], index: 2, kind: input, shape index: {}]
  %s3 = inlined_call_operand.vmem [shape: bf16[2,8,2048], index: 3, kind: output, shape index: {}]
  %s4 = sld [smem:[#allocation0]]
  $region49: #{actor_critic_forward.8} parent=0
    _
  %s6 = ssub.s32 1, %s4
  %s7 = scalar_select 0, %s6, %s4
  $region1: #{actor_critic_forward.8} parent=0
    #allocation2 [shape = 'u8[4194304]{0}', space=vmem, size = 0x400000, scoped, tag = 'input window, operand 1']
    #allocation3 [shape = 's32[2]{0}', space=sflag, size = 0x8, scoped, tag = 'scoped memory for actor_critic_forward.8']
    %8 = vsyncpa [#allocation3], 0
    %s9 = scalar_lea.sflag [#allocation3], 1
    %10 = vsyncpa %s9, 0
    loop: start=0, step=1, limit=10
    $region2: #{actor_critic_forward.8} parent=1 // loop_pre_header
      _
    $region3: #{actor_critic_forward.8} parent=1 // loop_header
      %s12 = sphi 0, %s16
      %p13 = scmp.ge.s32.totalorder %s12, 10
      %s19 = sphi 0, %s31
      %s20 = sphi 0, %s27
      %s21 = sphi 0, %s19
      %s22 = sphi 0, %s20
      %s23 = sphi 0, %s21
      %s24 = sphi 0, %s22
      %s34 = sphi 0, %s36
      %s37 = sphi 0, %s34
      %s38 = sphi 0, %s37
      %s54 = sphi 0, %s38
      %s62 = sphi 0, %s64
      %s65 = sphi 0, %s62
      %s66 = sphi 0, %s65
      %s82 = sphi 0, %s66
      %s90 = sphi 0, %s92
      %s93 = sphi 0, %s90
      %s94 = sphi 0, %s93
      %s110 = sphi 0, %s94
      %s118 = sphi 0, %s120
      %s121 = sphi 0, %s118
      %s122 = sphi 0, %s121
      %s138 = sphi 0, %s122
    $region4: #{actor_critic_forward.8} parent=1 // loop_header_branch
      %15 = sbr.rel (%p13) target = $region8
    $region5: #{actor_critic_forward.8} parent=1 // loop_body
      %s17 = ssub.s32 %s12, 1
      %s18 = ssub.s32 %s12, 2
      %s25 = sadd.s32 1, %s20
      %p26 = scmp.ge.s32.totalorder %s25, 4
      %s27 = scalar_select %p26, 0, %s25
      %s28 = sadd.s32 1, %s19
      %s29 = scalar_select %p26, %s28, %s19
      %p30 = scmp.ge.s32.totalorder %s29, 2
      %s31 = scalar_select %p30, 0, %s29
      %s32 = ssub.s32 %s19, %s31
      %p33 = scmp.eq.s32.totalorder %s32, 0
      %s35 = sadd.s32 %s34, 1
      %s36 = scalar_select %p33, %s34, %s35
      %p39 = pneg %p33
      %p40 = scmp.eq.s32.totalorder %s12, 7
      %p41 = por %p39, %p40
      %p42 = scmp.ne.s32.totalorder %s34, %s37
      %p43 = scmp.eq.s32.totalorder %s12, 0
      %p44 = por %p42, %p43
      %p45 = scmp.ne.s32.totalorder %s34, %s37
      %p46 = scmp.eq.s32.totalorder %s17, 7
      %p47 = por %p45, %p46
      %p48 = scmp.ne.s32.totalorder %s37, %s38
      %p49 = scmp.eq.s32.totalorder %s17, 0
      %p50 = por %p48, %p49
      %p51 = scmp.ne.s32.totalorder %s37, %s38
      %p52 = scmp.eq.s32.totalorder %s18, 7
      %p53 = por %p51, %p52
      %p55 = scmp.ne.s32.totalorder %s38, %s54
      %p56 = scmp.eq.s32.totalorder %s18, 0
      %p57 = por %p55, %p56
      %s58 = ssub.s32 %s19, %s31
      %s59 = ssub.s32 %s20, %s27
      %s60 = sor.u32 %s58, %s59
      %p61 = scmp.eq.s32.totalorder %s60, 0
      %s63 = sadd.s32 %s62, 1
      %s64 = scalar_select %p61, %s62, %s63
      %p67 = pneg %p61
      %p68 = scmp.eq.s32.totalorder %s12, 7
      %p69 = por %p67, %p68
      %p70 = scmp.ne.s32.totalorder %s62, %s65
      %p71 = scmp.eq.s32.totalorder %s12, 0
      %p72 = por %p70, %p71
      %p73 = scmp.ne.s32.totalorder %s62, %s65
      %p74 = scmp.eq.s32.totalorder %s17, 7
      %p75 = por %p73, %p74
      %p76 = scmp.ne.s32.totalorder %s65, %s66
      %p77 = scmp.eq.s32.totalorder %s17, 0
      %p78 = por %p76, %p77
      %p79 = scmp.ne.s32.totalorder %s65, %s66
      %p80 = scmp.eq.s32.totalorder %s18, 7
      %p81 = por %p79, %p80
      %p83 = scmp.ne.s32.totalorder %s66, %s82
      %p84 = scmp.eq.s32.totalorder %s18, 0
      %p85 = por %p83, %p84
      %s86 = ssub.s32 %s19, %s31
      %s87 = ssub.s32 %s20, %s27
      %s88 = sor.u32 %s86, %s87
      %p89 = scmp.eq.s32.totalorder %s88, 0
      %s91 = sadd.s32 %s90, 1
      %s92 = scalar_select %p89, %s90, %s91
      %p95 = pneg %p89
      %p96 = scmp.eq.s32.totalorder %s12, 7
      %p97 = por %p95, %p96
      %p98 = scmp.ne.s32.totalorder %s90, %s93
      %p99 = scmp.eq.s32.totalorder %s12, 0
      %p100 = por %p98, %p99
      %p101 = scmp.ne.s32.totalorder %s90, %s93
      %p102 = scmp.eq.s32.totalorder %s17, 7
      %p103 = por %p101, %p102
      %p104 = scmp.ne.s32.totalorder %s93, %s94
      %p105 = scmp.eq.s32.totalorder %s17, 0
      %p106 = por %p104, %p105
      %p107 = scmp.ne.s32.totalorder %s93, %s94
      %p108 = scmp.eq.s32.totalorder %s18, 7
      %p109 = por %p107, %p108
      %p111 = scmp.ne.s32.totalorder %s94, %s110
      %p112 = scmp.eq.s32.totalorder %s18, 0
      %p113 = por %p111, %p112
      %s114 = ssub.s32 %s19, %s31
      %s115 = ssub.s32 %s20, %s27
      %s116 = sor.u32 %s114, %s115
      %p117 = scmp.eq.s32.totalorder %s116, 0
      %s119 = sadd.s32 %s118, 1
      %s120 = scalar_select %p117, %s118, %s119
      %p123 = pneg %p117
      %p124 = scmp.eq.s32.totalorder %s12, 7
      %p125 = por %p123, %p124
      %p126 = scmp.ne.s32.totalorder %s118, %s121
      %p127 = scmp.eq.s32.totalorder %s12, 0
      %p128 = por %p126, %p127
      %p129 = scmp.ne.s32.totalorder %s118, %s121
      %p130 = scmp.eq.s32.totalorder %s17, 7
      %p131 = por %p129, %p130
      %p132 = scmp.ne.s32.totalorder %s121, %s122
      %p133 = scmp.eq.s32.totalorder %s17, 0
      %p134 = por %p132, %p133
      %p135 = scmp.ne.s32.totalorder %s121, %s122
      %p136 = scmp.eq.s32.totalorder %s18, 7
      %p137 = por %p135, %p136
      %p139 = scmp.ne.s32.totalorder %s122, %s138
      %p140 = scmp.eq.s32.totalorder %s18, 0
      %p141 = por %p139, %p140
      %p142 = scmp.le.s32.totalorder 1, %s12
      %p143 = scmp.lt.s32.totalorder %s12, 9
      %p144 = pnand %p142, %p143
      %p145 = pneg %p144
      // Predicated region
      $region9: #{actor_critic_forward.8} parent=5 // pred_check
        _
      $region10: #{actor_critic_forward.8} parent=5 // pred_check_branch
        %147 = sbr.rel (%p144) target = $region12
      $region11: #{actor_critic_forward.8} parent=5 // pred_region
        %s148 = ssub.s32 %s12, 1
      $region12: #{actor_critic_forward.8} parent=5 // pred_fallthru
        _
      %p149 = scmp.lt.s32.totalorder %s12, 8
      // Predicated region
      $region13: #{actor_critic_forward.8} parent=5 // pred_check
        %p150 = pneg %p149
      $region14: #{actor_critic_forward.8} parent=5 // pred_check_branch
        %152 = sbr.rel (%p150) target = $region16
      $region15: #{actor_critic_forward.8} parent=5 // pred_region
        // Predicated region
        $region17: #{actor_critic_forward.8} parent=15 // pred_check
          %p153 = pneg %p44
        $region18: #{actor_critic_forward.8} parent=15 // pred_check_branch
          %155 = sbr.rel (%p153) target = $region20
        $region19: #{actor_critic_forward.8} parent=15 // pred_region
          %p156 = scmp.lt.s32.totalorder %s19, 1
          %s157 = scalar_select %p156, %s19, 1
          %s158 = smul.addr %s157, 16
          %s159 = smul.addr %s158, 4
          %s160 = scalar_lea.vmem %s0, %s159
        $region20: #{actor_critic_forward.8} parent=15 // pred_fallthru
          _
        // Predicated region
        $region21: #{actor_critic_forward.8} parent=15 // pred_check
          %p161 = pneg %p72
        $region22: #{actor_critic_forward.8} parent=15 // pred_check_branch
          %163 = sbr.rel (%p161) target = $region24
        $region23: #{actor_critic_forward.8} parent=15 // pred_region
          %s164 = sand.u32 %s62, 1
          %s165 = scalar_lea.sflag [#allocation3], %s164
          %s166 = sand.u32 %s62, 1
          %s167 = smul.addr %s166, 4096
          %s168 = scalar_lea.vmem [#allocation2], %s167
          %s170 = ssub.s32 65536, 65536
          %171 = vsyncadd %s165, %s170
          %s172 = smul.addr %s20, 1024
          %s173 = smul.addr %s19, 4096
          %s174 = sadd.s32 %s172, %s173
          %s175 = smul.addr %s174, 64
          %s176 = scalar_lea.hbm %s1, %s175
          %s177 = sshll.u32 %s168, 4
          %s178 = int_to_ptr.vmem [resolvable:$true] %s177
          %183 = dma.hbm_to_vmem [thread:$0]  %s176, 65536, %s178, %s165, 256, 256, 16
        $region24: #{actor_critic_forward.8} parent=15 // pred_fallthru
          _
        // Predicated region
        $region25: #{actor_critic_forward.8} parent=15 // pred_check
          %p184 = pneg %p100
        $region26: #{actor_critic_forward.8} parent=15 // pred_check_branch
          %186 = sbr.rel (%p184) target = $region28
        $region27: #{actor_critic_forward.8} parent=15 // pred_region
          %s187 = smul.u32 4, %s20
          %p188 = scmp.lt.s32.totalorder %s19, 1
          %s189 = scalar_select %p188, %s19, 1
          %p190 = scmp.lt.s32.totalorder %s187, 15
          %s191 = scalar_select %p190, %s187, 15
          %s192 = smul.addr %s189, 16
          %s193 = sadd.s32 %s191, %s192
          %s194 = scalar_lea.vmem %s2, %s193
          %s195 = smul.u32 4, %s20
        $region28: #{actor_critic_forward.8} parent=15 // pred_fallthru
          _
      $region16: #{actor_critic_forward.8} parent=5 // pred_fallthru
        _
      %p196 = scmp.le.s32.totalorder 1, %s12
      %p197 = scmp.lt.s32.totalorder %s12, 9
      %p198 = pnand %p196, %p197
      %p199 = pneg %p198
      // Predicated region
      $region29: #{actor_critic_forward.8} parent=5 // pred_check
        _
      $region30: #{actor_critic_forward.8} parent=5 // pred_check_branch
        %201 = sbr.rel (%p198) target = $region32
      $region31: #{actor_critic_forward.8} parent=5 // pred_region
        %s202 = ssub.s32 %s12, 1
        %s203 = sand.u32 %s65, 1
        %s204 = scalar_lea.sflag [#allocation3], %s203
        %s205 = sand.u32 %s65, 1
        %s206 = smul.addr %s205, 4096
        %s207 = scalar_lea.vmem [#allocation2], %s206
        // Predicated region
        $region33: #{actor_critic_forward.8} parent=31 // pred_check
          %p208 = pneg %p78
        $region34: #{actor_critic_forward.8} parent=31 // pred_check_branch
          %210 = sbr.rel (%p208) target = $region36
        $region35: #{actor_critic_forward.8} parent=31 // pred_region
          %211 = dma.done %s204, 65536
        $region36: #{actor_critic_forward.8} parent=31 // pred_fallthru
          _
        %p212 = scmp.lt.s32.totalorder %s21, 1
        %s213 = scalar_select %p212, %s21, 1
        %s214 = smul.addr %s213, 16
        %s215 = smul.addr %s214, 4
        %s216 = scalar_lea.vmem %s0, %s215
        %p217 = pneg %p50
        %p218 = pneg %p47
        %s219 = sand.u32 %s65, 1
        %s220 = scalar_lea.sflag [#allocation3], %s219
        %s221 = sand.u32 %s65, 1
        %s222 = smul.addr %s221, 4096
        %s223 = scalar_lea.vmem [#allocation2], %s222
        %p224 = pneg %p78
        %p225 = pneg %p75
        %s226 = smul.u32 4, %s22
        %p227 = scmp.lt.s32.totalorder %s21, 1
        %s228 = scalar_select %p227, %s21, 1
        %p229 = scmp.lt.s32.totalorder %s226, 15
        %s230 = scalar_select %p229, %s226, 15
        %s231 = smul.addr %s228, 16
        %s232 = sadd.s32 %s230, %s231
        %s233 = scalar_lea.vmem %s2, %s232
        %p234 = pneg %p106
        %p235 = pneg %p103
        %p236 = pneg %p134
        %p237 = pneg %p131
        %s238 = smul.u32 4, %s22
        %p239 = scmp.lt.s32.totalorder %s21, 1
        %s240 = scalar_select %p239, %s21, 1
        %p241 = scmp.lt.s32.totalorder %s238, 15
        %s242 = scalar_select %p241, %s238, 15
        %s243 = smul.addr %s240, 16
        %s244 = sadd.s32 %s242, %s243
        %s245 = smul.addr %s244, 4
        %s246 = scalar_lea.vmem %s3, %s245
        %p247 = scmp.lt.s32.totalorder %s21, 1
        %s248 = scalar_select %p247, %s21, 1
        %s249 = smul.addr %s248, 16
        %s250 = smul.addr %s249, 4
        %s251 = scalar_lea.vmem %s0, %s250
        %s252 = smul.u32 4, %s22
        %p253 = scmp.lt.s32.totalorder %s21, 1
        %s254 = scalar_select %p253, %s21, 1
        %p255 = scmp.lt.s32.totalorder %s252, 15
        %s256 = scalar_select %p255, %s252, 15
        %s257 = smul.addr %s254, 16
        %s258 = sadd.s32 %s256, %s257
        %s259 = scalar_lea.vmem %s2, %s258
        %s260 = smul.u32 4, %s22
        %s261 = smul.u32 4, %s22
        %p262 = scmp.lt.s32.totalorder %s21, 1
        %s263 = scalar_select %p262, %s21, 1
        %p264 = scmp.lt.s32.totalorder %s261, 15
        %s265 = scalar_select %p264, %s261, 15
        %s266 = smul.addr %s263, 16
        %s267 = sadd.s32 %s265, %s266
        %s268 = smul.addr %s267, 4
        %s269 = scalar_lea.vmem %s3, %s268
        %s270 = smul.u32 4, %s22
        %v271 = vld [vmem:[%s251] sm:$0xff]
        %v272 = vld [vmem:[%s251 + $0x8] sm:$0xff]
        %v273 = vld [vmem:[%s251 + $0x10] sm:$0xff]
        %v274 = vld [vmem:[%s251 + $0x18] sm:$0xff]
        %v275 = vld [vmem:[%s251 + $0x20] sm:$0xff]
        %v276 = vld [vmem:[%s251 + $0x28] sm:$0xff]
        %v277 = vld [vmem:[%s251 + $0x30] sm:$0xff]
        %v278 = vld [vmem:[%s251 + $0x38] sm:$0xff]
        %v279 = vld [vmem:[%s207] sm:$0xff]
        %v280 = vld [vmem:[%s207 + $0x8] sm:$0xff]
        %v281 = vld [vmem:[%s207 + $0x10] sm:$0xff]
        %v282 = vld [vmem:[%s207 + $0x18] sm:$0xff]
        %v283 = vld [vmem:[%s207 + $0x20] sm:$0xff]
        %v284 = vld [vmem:[%s207 + $0x28] sm:$0xff]
        %v285 = vld [vmem:[%s207 + $0x30] sm:$0xff]
        %v286 = vld [vmem:[%s207 + $0x38] sm:$0xff]
        %v287 = vld [vmem:[%s207 + $0x40] sm:$0xff]
        %v288 = vld [vmem:[%s207 + $0x48] sm:$0xff]
        %v289 = vld [vmem:[%s207 + $0x50] sm:$0xff]
        %v290 = vld [vmem:[%s207 + $0x58] sm:$0xff]
        %v291 = vld [vmem:[%s207 + $0x60] sm:$0xff]
        %v292 = vld [vmem:[%s207 + $0x68] sm:$0xff]
        %v293 = vld [vmem:[%s207 + $0x70] sm:$0xff]
        %v294 = vld [vmem:[%s207 + $0x78] sm:$0xff]
        %v295 = vld [vmem:[%s207 + $0x80] sm:$0xff]
        %v296 = vld [vmem:[%s207 + $0x88] sm:$0xff]
        %v297 = vld [vmem:[%s207 + $0x90] sm:$0xff]
        %v298 = vld [vmem:[%s207 + $0x98] sm:$0xff]
        %v299 = vld [vmem:[%s207 + $0xa0] sm:$0xff]
        %v300 = vld [vmem:[%s207 + $0xa8] sm:$0xff]
        %v301 = vld [vmem:[%s207 + $0xb0] sm:$0xff]
        %v302 = vld [vmem:[%s207 + $0xb8] sm:$0xff]
        %v303 = vld [vmem:[%s207 + $0xc0] sm:$0xff]
        %v304 = vld [vmem:[%s207 + $0xc8] sm:$0xff]
        %v305 = vld [vmem:[%s207 + $0xd0] sm:$0xff]
        %v306 = vld [vmem:[%s207 + $0xd8] sm:$0xff]
        %v307 = vld [vmem:[%s207 + $0xe0] sm:$0xff]
        %v308 = vld [vmem:[%s207 + $0xe8] sm:$0xff]
        %v309 = vld [vmem:[%s207 + $0xf0] sm:$0xff]
        %v310 = vld [vmem:[%s207 + $0xf8] sm:$0xff]
        %v311 = vld [vmem:[%s207 + $0x100] sm:$0xff]
        %v312 = vld [vmem:[%s207 + $0x108] sm:$0xff]
        %v313 = vld [vmem:[%s207 + $0x110] sm:$0xff]
        %v314 = vld [vmem:[%s207 + $0x118] sm:$0xff]
        %v315 = vld [vmem:[%s207 + $0x120] sm:$0xff]
        %v316 = vld [vmem:[%s207 + $0x128] sm:$0xff]
        %v317 = vld [vmem:[%s207 + $0x130] sm:$0xff]
        %v318 = vld [vmem:[%s207 + $0x138] sm:$0xff]
        %v319 = vld [vmem:[%s207 + $0x140] sm:$0xff]
        %v320 = vld [vmem:[%s207 + $0x148] sm:$0xff]
        %v321 = vld [vmem:[%s207 + $0x150] sm:$0xff]
        %v322 = vld [vmem:[%s207 + $0x158] sm:$0xff]
        %v323 = vld [vmem:[%s207 + $0x160] sm:$0xff]
        %v324 = vld [vmem:[%s207 + $0x168] sm:$0xff]
        %v325 = vld [vmem:[%s207 + $0x170] sm:$0xff]
        %v326 = vld [vmem:[%s207 + $0x178] sm:$0xff]
        %v327 = vld [vmem:[%s207 + $0x180] sm:$0xff]
        %v328 = vld [vmem:[%s207 + $0x188] sm:$0xff]
        %v329 = vld [vmem:[%s207 + $0x190] sm:$0xff]
        %v330 = vld [vmem:[%s207 + $0x198] sm:$0xff]
        %v331 = vld [vmem:[%s207 + $0x1a0] sm:$0xff]
        %v332 = vld [vmem:[%s207 + $0x1a8] sm:$0xff]
        %v333 = vld [vmem:[%s207 + $0x1b0] sm:$0xff]
        %v334 = vld [vmem:[%s207 + $0x1b8] sm:$0xff]
        %v335 = vld [vmem:[%s207 + $0x1c0] sm:$0xff]
        %v336 = vld [vmem:[%s207 + $0x1c8] sm:$0xff]
        %v337 = vld [vmem:[%s207 + $0x1d0] sm:$0xff]
        %v338 = vld [vmem:[%s207 + $0x1d8] sm:$0xff]
        %v339 = vld [vmem:[%s207 + $0x1e0] sm:$0xff]
        %v340 = vld [vmem:[%s207 + $0x1e8] sm:$0xff]
        %v341 = vld [vmem:[%s207 + $0x1f0] sm:$0xff]
        %v342 = vld [vmem:[%s207 + $0x1f8] sm:$0xff]
        %v343 = vld [vmem:[%s207 + $0x200] sm:$0xff]
        %v344 = vld [vmem:[%s207 + $0x208] sm:$0xff]
        %v345 = vld [vmem:[%s207 + $0x210] sm:$0xff]
        %v346 = vld [vmem:[%s207 + $0x218] sm:$0xff]
        %v347 = vld [vmem:[%s207 + $0x220] sm:$0xff]
        %v348 = vld [vmem:[%s207 + $0x228] sm:$0xff]
        %v349 = vld [vmem:[%s207 + $0x230] sm:$0xff]
        %v350 = vld [vmem:[%s207 + $0x238] sm:$0xff]
        %v351 = vld [vmem:[%s207 + $0x240] sm:$0xff]
        %v352 = vld [vmem:[%s207 + $0x248] sm:$0xff]
        %v353 = vld [vmem:[%s207 + $0x250] sm:$0xff]
        %v354 = vld [vmem:[%s207 + $0x258] sm:$0xff]
        %v355 = vld [vmem:[%s207 + $0x260] sm:$0xff]
        %v356 = vld [vmem:[%s207 + $0x268] sm:$0xff]
        %v357 = vld [vmem:[%s207 + $0x270] sm:$0xff]
        %v358 = vld [vmem:[%s207 + $0x278] sm:$0xff]
        %v359 = vld [vmem:[%s207 + $0x280] sm:$0xff]
        %v360 = vld [vmem:[%s207 + $0x288] sm:$0xff]
        %v361 = vld [vmem:[%s207 + $0x290] sm:$0xff]
        %v362 = vld [vmem:[%s207 + $0x298] sm:$0xff]
        %v363 = vld [vmem:[%s207 + $0x2a0] sm:$0xff]
        %v364 = vld [vmem:[%s207 + $0x2a8] sm:$0xff]
        %v365 = vld [vmem:[%s207 + $0x2b0] sm:$0xff]
        %v366 = vld [vmem:[%s207 + $0x2b8] sm:$0xff]
        %v367 = vld [vmem:[%s207 + $0x2c0] sm:$0xff]
        %v368 = vld [vmem:[%s207 + $0x2c8] sm:$0xff]
        %v369 = vld [vmem:[%s207 + $0x2d0] sm:$0xff]
        %v370 = vld [vmem:[%s207 + $0x2d8] sm:$0xff]
        %v371 = vld [vmem:[%s207 + $0x2e0] sm:$0xff]
        %v372 = vld [vmem:[%s207 + $0x2e8] sm:$0xff]
        %v373 = vld [vmem:[%s207 + $0x2f0] sm:$0xff]
        %v374 = vld [vmem:[%s207 + $0x2f8] sm:$0xff]
        %v375 = vld [vmem:[%s207 + $0x300] sm:$0xff]
        %v376 = vld [vmem:[%s207 + $0x308] sm:$0xff]
        %v377 = vld [vmem:[%s207 + $0x310] sm:$0xff]
        %v378 = vld [vmem:[%s207 + $0x318] sm:$0xff]
        %v379 = vld [vmem:[%s207 + $0x320] sm:$0xff]
        %v380 = vld [vmem:[%s207 + $0x328] sm:$0xff]
        %v381 = vld [vmem:[%s207 + $0x330] sm:$0xff]
        %v382 = vld [vmem:[%s207 + $0x338] sm:$0xff]
        %v383 = vld [vmem:[%s207 + $0x340] sm:$0xff]
        %v384 = vld [vmem:[%s207 + $0x348] sm:$0xff]
        %v385 = vld [vmem:[%s207 + $0x350] sm:$0xff]
        %v386 = vld [vmem:[%s207 + $0x358] sm:$0xff]
        %v387 = vld [vmem:[%s207 + $0x360] sm:$0xff]
        %v388 = vld [vmem:[%s207 + $0x368] sm:$0xff]
        %v389 = vld [vmem:[%s207 + $0x370] sm:$0xff]
        %v390 = vld [vmem:[%s207 + $0x378] sm:$0xff]
        %v391 = vld [vmem:[%s207 + $0x380] sm:$0xff]
        %v392 = vld [vmem:[%s207 + $0x388] sm:$0xff]
        %v393 = vld [vmem:[%s207 + $0x390] sm:$0xff]
        %v394 = vld [vmem:[%s207 + $0x398] sm:$0xff]
        %v395 = vld [vmem:[%s207 + $0x3a0] sm:$0xff]
        %v396 = vld [vmem:[%s207 + $0x3a8] sm:$0xff]
        %v397 = vld [vmem:[%s207 + $0x3b0] sm:$0xff]
        %v398 = vld [vmem:[%s207 + $0x3b8] sm:$0xff]
        %v399 = vld [vmem:[%s207 + $0x3c0] sm:$0xff]
        %v400 = vld [vmem:[%s207 + $0x3c8] sm:$0xff]
        %v401 = vld [vmem:[%s207 + $0x3d0] sm:$0xff]
        %v402 = vld [vmem:[%s207 + $0x3d8] sm:$0xff]
        %v403 = vld [vmem:[%s207 + $0x3e0] sm:$0xff]
        %v404 = vld [vmem:[%s207 + $0x3e8] sm:$0xff]
        %v405 = vld [vmem:[%s207 + $0x3f0] sm:$0xff]
        %v406 = vld [vmem:[%s207 + $0x3f8] sm:$0xff]
        %v407 = vld [vmem:[%s207 + $0x400] sm:$0xff]
        %v408 = vld [vmem:[%s207 + $0x408] sm:$0xff]
        %v409 = vld [vmem:[%s207 + $0x410] sm:$0xff]
        %v410 = vld [vmem:[%s207 + $0x418] sm:$0xff]
        %v411 = vld [vmem:[%s207 + $0x420] sm:$0xff]
        %v412 = vld [vmem:[%s207 + $0x428] sm:$0xff]
        %v413 = vld [vmem:[%s207 + $0x430] sm:$0xff]
        %v414 = vld [vmem:[%s207 + $0x438] sm:$0xff]
        %v415 = vld [vmem:[%s207 + $0x440] sm:$0xff]
        %v416 = vld [vmem:[%s207 + $0x448] sm:$0xff]
        %v417 = vld [vmem:[%s207 + $0x450] sm:$0xff]
        %v418 = vld [vmem:[%s207 + $0x458] sm:$0xff]
        %v419 = vld [vmem:[%s207 + $0x460] sm:$0xff]
        %v420 = vld [vmem:[%s207 + $0x468] sm:$0xff]
        %v421 = vld [vmem:[%s207 + $0x470] sm:$0xff]
        %v422 = vld [vmem:[%s207 + $0x478] sm:$0xff]
        %v423 = vld [vmem:[%s207 + $0x480] sm:$0xff]
        %v424 = vld [vmem:[%s207 + $0x488] sm:$0xff]
        %v425 = vld [vmem:[%s207 + $0x490] sm:$0xff]
        %v426 = vld [vmem:[%s207 + $0x498] sm:$0xff]
        %v427 = vld [vmem:[%s207 + $0x4a0] sm:$0xff]
        %v428 = vld [vmem:[%s207 + $0x4a8] sm:$0xff]
        %v429 = vld [vmem:[%s207 + $0x4b0] sm:$0xff]
        %v430 = vld [vmem:[%s207 + $0x4b8] sm:$0xff]
        %v431 = vld [vmem:[%s207 + $0x4c0] sm:$0xff]
        %v432 = vld [vmem:[%s207 + $0x4c8] sm:$0xff]
        %v433 = vld [vmem:[%s207 + $0x4d0] sm:$0xff]
        %v434 = vld [vmem:[%s207 + $0x4d8] sm:$0xff]
        %v435 = vld [vmem:[%s207 + $0x4e0] sm:$0xff]
        %v436 = vld [vmem:[%s207 + $0x4e8] sm:$0xff]
        %v437 = vld [vmem:[%s207 + $0x4f0] sm:$0xff]
        %v438 = vld [vmem:[%s207 + $0x4f8] sm:$0xff]
        %v439 = vld [vmem:[%s207 + $0x500] sm:$0xff]
        %v440 = vld [vmem:[%s207 + $0x508] sm:$0xff]
        %v441 = vld [vmem:[%s207 + $0x510] sm:$0xff]
        %v442 = vld [vmem:[%s207 + $0x518] sm:$0xff]
        %v443 = vld [vmem:[%s207 + $0x520] sm:$0xff]
        %v444 = vld [vmem:[%s207 + $0x528] sm:$0xff]
        %v445 = vld [vmem:[%s207 + $0x530] sm:$0xff]
        %v446 = vld [vmem:[%s207 + $0x538] sm:$0xff]
        %v447 = vld [vmem:[%s207 + $0x540] sm:$0xff]
        %v448 = vld [vmem:[%s207 + $0x548] sm:$0xff]
        %v449 = vld [vmem:[%s207 + $0x550] sm:$0xff]
        %v450 = vld [vmem:[%s207 + $0x558] sm:$0xff]
        %v451 = vld [vmem:[%s207 + $0x560] sm:$0xff]
        %v452 = vld [vmem:[%s207 + $0x568] sm:$0xff]
        %v453 = vld [vmem:[%s207 + $0x570] sm:$0xff]
        %v454 = vld [vmem:[%s207 + $0x578] sm:$0xff]
        %v455 = vld [vmem:[%s207 + $0x580] sm:$0xff]
        %v456 = vld [vmem:[%s207 + $0x588] sm:$0xff]
        %v457 = vld [vmem:[%s207 + $0x590] sm:$0xff]
        %v458 = vld [vmem:[%s207 + $0x598] sm:$0xff]
        %v459 = vld [vmem:[%s207 + $0x5a0] sm:$0xff]
        %v460 = vld [vmem:[%s207 + $0x5a8] sm:$0xff]
        %v461 = vld [vmem:[%s207 + $0x5b0] sm:$0xff]
        %v462 = vld [vmem:[%s207 + $0x5b8] sm:$0xff]
        %v463 = vld [vmem:[%s207 + $0x5c0] sm:$0xff]
        %v464 = vld [vmem:[%s207 + $0x5c8] sm:$0xff]
        %v465 = vld [vmem:[%s207 + $0x5d0] sm:$0xff]
        %v466 = vld [vmem:[%s207 + $0x5d8] sm:$0xff]
        %v467 = vld [vmem:[%s207 + $0x5e0] sm:$0xff]
        %v468 = vld [vmem:[%s207 + $0x5e8] sm:$0xff]
        %v469 = vld [vmem:[%s207 + $0x5f0] sm:$0xff]
        %v470 = vld [vmem:[%s207 + $0x5f8] sm:$0xff]
        %v471 = vld [vmem:[%s207 + $0x600] sm:$0xff]
        %v472 = vld [vmem:[%s207 + $0x608] sm:$0xff]
        %v473 = vld [vmem:[%s207 + $0x610] sm:$0xff]
        %v474 = vld [vmem:[%s207 + $0x618] sm:$0xff]
        %v475 = vld [vmem:[%s207 + $0x620] sm:$0xff]
        %v476 = vld [vmem:[%s207 + $0x628] sm:$0xff]
        %v477 = vld [vmem:[%s207 + $0x630] sm:$0xff]
        %v478 = vld [vmem:[%s207 + $0x638] sm:$0xff]
        %v479 = vld [vmem:[%s207 + $0x640] sm:$0xff]
        %v480 = vld [vmem:[%s207 + $0x648] sm:$0xff]
        %v481 = vld [vmem:[%s207 + $0x650] sm:$0xff]
        %v482 = vld [vmem:[%s207 + $0x658] sm:$0xff]
        %v483 = vld [vmem:[%s207 + $0x660] sm:$0xff]
        %v484 = vld [vmem:[%s207 + $0x668] sm:$0xff]
        %v485 = vld [vmem:[%s207 + $0x670] sm:$0xff]
        %v486 = vld [vmem:[%s207 + $0x678] sm:$0xff]
        %v487 = vld [vmem:[%s207 + $0x680] sm:$0xff]
        %v488 = vld [vmem:[%s207 + $0x688] sm:$0xff]
        %v489 = vld [vmem:[%s207 + $0x690] sm:$0xff]
        %v490 = vld [vmem:[%s207 + $0x698] sm:$0xff]
        %v491 = vld [vmem:[%s207 + $0x6a0] sm:$0xff]
        %v492 = vld [vmem:[%s207 + $0x6a8] sm:$0xff]
        %v493 = vld [vmem:[%s207 + $0x6b0] sm:$0xff]
        %v494 = vld [vmem:[%s207 + $0x6b8] sm:$0xff]
        %v495 = vld [vmem:[%s207 + $0x6c0] sm:$0xff]
        %v496 = vld [vmem:[%s207 + $0x6c8] sm:$0xff]
        %v497 = vld [vmem:[%s207 + $0x6d0] sm:$0xff]
        %v498 = vld [vmem:[%s207 + $0x6d8] sm:$0xff]
        %v499 = vld [vmem:[%s207 + $0x6e0] sm:$0xff]
        %v500 = vld [vmem:[%s207 + $0x6e8] sm:$0xff]
        %v501 = vld [vmem:[%s207 + $0x6f0] sm:$0xff]
        %v502 = vld [vmem:[%s207 + $0x6f8] sm:$0xff]
        %v503 = vld [vmem:[%s207 + $0x700] sm:$0xff]
        %v504 = vld [vmem:[%s207 + $0x708] sm:$0xff]
        %v505 = vld [vmem:[%s207 + $0x710] sm:$0xff]
        %v506 = vld [vmem:[%s207 + $0x718] sm:$0xff]
        %v507 = vld [vmem:[%s207 + $0x720] sm:$0xff]
        %v508 = vld [vmem:[%s207 + $0x728] sm:$0xff]
        %v509 = vld [vmem:[%s207 + $0x730] sm:$0xff]
        %v510 = vld [vmem:[%s207 + $0x738] sm:$0xff]
        %v511 = vld [vmem:[%s207 + $0x740] sm:$0xff]
        %v512 = vld [vmem:[%s207 + $0x748] sm:$0xff]
        %v513 = vld [vmem:[%s207 + $0x750] sm:$0xff]
        %v514 = vld [vmem:[%s207 + $0x758] sm:$0xff]
        %v515 = vld [vmem:[%s207 + $0x760] sm:$0xff]
        %v516 = vld [vmem:[%s207 + $0x768] sm:$0xff]
        %v517 = vld [vmem:[%s207 + $0x770] sm:$0xff]
        %v518 = vld [vmem:[%s207 + $0x778] sm:$0xff]
        %v519 = vld [vmem:[%s207 + $0x780] sm:$0xff]
        %v520 = vld [vmem:[%s207 + $0x788] sm:$0xff]
        %v521 = vld [vmem:[%s207 + $0x790] sm:$0xff]
        %v522 = vld [vmem:[%s207 + $0x798] sm:$0xff]
        %v523 = vld [vmem:[%s207 + $0x7a0] sm:$0xff]
        %v524 = vld [vmem:[%s207 + $0x7a8] sm:$0xff]
        %v525 = vld [vmem:[%s207 + $0x7b0] sm:$0xff]
        %v526 = vld [vmem:[%s207 + $0x7b8] sm:$0xff]
        %v527 = vld [vmem:[%s207 + $0x7c0] sm:$0xff]
        %v528 = vld [vmem:[%s207 + $0x7c8] sm:$0xff]
        %v529 = vld [vmem:[%s207 + $0x7d0] sm:$0xff]
        %v530 = vld [vmem:[%s207 + $0x7d8] sm:$0xff]
        %v531 = vld [vmem:[%s207 + $0x7e0] sm:$0xff]
        %v532 = vld [vmem:[%s207 + $0x7e8] sm:$0xff]
        %v533 = vld [vmem:[%s207 + $0x7f0] sm:$0xff]
        %v534 = vld [vmem:[%s207 + $0x7f8] sm:$0xff]
        %v535 = vld [vmem:[%s207 + $0x800] sm:$0xff]
        %v536 = vld [vmem:[%s207 + $0x808] sm:$0xff]
        %v537 = vld [vmem:[%s207 + $0x810] sm:$0xff]
        %v538 = vld [vmem:[%s207 + $0x818] sm:$0xff]
        %v539 = vld [vmem:[%s207 + $0x820] sm:$0xff]
        %v540 = vld [vmem:[%s207 + $0x828] sm:$0xff]
        %v541 = vld [vmem:[%s207 + $0x830] sm:$0xff]
        %v542 = vld [vmem:[%s207 + $0x838] sm:$0xff]
        %v543 = vld [vmem:[%s207 + $0x840] sm:$0xff]
        %v544 = vld [vmem:[%s207 + $0x848] sm:$0xff]
        %v545 = vld [vmem:[%s207 + $0x850] sm:$0xff]
        %v546 = vld [vmem:[%s207 + $0x858] sm:$0xff]
        %v547 = vld [vmem:[%s207 + $0x860] sm:$0xff]
        %v548 = vld [vmem:[%s207 + $0x868] sm:$0xff]
        %v549 = vld [vmem:[%s207 + $0x870] sm:$0xff]
        %v550 = vld [vmem:[%s207 + $0x878] sm:$0xff]
        %v551 = vld [vmem:[%s207 + $0x880] sm:$0xff]
        %v552 = vld [vmem:[%s207 + $0x888] sm:$0xff]
        %v553 = vld [vmem:[%s207 + $0x890] sm:$0xff]
        %v554 = vld [vmem:[%s207 + $0x898] sm:$0xff]
        %v555 = vld [vmem:[%s207 + $0x8a0] sm:$0xff]
        %v556 = vld [vmem:[%s207 + $0x8a8] sm:$0xff]
        %v557 = vld [vmem:[%s207 + $0x8b0] sm:$0xff]
        %v558 = vld [vmem:[%s207 + $0x8b8] sm:$0xff]
        %v559 = vld [vmem:[%s207 + $0x8c0] sm:$0xff]
        %v560 = vld [vmem:[%s207 + $0x8c8] sm:$0xff]
        %v561 = vld [vmem:[%s207 + $0x8d0] sm:$0xff]
        %v562 = vld [vmem:[%s207 + $0x8d8] sm:$0xff]
        %v563 = vld [vmem:[%s207 + $0x8e0] sm:$0xff]
        %v564 = vld [vmem:[%s207 + $0x8e8] sm:$0xff]
        %v565 = vld [vmem:[%s207 + $0x8f0] sm:$0xff]
        %v566 = vld [vmem:[%s207 + $0x8f8] sm:$0xff]
        %v567 = vld [vmem:[%s207 + $0x900] sm:$0xff]
        %v568 = vld [vmem:[%s207 + $0x908] sm:$0xff]
        %v569 = vld [vmem:[%s207 + $0x910] sm:$0xff]
        %v570 = vld [vmem:[%s207 + $0x918] sm:$0xff]
        %v571 = vld [vmem:[%s207 + $0x920] sm:$0xff]
        %v572 = vld [vmem:[%s207 + $0x928] sm:$0xff]
        %v573 = vld [vmem:[%s207 + $0x930] sm:$0xff]
        %v574 = vld [vmem:[%s207 + $0x938] sm:$0xff]
        %v575 = vld [vmem:[%s207 + $0x940] sm:$0xff]
        %v576 = vld [vmem:[%s207 + $0x948] sm:$0xff]
        %v577 = vld [vmem:[%s207 + $0x950] sm:$0xff]
        %v578 = vld [vmem:[%s207 + $0x958] sm:$0xff]
        %v579 = vld [vmem:[%s207 + $0x960] sm:$0xff]
        %v580 = vld [vmem:[%s207 + $0x968] sm:$0xff]
        %v581 = vld [vmem:[%s207 + $0x970] sm:$0xff]
        %v582 = vld [vmem:[%s207 + $0x978] sm:$0xff]
        %v583 = vld [vmem:[%s207 + $0x980] sm:$0xff]
        %v584 = vld [vmem:[%s207 + $0x988] sm:$0xff]
        %v585 = vld [vmem:[%s207 + $0x990] sm:$0xff]
        %v586 = vld [vmem:[%s207 + $0x998] sm:$0xff]
        %v587 = vld [vmem:[%s207 + $0x9a0] sm:$0xff]
        %v588 = vld [vmem:[%s207 + $0x9a8] sm:$0xff]
        %v589 = vld [vmem:[%s207 + $0x9b0] sm:$0xff]
        %v590 = vld [vmem:[%s207 + $0x9b8] sm:$0xff]
        %v591 = vld [vmem:[%s207 + $0x9c0] sm:$0xff]
        %v592 = vld [vmem:[%s207 + $0x9c8] sm:$0xff]
        %v593 = vld [vmem:[%s207 + $0x9d0] sm:$0xff]
        %v594 = vld [vmem:[%s207 + $0x9d8] sm:$0xff]
        %v595 = vld [vmem:[%s207 + $0x9e0] sm:$0xff]
        %v596 = vld [vmem:[%s207 + $0x9e8] sm:$0xff]
        %v597 = vld [vmem:[%s207 + $0x9f0] sm:$0xff]
        %v598 = vld [vmem:[%s207 + $0x9f8] sm:$0xff]
        %v599 = vld [vmem:[%s207 + $0xa00] sm:$0xff]
        %v600 = vld [vmem:[%s207 + $0xa08] sm:$0xff]
        %v601 = vld [vmem:[%s207 + $0xa10] sm:$0xff]
        %v602 = vld [vmem:[%s207 + $0xa18] sm:$0xff]
        %v603 = vld [vmem:[%s207 + $0xa20] sm:$0xff]
        %v604 = vld [vmem:[%s207 + $0xa28] sm:$0xff]
        %v605 = vld [vmem:[%s207 + $0xa30] sm:$0xff]
        %v606 = vld [vmem:[%s207 + $0xa38] sm:$0xff]
        %v607 = vld [vmem:[%s207 + $0xa40] sm:$0xff]
        %v608 = vld [vmem:[%s207 + $0xa48] sm:$0xff]
        %v609 = vld [vmem:[%s207 + $0xa50] sm:$0xff]
        %v610 = vld [vmem:[%s207 + $0xa58] sm:$0xff]
        %v611 = vld [vmem:[%s207 + $0xa60] sm:$0xff]
        %v612 = vld [vmem:[%s207 + $0xa68] sm:$0xff]
        %v613 = vld [vmem:[%s207 + $0xa70] sm:$0xff]
        %v614 = vld [vmem:[%s207 + $0xa78] sm:$0xff]
        %v615 = vld [vmem:[%s207 + $0xa80] sm:$0xff]
        %v616 = vld [vmem:[%s207 + $0xa88] sm:$0xff]
        %v617 = vld [vmem:[%s207 + $0xa90] sm:$0xff]
        %v618 = vld [vmem:[%s207 + $0xa98] sm:$0xff]
        %v619 = vld [vmem:[%s207 + $0xaa0] sm:$0xff]
        %v620 = vld [vmem:[%s207 + $0xaa8] sm:$0xff]
        %v621 = vld [vmem:[%s207 + $0xab0] sm:$0xff]
        %v622 = vld [vmem:[%s207 + $0xab8] sm:$0xff]
        %v623 = vld [vmem:[%s207 + $0xac0] sm:$0xff]
        %v624 = vld [vmem:[%s207 + $0xac8] sm:$0xff]
        %v625 = vld [vmem:[%s207 + $0xad0] sm:$0xff]
        %v626 = vld [vmem:[%s207 + $0xad8] sm:$0xff]
        %v627 = vld [vmem:[%s207 + $0xae0] sm:$0xff]
        %v628 = vld [vmem:[%s207 + $0xae8] sm:$0xff]
        %v629 = vld [vmem:[%s207 + $0xaf0] sm:$0xff]
        %v630 = vld [vmem:[%s207 + $0xaf8] sm:$0xff]
        %v631 = vld [vmem:[%s207 + $0xb00] sm:$0xff]
        %v632 = vld [vmem:[%s207 + $0xb08] sm:$0xff]
        %v633 = vld [vmem:[%s207 + $0xb10] sm:$0xff]
        %v634 = vld [vmem:[%s207 + $0xb18] sm:$0xff]
        %v635 = vld [vmem:[%s207 + $0xb20] sm:$0xff]
        %v636 = vld [vmem:[%s207 + $0xb28] sm:$0xff]
        %v637 = vld [vmem:[%s207 + $0xb30] sm:$0xff]
        %v638 = vld [vmem:[%s207 + $0xb38] sm:$0xff]
        %v639 = vld [vmem:[%s207 + $0xb40] sm:$0xff]
        %v640 = vld [vmem:[%s207 + $0xb48] sm:$0xff]
        %v641 = vld [vmem:[%s207 + $0xb50] sm:$0xff]
        %v642 = vld [vmem:[%s207 + $0xb58] sm:$0xff]
        %v643 = vld [vmem:[%s207 + $0xb60] sm:$0xff]
        %v644 = vld [vmem:[%s207 + $0xb68] sm:$0xff]
        %v645 = vld [vmem:[%s207 + $0xb70] sm:$0xff]
        %v646 = vld [vmem:[%s207 + $0xb78] sm:$0xff]
        %v647 = vld [vmem:[%s207 + $0xb80] sm:$0xff]
        %v648 = vld [vmem:[%s207 + $0xb88] sm:$0xff]
        %v649 = vld [vmem:[%s207 + $0xb90] sm:$0xff]
        %v650 = vld [vmem:[%s207 + $0xb98] sm:$0xff]
        %v651 = vld [vmem:[%s207 + $0xba0] sm:$0xff]
        %v652 = vld [vmem:[%s207 + $0xba8] sm:$0xff]
        %v653 = vld [vmem:[%s207 + $0xbb0] sm:$0xff]
        %v654 = vld [vmem:[%s207 + $0xbb8] sm:$0xff]
        %v655 = vld [vmem:[%s207 + $0xbc0] sm:$0xff]
        %v656 = vld [vmem:[%s207 + $0xbc8] sm:$0xff]
        %v657 = vld [vmem:[%s207 + $0xbd0] sm:$0xff]
        %v658 = vld [vmem:[%s207 + $0xbd8] sm:$0xff]
        %v659 = vld [vmem:[%s207 + $0xbe0] sm:$0xff]
        %v660 = vld [vmem:[%s207 + $0xbe8] sm:$0xff]
        %v661 = vld [vmem:[%s207 + $0xbf0] sm:$0xff]
        %v662 = vld [vmem:[%s207 + $0xbf8] sm:$0xff]
        %v663 = vld [vmem:[%s207 + $0xc00] sm:$0xff]
        %v664 = vld [vmem:[%s207 + $0xc08] sm:$0xff]
        %v665 = vld [vmem:[%s207 + $0xc10] sm:$0xff]
        %v666 = vld [vmem:[%s207 + $0xc18] sm:$0xff]
        %v667 = vld [vmem:[%s207 + $0xc20] sm:$0xff]
        %v668 = vld [vmem:[%s207 + $0xc28] sm:$0xff]
        %v669 = vld [vmem:[%s207 + $0xc30] sm:$0xff]
        %v670 = vld [vmem:[%s207 + $0xc38] sm:$0xff]
        %v671 = vld [vmem:[%s207 + $0xc40] sm:$0xff]
        %v672 = vld [vmem:[%s207 + $0xc48] sm:$0xff]
        %v673 = vld [vmem:[%s207 + $0xc50] sm:$0xff]
        %v674 = vld [vmem:[%s207 + $0xc58] sm:$0xff]
        %v675 = vld [vmem:[%s207 + $0xc60] sm:$0xff]
        %v676 = vld [vmem:[%s207 + $0xc68] sm:$0xff]
        %v677 = vld [vmem:[%s207 + $0xc70] sm:$0xff]
        %v678 = vld [vmem:[%s207 + $0xc78] sm:$0xff]
        %v679 = vld [vmem:[%s207 + $0xc80] sm:$0xff]
        %v680 = vld [vmem:[%s207 + $0xc88] sm:$0xff]
        %v681 = vld [vmem:[%s207 + $0xc90] sm:$0xff]
        %v682 = vld [vmem:[%s207 + $0xc98] sm:$0xff]
        %v683 = vld [vmem:[%s207 + $0xca0] sm:$0xff]
        %v684 = vld [vmem:[%s207 + $0xca8] sm:$0xff]
        %v685 = vld [vmem:[%s207 + $0xcb0] sm:$0xff]
        %v686 = vld [vmem:[%s207 + $0xcb8] sm:$0xff]
        %v687 = vld [vmem:[%s207 + $0xcc0] sm:$0xff]
        %v688 = vld [vmem:[%s207 + $0xcc8] sm:$0xff]
        %v689 = vld [vmem:[%s207 + $0xcd0] sm:$0xff]
        %v690 = vld [vmem:[%s207 + $0xcd8] sm:$0xff]
        %v691 = vld [vmem:[%s207 + $0xce0] sm:$0xff]
        %v692 = vld [vmem:[%s207 + $0xce8] sm:$0xff]
        %v693 = vld [vmem:[%s207 + $0xcf0] sm:$0xff]
        %v694 = vld [vmem:[%s207 + $0xcf8] sm:$0xff]
        %v695 = vld [vmem:[%s207 + $0xd00] sm:$0xff]
        %v696 = vld [vmem:[%s207 + $0xd08] sm:$0xff]
        %v697 = vld [vmem:[%s207 + $0xd10] sm:$0xff]
        %v698 = vld [vmem:[%s207 + $0xd18] sm:$0xff]
        %v699 = vld [vmem:[%s207 + $0xd20] sm:$0xff]
        %v700 = vld [vmem:[%s207 + $0xd28] sm:$0xff]
        %v701 = vld [vmem:[%s207 + $0xd30] sm:$0xff]
        %v702 = vld [vmem:[%s207 + $0xd38] sm:$0xff]
        %v703 = vld [vmem:[%s207 + $0xd40] sm:$0xff]
        %v704 = vld [vmem:[%s207 + $0xd48] sm:$0xff]
        %v705 = vld [vmem:[%s207 + $0xd50] sm:$0xff]
        %v706 = vld [vmem:[%s207 + $0xd58] sm:$0xff]
        %v707 = vld [vmem:[%s207 + $0xd60] sm:$0xff]
        %v708 = vld [vmem:[%s207 + $0xd68] sm:$0xff]
        %v709 = vld [vmem:[%s207 + $0xd70] sm:$0xff]
        %v710 = vld [vmem:[%s207 + $0xd78] sm:$0xff]
        %v711 = vld [vmem:[%s207 + $0xd80] sm:$0xff]
        %v712 = vld [vmem:[%s207 + $0xd88] sm:$0xff]
        %v713 = vld [vmem:[%s207 + $0xd90] sm:$0xff]
        %v714 = vld [vmem:[%s207 + $0xd98] sm:$0xff]
        %v715 = vld [vmem:[%s207 + $0xda0] sm:$0xff]
        %v716 = vld [vmem:[%s207 + $0xda8] sm:$0xff]
        %v717 = vld [vmem:[%s207 + $0xdb0] sm:$0xff]
        %v718 = vld [vmem:[%s207 + $0xdb8] sm:$0xff]
        %v719 = vld [vmem:[%s207 + $0xdc0] sm:$0xff]
        %v720 = vld [vmem:[%s207 + $0xdc8] sm:$0xff]
        %v721 = vld [vmem:[%s207 + $0xdd0] sm:$0xff]
        %v722 = vld [vmem:[%s207 + $0xdd8] sm:$0xff]
        %v723 = vld [vmem:[%s207 + $0xde0] sm:$0xff]
        %v724 = vld [vmem:[%s207 + $0xde8] sm:$0xff]
        %v725 = vld [vmem:[%s207 + $0xdf0] sm:$0xff]
        %v726 = vld [vmem:[%s207 + $0xdf8] sm:$0xff]
        %v727 = vld [vmem:[%s207 + $0xe00] sm:$0xff]
        %v728 = vld [vmem:[%s207 + $0xe08] sm:$0xff]
        %v729 = vld [vmem:[%s207 + $0xe10] sm:$0xff]
        %v730 = vld [vmem:[%s207 + $0xe18] sm:$0xff]
        %v731 = vld [vmem:[%s207 + $0xe20] sm:$0xff]
        %v732 = vld [vmem:[%s207 + $0xe28] sm:$0xff]
        %v733 = vld [vmem:[%s207 + $0xe30] sm:$0xff]
        %v734 = vld [vmem:[%s207 + $0xe38] sm:$0xff]
        %v735 = vld [vmem:[%s207 + $0xe40] sm:$0xff]
        %v736 = vld [vmem:[%s207 + $0xe48] sm:$0xff]
        %v737 = vld [vmem:[%s207 + $0xe50] sm:$0xff]
        %v738 = vld [vmem:[%s207 + $0xe58] sm:$0xff]
        %v739 = vld [vmem:[%s207 + $0xe60] sm:$0xff]
        %v740 = vld [vmem:[%s207 + $0xe68] sm:$0xff]
        %v741 = vld [vmem:[%s207 + $0xe70] sm:$0xff]
        %v742 = vld [vmem:[%s207 + $0xe78] sm:$0xff]
        %v743 = vld [vmem:[%s207 + $0xe80] sm:$0xff]
        %v744 = vld [vmem:[%s207 + $0xe88] sm:$0xff]
        %v745 = vld [vmem:[%s207 + $0xe90] sm:$0xff]
        %v746 = vld [vmem:[%s207 + $0xe98] sm:$0xff]
        %v747 = vld [vmem:[%s207 + $0xea0] sm:$0xff]
        %v748 = vld [vmem:[%s207 + $0xea8] sm:$0xff]
        %v749 = vld [vmem:[%s207 + $0xeb0] sm:$0xff]
        %v750 = vld [vmem:[%s207 + $0xeb8] sm:$0xff]
        %v751 = vld [vmem:[%s207 + $0xec0] sm:$0xff]
        %v752 = vld [vmem:[%s207 + $0xec8] sm:$0xff]
        %v753 = vld [vmem:[%s207 + $0xed0] sm:$0xff]
        %v754 = vld [vmem:[%s207 + $0xed8] sm:$0xff]
        %v755 = vld [vmem:[%s207 + $0xee0] sm:$0xff]
        %v756 = vld [vmem:[%s207 + $0xee8] sm:$0xff]
        %v757 = vld [vmem:[%s207 + $0xef0] sm:$0xff]
        %v758 = vld [vmem:[%s207 + $0xef8] sm:$0xff]
        %v759 = vld [vmem:[%s207 + $0xf00] sm:$0xff]
        %v760 = vld [vmem:[%s207 + $0xf08] sm:$0xff]
        %v761 = vld [vmem:[%s207 + $0xf10] sm:$0xff]
        %v762 = vld [vmem:[%s207 + $0xf18] sm:$0xff]
        %v763 = vld [vmem:[%s207 + $0xf20] sm:$0xff]
        %v764 = vld [vmem:[%s207 + $0xf28] sm:$0xff]
        %v765 = vld [vmem:[%s207 + $0xf30] sm:$0xff]
        %v766 = vld [vmem:[%s207 + $0xf38] sm:$0xff]
        %v767 = vld [vmem:[%s207 + $0xf40] sm:$0xff]
        %v768 = vld [vmem:[%s207 + $0xf48] sm:$0xff]
        %v769 = vld [vmem:[%s207 + $0xf50] sm:$0xff]
        %v770 = vld [vmem:[%s207 + $0xf58] sm:$0xff]
        %v771 = vld [vmem:[%s207 + $0xf60] sm:$0xff]
        %v772 = vld [vmem:[%s207 + $0xf68] sm:$0xff]
        %v773 = vld [vmem:[%s207 + $0xf70] sm:$0xff]
        %v774 = vld [vmem:[%s207 + $0xf78] sm:$0xff]
        %v775 = vld [vmem:[%s207 + $0xf80] sm:$0xff]
        %v776 = vld [vmem:[%s207 + $0xf88] sm:$0xff]
        %v777 = vld [vmem:[%s207 + $0xf90] sm:$0xff]
        %v778 = vld [vmem:[%s207 + $0xf98] sm:$0xff]
        %v779 = vld [vmem:[%s207 + $0xfa0] sm:$0xff]
        %v780 = vld [vmem:[%s207 + $0xfa8] sm:$0xff]
        %v781 = vld [vmem:[%s207 + $0xfb0] sm:$0xff]
        %v782 = vld [vmem:[%s207 + $0xfb8] sm:$0xff]
        %v783 = vld [vmem:[%s207 + $0xfc0] sm:$0xff]
        %v784 = vld [vmem:[%s207 + $0xfc8] sm:$0xff]
        %v785 = vld [vmem:[%s207 + $0xfd0] sm:$0xff]
        %v786 = vld [vmem:[%s207 + $0xfd8] sm:$0xff]
        %v787 = vld [vmem:[%s207 + $0xfe0] sm:$0xff]
        %v788 = vld [vmem:[%s207 + $0xfe8] sm:$0xff]
        %v789 = vld [vmem:[%s207 + $0xff0] sm:$0xff]
        %v790 = vld [vmem:[%s207 + $0xff8] sm:$0xff]
        %v791 = vld [vmem:[%s259] sm:$0xf]
        %v793 = vlaneseq
        %v794 = vshrl.u32 %v793, 7
        %v795 = vsub.s32 0, %v794
        %v796 = vrot.slane %v791, %v795
        %v797 = vlaneseq
        %v798 = vshrl.u32 %v797, 7
        %v799 = vsub.s32 1, %v798
        %v800 = vrot.slane %v791, %v799
        %v801 = vlaneseq
        %v802 = vshrl.u32 %v801, 7
        %v803 = vsub.s32 2, %v802
        %v804 = vrot.slane %v791, %v803
        %v805 = vlaneseq
        %v806 = vshrl.u32 %v805, 7
        %v807 = vsub.s32 3, %v806
        %v808 = vrot.slane %v791, %v807
        %v821 = vunpack.c.l.b16 %v271
        %v822 = vunpack.c.h.b16 %v271
        %v823 = vunpack.c.l.b16 %v272
        %v824 = vunpack.c.h.b16 %v272
        %v825 = vunpack.c.l.b16 %v273
        %v826 = vunpack.c.h.b16 %v273
        %v827 = vunpack.c.l.b16 %v274
        %v828 = vunpack.c.h.b16 %v274
        %v829 = vunpack.c.l.b16 %v275
        %v830 = vunpack.c.h.b16 %v275
        %v831 = vunpack.c.l.b16 %v276
        %v832 = vunpack.c.h.b16 %v276
        %v833 = vunpack.c.l.b16 %v277
        %v834 = vunpack.c.h.b16 %v277
        %v835 = vunpack.c.l.b16 %v278
        %v836 = vunpack.c.h.b16 %v278
        %v837 = vpack.c.b16 %v821, %v821
        %v838 = vpack.c.b16 %v822, %v822
        %v839 = vpack.c.b16 %v823, %v823
        %v840 = vpack.c.b16 %v824, %v824
        %v841 = vpack.c.b16 %v825, %v825
        %v842 = vpack.c.b16 %v826, %v826
        %v843 = vpack.c.b16 %v827, %v827
        %v844 = vpack.c.b16 %v828, %v828
        %v845 = vpack.c.b16 %v829, %v829
        %v846 = vpack.c.b16 %v830, %v830
        %v847 = vpack.c.b16 %v831, %v831
        %v848 = vpack.c.b16 %v832, %v832
        %v849 = vpack.c.b16 %v833, %v833
        %v850 = vpack.c.b16 %v834, %v834
        %v851 = vpack.c.b16 %v835, %v835
        %v852 = vpack.c.b16 %v836, %v836
        %v1381 = vunpack.c.l.b16 %v279
        %v1382 = vunpack.c.h.b16 %v279
        %v1383 = vunpack.c.l.b16 %v280
        %v1384 = vunpack.c.h.b16 %v280
        %v1385 = vunpack.c.l.b16 %v281
        %v1386 = vunpack.c.h.b16 %v281
        %v1387 = vunpack.c.l.b16 %v282
        %v1388 = vunpack.c.h.b16 %v282
        %v1389 = vunpack.c.l.b16 %v283
        %v1390 = vunpack.c.h.b16 %v283
        %v1391 = vunpack.c.l.b16 %v284
        %v1392 = vunpack.c.h.b16 %v284
        %v1393 = vunpack.c.l.b16 %v285
        %v1394 = vunpack.c.h.b16 %v285
        %v1395 = vunpack.c.l.b16 %v286
        %v1396 = vunpack.c.h.b16 %v286
        %v1397 = vunpack.c.l.b16 %v287
        %v1398 = vunpack.c.h.b16 %v287
        %v1399 = vunpack.c.l.b16 %v288
        %v1400 = vunpack.c.h.b16 %v288
        %v1401 = vunpack.c.l.b16 %v289
        %v1402 = vunpack.c.h.b16 %v289
        %v1403 = vunpack.c.l.b16 %v290
        %v1404 = vunpack.c.h.b16 %v290
        %v1405 = vunpack.c.l.b16 %v291
        %v1406 = vunpack.c.h.b16 %v291
        %v1407 = vunpack.c.l.b16 %v292
        %v1408 = vunpack.c.h.b16 %v292
        %v1409 = vunpack.c.l.b16 %v293
        %v1410 = vunpack.c.h.b16 %v293
        %v1411 = vunpack.c.l.b16 %v294
        %v1412 = vunpack.c.h.b16 %v294
        %v1413 = vunpack.c.l.b16 %v295
        %v1414 = vunpack.c.h.b16 %v295
        %v1415 = vunpack.c.l.b16 %v296
        %v1416 = vunpack.c.h.b16 %v296
        %v1417 = vunpack.c.l.b16 %v297
        %v1418 = vunpack.c.h.b16 %v297
        %v1419 = vunpack.c.l.b16 %v298
        %v1420 = vunpack.c.h.b16 %v298
        %v1421 = vunpack.c.l.b16 %v299
        %v1422 = vunpack.c.h.b16 %v299
        %v1423 = vunpack.c.l.b16 %v300
        %v1424 = vunpack.c.h.b16 %v300
        %v1425 = vunpack.c.l.b16 %v301
        %v1426 = vunpack.c.h.b16 %v301
        %v1427 = vunpack.c.l.b16 %v302
        %v1428 = vunpack.c.h.b16 %v302
        %v1429 = vunpack.c.l.b16 %v303
        %v1430 = vunpack.c.h.b16 %v303
        %v1431 = vunpack.c.l.b16 %v304
        %v1432 = vunpack.c.h.b16 %v304
        %v1433 = vunpack.c.l.b16 %v305
        %v1434 = vunpack.c.h.b16 %v305
        %v1435 = vunpack.c.l.b16 %v306
        %v1436 = vunpack.c.h.b16 %v306
        %v1437 = vunpack.c.l.b16 %v307
        %v1438 = vunpack.c.h.b16 %v307
        %v1439 = vunpack.c.l.b16 %v308
        %v1440 = vunpack.c.h.b16 %v308
        %v1441 = vunpack.c.l.b16 %v309
        %v1442 = vunpack.c.h.b16 %v309
        %v1443 = vunpack.c.l.b16 %v310
        %v1444 = vunpack.c.h.b16 %v310
        %v1445 = vunpack.c.l.b16 %v311
        %v1446 = vunpack.c.h.b16 %v311
        %v1447 = vunpack.c.l.b16 %v312
        %v1448 = vunpack.c.h.b16 %v312
        %v1449 = vunpack.c.l.b16 %v313
        %v1450 = vunpack.c.h.b16 %v313
        %v1451 = vunpack.c.l.b16 %v314
        %v1452 = vunpack.c.h.b16 %v314
        %v1453 = vunpack.c.l.b16 %v315
        %v1454 = vunpack.c.h.b16 %v315
        %v1455 = vunpack.c.l.b16 %v316
        %v1456 = vunpack.c.h.b16 %v316
        %v1457 = vunpack.c.l.b16 %v317
        %v1458 = vunpack.c.h.b16 %v317
        %v1459 = vunpack.c.l.b16 %v318
        %v1460 = vunpack.c.h.b16 %v318
        %v1461 = vunpack.c.l.b16 %v319
        %v1462 = vunpack.c.h.b16 %v319
        %v1463 = vunpack.c.l.b16 %v320
        %v1464 = vunpack.c.h.b16 %v320
        %v1465 = vunpack.c.l.b16 %v321
        %v1466 = vunpack.c.h.b16 %v321
        %v1467 = vunpack.c.l.b16 %v322
        %v1468 = vunpack.c.h.b16 %v322
        %v1469 = vunpack.c.l.b16 %v323
        %v1470 = vunpack.c.h.b16 %v323
        %v1471 = vunpack.c.l.b16 %v324
        %v1472 = vunpack.c.h.b16 %v324
        %v1473 = vunpack.c.l.b16 %v325
        %v1474 = vunpack.c.h.b16 %v325
        %v1475 = vunpack.c.l.b16 %v326
        %v1476 = vunpack.c.h.b16 %v326
        %v1477 = vunpack.c.l.b16 %v327
        %v1478 = vunpack.c.h.b16 %v327
        %v1479 = vunpack.c.l.b16 %v328
        %v1480 = vunpack.c.h.b16 %v328
        %v1481 = vunpack.c.l.b16 %v329
        %v1482 = vunpack.c.h.b16 %v329
        %v1483 = vunpack.c.l.b16 %v330
        %v1484 = vunpack.c.h.b16 %v330
        %v1485 = vunpack.c.l.b16 %v331
        %v1486 = vunpack.c.h.b16 %v331
        %v1487 = vunpack.c.l.b16 %v332
        %v1488 = vunpack.c.h.b16 %v332
        %v1489 = vunpack.c.l.b16 %v333
        %v1490 = vunpack.c.h.b16 %v333
        %v1491 = vunpack.c.l.b16 %v334
        %v1492 = vunpack.c.h.b16 %v334
        %v1493 = vunpack.c.l.b16 %v335
        %v1494 = vunpack.c.h.b16 %v335
        %v1495 = vunpack.c.l.b16 %v336
        %v1496 = vunpack.c.h.b16 %v336
        %v1497 = vunpack.c.l.b16 %v337
        %v1498 = vunpack.c.h.b16 %v337
        %v1499 = vunpack.c.l.b16 %v338
        %v1500 = vunpack.c.h.b16 %v338
        %v1501 = vunpack.c.l.b16 %v339
        %v1502 = vunpack.c.h.b16 %v339
        %v1503 = vunpack.c.l.b16 %v340
        %v1504 = vunpack.c.h.b16 %v340
        %v1505 = vunpack.c.l.b16 %v341
        %v1506 = vunpack.c.h.b16 %v341
        %v1507 = vunpack.c.l.b16 %v342
        %v1508 = vunpack.c.h.b16 %v342
        %v1509 = vunpack.c.l.b16 %v343
        %v1510 = vunpack.c.h.b16 %v343
        %v1511 = vunpack.c.l.b16 %v344
        %v1512 = vunpack.c.h.b16 %v344
        %v1513 = vunpack.c.l.b16 %v345
        %v1514 = vunpack.c.h.b16 %v345
        %v1515 = vunpack.c.l.b16 %v346
        %v1516 = vunpack.c.h.b16 %v346
        %v1517 = vunpack.c.l.b16 %v347
        %v1518 = vunpack.c.h.b16 %v347
        %v1519 = vunpack.c.l.b16 %v348
        %v1520 = vunpack.c.h.b16 %v348
        %v1521 = vunpack.c.l.b16 %v349
        %v1522 = vunpack.c.h.b16 %v349
        %v1523 = vunpack.c.l.b16 %v350
        %v1524 = vunpack.c.h.b16 %v350
        %v1525 = vunpack.c.l.b16 %v351
        %v1526 = vunpack.c.h.b16 %v351
        %v1527 = vunpack.c.l.b16 %v352
        %v1528 = vunpack.c.h.b16 %v352
        %v1529 = vunpack.c.l.b16 %v353
        %v1530 = vunpack.c.h.b16 %v353
        %v1531 = vunpack.c.l.b16 %v354
        %v1532 = vunpack.c.h.b16 %v354
        %v1533 = vunpack.c.l.b16 %v355
        %v1534 = vunpack.c.h.b16 %v355
        %v1535 = vunpack.c.l.b16 %v356
        %v1536 = vunpack.c.h.b16 %v356
        %v1537 = vunpack.c.l.b16 %v357
        %v1538 = vunpack.c.h.b16 %v357
        %v1539 = vunpack.c.l.b16 %v358
        %v1540 = vunpack.c.h.b16 %v358
        %v1541 = vunpack.c.l.b16 %v359
        %v1542 = vunpack.c.h.b16 %v359
        %v1543 = vunpack.c.l.b16 %v360
        %v1544 = vunpack.c.h.b16 %v360
        %v1545 = vunpack.c.l.b16 %v361
        %v1546 = vunpack.c.h.b16 %v361
        %v1547 = vunpack.c.l.b16 %v362
        %v1548 = vunpack.c.h.b16 %v362
        %v1549 = vunpack.c.l.b16 %v363
        %v1550 = vunpack.c.h.b16 %v363
        %v1551 = vunpack.c.l.b16 %v364
        %v1552 = vunpack.c.h.b16 %v364
        %v1553 = vunpack.c.l.b16 %v365
        %v1554 = vunpack.c.h.b16 %v365
        %v1555 = vunpack.c.l.b16 %v366
        %v1556 = vunpack.c.h.b16 %v366
        %v1557 = vunpack.c.l.b16 %v367
        %v1558 = vunpack.c.h.b16 %v367
        %v1559 = vunpack.c.l.b16 %v368
        %v1560 = vunpack.c.h.b16 %v368
        %v1561 = vunpack.c.l.b16 %v369
        %v1562 = vunpack.c.h.b16 %v369
        %v1563 = vunpack.c.l.b16 %v370
        %v1564 = vunpack.c.h.b16 %v370
        %v1565 = vunpack.c.l.b16 %v371
        %v1566 = vunpack.c.h.b16 %v371
        %v1567 = vunpack.c.l.b16 %v372
        %v1568 = vunpack.c.h.b16 %v372
        %v1569 = vunpack.c.l.b16 %v373
        %v1570 = vunpack.c.h.b16 %v373
        %v1571 = vunpack.c.l.b16 %v374
        %v1572 = vunpack.c.h.b16 %v374
        %v1573 = vunpack.c.l.b16 %v375
        %v1574 = vunpack.c.h.b16 %v375
        %v1575 = vunpack.c.l.b16 %v376
        %v1576 = vunpack.c.h.b16 %v376
        %v1577 = vunpack.c.l.b16 %v377
        %v1578 = vunpack.c.h.b16 %v377
        %v1579 = vunpack.c.l.b16 %v378
        %v1580 = vunpack.c.h.b16 %v378
        %v1581 = vunpack.c.l.b16 %v379
        %v1582 = vunpack.c.h.b16 %v379
        %v1583 = vunpack.c.l.b16 %v380
        %v1584 = vunpack.c.h.b16 %v380
        %v1585 = vunpack.c.l.b16 %v381
        %v1586 = vunpack.c.h.b16 %v381
        %v1587 = vunpack.c.l.b16 %v382
        %v1588 = vunpack.c.h.b16 %v382
        %v1589 = vunpack.c.l.b16 %v383
        %v1590 = vunpack.c.h.b16 %v383
        %v1591 = vunpack.c.l.b16 %v384
        %v1592 = vunpack.c.h.b16 %v384
        %v1593 = vunpack.c.l.b16 %v385
        %v1594 = vunpack.c.h.b16 %v385
        %v1595 = vunpack.c.l.b16 %v386
        %v1596 = vunpack.c.h.b16 %v386
        %v1597 = vunpack.c.l.b16 %v387
        %v1598 = vunpack.c.h.b16 %v387
        %v1599 = vunpack.c.l.b16 %v388
        %v1600 = vunpack.c.h.b16 %v388
        %v1601 = vunpack.c.l.b16 %v389
        %v1602 = vunpack.c.h.b16 %v389
        %v1603 = vunpack.c.l.b16 %v390
        %v1604 = vunpack.c.h.b16 %v390
        %v1605 = vunpack.c.l.b16 %v391
        %v1606 = vunpack.c.h.b16 %v391
        %v1607 = vunpack.c.l.b16 %v392
        %v1608 = vunpack.c.h.b16 %v392
        %v1609 = vunpack.c.l.b16 %v393
        %v1610 = vunpack.c.h.b16 %v393
        %v1611 = vunpack.c.l.b16 %v394
        %v1612 = vunpack.c.h.b16 %v394
        %v1613 = vunpack.c.l.b16 %v395
        %v1614 = vunpack.c.h.b16 %v395
        %v1615 = vunpack.c.l.b16 %v396
        %v1616 = vunpack.c.h.b16 %v396
        %v1617 = vunpack.c.l.b16 %v397
        %v1618 = vunpack.c.h.b16 %v397
        %v1619 = vunpack.c.l.b16 %v398
        %v1620 = vunpack.c.h.b16 %v398
        %v1621 = vunpack.c.l.b16 %v399
        %v1622 = vunpack.c.h.b16 %v399
        %v1623 = vunpack.c.l.b16 %v400
        %v1624 = vunpack.c.h.b16 %v400
        %v1625 = vunpack.c.l.b16 %v401
        %v1626 = vunpack.c.h.b16 %v401
        %v1627 = vunpack.c.l.b16 %v402
        %v1628 = vunpack.c.h.b16 %v402
        %v1629 = vunpack.c.l.b16 %v403
        %v1630 = vunpack.c.h.b16 %v403
        %v1631 = vunpack.c.l.b16 %v404
        %v1632 = vunpack.c.h.b16 %v404
        %v1633 = vunpack.c.l.b16 %v405
        %v1634 = vunpack.c.h.b16 %v405
        %v1635 = vunpack.c.l.b16 %v406
        %v1636 = vunpack.c.h.b16 %v406
        %v1637 = vunpack.c.l.b16 %v407
        %v1638 = vunpack.c.h.b16 %v407
        %v1639 = vunpack.c.l.b16 %v408
        %v1640 = vunpack.c.h.b16 %v408
        %v1641 = vunpack.c.l.b16 %v409
        %v1642 = vunpack.c.h.b16 %v409
        %v1643 = vunpack.c.l.b16 %v410
        %v1644 = vunpack.c.h.b16 %v410
        %v1645 = vunpack.c.l.b16 %v411
        %v1646 = vunpack.c.h.b16 %v411
        %v1647 = vunpack.c.l.b16 %v412
        %v1648 = vunpack.c.h.b16 %v412
        %v1649 = vunpack.c.l.b16 %v413
        %v1650 = vunpack.c.h.b16 %v413
        %v1651 = vunpack.c.l.b16 %v414
        %v1652 = vunpack.c.h.b16 %v414
        %v1653 = vunpack.c.l.b16 %v415
        %v1654 = vunpack.c.h.b16 %v415
        %v1655 = vunpack.c.l.b16 %v416
        %v1656 = vunpack.c.h.b16 %v416
        %v1657 = vunpack.c.l.b16 %v417
        %v1658 = vunpack.c.h.b16 %v417
        %v1659 = vunpack.c.l.b16 %v418
        %v1660 = vunpack.c.h.b16 %v418
        %v1661 = vunpack.c.l.b16 %v419
        %v1662 = vunpack.c.h.b16 %v419
        %v1663 = vunpack.c.l.b16 %v420
        %v1664 = vunpack.c.h.b16 %v420
        %v1665 = vunpack.c.l.b16 %v421
        %v1666 = vunpack.c.h.b16 %v421
        %v1667 = vunpack.c.l.b16 %v422
        %v1668 = vunpack.c.h.b16 %v422
        %v1669 = vunpack.c.l.b16 %v423
        %v1670 = vunpack.c.h.b16 %v423
        %v1671 = vunpack.c.l.b16 %v424
        %v1672 = vunpack.c.h.b16 %v424
        %v1673 = vunpack.c.l.b16 %v425
        %v1674 = vunpack.c.h.b16 %v425
        %v1675 = vunpack.c.l.b16 %v426
        %v1676 = vunpack.c.h.b16 %v426
        %v1677 = vunpack.c.l.b16 %v427
        %v1678 = vunpack.c.h.b16 %v427
        %v1679 = vunpack.c.l.b16 %v428
        %v1680 = vunpack.c.h.b16 %v428
        %v1681 = vunpack.c.l.b16 %v429
        %v1682 = vunpack.c.h.b16 %v429
        %v1683 = vunpack.c.l.b16 %v430
        %v1684 = vunpack.c.h.b16 %v430
        %v1685 = vunpack.c.l.b16 %v431
        %v1686 = vunpack.c.h.b16 %v431
        %v1687 = vunpack.c.l.b16 %v432
        %v1688 = vunpack.c.h.b16 %v432
        %v1689 = vunpack.c.l.b16 %v433
        %v1690 = vunpack.c.h.b16 %v433
        %v1691 = vunpack.c.l.b16 %v434
        %v1692 = vunpack.c.h.b16 %v434
        %v1693 = vunpack.c.l.b16 %v435
        %v1694 = vunpack.c.h.b16 %v435
        %v1695 = vunpack.c.l.b16 %v436
        %v1696 = vunpack.c.h.b16 %v436
        %v1697 = vunpack.c.l.b16 %v437
        %v1698 = vunpack.c.h.b16 %v437
        %v1699 = vunpack.c.l.b16 %v438
        %v1700 = vunpack.c.h.b16 %v438
        %v1701 = vunpack.c.l.b16 %v439
        %v1702 = vunpack.c.h.b16 %v439
        %v1703 = vunpack.c.l.b16 %v440
        %v1704 = vunpack.c.h.b16 %v440
        %v1705 = vunpack.c.l.b16 %v441
        %v1706 = vunpack.c.h.b16 %v441
        %v1707 = vunpack.c.l.b16 %v442
        %v1708 = vunpack.c.h.b16 %v442
        %v1709 = vunpack.c.l.b16 %v443
        %v1710 = vunpack.c.h.b16 %v443
        %v1711 = vunpack.c.l.b16 %v444
        %v1712 = vunpack.c.h.b16 %v444
        %v1713 = vunpack.c.l.b16 %v445
        %v1714 = vunpack.c.h.b16 %v445
        %v1715 = vunpack.c.l.b16 %v446
        %v1716 = vunpack.c.h.b16 %v446
        %v1717 = vunpack.c.l.b16 %v447
        %v1718 = vunpack.c.h.b16 %v447
        %v1719 = vunpack.c.l.b16 %v448
        %v1720 = vunpack.c.h.b16 %v448
        %v1721 = vunpack.c.l.b16 %v449
        %v1722 = vunpack.c.h.b16 %v449
        %v1723 = vunpack.c.l.b16 %v450
        %v1724 = vunpack.c.h.b16 %v450
        %v1725 = vunpack.c.l.b16 %v451
        %v1726 = vunpack.c.h.b16 %v451
        %v1727 = vunpack.c.l.b16 %v452
        %v1728 = vunpack.c.h.b16 %v452
        %v1729 = vunpack.c.l.b16 %v453
        %v1730 = vunpack.c.h.b16 %v453
        %v1731 = vunpack.c.l.b16 %v454
        %v1732 = vunpack.c.h.b16 %v454
        %v1733 = vunpack.c.l.b16 %v455
        %v1734 = vunpack.c.h.b16 %v455
        %v1735 = vunpack.c.l.b16 %v456
        %v1736 = vunpack.c.h.b16 %v456
        %v1737 = vunpack.c.l.b16 %v457
        %v1738 = vunpack.c.h.b16 %v457
        %v1739 = vunpack.c.l.b16 %v458
        %v1740 = vunpack.c.h.b16 %v458
        %v1741 = vunpack.c.l.b16 %v459
        %v1742 = vunpack.c.h.b16 %v459
        %v1743 = vunpack.c.l.b16 %v460
        %v1744 = vunpack.c.h.b16 %v460
        %v1745 = vunpack.c.l.b16 %v461
        %v1746 = vunpack.c.h.b16 %v461
        %v1747 = vunpack.c.l.b16 %v462
        %v1748 = vunpack.c.h.b16 %v462
        %v1749 = vunpack.c.l.b16 %v463
        %v1750 = vunpack.c.h.b16 %v463
        %v1751 = vunpack.c.l.b16 %v464
        %v1752 = vunpack.c.h.b16 %v464
        %v1753 = vunpack.c.l.b16 %v465
        %v1754 = vunpack.c.h.b16 %v465
        %v1755 = vunpack.c.l.b16 %v466
        %v1756 = vunpack.c.h.b16 %v466
        %v1757 = vunpack.c.l.b16 %v467
        %v1758 = vunpack.c.h.b16 %v467
        %v1759 = vunpack.c.l.b16 %v468
        %v1760 = vunpack.c.h.b16 %v468
        %v1761 = vunpack.c.l.b16 %v469
        %v1762 = vunpack.c.h.b16 %v469
        %v1763 = vunpack.c.l.b16 %v470
        %v1764 = vunpack.c.h.b16 %v470
        %v1765 = vunpack.c.l.b16 %v471
        %v1766 = vunpack.c.h.b16 %v471
        %v1767 = vunpack.c.l.b16 %v472
        %v1768 = vunpack.c.h.b16 %v472
        %v1769 = vunpack.c.l.b16 %v473
        %v1770 = vunpack.c.h.b16 %v473
        %v1771 = vunpack.c.l.b16 %v474
        %v1772 = vunpack.c.h.b16 %v474
        %v1773 = vunpack.c.l.b16 %v475
        %v1774 = vunpack.c.h.b16 %v475
        %v1775 = vunpack.c.l.b16 %v476
        %v1776 = vunpack.c.h.b16 %v476
        %v1777 = vunpack.c.l.b16 %v477
        %v1778 = vunpack.c.h.b16 %v477
        %v1779 = vunpack.c.l.b16 %v478
        %v1780 = vunpack.c.h.b16 %v478
        %v1781 = vunpack.c.l.b16 %v479
        %v1782 = vunpack.c.h.b16 %v479
        %v1783 = vunpack.c.l.b16 %v480
        %v1784 = vunpack.c.h.b16 %v480
        %v1785 = vunpack.c.l.b16 %v481
        %v1786 = vunpack.c.h.b16 %v481
        %v1787 = vunpack.c.l.b16 %v482
        %v1788 = vunpack.c.h.b16 %v482
        %v1789 = vunpack.c.l.b16 %v483
        %v1790 = vunpack.c.h.b16 %v483
        %v1791 = vunpack.c.l.b16 %v484
        %v1792 = vunpack.c.h.b16 %v484
        %v1793 = vunpack.c.l.b16 %v485
        %v1794 = vunpack.c.h.b16 %v485
        %v1795 = vunpack.c.l.b16 %v486
        %v1796 = vunpack.c.h.b16 %v486
        %v1797 = vunpack.c.l.b16 %v487
        %v1798 = vunpack.c.h.b16 %v487
        %v1799 = vunpack.c.l.b16 %v488
        %v1800 = vunpack.c.h.b16 %v488
        %v1801 = vunpack.c.l.b16 %v489
        %v1802 = vunpack.c.h.b16 %v489
        %v1803 = vunpack.c.l.b16 %v490
        %v1804 = vunpack.c.h.b16 %v490
        %v1805 = vunpack.c.l.b16 %v491
        %v1806 = vunpack.c.h.b16 %v491
        %v1807 = vunpack.c.l.b16 %v492
        %v1808 = vunpack.c.h.b16 %v492
        %v1809 = vunpack.c.l.b16 %v493
        %v1810 = vunpack.c.h.b16 %v493
        %v1811 = vunpack.c.l.b16 %v494
        %v1812 = vunpack.c.h.b16 %v494
        %v1813 = vunpack.c.l.b16 %v495
        %v1814 = vunpack.c.h.b16 %v495
        %v1815 = vunpack.c.l.b16 %v496
        %v1816 = vunpack.c.h.b16 %v496
        %v1817 = vunpack.c.l.b16 %v497
        %v1818 = vunpack.c.h.b16 %v497
        %v1819 = vunpack.c.l.b16 %v498
        %v1820 = vunpack.c.h.b16 %v498
        %v1821 = vunpack.c.l.b16 %v499
        %v1822 = vunpack.c.h.b16 %v499
        %v1823 = vunpack.c.l.b16 %v500
        %v1824 = vunpack.c.h.b16 %v500
        %v1825 = vunpack.c.l.b16 %v501
        %v1826 = vunpack.c.h.b16 %v501
        %v1827 = vunpack.c.l.b16 %v502
        %v1828 = vunpack.c.h.b16 %v502
        %v1829 = vunpack.c.l.b16 %v503
        %v1830 = vunpack.c.h.b16 %v503
        %v1831 = vunpack.c.l.b16 %v504
        %v1832 = vunpack.c.h.b16 %v504
        %v1833 = vunpack.c.l.b16 %v505
        %v1834 = vunpack.c.h.b16 %v505
        %v1835 = vunpack.c.l.b16 %v506
        %v1836 = vunpack.c.h.b16 %v506
        %v1837 = vunpack.c.l.b16 %v507
        %v1838 = vunpack.c.h.b16 %v507
        %v1839 = vunpack.c.l.b16 %v508
        %v1840 = vunpack.c.h.b16 %v508
        %v1841 = vunpack.c.l.b16 %v509
        %v1842 = vunpack.c.h.b16 %v509
        %v1843 = vunpack.c.l.b16 %v510
        %v1844 = vunpack.c.h.b16 %v510
        %v1845 = vunpack.c.l.b16 %v511
        %v1846 = vunpack.c.h.b16 %v511
        %v1847 = vunpack.c.l.b16 %v512
        %v1848 = vunpack.c.h.b16 %v512
        %v1849 = vunpack.c.l.b16 %v513
        %v1850 = vunpack.c.h.b16 %v513
        %v1851 = vunpack.c.l.b16 %v514
        %v1852 = vunpack.c.h.b16 %v514
        %v1853 = vunpack.c.l.b16 %v515
        %v1854 = vunpack.c.h.b16 %v515
        %v1855 = vunpack.c.l.b16 %v516
        %v1856 = vunpack.c.h.b16 %v516
        %v1857 = vunpack.c.l.b16 %v517
        %v1858 = vunpack.c.h.b16 %v517
        %v1859 = vunpack.c.l.b16 %v518
        %v1860 = vunpack.c.h.b16 %v518
        %v1861 = vunpack.c.l.b16 %v519
        %v1862 = vunpack.c.h.b16 %v519
        %v1863 = vunpack.c.l.b16 %v520
        %v1864 = vunpack.c.h.b16 %v520
        %v1865 = vunpack.c.l.b16 %v521
        %v1866 = vunpack.c.h.b16 %v521
        %v1867 = vunpack.c.l.b16 %v522
        %v1868 = vunpack.c.h.b16 %v522
        %v1869 = vunpack.c.l.b16 %v523
        %v1870 = vunpack.c.h.b16 %v523
        %v1871 = vunpack.c.l.b16 %v524
        %v1872 = vunpack.c.h.b16 %v524
        %v1873 = vunpack.c.l.b16 %v525
        %v1874 = vunpack.c.h.b16 %v525
        %v1875 = vunpack.c.l.b16 %v526
        %v1876 = vunpack.c.h.b16 %v526
        %v1877 = vunpack.c.l.b16 %v527
        %v1878 = vunpack.c.h.b16 %v527
        %v1879 = vunpack.c.l.b16 %v528
        %v1880 = vunpack.c.h.b16 %v528
        %v1881 = vunpack.c.l.b16 %v529
        %v1882 = vunpack.c.h.b16 %v529
        %v1883 = vunpack.c.l.b16 %v530
        %v1884 = vunpack.c.h.b16 %v530
        %v1885 = vunpack.c.l.b16 %v531
        %v1886 = vunpack.c.h.b16 %v531
        %v1887 = vunpack.c.l.b16 %v532
        %v1888 = vunpack.c.h.b16 %v532
        %v1889 = vunpack.c.l.b16 %v533
        %v1890 = vunpack.c.h.b16 %v533
        %v1891 = vunpack.c.l.b16 %v534
        %v1892 = vunpack.c.h.b16 %v534
        %v1893 = vunpack.c.l.b16 %v535
        %v1894 = vunpack.c.h.b16 %v535
        %v1895 = vunpack.c.l.b16 %v536
        %v1896 = vunpack.c.h.b16 %v536
        %v1897 = vunpack.c.l.b16 %v537
        %v1898 = vunpack.c.h.b16 %v537
        %v1899 = vunpack.c.l.b16 %v538
        %v1900 = vunpack.c.h.b16 %v538
        %v1901 = vunpack.c.l.b16 %v539
        %v1902 = vunpack.c.h.b16 %v539
        %v1903 = vunpack.c.l.b16 %v540
        %v1904 = vunpack.c.h.b16 %v540
        %v1905 = vunpack.c.l.b16 %v541
        %v1906 = vunpack.c.h.b16 %v541
        %v1907 = vunpack.c.l.b16 %v542
        %v1908 = vunpack.c.h.b16 %v542
        %v1909 = vunpack.c.l.b16 %v543
        %v1910 = vunpack.c.h.b16 %v543
        %v1911 = vunpack.c.l.b16 %v544
        %v1912 = vunpack.c.h.b16 %v544
        %v1913 = vunpack.c.l.b16 %v545
        %v1914 = vunpack.c.h.b16 %v545
        %v1915 = vunpack.c.l.b16 %v546
        %v1916 = vunpack.c.h.b16 %v546
        %v1917 = vunpack.c.l.b16 %v547
        %v1918 = vunpack.c.h.b16 %v547
        %v1919 = vunpack.c.l.b16 %v548
        %v1920 = vunpack.c.h.b16 %v548
        %v1921 = vunpack.c.l.b16 %v549
        %v1922 = vunpack.c.h.b16 %v549
        %v1923 = vunpack.c.l.b16 %v550
        %v1924 = vunpack.c.h.b16 %v550
        %v1925 = vunpack.c.l.b16 %v551
        %v1926 = vunpack.c.h.b16 %v551
        %v1927 = vunpack.c.l.b16 %v552
        %v1928 = vunpack.c.h.b16 %v552
        %v1929 = vunpack.c.l.b16 %v553
        %v1930 = vunpack.c.h.b16 %v553
        %v1931 = vunpack.c.l.b16 %v554
        %v1932 = vunpack.c.h.b16 %v554
        %v1933 = vunpack.c.l.b16 %v555
        %v1934 = vunpack.c.h.b16 %v555
        %v1935 = vunpack.c.l.b16 %v556
        %v1936 = vunpack.c.h.b16 %v556
        %v1937 = vunpack.c.l.b16 %v557
        %v1938 = vunpack.c.h.b16 %v557
        %v1939 = vunpack.c.l.b16 %v558
        %v1940 = vunpack.c.h.b16 %v558
        %v1941 = vunpack.c.l.b16 %v559
        %v1942 = vunpack.c.h.b16 %v559
        %v1943 = vunpack.c.l.b16 %v560
        %v1944 = vunpack.c.h.b16 %v560
        %v1945 = vunpack.c.l.b16 %v561
        %v1946 = vunpack.c.h.b16 %v561
        %v1947 = vunpack.c.l.b16 %v562
        %v1948 = vunpack.c.h.b16 %v562
        %v1949 = vunpack.c.l.b16 %v563
        %v1950 = vunpack.c.h.b16 %v563
        %v1951 = vunpack.c.l.b16 %v564
        %v1952 = vunpack.c.h.b16 %v564
        %v1953 = vunpack.c.l.b16 %v565
        %v1954 = vunpack.c.h.b16 %v565
        %v1955 = vunpack.c.l.b16 %v566
        %v1956 = vunpack.c.h.b16 %v566
        %v1957 = vunpack.c.l.b16 %v567
        %v1958 = vunpack.c.h.b16 %v567
        %v1959 = vunpack.c.l.b16 %v568
        %v1960 = vunpack.c.h.b16 %v568
        %v1961 = vunpack.c.l.b16 %v569
        %v1962 = vunpack.c.h.b16 %v569
        %v1963 = vunpack.c.l.b16 %v570
        %v1964 = vunpack.c.h.b16 %v570
        %v1965 = vunpack.c.l.b16 %v571
        %v1966 = vunpack.c.h.b16 %v571
        %v1967 = vunpack.c.l.b16 %v572
        %v1968 = vunpack.c.h.b16 %v572
        %v1969 = vunpack.c.l.b16 %v573
        %v1970 = vunpack.c.h.b16 %v573
        %v1971 = vunpack.c.l.b16 %v574
        %v1972 = vunpack.c.h.b16 %v574
        %v1973 = vunpack.c.l.b16 %v575
        %v1974 = vunpack.c.h.b16 %v575
        %v1975 = vunpack.c.l.b16 %v576
        %v1976 = vunpack.c.h.b16 %v576
        %v1977 = vunpack.c.l.b16 %v577
        %v1978 = vunpack.c.h.b16 %v577
        %v1979 = vunpack.c.l.b16 %v578
        %v1980 = vunpack.c.h.b16 %v578
        %v1981 = vunpack.c.l.b16 %v579
        %v1982 = vunpack.c.h.b16 %v579
        %v1983 = vunpack.c.l.b16 %v580
        %v1984 = vunpack.c.h.b16 %v580
        %v1985 = vunpack.c.l.b16 %v581
        %v1986 = vunpack.c.h.b16 %v581
        %v1987 = vunpack.c.l.b16 %v582
        %v1988 = vunpack.c.h.b16 %v582
        %v1989 = vunpack.c.l.b16 %v583
        %v1990 = vunpack.c.h.b16 %v583
        %v1991 = vunpack.c.l.b16 %v584
        %v1992 = vunpack.c.h.b16 %v584
        %v1993 = vunpack.c.l.b16 %v585
        %v1994 = vunpack.c.h.b16 %v585
        %v1995 = vunpack.c.l.b16 %v586
        %v1996 = vunpack.c.h.b16 %v586
        %v1997 = vunpack.c.l.b16 %v587
        %v1998 = vunpack.c.h.b16 %v587
        %v1999 = vunpack.c.l.b16 %v588
        %v2000 = vunpack.c.h.b16 %v588
        %v2001 = vunpack.c.l.b16 %v589
        %v2002 = vunpack.c.h.b16 %v589
        %v2003 = vunpack.c.l.b16 %v590
        %v2004 = vunpack.c.h.b16 %v590
        %v2005 = vunpack.c.l.b16 %v591
        %v2006 = vunpack.c.h.b16 %v591
        %v2007 = vunpack.c.l.b16 %v592
        %v2008 = vunpack.c.h.b16 %v592
        %v2009 = vunpack.c.l.b16 %v593
        %v2010 = vunpack.c.h.b16 %v593
        %v2011 = vunpack.c.l.b16 %v594
        %v2012 = vunpack.c.h.b16 %v594
        %v2013 = vunpack.c.l.b16 %v595
        %v2014 = vunpack.c.h.b16 %v595
        %v2015 = vunpack.c.l.b16 %v596
        %v2016 = vunpack.c.h.b16 %v596
        %v2017 = vunpack.c.l.b16 %v597
        %v2018 = vunpack.c.h.b16 %v597
        %v2019 = vunpack.c.l.b16 %v598
        %v2020 = vunpack.c.h.b16 %v598
        %v2021 = vunpack.c.l.b16 %v599
        %v2022 = vunpack.c.h.b16 %v599
        %v2023 = vunpack.c.l.b16 %v600
        %v2024 = vunpack.c.h.b16 %v600
        %v2025 = vunpack.c.l.b16 %v601
        %v2026 = vunpack.c.h.b16 %v601
        %v2027 = vunpack.c.l.b16 %v602
        %v2028 = vunpack.c.h.b16 %v602
        %v2029 = vunpack.c.l.b16 %v603
        %v2030 = vunpack.c.h.b16 %v603
        %v2031 = vunpack.c.l.b16 %v604
        %v2032 = vunpack.c.h.b16 %v604
        %v2033 = vunpack.c.l.b16 %v605
        %v2034 = vunpack.c.h.b16 %v605
        %v2035 = vunpack.c.l.b16 %v606
        %v2036 = vunpack.c.h.b16 %v606
        %v2037 = vunpack.c.l.b16 %v607
        %v2038 = vunpack.c.h.b16 %v607
        %v2039 = vunpack.c.l.b16 %v608
        %v2040 = vunpack.c.h.b16 %v608
        %v2041 = vunpack.c.l.b16 %v609
        %v2042 = vunpack.c.h.b16 %v609
        %v2043 = vunpack.c.l.b16 %v610
        %v2044 = vunpack.c.h.b16 %v610
        %v2045 = vunpack.c.l.b16 %v611
        %v2046 = vunpack.c.h.b16 %v611
        %v2047 = vunpack.c.l.b16 %v612
        %v2048 = vunpack.c.h.b16 %v612
        %v2049 = vunpack.c.l.b16 %v613
        %v2050 = vunpack.c.h.b16 %v613
        %v2051 = vunpack.c.l.b16 %v614
        %v2052 = vunpack.c.h.b16 %v614
        %v2053 = vunpack.c.l.b16 %v615
        %v2054 = vunpack.c.h.b16 %v615
        %v2055 = vunpack.c.l.b16 %v616
        %v2056 = vunpack.c.h.b16 %v616
        %v2057 = vunpack.c.l.b16 %v617
        %v2058 = vunpack.c.h.b16 %v617
        %v2059 = vunpack.c.l.b16 %v618
        %v2060 = vunpack.c.h.b16 %v618
        %v2061 = vunpack.c.l.b16 %v619
        %v2062 = vunpack.c.h.b16 %v619
        %v2063 = vunpack.c.l.b16 %v620
        %v2064 = vunpack.c.h.b16 %v620
        %v2065 = vunpack.c.l.b16 %v621
        %v2066 = vunpack.c.h.b16 %v621
        %v2067 = vunpack.c.l.b16 %v622
        %v2068 = vunpack.c.h.b16 %v622
        %v2069 = vunpack.c.l.b16 %v623
        %v2070 = vunpack.c.h.b16 %v623
        %v2071 = vunpack.c.l.b16 %v624
        %v2072 = vunpack.c.h.b16 %v624
        %v2073 = vunpack.c.l.b16 %v625
        %v2074 = vunpack.c.h.b16 %v625
        %v2075 = vunpack.c.l.b16 %v626
        %v2076 = vunpack.c.h.b16 %v626
        %v2077 = vunpack.c.l.b16 %v627
        %v2078 = vunpack.c.h.b16 %v627
        %v2079 = vunpack.c.l.b16 %v628
        %v2080 = vunpack.c.h.b16 %v628
        %v2081 = vunpack.c.l.b16 %v629
        %v2082 = vunpack.c.h.b16 %v629
        %v2083 = vunpack.c.l.b16 %v630
        %v2084 = vunpack.c.h.b16 %v630
        %v2085 = vunpack.c.l.b16 %v631
        %v2086 = vunpack.c.h.b16 %v631
        %v2087 = vunpack.c.l.b16 %v632
        %v2088 = vunpack.c.h.b16 %v632
        %v2089 = vunpack.c.l.b16 %v633
        %v2090 = vunpack.c.h.b16 %v633
        %v2091 = vunpack.c.l.b16 %v634
        %v2092 = vunpack.c.h.b16 %v634
        %v2093 = vunpack.c.l.b16 %v635
        %v2094 = vunpack.c.h.b16 %v635
        %v2095 = vunpack.c.l.b16 %v636
        %v2096 = vunpack.c.h.b16 %v636
        %v2097 = vunpack.c.l.b16 %v637
        %v2098 = vunpack.c.h.b16 %v637
        %v2099 = vunpack.c.l.b16 %v638
        %v2100 = vunpack.c.h.b16 %v638
        %v2101 = vunpack.c.l.b16 %v639
        %v2102 = vunpack.c.h.b16 %v639
        %v2103 = vunpack.c.l.b16 %v640
        %v2104 = vunpack.c.h.b16 %v640
        %v2105 = vunpack.c.l.b16 %v641
        %v2106 = vunpack.c.h.b16 %v641
        %v2107 = vunpack.c.l.b16 %v642
        %v2108 = vunpack.c.h.b16 %v642
        %v2109 = vunpack.c.l.b16 %v643
        %v2110 = vunpack.c.h.b16 %v643
        %v2111 = vunpack.c.l.b16 %v644
        %v2112 = vunpack.c.h.b16 %v644
        %v2113 = vunpack.c.l.b16 %v645
        %v2114 = vunpack.c.h.b16 %v645
        %v2115 = vunpack.c.l.b16 %v646
        %v2116 = vunpack.c.h.b16 %v646
        %v2117 = vunpack.c.l.b16 %v647
        %v2118 = vunpack.c.h.b16 %v647
        %v2119 = vunpack.c.l.b16 %v648
        %v2120 = vunpack.c.h.b16 %v648
        %v2121 = vunpack.c.l.b16 %v649
        %v2122 = vunpack.c.h.b16 %v649
        %v2123 = vunpack.c.l.b16 %v650
        %v2124 = vunpack.c.h.b16 %v650
        %v2125 = vunpack.c.l.b16 %v651
        %v2126 = vunpack.c.h.b16 %v651
        %v2127 = vunpack.c.l.b16 %v652
        %v2128 = vunpack.c.h.b16 %v652
        %v2129 = vunpack.c.l.b16 %v653
        %v2130 = vunpack.c.h.b16 %v653
        %v2131 = vunpack.c.l.b16 %v654
        %v2132 = vunpack.c.h.b16 %v654
        %v2133 = vunpack.c.l.b16 %v655
        %v2134 = vunpack.c.h.b16 %v655
        %v2135 = vunpack.c.l.b16 %v656
        %v2136 = vunpack.c.h.b16 %v656
        %v2137 = vunpack.c.l.b16 %v657
        %v2138 = vunpack.c.h.b16 %v657
        %v2139 = vunpack.c.l.b16 %v658
        %v2140 = vunpack.c.h.b16 %v658
        %v2141 = vunpack.c.l.b16 %v659
        %v2142 = vunpack.c.h.b16 %v659
        %v2143 = vunpack.c.l.b16 %v660
        %v2144 = vunpack.c.h.b16 %v660
        %v2145 = vunpack.c.l.b16 %v661
        %v2146 = vunpack.c.h.b16 %v661
        %v2147 = vunpack.c.l.b16 %v662
        %v2148 = vunpack.c.h.b16 %v662
        %v2149 = vunpack.c.l.b16 %v663
        %v2150 = vunpack.c.h.b16 %v663
        %v2151 = vunpack.c.l.b16 %v664
        %v2152 = vunpack.c.h.b16 %v664
        %v2153 = vunpack.c.l.b16 %v665
        %v2154 = vunpack.c.h.b16 %v665
        %v2155 = vunpack.c.l.b16 %v666
        %v2156 = vunpack.c.h.b16 %v666
        %v2157 = vunpack.c.l.b16 %v667
        %v2158 = vunpack.c.h.b16 %v667
        %v2159 = vunpack.c.l.b16 %v668
        %v2160 = vunpack.c.h.b16 %v668
        %v2161 = vunpack.c.l.b16 %v669
        %v2162 = vunpack.c.h.b16 %v669
        %v2163 = vunpack.c.l.b16 %v670
        %v2164 = vunpack.c.h.b16 %v670
        %v2165 = vunpack.c.l.b16 %v671
        %v2166 = vunpack.c.h.b16 %v671
        %v2167 = vunpack.c.l.b16 %v672
        %v2168 = vunpack.c.h.b16 %v672
        %v2169 = vunpack.c.l.b16 %v673
        %v2170 = vunpack.c.h.b16 %v673
        %v2171 = vunpack.c.l.b16 %v674
        %v2172 = vunpack.c.h.b16 %v674
        %v2173 = vunpack.c.l.b16 %v675
        %v2174 = vunpack.c.h.b16 %v675
        %v2175 = vunpack.c.l.b16 %v676
        %v2176 = vunpack.c.h.b16 %v676
        %v2177 = vunpack.c.l.b16 %v677
        %v2178 = vunpack.c.h.b16 %v677
        %v2179 = vunpack.c.l.b16 %v678
        %v2180 = vunpack.c.h.b16 %v678
        %v2181 = vunpack.c.l.b16 %v679
        %v2182 = vunpack.c.h.b16 %v679
        %v2183 = vunpack.c.l.b16 %v680
        %v2184 = vunpack.c.h.b16 %v680
        %v2185 = vunpack.c.l.b16 %v681
        %v2186 = vunpack.c.h.b16 %v681
        %v2187 = vunpack.c.l.b16 %v682
        %v2188 = vunpack.c.h.b16 %v682
        %v2189 = vunpack.c.l.b16 %v683
        %v2190 = vunpack.c.h.b16 %v683
        %v2191 = vunpack.c.l.b16 %v684
        %v2192 = vunpack.c.h.b16 %v684
        %v2193 = vunpack.c.l.b16 %v685
        %v2194 = vunpack.c.h.b16 %v685
        %v2195 = vunpack.c.l.b16 %v686
        %v2196 = vunpack.c.h.b16 %v686
        %v2197 = vunpack.c.l.b16 %v687
        %v2198 = vunpack.c.h.b16 %v687
        %v2199 = vunpack.c.l.b16 %v688
        %v2200 = vunpack.c.h.b16 %v688
        %v2201 = vunpack.c.l.b16 %v689
        %v2202 = vunpack.c.h.b16 %v689
        %v2203 = vunpack.c.l.b16 %v690
        %v2204 = vunpack.c.h.b16 %v690
        %v2205 = vunpack.c.l.b16 %v691
        %v2206 = vunpack.c.h.b16 %v691
        %v2207 = vunpack.c.l.b16 %v692
        %v2208 = vunpack.c.h.b16 %v692
        %v2209 = vunpack.c.l.b16 %v693
        %v2210 = vunpack.c.h.b16 %v693
        %v2211 = vunpack.c.l.b16 %v694
        %v2212 = vunpack.c.h.b16 %v694
        %v2213 = vunpack.c.l.b16 %v695
        %v2214 = vunpack.c.h.b16 %v695
        %v2215 = vunpack.c.l.b16 %v696
        %v2216 = vunpack.c.h.b16 %v696
        %v2217 = vunpack.c.l.b16 %v697
        %v2218 = vunpack.c.h.b16 %v697
        %v2219 = vunpack.c.l.b16 %v698
        %v2220 = vunpack.c.h.b16 %v698
        %v2221 = vunpack.c.l.b16 %v699
        %v2222 = vunpack.c.h.b16 %v699
        %v2223 = vunpack.c.l.b16 %v700
        %v2224 = vunpack.c.h.b16 %v700
        %v2225 = vunpack.c.l.b16 %v701
        %v2226 = vunpack.c.h.b16 %v701
        %v2227 = vunpack.c.l.b16 %v702
        %v2228 = vunpack.c.h.b16 %v702
        %v2229 = vunpack.c.l.b16 %v703
        %v2230 = vunpack.c.h.b16 %v703
        %v2231 = vunpack.c.l.b16 %v704
        %v2232 = vunpack.c.h.b16 %v704
        %v2233 = vunpack.c.l.b16 %v705
        %v2234 = vunpack.c.h.b16 %v705
        %v2235 = vunpack.c.l.b16 %v706
        %v2236 = vunpack.c.h.b16 %v706
        %v2237 = vunpack.c.l.b16 %v707
        %v2238 = vunpack.c.h.b16 %v707
        %v2239 = vunpack.c.l.b16 %v708
        %v2240 = vunpack.c.h.b16 %v708
        %v2241 = vunpack.c.l.b16 %v709
        %v2242 = vunpack.c.h.b16 %v709
        %v2243 = vunpack.c.l.b16 %v710
        %v2244 = vunpack.c.h.b16 %v710
        %v2245 = vunpack.c.l.b16 %v711
        %v2246 = vunpack.c.h.b16 %v711
        %v2247 = vunpack.c.l.b16 %v712
        %v2248 = vunpack.c.h.b16 %v712
        %v2249 = vunpack.c.l.b16 %v713
        %v2250 = vunpack.c.h.b16 %v713
        %v2251 = vunpack.c.l.b16 %v714
        %v2252 = vunpack.c.h.b16 %v714
        %v2253 = vunpack.c.l.b16 %v715
        %v2254 = vunpack.c.h.b16 %v715
        %v2255 = vunpack.c.l.b16 %v716
        %v2256 = vunpack.c.h.b16 %v716
        %v2257 = vunpack.c.l.b16 %v717
        %v2258 = vunpack.c.h.b16 %v717
        %v2259 = vunpack.c.l.b16 %v718
        %v2260 = vunpack.c.h.b16 %v718
        %v2261 = vunpack.c.l.b16 %v719
        %v2262 = vunpack.c.h.b16 %v719
        %v2263 = vunpack.c.l.b16 %v720
        %v2264 = vunpack.c.h.b16 %v720
        %v2265 = vunpack.c.l.b16 %v721
        %v2266 = vunpack.c.h.b16 %v721
        %v2267 = vunpack.c.l.b16 %v722
        %v2268 = vunpack.c.h.b16 %v722
        %v2269 = vunpack.c.l.b16 %v723
        %v2270 = vunpack.c.h.b16 %v723
        %v2271 = vunpack.c.l.b16 %v724
        %v2272 = vunpack.c.h.b16 %v724
        %v2273 = vunpack.c.l.b16 %v725
        %v2274 = vunpack.c.h.b16 %v725
        %v2275 = vunpack.c.l.b16 %v726
        %v2276 = vunpack.c.h.b16 %v726
        %v2277 = vunpack.c.l.b16 %v727
        %v2278 = vunpack.c.h.b16 %v727
        %v2279 = vunpack.c.l.b16 %v728
        %v2280 = vunpack.c.h.b16 %v728
        %v2281 = vunpack.c.l.b16 %v729
        %v2282 = vunpack.c.h.b16 %v729
        %v2283 = vunpack.c.l.b16 %v730
        %v2284 = vunpack.c.h.b16 %v730
        %v2285 = vunpack.c.l.b16 %v731
        %v2286 = vunpack.c.h.b16 %v731
        %v2287 = vunpack.c.l.b16 %v732
        %v2288 = vunpack.c.h.b16 %v732
        %v2289 = vunpack.c.l.b16 %v733
        %v2290 = vunpack.c.h.b16 %v733
        %v2291 = vunpack.c.l.b16 %v734
        %v2292 = vunpack.c.h.b16 %v734
        %v2293 = vunpack.c.l.b16 %v735
        %v2294 = vunpack.c.h.b16 %v735
        %v2295 = vunpack.c.l.b16 %v736
        %v2296 = vunpack.c.h.b16 %v736
        %v2297 = vunpack.c.l.b16 %v737
        %v2298 = vunpack.c.h.b16 %v737
        %v2299 = vunpack.c.l.b16 %v738
        %v2300 = vunpack.c.h.b16 %v738
        %v2301 = vunpack.c.l.b16 %v739
        %v2302 = vunpack.c.h.b16 %v739
        %v2303 = vunpack.c.l.b16 %v740
        %v2304 = vunpack.c.h.b16 %v740
        %v2305 = vunpack.c.l.b16 %v741
        %v2306 = vunpack.c.h.b16 %v741
        %v2307 = vunpack.c.l.b16 %v742
        %v2308 = vunpack.c.h.b16 %v742
        %v2309 = vunpack.c.l.b16 %v743
        %v2310 = vunpack.c.h.b16 %v743
        %v2311 = vunpack.c.l.b16 %v744
        %v2312 = vunpack.c.h.b16 %v744
        %v2313 = vunpack.c.l.b16 %v745
        %v2314 = vunpack.c.h.b16 %v745
        %v2315 = vunpack.c.l.b16 %v746
        %v2316 = vunpack.c.h.b16 %v746
        %v2317 = vunpack.c.l.b16 %v747
        %v2318 = vunpack.c.h.b16 %v747
        %v2319 = vunpack.c.l.b16 %v748
        %v2320 = vunpack.c.h.b16 %v748
        %v2321 = vunpack.c.l.b16 %v749
        %v2322 = vunpack.c.h.b16 %v749
        %v2323 = vunpack.c.l.b16 %v750
        %v2324 = vunpack.c.h.b16 %v750
        %v2325 = vunpack.c.l.b16 %v751
        %v2326 = vunpack.c.h.b16 %v751
        %v2327 = vunpack.c.l.b16 %v752
        %v2328 = vunpack.c.h.b16 %v752
        %v2329 = vunpack.c.l.b16 %v753
        %v2330 = vunpack.c.h.b16 %v753
        %v2331 = vunpack.c.l.b16 %v754
        %v2332 = vunpack.c.h.b16 %v754
        %v2333 = vunpack.c.l.b16 %v755
        %v2334 = vunpack.c.h.b16 %v755
        %v2335 = vunpack.c.l.b16 %v756
        %v2336 = vunpack.c.h.b16 %v756
        %v2337 = vunpack.c.l.b16 %v757
        %v2338 = vunpack.c.h.b16 %v757
        %v2339 = vunpack.c.l.b16 %v758
        %v2340 = vunpack.c.h.b16 %v758
        %v2341 = vunpack.c.l.b16 %v759
        %v2342 = vunpack.c.h.b16 %v759
        %v2343 = vunpack.c.l.b16 %v760
        %v2344 = vunpack.c.h.b16 %v760
        %v2345 = vunpack.c.l.b16 %v761
        %v2346 = vunpack.c.h.b16 %v761
        %v2347 = vunpack.c.l.b16 %v762
        %v2348 = vunpack.c.h.b16 %v762
        %v2349 = vunpack.c.l.b16 %v763
        %v2350 = vunpack.c.h.b16 %v763
        %v2351 = vunpack.c.l.b16 %v764
        %v2352 = vunpack.c.h.b16 %v764
        %v2353 = vunpack.c.l.b16 %v765
        %v2354 = vunpack.c.h.b16 %v765
        %v2355 = vunpack.c.l.b16 %v766
        %v2356 = vunpack.c.h.b16 %v766
        %v2357 = vunpack.c.l.b16 %v767
        %v2358 = vunpack.c.h.b16 %v767
        %v2359 = vunpack.c.l.b16 %v768
        %v2360 = vunpack.c.h.b16 %v768
        %v2361 = vunpack.c.l.b16 %v769
        %v2362 = vunpack.c.h.b16 %v769
        %v2363 = vunpack.c.l.b16 %v770
        %v2364 = vunpack.c.h.b16 %v770
        %v2365 = vunpack.c.l.b16 %v771
        %v2366 = vunpack.c.h.b16 %v771
        %v2367 = vunpack.c.l.b16 %v772
        %v2368 = vunpack.c.h.b16 %v772
        %v2369 = vunpack.c.l.b16 %v773
        %v2370 = vunpack.c.h.b16 %v773
        %v2371 = vunpack.c.l.b16 %v774
        %v2372 = vunpack.c.h.b16 %v774
        %v2373 = vunpack.c.l.b16 %v775
        %v2374 = vunpack.c.h.b16 %v775
        %v2375 = vunpack.c.l.b16 %v776
        %v2376 = vunpack.c.h.b16 %v776
        %v2377 = vunpack.c.l.b16 %v777
        %v2378 = vunpack.c.h.b16 %v777
        %v2379 = vunpack.c.l.b16 %v778
        %v2380 = vunpack.c.h.b16 %v778
        %v2381 = vunpack.c.l.b16 %v779
        %v2382 = vunpack.c.h.b16 %v779
        %v2383 = vunpack.c.l.b16 %v780
        %v2384 = vunpack.c.h.b16 %v780
        %v2385 = vunpack.c.l.b16 %v781
        %v2386 = vunpack.c.h.b16 %v781
        %v2387 = vunpack.c.l.b16 %v782
        %v2388 = vunpack.c.h.b16 %v782
        %v2389 = vunpack.c.l.b16 %v783
        %v2390 = vunpack.c.h.b16 %v783
        %v2391 = vunpack.c.l.b16 %v784
        %v2392 = vunpack.c.h.b16 %v784
        %v2393 = vunpack.c.l.b16 %v785
        %v2394 = vunpack.c.h.b16 %v785
        %v2395 = vunpack.c.l.b16 %v786
        %v2396 = vunpack.c.h.b16 %v786
        %v2397 = vunpack.c.l.b16 %v787
        %v2398 = vunpack.c.h.b16 %v787
        %v2399 = vunpack.c.l.b16 %v788
        %v2400 = vunpack.c.h.b16 %v788
        %v2401 = vunpack.c.l.b16 %v789
        %v2402 = vunpack.c.h.b16 %v789
        %v2403 = vunpack.c.l.b16 %v790
        %v2404 = vunpack.c.h.b16 %v790
        %v2405 = vpack.c.b16 %v1385, %v1381
        %v2406 = vpack.c.b16 %v1386, %v1382
        %v2407 = vpack.c.b16 %v1387, %v1383
        %v2408 = vpack.c.b16 %v1388, %v1384
        %v2409 = vpack.c.b16 %v1393, %v1389
        %v2410 = vpack.c.b16 %v1394, %v1390
        %v2411 = vpack.c.b16 %v1395, %v1391
        %v2412 = vpack.c.b16 %v1396, %v1392
        %v2413 = vpack.c.b16 %v1401, %v1397
        %v2414 = vpack.c.b16 %v1402, %v1398
        %v2415 = vpack.c.b16 %v1403, %v1399
        %v2416 = vpack.c.b16 %v1404, %v1400
        %v2417 = vpack.c.b16 %v1409, %v1405
        %v2418 = vpack.c.b16 %v1410, %v1406
        %v2419 = vpack.c.b16 %v1411, %v1407
        %v2420 = vpack.c.b16 %v1412, %v1408
        %v2421 = vpack.c.b16 %v1417, %v1413
        %v2422 = vpack.c.b16 %v1418, %v1414
        %v2423 = vpack.c.b16 %v1419, %v1415
        %v2424 = vpack.c.b16 %v1420, %v1416
        %v2425 = vpack.c.b16 %v1425, %v1421
        %v2426 = vpack.c.b16 %v1426, %v1422
        %v2427 = vpack.c.b16 %v1427, %v1423
        %v2428 = vpack.c.b16 %v1428, %v1424
        %v2429 = vpack.c.b16 %v1433, %v1429
        %v2430 = vpack.c.b16 %v1434, %v1430
        %v2431 = vpack.c.b16 %v1435, %v1431
        %v2432 = vpack.c.b16 %v1436, %v1432
        %v2433 = vpack.c.b16 %v1441, %v1437
        %v2434 = vpack.c.b16 %v1442, %v1438
        %v2435 = vpack.c.b16 %v1443, %v1439
        %v2436 = vpack.c.b16 %v1444, %v1440
        %v2437 = vpack.c.b16 %v1449, %v1445
        %v2438 = vpack.c.b16 %v1450, %v1446
        %v2439 = vpack.c.b16 %v1451, %v1447
        %v2440 = vpack.c.b16 %v1452, %v1448
        %v2441 = vpack.c.b16 %v1457, %v1453
        %v2442 = vpack.c.b16 %v1458, %v1454
        %v2443 = vpack.c.b16 %v1459, %v1455
        %v2444 = vpack.c.b16 %v1460, %v1456
        %v2445 = vpack.c.b16 %v1465, %v1461
        %v2446 = vpack.c.b16 %v1466, %v1462
        %v2447 = vpack.c.b16 %v1467, %v1463
        %v2448 = vpack.c.b16 %v1468, %v1464
        %v2449 = vpack.c.b16 %v1473, %v1469
        %v2450 = vpack.c.b16 %v1474, %v1470
        %v2451 = vpack.c.b16 %v1475, %v1471
        %v2452 = vpack.c.b16 %v1476, %v1472
        %v2453 = vpack.c.b16 %v1481, %v1477
        %v2454 = vpack.c.b16 %v1482, %v1478
        %v2455 = vpack.c.b16 %v1483, %v1479
        %v2456 = vpack.c.b16 %v1484, %v1480
        %v2457 = vpack.c.b16 %v1489, %v1485
        %v2458 = vpack.c.b16 %v1490, %v1486
        %v2459 = vpack.c.b16 %v1491, %v1487
        %v2460 = vpack.c.b16 %v1492, %v1488
        %v2461 = vpack.c.b16 %v1497, %v1493
        %v2462 = vpack.c.b16 %v1498, %v1494
        %v2463 = vpack.c.b16 %v1499, %v1495
        %v2464 = vpack.c.b16 %v1500, %v1496
        %v2465 = vpack.c.b16 %v1505, %v1501
        %v2466 = vpack.c.b16 %v1506, %v1502
        %v2467 = vpack.c.b16 %v1507, %v1503
        %v2468 = vpack.c.b16 %v1508, %v1504
        %v2469 = vpack.c.b16 %v1513, %v1509
        %v2470 = vpack.c.b16 %v1514, %v1510
        %v2471 = vpack.c.b16 %v1515, %v1511
        %v2472 = vpack.c.b16 %v1516, %v1512
        %v2473 = vpack.c.b16 %v1521, %v1517
        %v2474 = vpack.c.b16 %v1522, %v1518
        %v2475 = vpack.c.b16 %v1523, %v1519
        %v2476 = vpack.c.b16 %v1524, %v1520
        %v2477 = vpack.c.b16 %v1529, %v1525
        %v2478 = vpack.c.b16 %v1530, %v1526
        %v2479 = vpack.c.b16 %v1531, %v1527
        %v2480 = vpack.c.b16 %v1532, %v1528
        %v2481 = vpack.c.b16 %v1537, %v1533
        %v2482 = vpack.c.b16 %v1538, %v1534
        %v2483 = vpack.c.b16 %v1539, %v1535
        %v2484 = vpack.c.b16 %v1540, %v1536
        %v2485 = vpack.c.b16 %v1545, %v1541
        %v2486 = vpack.c.b16 %v1546, %v1542
        %v2487 = vpack.c.b16 %v1547, %v1543
        %v2488 = vpack.c.b16 %v1548, %v1544
        %v2489 = vpack.c.b16 %v1553, %v1549
        %v2490 = vpack.c.b16 %v1554, %v1550
        %v2491 = vpack.c.b16 %v1555, %v1551
        %v2492 = vpack.c.b16 %v1556, %v1552
        %v2493 = vpack.c.b16 %v1561, %v1557
        %v2494 = vpack.c.b16 %v1562, %v1558
        %v2495 = vpack.c.b16 %v1563, %v1559
        %v2496 = vpack.c.b16 %v1564, %v1560
        %v2497 = vpack.c.b16 %v1569, %v1565
        %v2498 = vpack.c.b16 %v1570, %v1566
        %v2499 = vpack.c.b16 %v1571, %v1567
        %v2500 = vpack.c.b16 %v1572, %v1568
        %v2501 = vpack.c.b16 %v1577, %v1573
        %v2502 = vpack.c.b16 %v1578, %v1574
        %v2503 = vpack.c.b16 %v1579, %v1575
        %v2504 = vpack.c.b16 %v1580, %v1576
        %v2505 = vpack.c.b16 %v1585, %v1581
        %v2506 = vpack.c.b16 %v1586, %v1582
        %v2507 = vpack.c.b16 %v1587, %v1583
        %v2508 = vpack.c.b16 %v1588, %v1584
        %v2509 = vpack.c.b16 %v1593, %v1589
        %v2510 = vpack.c.b16 %v1594, %v1590
        %v2511 = vpack.c.b16 %v1595, %v1591
        %v2512 = vpack.c.b16 %v1596, %v1592
        %v2513 = vpack.c.b16 %v1601, %v1597
        %v2514 = vpack.c.b16 %v1602, %v1598
        %v2515 = vpack.c.b16 %v1603, %v1599
        %v2516 = vpack.c.b16 %v1604, %v1600
        %v2517 = vpack.c.b16 %v1609, %v1605
        %v2518 = vpack.c.b16 %v1610, %v1606
        %v2519 = vpack.c.b16 %v1611, %v1607
        %v2520 = vpack.c.b16 %v1612, %v1608
        %v2521 = vpack.c.b16 %v1617, %v1613
        %v2522 = vpack.c.b16 %v1618, %v1614
        %v2523 = vpack.c.b16 %v1619, %v1615
        %v2524 = vpack.c.b16 %v1620, %v1616
        %v2525 = vpack.c.b16 %v1625, %v1621
        %v2526 = vpack.c.b16 %v1626, %v1622
        %v2527 = vpack.c.b16 %v1627, %v1623
        %v2528 = vpack.c.b16 %v1628, %v1624
        %v2529 = vpack.c.b16 %v1633, %v1629
        %v2530 = vpack.c.b16 %v1634, %v1630
        %v2531 = vpack.c.b16 %v1635, %v1631
        %v2532 = vpack.c.b16 %v1636, %v1632
        %v2533 = vpack.c.b16 %v1641, %v1637
        %v2534 = vpack.c.b16 %v1642, %v1638
        %v2535 = vpack.c.b16 %v1643, %v1639
        %v2536 = vpack.c.b16 %v1644, %v1640
        %v2537 = vpack.c.b16 %v1649, %v1645
        %v2538 = vpack.c.b16 %v1650, %v1646
        %v2539 = vpack.c.b16 %v1651, %v1647
        %v2540 = vpack.c.b16 %v1652, %v1648
        %v2541 = vpack.c.b16 %v1657, %v1653
        %v2542 = vpack.c.b16 %v1658, %v1654
        %v2543 = vpack.c.b16 %v1659, %v1655
        %v2544 = vpack.c.b16 %v1660, %v1656
        %v2545 = vpack.c.b16 %v1665, %v1661
        %v2546 = vpack.c.b16 %v1666, %v1662
        %v2547 = vpack.c.b16 %v1667, %v1663
        %v2548 = vpack.c.b16 %v1668, %v1664
        %v2549 = vpack.c.b16 %v1673, %v1669
        %v2550 = vpack.c.b16 %v1674, %v1670
        %v2551 = vpack.c.b16 %v1675, %v1671
        %v2552 = vpack.c.b16 %v1676, %v1672
        %v2553 = vpack.c.b16 %v1681, %v1677
        %v2554 = vpack.c.b16 %v1682, %v1678
        %v2555 = vpack.c.b16 %v1683, %v1679
        %v2556 = vpack.c.b16 %v1684, %v1680
        %v2557 = vpack.c.b16 %v1689, %v1685
        %v2558 = vpack.c.b16 %v1690, %v1686
        %v2559 = vpack.c.b16 %v1691, %v1687
        %v2560 = vpack.c.b16 %v1692, %v1688
        %v2561 = vpack.c.b16 %v1697, %v1693
        %v2562 = vpack.c.b16 %v1698, %v1694
        %v2563 = vpack.c.b16 %v1699, %v1695
        %v2564 = vpack.c.b16 %v1700, %v1696
        %v2565 = vpack.c.b16 %v1705, %v1701
        %v2566 = vpack.c.b16 %v1706, %v1702
        %v2567 = vpack.c.b16 %v1707, %v1703
        %v2568 = vpack.c.b16 %v1708, %v1704
        %v2569 = vpack.c.b16 %v1713, %v1709
        %v2570 = vpack.c.b16 %v1714, %v1710
        %v2571 = vpack.c.b16 %v1715, %v1711
        %v2572 = vpack.c.b16 %v1716, %v1712
        %v2573 = vpack.c.b16 %v1721, %v1717
        %v2574 = vpack.c.b16 %v1722, %v1718
        %v2575 = vpack.c.b16 %v1723, %v1719
        %v2576 = vpack.c.b16 %v1724, %v1720
        %v2577 = vpack.c.b16 %v1729, %v1725
        %v2578 = vpack.c.b16 %v1730, %v1726
        %v2579 = vpack.c.b16 %v1731, %v1727
        %v2580 = vpack.c.b16 %v1732, %v1728
        %v2581 = vpack.c.b16 %v1737, %v1733
        %v2582 = vpack.c.b16 %v1738, %v1734
        %v2583 = vpack.c.b16 %v1739, %v1735
        %v2584 = vpack.c.b16 %v1740, %v1736
        %v2585 = vpack.c.b16 %v1745, %v1741
        %v2586 = vpack.c.b16 %v1746, %v1742
        %v2587 = vpack.c.b16 %v1747, %v1743
        %v2588 = vpack.c.b16 %v1748, %v1744
        %v2589 = vpack.c.b16 %v1753, %v1749
        %v2590 = vpack.c.b16 %v1754, %v1750
        %v2591 = vpack.c.b16 %v1755, %v1751
        %v2592 = vpack.c.b16 %v1756, %v1752
        %v2593 = vpack.c.b16 %v1761, %v1757
        %v2594 = vpack.c.b16 %v1762, %v1758
        %v2595 = vpack.c.b16 %v1763, %v1759
        %v2596 = vpack.c.b16 %v1764, %v1760
        %v2597 = vpack.c.b16 %v1769, %v1765
        %v2598 = vpack.c.b16 %v1770, %v1766
        %v2599 = vpack.c.b16 %v1771, %v1767
        %v2600 = vpack.c.b16 %v1772, %v1768
        %v2601 = vpack.c.b16 %v1777, %v1773
        %v2602 = vpack.c.b16 %v1778, %v1774
        %v2603 = vpack.c.b16 %v1779, %v1775
        %v2604 = vpack.c.b16 %v1780, %v1776
        %v2605 = vpack.c.b16 %v1785, %v1781
        %v2606 = vpack.c.b16 %v1786, %v1782
        %v2607 = vpack.c.b16 %v1787, %v1783
        %v2608 = vpack.c.b16 %v1788, %v1784
        %v2609 = vpack.c.b16 %v1793, %v1789
        %v2610 = vpack.c.b16 %v1794, %v1790
        %v2611 = vpack.c.b16 %v1795, %v1791
        %v2612 = vpack.c.b16 %v1796, %v1792
        %v2613 = vpack.c.b16 %v1801, %v1797
        %v2614 = vpack.c.b16 %v1802, %v1798
        %v2615 = vpack.c.b16 %v1803, %v1799
        %v2616 = vpack.c.b16 %v1804, %v1800
        %v2617 = vpack.c.b16 %v1809, %v1805
        %v2618 = vpack.c.b16 %v1810, %v1806
        %v2619 = vpack.c.b16 %v1811, %v1807
        %v2620 = vpack.c.b16 %v1812, %v1808
        %v2621 = vpack.c.b16 %v1817, %v1813
        %v2622 = vpack.c.b16 %v1818, %v1814
        %v2623 = vpack.c.b16 %v1819, %v1815
        %v2624 = vpack.c.b16 %v1820, %v1816
        %v2625 = vpack.c.b16 %v1825, %v1821
        %v2626 = vpack.c.b16 %v1826, %v1822
        %v2627 = vpack.c.b16 %v1827, %v1823
        %v2628 = vpack.c.b16 %v1828, %v1824
        %v2629 = vpack.c.b16 %v1833, %v1829
        %v2630 = vpack.c.b16 %v1834, %v1830
        %v2631 = vpack.c.b16 %v1835, %v1831
        %v2632 = vpack.c.b16 %v1836, %v1832
        %v2633 = vpack.c.b16 %v1841, %v1837
        %v2634 = vpack.c.b16 %v1842, %v1838
        %v2635 = vpack.c.b16 %v1843, %v1839
        %v2636 = vpack.c.b16 %v1844, %v1840
        %v2637 = vpack.c.b16 %v1849, %v1845
        %v2638 = vpack.c.b16 %v1850, %v1846
        %v2639 = vpack.c.b16 %v1851, %v1847
        %v2640 = vpack.c.b16 %v1852, %v1848
        %v2641 = vpack.c.b16 %v1857, %v1853
        %v2642 = vpack.c.b16 %v1858, %v1854
        %v2643 = vpack.c.b16 %v1859, %v1855
        %v2644 = vpack.c.b16 %v1860, %v1856
        %v2645 = vpack.c.b16 %v1865, %v1861
        %v2646 = vpack.c.b16 %v1866, %v1862
        %v2647 = vpack.c.b16 %v1867, %v1863
        %v2648 = vpack.c.b16 %v1868, %v1864
        %v2649 = vpack.c.b16 %v1873, %v1869
        %v2650 = vpack.c.b16 %v1874, %v1870
        %v2651 = vpack.c.b16 %v1875, %v1871
        %v2652 = vpack.c.b16 %v1876, %v1872
        %v2653 = vpack.c.b16 %v1881, %v1877
        %v2654 = vpack.c.b16 %v1882, %v1878
        %v2655 = vpack.c.b16 %v1883, %v1879
        %v2656 = vpack.c.b16 %v1884, %v1880
        %v2657 = vpack.c.b16 %v1889, %v1885
        %v2658 = vpack.c.b16 %v1890, %v1886
        %v2659 = vpack.c.b16 %v1891, %v1887
        %v2660 = vpack.c.b16 %v1892, %v1888
        %v2661 = vpack.c.b16 %v1897, %v1893
        %v2662 = vpack.c.b16 %v1898, %v1894
        %v2663 = vpack.c.b16 %v1899, %v1895
        %v2664 = vpack.c.b16 %v1900, %v1896
        %v2665 = vpack.c.b16 %v1905, %v1901
        %v2666 = vpack.c.b16 %v1906, %v1902
        %v2667 = vpack.c.b16 %v1907, %v1903
        %v2668 = vpack.c.b16 %v1908, %v1904
        %v2669 = vpack.c.b16 %v1913, %v1909
        %v2670 = vpack.c.b16 %v1914, %v1910
        %v2671 = vpack.c.b16 %v1915, %v1911
        %v2672 = vpack.c.b16 %v1916, %v1912
        %v2673 = vpack.c.b16 %v1921, %v1917
        %v2674 = vpack.c.b16 %v1922, %v1918
        %v2675 = vpack.c.b16 %v1923, %v1919
        %v2676 = vpack.c.b16 %v1924, %v1920
        %v2677 = vpack.c.b16 %v1929, %v1925
        %v2678 = vpack.c.b16 %v1930, %v1926
        %v2679 = vpack.c.b16 %v1931, %v1927
        %v2680 = vpack.c.b16 %v1932, %v1928
        %v2681 = vpack.c.b16 %v1937, %v1933
        %v2682 = vpack.c.b16 %v1938, %v1934
        %v2683 = vpack.c.b16 %v1939, %v1935
        %v2684 = vpack.c.b16 %v1940, %v1936
        %v2685 = vpack.c.b16 %v1945, %v1941
        %v2686 = vpack.c.b16 %v1946, %v1942
        %v2687 = vpack.c.b16 %v1947, %v1943
        %v2688 = vpack.c.b16 %v1948, %v1944
        %v2689 = vpack.c.b16 %v1953, %v1949
        %v2690 = vpack.c.b16 %v1954, %v1950
        %v2691 = vpack.c.b16 %v1955, %v1951
        %v2692 = vpack.c.b16 %v1956, %v1952
        %v2693 = vpack.c.b16 %v1961, %v1957
        %v2694 = vpack.c.b16 %v1962, %v1958
        %v2695 = vpack.c.b16 %v1963, %v1959
        %v2696 = vpack.c.b16 %v1964, %v1960
        %v2697 = vpack.c.b16 %v1969, %v1965
        %v2698 = vpack.c.b16 %v1970, %v1966
        %v2699 = vpack.c.b16 %v1971, %v1967
        %v2700 = vpack.c.b16 %v1972, %v1968
        %v2701 = vpack.c.b16 %v1977, %v1973
        %v2702 = vpack.c.b16 %v1978, %v1974
        %v2703 = vpack.c.b16 %v1979, %v1975
        %v2704 = vpack.c.b16 %v1980, %v1976
        %v2705 = vpack.c.b16 %v1985, %v1981
        %v2706 = vpack.c.b16 %v1986, %v1982
        %v2707 = vpack.c.b16 %v1987, %v1983
        %v2708 = vpack.c.b16 %v1988, %v1984
        %v2709 = vpack.c.b16 %v1993, %v1989
        %v2710 = vpack.c.b16 %v1994, %v1990
        %v2711 = vpack.c.b16 %v1995, %v1991
        %v2712 = vpack.c.b16 %v1996, %v1992
        %v2713 = vpack.c.b16 %v2001, %v1997
        %v2714 = vpack.c.b16 %v2002, %v1998
        %v2715 = vpack.c.b16 %v2003, %v1999
        %v2716 = vpack.c.b16 %v2004, %v2000
        %v2717 = vpack.c.b16 %v2009, %v2005
        %v2718 = vpack.c.b16 %v2010, %v2006
        %v2719 = vpack.c.b16 %v2011, %v2007
        %v2720 = vpack.c.b16 %v2012, %v2008
        %v2721 = vpack.c.b16 %v2017, %v2013
        %v2722 = vpack.c.b16 %v2018, %v2014
        %v2723 = vpack.c.b16 %v2019, %v2015
        %v2724 = vpack.c.b16 %v2020, %v2016
        %v2725 = vpack.c.b16 %v2025, %v2021
        %v2726 = vpack.c.b16 %v2026, %v2022
        %v2727 = vpack.c.b16 %v2027, %v2023
        %v2728 = vpack.c.b16 %v2028, %v2024
        %v2729 = vpack.c.b16 %v2033, %v2029
        %v2730 = vpack.c.b16 %v2034, %v2030
        %v2731 = vpack.c.b16 %v2035, %v2031
        %v2732 = vpack.c.b16 %v2036, %v2032
        %v2733 = vpack.c.b16 %v2041, %v2037
        %v2734 = vpack.c.b16 %v2042, %v2038
        %v2735 = vpack.c.b16 %v2043, %v2039
        %v2736 = vpack.c.b16 %v2044, %v2040
        %v2737 = vpack.c.b16 %v2049, %v2045
        %v2738 = vpack.c.b16 %v2050, %v2046
        %v2739 = vpack.c.b16 %v2051, %v2047
        %v2740 = vpack.c.b16 %v2052, %v2048
        %v2741 = vpack.c.b16 %v2057, %v2053
        %v2742 = vpack.c.b16 %v2058, %v2054
        %v2743 = vpack.c.b16 %v2059, %v2055
        %v2744 = vpack.c.b16 %v2060, %v2056
        %v2745 = vpack.c.b16 %v2065, %v2061
        %v2746 = vpack.c.b16 %v2066, %v2062
        %v2747 = vpack.c.b16 %v2067, %v2063
        %v2748 = vpack.c.b16 %v2068, %v2064
        %v2749 = vpack.c.b16 %v2073, %v2069
        %v2750 = vpack.c.b16 %v2074, %v2070
        %v2751 = vpack.c.b16 %v2075, %v2071
        %v2752 = vpack.c.b16 %v2076, %v2072
        %v2753 = vpack.c.b16 %v2081, %v2077
        %v2754 = vpack.c.b16 %v2082, %v2078
        %v2755 = vpack.c.b16 %v2083, %v2079
        %v2756 = vpack.c.b16 %v2084, %v2080
        %v2757 = vpack.c.b16 %v2089, %v2085
        %v2758 = vpack.c.b16 %v2090, %v2086
        %v2759 = vpack.c.b16 %v2091, %v2087
        %v2760 = vpack.c.b16 %v2092, %v2088
        %v2761 = vpack.c.b16 %v2097, %v2093
        %v2762 = vpack.c.b16 %v2098, %v2094
        %v2763 = vpack.c.b16 %v2099, %v2095
        %v2764 = vpack.c.b16 %v2100, %v2096
        %v2765 = vpack.c.b16 %v2105, %v2101
        %v2766 = vpack.c.b16 %v2106, %v2102
        %v2767 = vpack.c.b16 %v2107, %v2103
        %v2768 = vpack.c.b16 %v2108, %v2104
        %v2769 = vpack.c.b16 %v2113, %v2109
        %v2770 = vpack.c.b16 %v2114, %v2110
        %v2771 = vpack.c.b16 %v2115, %v2111
        %v2772 = vpack.c.b16 %v2116, %v2112
        %v2773 = vpack.c.b16 %v2121, %v2117
        %v2774 = vpack.c.b16 %v2122, %v2118
        %v2775 = vpack.c.b16 %v2123, %v2119
        %v2776 = vpack.c.b16 %v2124, %v2120
        %v2777 = vpack.c.b16 %v2129, %v2125
        %v2778 = vpack.c.b16 %v2130, %v2126
        %v2779 = vpack.c.b16 %v2131, %v2127
        %v2780 = vpack.c.b16 %v2132, %v2128
        %v2781 = vpack.c.b16 %v2137, %v2133
        %v2782 = vpack.c.b16 %v2138, %v2134
        %v2783 = vpack.c.b16 %v2139, %v2135
        %v2784 = vpack.c.b16 %v2140, %v2136
        %v2785 = vpack.c.b16 %v2145, %v2141
        %v2786 = vpack.c.b16 %v2146, %v2142
        %v2787 = vpack.c.b16 %v2147, %v2143
        %v2788 = vpack.c.b16 %v2148, %v2144
        %v2789 = vpack.c.b16 %v2153, %v2149
        %v2790 = vpack.c.b16 %v2154, %v2150
        %v2791 = vpack.c.b16 %v2155, %v2151
        %v2792 = vpack.c.b16 %v2156, %v2152
        %v2793 = vpack.c.b16 %v2161, %v2157
        %v2794 = vpack.c.b16 %v2162, %v2158
        %v2795 = vpack.c.b16 %v2163, %v2159
        %v2796 = vpack.c.b16 %v2164, %v2160
        %v2797 = vpack.c.b16 %v2169, %v2165
        %v2798 = vpack.c.b16 %v2170, %v2166
        %v2799 = vpack.c.b16 %v2171, %v2167
        %v2800 = vpack.c.b16 %v2172, %v2168
        %v2801 = vpack.c.b16 %v2177, %v2173
        %v2802 = vpack.c.b16 %v2178, %v2174
        %v2803 = vpack.c.b16 %v2179, %v2175
        %v2804 = vpack.c.b16 %v2180, %v2176
        %v2805 = vpack.c.b16 %v2185, %v2181
        %v2806 = vpack.c.b16 %v2186, %v2182
        %v2807 = vpack.c.b16 %v2187, %v2183
        %v2808 = vpack.c.b16 %v2188, %v2184
        %v2809 = vpack.c.b16 %v2193, %v2189
        %v2810 = vpack.c.b16 %v2194, %v2190
        %v2811 = vpack.c.b16 %v2195, %v2191
        %v2812 = vpack.c.b16 %v2196, %v2192
        %v2813 = vpack.c.b16 %v2201, %v2197
        %v2814 = vpack.c.b16 %v2202, %v2198
        %v2815 = vpack.c.b16 %v2203, %v2199
        %v2816 = vpack.c.b16 %v2204, %v2200
        %v2817 = vpack.c.b16 %v2209, %v2205
        %v2818 = vpack.c.b16 %v2210, %v2206
        %v2819 = vpack.c.b16 %v2211, %v2207
        %v2820 = vpack.c.b16 %v2212, %v2208
        %v2821 = vpack.c.b16 %v2217, %v2213
        %v2822 = vpack.c.b16 %v2218, %v2214
        %v2823 = vpack.c.b16 %v2219, %v2215
        %v2824 = vpack.c.b16 %v2220, %v2216
        %v2825 = vpack.c.b16 %v2225, %v2221
        %v2826 = vpack.c.b16 %v2226, %v2222
        %v2827 = vpack.c.b16 %v2227, %v2223
        %v2828 = vpack.c.b16 %v2228, %v2224
        %v2829 = vpack.c.b16 %v2233, %v2229
        %v2830 = vpack.c.b16 %v2234, %v2230
        %v2831 = vpack.c.b16 %v2235, %v2231
        %v2832 = vpack.c.b16 %v2236, %v2232
        %v2833 = vpack.c.b16 %v2241, %v2237
        %v2834 = vpack.c.b16 %v2242, %v2238
        %v2835 = vpack.c.b16 %v2243, %v2239
        %v2836 = vpack.c.b16 %v2244, %v2240
        %v2837 = vpack.c.b16 %v2249, %v2245
        %v2838 = vpack.c.b16 %v2250, %v2246
        %v2839 = vpack.c.b16 %v2251, %v2247
        %v2840 = vpack.c.b16 %v2252, %v2248
        %v2841 = vpack.c.b16 %v2257, %v2253
        %v2842 = vpack.c.b16 %v2258, %v2254
        %v2843 = vpack.c.b16 %v2259, %v2255
        %v2844 = vpack.c.b16 %v2260, %v2256
        %v2845 = vpack.c.b16 %v2265, %v2261
        %v2846 = vpack.c.b16 %v2266, %v2262
        %v2847 = vpack.c.b16 %v2267, %v2263
        %v2848 = vpack.c.b16 %v2268, %v2264
        %v2849 = vpack.c.b16 %v2273, %v2269
        %v2850 = vpack.c.b16 %v2274, %v2270
        %v2851 = vpack.c.b16 %v2275, %v2271
        %v2852 = vpack.c.b16 %v2276, %v2272
        %v2853 = vpack.c.b16 %v2281, %v2277
        %v2854 = vpack.c.b16 %v2282, %v2278
        %v2855 = vpack.c.b16 %v2283, %v2279
        %v2856 = vpack.c.b16 %v2284, %v2280
        %v2857 = vpack.c.b16 %v2289, %v2285
        %v2858 = vpack.c.b16 %v2290, %v2286
        %v2859 = vpack.c.b16 %v2291, %v2287
        %v2860 = vpack.c.b16 %v2292, %v2288
        %v2861 = vpack.c.b16 %v2297, %v2293
        %v2862 = vpack.c.b16 %v2298, %v2294
        %v2863 = vpack.c.b16 %v2299, %v2295
        %v2864 = vpack.c.b16 %v2300, %v2296
        %v2865 = vpack.c.b16 %v2305, %v2301
        %v2866 = vpack.c.b16 %v2306, %v2302
        %v2867 = vpack.c.b16 %v2307, %v2303
        %v2868 = vpack.c.b16 %v2308, %v2304
        %v2869 = vpack.c.b16 %v2313, %v2309
        %v2870 = vpack.c.b16 %v2314, %v2310
        %v2871 = vpack.c.b16 %v2315, %v2311
        %v2872 = vpack.c.b16 %v2316, %v2312
        %v2873 = vpack.c.b16 %v2321, %v2317
        %v2874 = vpack.c.b16 %v2322, %v2318
        %v2875 = vpack.c.b16 %v2323, %v2319
        %v2876 = vpack.c.b16 %v2324, %v2320
        %v2877 = vpack.c.b16 %v2329, %v2325
        %v2878 = vpack.c.b16 %v2330, %v2326
        %v2879 = vpack.c.b16 %v2331, %v2327
        %v2880 = vpack.c.b16 %v2332, %v2328
        %v2881 = vpack.c.b16 %v2337, %v2333
        %v2882 = vpack.c.b16 %v2338, %v2334
        %v2883 = vpack.c.b16 %v2339, %v2335
        %v2884 = vpack.c.b16 %v2340, %v2336
        %v2885 = vpack.c.b16 %v2345, %v2341
        %v2886 = vpack.c.b16 %v2346, %v2342
        %v2887 = vpack.c.b16 %v2347, %v2343
        %v2888 = vpack.c.b16 %v2348, %v2344
        %v2889 = vpack.c.b16 %v2353, %v2349
        %v2890 = vpack.c.b16 %v2354, %v2350
        %v2891 = vpack.c.b16 %v2355, %v2351
        %v2892 = vpack.c.b16 %v2356, %v2352
        %v2893 = vpack.c.b16 %v2361, %v2357
        %v2894 = vpack.c.b16 %v2362, %v2358
        %v2895 = vpack.c.b16 %v2363, %v2359
        %v2896 = vpack.c.b16 %v2364, %v2360
        %v2897 = vpack.c.b16 %v2369, %v2365
        %v2898 = vpack.c.b16 %v2370, %v2366
        %v2899 = vpack.c.b16 %v2371, %v2367
        %v2900 = vpack.c.b16 %v2372, %v2368
        %v2901 = vpack.c.b16 %v2377, %v2373
        %v2902 = vpack.c.b16 %v2378, %v2374
        %v2903 = vpack.c.b16 %v2379, %v2375
        %v2904 = vpack.c.b16 %v2380, %v2376
        %v2905 = vpack.c.b16 %v2385, %v2381
        %v2906 = vpack.c.b16 %v2386, %v2382
        %v2907 = vpack.c.b16 %v2387, %v2383
        %v2908 = vpack.c.b16 %v2388, %v2384
        %v2909 = vpack.c.b16 %v2393, %v2389
        %v2910 = vpack.c.b16 %v2394, %v2390
        %v2911 = vpack.c.b16 %v2395, %v2391
        %v2912 = vpack.c.b16 %v2396, %v2392
        %v2913 = vpack.c.b16 %v2401, %v2397
        %v2914 = vpack.c.b16 %v2402, %v2398
        %v2915 = vpack.c.b16 %v2403, %v2399
        %v2916 = vpack.c.b16 %v2404, %v2400
        %3429 = vmatprep.subr.bf16.mxu0 %v2434
        %3430 = vmatpush1.bf16.msra.mxu0 %v2433
        %3431 = vmatprep.subr.bf16.mxu0 %v2430
        %3432 = vmatpush1.bf16.msra.mxu0 %v2429
        %3433 = vmatprep.subr.bf16.mxu0 %v2426
        %3434 = vmatpush1.bf16.msra.mxu0 %v2425
        %3435 = vmatprep.subr.bf16.mxu0 %v2422
        %3436 = vmatpush1.bf16.msra.mxu0 %v2421
        %3437 = vmatprep.subr.bf16.mxu0 %v2418
        %3438 = vmatpush1.bf16.msra.mxu0 %v2417
        %3439 = vmatprep.subr.bf16.mxu0 %v2414
        %3440 = vmatpush1.bf16.msra.mxu0 %v2413
        %3441 = vmatprep.subr.bf16.mxu0 %v2410
        %3442 = vmatpush1.bf16.msra.mxu0 %v2409
        %3443 = vmatprep.subr.bf16.mxu0 %v2406
        %3444 = vmatpush1.bf16.msra.mxu0 %v2405
        %3445 = vmatprep.subr.bf16.mxu0 %v2466
        %3446 = vmatpush2.bf16.msra.mxu0 %v2465
        %3447 = vmatprep.subr.bf16.mxu0 %v2462
        %3448 = vmatpush2.bf16.msra.mxu0 %v2461
        %3449 = vmatprep.subr.bf16.mxu0 %v2458
        %3450 = vmatpush2.bf16.msra.mxu0 %v2457
        %3451 = vmatprep.subr.bf16.mxu0 %v2454
        %3452 = vmatpush2.bf16.msra.mxu0 %v2453
        %3453 = vmatprep.subr.bf16.mxu0 %v2450
        %3454 = vmatpush2.bf16.msra.mxu0 %v2449
        %3455 = vmatprep.subr.bf16.mxu0 %v2446
        %3456 = vmatpush2.bf16.msra.mxu0 %v2445
        %3457 = vmatprep.subr.bf16.mxu0 %v2442
        %3458 = vmatpush2.bf16.msra.mxu0 %v2441
        %3459 = vmatprep.subr.bf16.mxu0 %v2438
        %3460 = vmatpush2.bf16.msra.mxu0 %v2437
        %3461 = vmatprep.mubr.bf16.mxu0 %v838
        %3462 = vmatmul.mubr.bf16.gmra.mxu0 %v837
        %v3463 = vpop.f32.mrf.mxu0
        %v3464 = vadd.f32 %v796, %v3463
        %v3465 = vpop.f32.mrf.mxu0
        %v3466 = vadd.f32 %v800, %v3465
        %v3467 = vpop.f32.mrf.mxu0
        %v3468 = vpop.f32.mrf.mxu0
        %3469 = vdwg.mxu0
        %3470 = vmatprep.subr.bf16.mxu0 %v2498
        %3471 = vmatpush1.bf16.msra.mxu0 %v2497
        %3472 = vmatprep.subr.bf16.mxu0 %v2494
        %3473 = vmatpush1.bf16.msra.mxu0 %v2493
        %3474 = vmatprep.subr.bf16.mxu0 %v2490
        %3475 = vmatpush1.bf16.msra.mxu0 %v2489
        %3476 = vmatprep.subr.bf16.mxu0 %v2486
        %3477 = vmatpush1.bf16.msra.mxu0 %v2485
        %3478 = vmatprep.subr.bf16.mxu0 %v2482
        %3479 = vmatpush1.bf16.msra.mxu0 %v2481
        %3480 = vmatprep.subr.bf16.mxu0 %v2478
        %3481 = vmatpush1.bf16.msra.mxu0 %v2477
        %3482 = vmatprep.subr.bf16.mxu0 %v2474
        %3483 = vmatpush1.bf16.msra.mxu0 %v2473
        %3484 = vmatprep.subr.bf16.mxu0 %v2470
        %3485 = vmatpush1.bf16.msra.mxu0 %v2469
        %3486 = vmatprep.subr.bf16.mxu0 %v2530
        %3487 = vmatpush2.bf16.msra.mxu0 %v2529
        %3488 = vmatprep.subr.bf16.mxu0 %v2526
        %3489 = vmatpush2.bf16.msra.mxu0 %v2525
        %3490 = vmatprep.subr.bf16.mxu0 %v2522
        %3491 = vmatpush2.bf16.msra.mxu0 %v2521
        %3492 = vmatprep.subr.bf16.mxu0 %v2518
        %3493 = vmatpush2.bf16.msra.mxu0 %v2517
        %3494 = vmatprep.subr.bf16.mxu0 %v2514
        %3495 = vmatpush2.bf16.msra.mxu0 %v2513
        %3496 = vmatprep.subr.bf16.mxu0 %v2510
        %3497 = vmatpush2.bf16.msra.mxu0 %v2509
        %3498 = vmatprep.subr.bf16.mxu0 %v2506
        %3499 = vmatpush2.bf16.msra.mxu0 %v2505
        %3500 = vmatprep.subr.bf16.mxu0 %v2502
        %3501 = vmatpush2.bf16.msra.mxu0 %v2501
        %3502 = vmatprep.mubr.bf16.mxu0 %v840
        %3503 = vmatmul.mubr.bf16.gmra.mxu0 %v839
        %v3504 = vpop.f32.mrf.mxu0
        %v3505 = vadd.f32 %v3464, %v3504
        %v3506 = vpop.f32.mrf.mxu0
        %v3507 = vadd.f32 %v3466, %v3506
        %v3508 = vpop.f32.mrf.mxu0
        %v3509 = vpop.f32.mrf.mxu0
        %3510 = vdwg.mxu0
        %3511 = vmatprep.subr.bf16.mxu0 %v2562
        %3512 = vmatpush1.bf16.msra.mxu0 %v2561
        %3513 = vmatprep.subr.bf16.mxu0 %v2558
        %3514 = vmatpush1.bf16.msra.mxu0 %v2557
        %3515 = vmatprep.subr.bf16.mxu0 %v2554
        %3516 = vmatpush1.bf16.msra.mxu0 %v2553
        %3517 = vmatprep.subr.bf16.mxu0 %v2550
        %3518 = vmatpush1.bf16.msra.mxu0 %v2549
        %3519 = vmatprep.subr.bf16.mxu0 %v2546
        %3520 = vmatpush1.bf16.msra.mxu0 %v2545
        %3521 = vmatprep.subr.bf16.mxu0 %v2542
        %3522 = vmatpush1.bf16.msra.mxu0 %v2541
        %3523 = vmatprep.subr.bf16.mxu0 %v2538
        %3524 = vmatpush1.bf16.msra.mxu0 %v2537
        %3525 = vmatprep.subr.bf16.mxu0 %v2534
        %3526 = vmatpush1.bf16.msra.mxu0 %v2533
        %3527 = vmatprep.subr.bf16.mxu0 %v2594
        %3528 = vmatpush2.bf16.msra.mxu0 %v2593
        %3529 = vmatprep.subr.bf16.mxu0 %v2590
        %3530 = vmatpush2.bf16.msra.mxu0 %v2589
        %3531 = vmatprep.subr.bf16.mxu0 %v2586
        %3532 = vmatpush2.bf16.msra.mxu0 %v2585
        %3533 = vmatprep.subr.bf16.mxu0 %v2582
        %3534 = vmatpush2.bf16.msra.mxu0 %v2581
        %3535 = vmatprep.subr.bf16.mxu0 %v2578
        %3536 = vmatpush2.bf16.msra.mxu0 %v2577
        %3537 = vmatprep.subr.bf16.mxu0 %v2574
        %3538 = vmatpush2.bf16.msra.mxu0 %v2573
        %3539 = vmatprep.subr.bf16.mxu0 %v2570
        %3540 = vmatpush2.bf16.msra.mxu0 %v2569
        %3541 = vmatprep.subr.bf16.mxu0 %v2566
        %3542 = vmatpush2.bf16.msra.mxu0 %v2565
        %3543 = vmatprep.mubr.bf16.mxu0 %v842
        %3544 = vmatmul.mubr.bf16.gmra.mxu0 %v841
        %v3545 = vpop.f32.mrf.mxu0
        %v3546 = vadd.f32 %v3505, %v3545
        %v3547 = vpop.f32.mrf.mxu0
        %v3548 = vadd.f32 %v3507, %v3547
        %v3549 = vpop.f32.mrf.mxu0
        %v3550 = vpop.f32.mrf.mxu0
        %3551 = vdwg.mxu0
        %3552 = vmatprep.subr.bf16.mxu0 %v2626
        %3553 = vmatpush1.bf16.msra.mxu0 %v2625
        %3554 = vmatprep.subr.bf16.mxu0 %v2622
        %3555 = vmatpush1.bf16.msra.mxu0 %v2621
        %3556 = vmatprep.subr.bf16.mxu0 %v2618
        %3557 = vmatpush1.bf16.msra.mxu0 %v2617
        %3558 = vmatprep.subr.bf16.mxu0 %v2614
        %3559 = vmatpush1.bf16.msra.mxu0 %v2613
        %3560 = vmatprep.subr.bf16.mxu0 %v2610
        %3561 = vmatpush1.bf16.msra.mxu0 %v2609
        %3562 = vmatprep.subr.bf16.mxu0 %v2606
        %3563 = vmatpush1.bf16.msra.mxu0 %v2605
        %3564 = vmatprep.subr.bf16.mxu0 %v2602
        %3565 = vmatpush1.bf16.msra.mxu0 %v2601
        %3566 = vmatprep.subr.bf16.mxu0 %v2598
        %3567 = vmatpush1.bf16.msra.mxu0 %v2597
        %3568 = vmatprep.subr.bf16.mxu0 %v2658
        %3569 = vmatpush2.bf16.msra.mxu0 %v2657
        %3570 = vmatprep.subr.bf16.mxu0 %v2654
        %3571 = vmatpush2.bf16.msra.mxu0 %v2653
        %3572 = vmatprep.subr.bf16.mxu0 %v2650
        %3573 = vmatpush2.bf16.msra.mxu0 %v2649
        %3574 = vmatprep.subr.bf16.mxu0 %v2646
        %3575 = vmatpush2.bf16.msra.mxu0 %v2645
        %3576 = vmatprep.subr.bf16.mxu0 %v2642
        %3577 = vmatpush2.bf16.msra.mxu0 %v2641
        %3578 = vmatprep.subr.bf16.mxu0 %v2638
        %3579 = vmatpush2.bf16.msra.mxu0 %v2637
        %3580 = vmatprep.subr.bf16.mxu0 %v2634
        %3581 = vmatpush2.bf16.msra.mxu0 %v2633
        %3582 = vmatprep.subr.bf16.mxu0 %v2630
        %3583 = vmatpush2.bf16.msra.mxu0 %v2629
        %3584 = vmatprep.mubr.bf16.mxu0 %v844
        %3585 = vmatmul.mubr.bf16.gmra.mxu0 %v843
        %v3586 = vpop.f32.mrf.mxu0
        %v3587 = vadd.f32 %v3546, %v3586
        %v3588 = vpop.f32.mrf.mxu0
        %v3589 = vadd.f32 %v3548, %v3588
        %v3590 = vpop.f32.mrf.mxu0
        %v3591 = vpop.f32.mrf.mxu0
        %3592 = vdwg.mxu0
        %3593 = vmatprep.subr.bf16.mxu0 %v2690
        %3594 = vmatpush1.bf16.msra.mxu0 %v2689
        %3595 = vmatprep.subr.bf16.mxu0 %v2686
        %3596 = vmatpush1.bf16.msra.mxu0 %v2685
        %3597 = vmatprep.subr.bf16.mxu0 %v2682
        %3598 = vmatpush1.bf16.msra.mxu0 %v2681
        %3599 = vmatprep.subr.bf16.mxu0 %v2678
        %3600 = vmatpush1.bf16.msra.mxu0 %v2677
        %3601 = vmatprep.subr.bf16.mxu0 %v2674
        %3602 = vmatpush1.bf16.msra.mxu0 %v2673
        %3603 = vmatprep.subr.bf16.mxu0 %v2670
        %3604 = vmatpush1.bf16.msra.mxu0 %v2669
        %3605 = vmatprep.subr.bf16.mxu0 %v2666
        %3606 = vmatpush1.bf16.msra.mxu0 %v2665
        %3607 = vmatprep.subr.bf16.mxu0 %v2662
        %3608 = vmatpush1.bf16.msra.mxu0 %v2661
        %3609 = vmatprep.subr.bf16.mxu0 %v2722
        %3610 = vmatpush2.bf16.msra.mxu0 %v2721
        %3611 = vmatprep.subr.bf16.mxu0 %v2718
        %3612 = vmatpush2.bf16.msra.mxu0 %v2717
        %3613 = vmatprep.subr.bf16.mxu0 %v2714
        %3614 = vmatpush2.bf16.msra.mxu0 %v2713
        %3615 = vmatprep.subr.bf16.mxu0 %v2710
        %3616 = vmatpush2.bf16.msra.mxu0 %v2709
        %3617 = vmatprep.subr.bf16.mxu0 %v2706
        %3618 = vmatpush2.bf16.msra.mxu0 %v2705
        %3619 = vmatprep.subr.bf16.mxu0 %v2702
        %3620 = vmatpush2.bf16.msra.mxu0 %v2701
        %3621 = vmatprep.subr.bf16.mxu0 %v2698
        %3622 = vmatpush2.bf16.msra.mxu0 %v2697
        %3623 = vmatprep.subr.bf16.mxu0 %v2694
        %3624 = vmatpush2.bf16.msra.mxu0 %v2693
        %3625 = vmatprep.mubr.bf16.mxu0 %v846
        %3626 = vmatmul.mubr.bf16.gmra.mxu0 %v845
        %v3627 = vpop.f32.mrf.mxu0
        %v3628 = vadd.f32 %v3587, %v3627
        %v3629 = vpop.f32.mrf.mxu0
        %v3630 = vadd.f32 %v3589, %v3629
        %v3631 = vpop.f32.mrf.mxu0
        %v3632 = vpop.f32.mrf.mxu0
        %3633 = vdwg.mxu0
        %3634 = vmatprep.subr.bf16.mxu0 %v2754
        %3635 = vmatpush1.bf16.msra.mxu0 %v2753
        %3636 = vmatprep.subr.bf16.mxu0 %v2750
        %3637 = vmatpush1.bf16.msra.mxu0 %v2749
        %3638 = vmatprep.subr.bf16.mxu0 %v2746
        %3639 = vmatpush1.bf16.msra.mxu0 %v2745
        %3640 = vmatprep.subr.bf16.mxu0 %v2742
        %3641 = vmatpush1.bf16.msra.mxu0 %v2741
        %3642 = vmatprep.subr.bf16.mxu0 %v2738
        %3643 = vmatpush1.bf16.msra.mxu0 %v2737
        %3644 = vmatprep.subr.bf16.mxu0 %v2734
        %3645 = vmatpush1.bf16.msra.mxu0 %v2733
        %3646 = vmatprep.subr.bf16.mxu0 %v2730
        %3647 = vmatpush1.bf16.msra.mxu0 %v2729
        %3648 = vmatprep.subr.bf16.mxu0 %v2726
        %3649 = vmatpush1.bf16.msra.mxu0 %v2725
        %3650 = vmatprep.subr.bf16.mxu0 %v2786
        %3651 = vmatpush2.bf16.msra.mxu0 %v2785
        %3652 = vmatprep.subr.bf16.mxu0 %v2782
        %3653 = vmatpush2.bf16.msra.mxu0 %v2781
        %3654 = vmatprep.subr.bf16.mxu0 %v2778
        %3655 = vmatpush2.bf16.msra.mxu0 %v2777
        %3656 = vmatprep.subr.bf16.mxu0 %v2774
        %3657 = vmatpush2.bf16.msra.mxu0 %v2773
        %3658 = vmatprep.subr.bf16.mxu0 %v2770
        %3659 = vmatpush2.bf16.msra.mxu0 %v2769
        %3660 = vmatprep.subr.bf16.mxu0 %v2766
        %3661 = vmatpush2.bf16.msra.mxu0 %v2765
        %3662 = vmatprep.subr.bf16.mxu0 %v2762
        %3663 = vmatpush2.bf16.msra.mxu0 %v2761
        %3664 = vmatprep.subr.bf16.mxu0 %v2758
        %3665 = vmatpush2.bf16.msra.mxu0 %v2757
        %3666 = vmatprep.mubr.bf16.mxu0 %v848
        %3667 = vmatmul.mubr.bf16.gmra.mxu0 %v847
        %v3668 = vpop.f32.mrf.mxu0
        %v3669 = vadd.f32 %v3628, %v3668
        %v3670 = vpop.f32.mrf.mxu0
        %v3671 = vadd.f32 %v3630, %v3670
        %v3672 = vpop.f32.mrf.mxu0
        %v3673 = vpop.f32.mrf.mxu0
        %3674 = vdwg.mxu0
        %3675 = vmatprep.subr.bf16.mxu0 %v2818
        %3676 = vmatpush1.bf16.msra.mxu0 %v2817
        %3677 = vmatprep.subr.bf16.mxu0 %v2814
        %3678 = vmatpush1.bf16.msra.mxu0 %v2813
        %3679 = vmatprep.subr.bf16.mxu0 %v2810
        %3680 = vmatpush1.bf16.msra.mxu0 %v2809
        %3681 = vmatprep.subr.bf16.mxu0 %v2806
        %3682 = vmatpush1.bf16.msra.mxu0 %v2805
        %3683 = vmatprep.subr.bf16.mxu0 %v2802
        %3684 = vmatpush1.bf16.msra.mxu0 %v2801
        %3685 = vmatprep.subr.bf16.mxu0 %v2798
        %3686 = vmatpush1.bf16.msra.mxu0 %v2797
        %3687 = vmatprep.subr.bf16.mxu0 %v2794
        %3688 = vmatpush1.bf16.msra.mxu0 %v2793
        %3689 = vmatprep.subr.bf16.mxu0 %v2790
        %3690 = vmatpush1.bf16.msra.mxu0 %v2789
        %3691 = vmatprep.subr.bf16.mxu0 %v2850
        %3692 = vmatpush2.bf16.msra.mxu0 %v2849
        %3693 = vmatprep.subr.bf16.mxu0 %v2846
        %3694 = vmatpush2.bf16.msra.mxu0 %v2845
        %3695 = vmatprep.subr.bf16.mxu0 %v2842
        %3696 = vmatpush2.bf16.msra.mxu0 %v2841
        %3697 = vmatprep.subr.bf16.mxu0 %v2838
        %3698 = vmatpush2.bf16.msra.mxu0 %v2837
        %3699 = vmatprep.subr.bf16.mxu0 %v2834
        %3700 = vmatpush2.bf16.msra.mxu0 %v2833
        %3701 = vmatprep.subr.bf16.mxu0 %v2830
        %3702 = vmatpush2.bf16.msra.mxu0 %v2829
        %3703 = vmatprep.subr.bf16.mxu0 %v2826
        %3704 = vmatpush2.bf16.msra.mxu0 %v2825
        %3705 = vmatprep.subr.bf16.mxu0 %v2822
        %3706 = vmatpush2.bf16.msra.mxu0 %v2821
        %3707 = vmatprep.mubr.bf16.mxu0 %v850
        %3708 = vmatmul.mubr.bf16.gmra.mxu0 %v849
        %v3709 = vpop.f32.mrf.mxu0
        %v3710 = vadd.f32 %v3669, %v3709
        %v3711 = vpop.f32.mrf.mxu0
        %v3712 = vadd.f32 %v3671, %v3711
        %v3713 = vpop.f32.mrf.mxu0
        %v3714 = vpop.f32.mrf.mxu0
        %3715 = vdwg.mxu0
        %3716 = vmatprep.subr.bf16.mxu0 %v2882
        %3717 = vmatpush1.bf16.msra.mxu0 %v2881
        %3718 = vmatprep.subr.bf16.mxu0 %v2878
        %3719 = vmatpush1.bf16.msra.mxu0 %v2877
        %3720 = vmatprep.subr.bf16.mxu0 %v2874
        %3721 = vmatpush1.bf16.msra.mxu0 %v2873
        %3722 = vmatprep.subr.bf16.mxu0 %v2870
        %3723 = vmatpush1.bf16.msra.mxu0 %v2869
        %3724 = vmatprep.subr.bf16.mxu0 %v2866
        %3725 = vmatpush1.bf16.msra.mxu0 %v2865
        %3726 = vmatprep.subr.bf16.mxu0 %v2862
        %3727 = vmatpush1.bf16.msra.mxu0 %v2861
        %3728 = vmatprep.subr.bf16.mxu0 %v2858
        %3729 = vmatpush1.bf16.msra.mxu0 %v2857
        %3730 = vmatprep.subr.bf16.mxu0 %v2854
        %3731 = vmatpush1.bf16.msra.mxu0 %v2853
        %3732 = vmatprep.subr.bf16.mxu0 %v2914
        %3733 = vmatpush2.bf16.msra.mxu0 %v2913
        %3734 = vmatprep.subr.bf16.mxu0 %v2910
        %3735 = vmatpush2.bf16.msra.mxu0 %v2909
        %3736 = vmatprep.subr.bf16.mxu0 %v2906
        %3737 = vmatpush2.bf16.msra.mxu0 %v2905
        %3738 = vmatprep.subr.bf16.mxu0 %v2902
        %3739 = vmatpush2.bf16.msra.mxu0 %v2901
        %3740 = vmatprep.subr.bf16.mxu0 %v2898
        %3741 = vmatpush2.bf16.msra.mxu0 %v2897
        %3742 = vmatprep.subr.bf16.mxu0 %v2894
        %3743 = vmatpush2.bf16.msra.mxu0 %v2893
        %3744 = vmatprep.subr.bf16.mxu0 %v2890
        %3745 = vmatpush2.bf16.msra.mxu0 %v2889
        %3746 = vmatprep.subr.bf16.mxu0 %v2886
        %3747 = vmatpush2.bf16.msra.mxu0 %v2885
        %3748 = vmatprep.mubr.bf16.mxu0 %v852
        %3749 = vmatmul.mubr.bf16.gmra.mxu0 %v851
        %v3750 = vpop.f32.mrf.mxu0
        %v3751 = vadd.f32 %v3710, %v3750
        %v3752 = vpop.f32.mrf.mxu0
        %v3753 = vadd.f32 %v3712, %v3752
        %v3754 = vpop.f32.mrf.mxu0
        %v3755 = vpop.f32.mrf.mxu0
        %3756 = vdwg.mxu0
        %3757 = vmatprep.subr.bf16.mxu0 %v2436
        %3758 = vmatpush1.bf16.msra.mxu0 %v2435
        %3759 = vmatprep.subr.bf16.mxu0 %v2432
        %3760 = vmatpush1.bf16.msra.mxu0 %v2431
        %3761 = vmatprep.subr.bf16.mxu0 %v2428
        %3762 = vmatpush1.bf16.msra.mxu0 %v2427
        %3763 = vmatprep.subr.bf16.mxu0 %v2424
        %3764 = vmatpush1.bf16.msra.mxu0 %v2423
        %3765 = vmatprep.subr.bf16.mxu0 %v2420
        %3766 = vmatpush1.bf16.msra.mxu0 %v2419
        %3767 = vmatprep.subr.bf16.mxu0 %v2416
        %3768 = vmatpush1.bf16.msra.mxu0 %v2415
        %3769 = vmatprep.subr.bf16.mxu0 %v2412
        %3770 = vmatpush1.bf16.msra.mxu0 %v2411
        %3771 = vmatprep.subr.bf16.mxu0 %v2408
        %3772 = vmatpush1.bf16.msra.mxu0 %v2407
        %3773 = vmatprep.subr.bf16.mxu0 %v2468
        %3774 = vmatpush2.bf16.msra.mxu0 %v2467
        %3775 = vmatprep.subr.bf16.mxu0 %v2464
        %3776 = vmatpush2.bf16.msra.mxu0 %v2463
        %3777 = vmatprep.subr.bf16.mxu0 %v2460
        %3778 = vmatpush2.bf16.msra.mxu0 %v2459
        %3779 = vmatprep.subr.bf16.mxu0 %v2456
        %3780 = vmatpush2.bf16.msra.mxu0 %v2455
        %3781 = vmatprep.subr.bf16.mxu0 %v2452
        %3782 = vmatpush2.bf16.msra.mxu0 %v2451
        %3783 = vmatprep.subr.bf16.mxu0 %v2448
        %3784 = vmatpush2.bf16.msra.mxu0 %v2447
        %3785 = vmatprep.subr.bf16.mxu0 %v2444
        %3786 = vmatpush2.bf16.msra.mxu0 %v2443
        %3787 = vmatprep.subr.bf16.mxu0 %v2440
        %3788 = vmatpush2.bf16.msra.mxu0 %v2439
        %3789 = vmatprep.mubr.bf16.mxu0 %v838
        %3790 = vmatmul.mubr.bf16.gmra.mxu0 %v837
        %v3791 = vpop.f32.mrf.mxu0
        %v3792 = vadd.f32 %v804, %v3791
        %v3793 = vpop.f32.mrf.mxu0
        %v3794 = vadd.f32 %v808, %v3793
        %v3795 = vpop.f32.mrf.mxu0
        %v3796 = vpop.f32.mrf.mxu0
        %3797 = vdwg.mxu0
        %3798 = vmatprep.subr.bf16.mxu0 %v2500
        %3799 = vmatpush1.bf16.msra.mxu0 %v2499
        %3800 = vmatprep.subr.bf16.mxu0 %v2496
        %3801 = vmatpush1.bf16.msra.mxu0 %v2495
        %3802 = vmatprep.subr.bf16.mxu0 %v2492
        %3803 = vmatpush1.bf16.msra.mxu0 %v2491
        %3804 = vmatprep.subr.bf16.mxu0 %v2488
        %3805 = vmatpush1.bf16.msra.mxu0 %v2487
        %3806 = vmatprep.subr.bf16.mxu0 %v2484
        %3807 = vmatpush1.bf16.msra.mxu0 %v2483
        %3808 = vmatprep.subr.bf16.mxu0 %v2480
        %3809 = vmatpush1.bf16.msra.mxu0 %v2479
        %3810 = vmatprep.subr.bf16.mxu0 %v2476
        %3811 = vmatpush1.bf16.msra.mxu0 %v2475
        %3812 = vmatprep.subr.bf16.mxu0 %v2472
        %3813 = vmatpush1.bf16.msra.mxu0 %v2471
        %3814 = vmatprep.subr.bf16.mxu0 %v2532
        %3815 = vmatpush2.bf16.msra.mxu0 %v2531
        %3816 = vmatprep.subr.bf16.mxu0 %v2528
        %3817 = vmatpush2.bf16.msra.mxu0 %v2527
        %3818 = vmatprep.subr.bf16.mxu0 %v2524
        %3819 = vmatpush2.bf16.msra.mxu0 %v2523
        %3820 = vmatprep.subr.bf16.mxu0 %v2520
        %3821 = vmatpush2.bf16.msra.mxu0 %v2519
        %3822 = vmatprep.subr.bf16.mxu0 %v2516
        %3823 = vmatpush2.bf16.msra.mxu0 %v2515
        %3824 = vmatprep.subr.bf16.mxu0 %v2512
        %3825 = vmatpush2.bf16.msra.mxu0 %v2511
        %3826 = vmatprep.subr.bf16.mxu0 %v2508
        %3827 = vmatpush2.bf16.msra.mxu0 %v2507
        %3828 = vmatprep.subr.bf16.mxu0 %v2504
        %3829 = vmatpush2.bf16.msra.mxu0 %v2503
        %3830 = vmatprep.mubr.bf16.mxu0 %v840
        %3831 = vmatmul.mubr.bf16.gmra.mxu0 %v839
        %v3832 = vpop.f32.mrf.mxu0
        %v3833 = vadd.f32 %v3792, %v3832
        %v3834 = vpop.f32.mrf.mxu0
        %v3835 = vadd.f32 %v3794, %v3834
        %v3836 = vpop.f32.mrf.mxu0
        %v3837 = vpop.f32.mrf.mxu0
        %3838 = vdwg.mxu0
        %3839 = vmatprep.subr.bf16.mxu0 %v2564
        %3840 = vmatpush1.bf16.msra.mxu0 %v2563
        %3841 = vmatprep.subr.bf16.mxu0 %v2560
        %3842 = vmatpush1.bf16.msra.mxu0 %v2559
        %3843 = vmatprep.subr.bf16.mxu0 %v2556
        %3844 = vmatpush1.bf16.msra.mxu0 %v2555
        %3845 = vmatprep.subr.bf16.mxu0 %v2552
        %3846 = vmatpush1.bf16.msra.mxu0 %v2551
        %3847 = vmatprep.subr.bf16.mxu0 %v2548
        %3848 = vmatpush1.bf16.msra.mxu0 %v2547
        %3849 = vmatprep.subr.bf16.mxu0 %v2544
        %3850 = vmatpush1.bf16.msra.mxu0 %v2543
        %3851 = vmatprep.subr.bf16.mxu0 %v2540
        %3852 = vmatpush1.bf16.msra.mxu0 %v2539
        %3853 = vmatprep.subr.bf16.mxu0 %v2536
        %3854 = vmatpush1.bf16.msra.mxu0 %v2535
        %3855 = vmatprep.subr.bf16.mxu0 %v2596
        %3856 = vmatpush2.bf16.msra.mxu0 %v2595
        %3857 = vmatprep.subr.bf16.mxu0 %v2592
        %3858 = vmatpush2.bf16.msra.mxu0 %v2591
        %3859 = vmatprep.subr.bf16.mxu0 %v2588
        %3860 = vmatpush2.bf16.msra.mxu0 %v2587
        %3861 = vmatprep.subr.bf16.mxu0 %v2584
        %3862 = vmatpush2.bf16.msra.mxu0 %v2583
        %3863 = vmatprep.subr.bf16.mxu0 %v2580
        %3864 = vmatpush2.bf16.msra.mxu0 %v2579
        %3865 = vmatprep.subr.bf16.mxu0 %v2576
        %3866 = vmatpush2.bf16.msra.mxu0 %v2575
        %3867 = vmatprep.subr.bf16.mxu0 %v2572
        %3868 = vmatpush2.bf16.msra.mxu0 %v2571
        %3869 = vmatprep.subr.bf16.mxu0 %v2568
        %3870 = vmatpush2.bf16.msra.mxu0 %v2567
        %3871 = vmatprep.mubr.bf16.mxu0 %v842
        %3872 = vmatmul.mubr.bf16.gmra.mxu0 %v841
        %v3873 = vpop.f32.mrf.mxu0
        %v3874 = vadd.f32 %v3833, %v3873
        %v3875 = vpop.f32.mrf.mxu0
        %v3876 = vadd.f32 %v3835, %v3875
        %v3877 = vpop.f32.mrf.mxu0
        %v3878 = vpop.f32.mrf.mxu0
        %3879 = vdwg.mxu0
        %3880 = vmatprep.subr.bf16.mxu0 %v2628
        %3881 = vmatpush1.bf16.msra.mxu0 %v2627
        %3882 = vmatprep.subr.bf16.mxu0 %v2624
        %3883 = vmatpush1.bf16.msra.mxu0 %v2623
        %3884 = vmatprep.subr.bf16.mxu0 %v2620
        %3885 = vmatpush1.bf16.msra.mxu0 %v2619
        %3886 = vmatprep.subr.bf16.mxu0 %v2616
        %3887 = vmatpush1.bf16.msra.mxu0 %v2615
        %3888 = vmatprep.subr.bf16.mxu0 %v2612
        %3889 = vmatpush1.bf16.msra.mxu0 %v2611
        %3890 = vmatprep.subr.bf16.mxu0 %v2608
        %3891 = vmatpush1.bf16.msra.mxu0 %v2607
        %3892 = vmatprep.subr.bf16.mxu0 %v2604
        %3893 = vmatpush1.bf16.msra.mxu0 %v2603
        %3894 = vmatprep.subr.bf16.mxu0 %v2600
        %3895 = vmatpush1.bf16.msra.mxu0 %v2599
        %3896 = vmatprep.subr.bf16.mxu0 %v2660
        %3897 = vmatpush2.bf16.msra.mxu0 %v2659
        %3898 = vmatprep.subr.bf16.mxu0 %v2656
        %3899 = vmatpush2.bf16.msra.mxu0 %v2655
        %3900 = vmatprep.subr.bf16.mxu0 %v2652
        %3901 = vmatpush2.bf16.msra.mxu0 %v2651
        %3902 = vmatprep.subr.bf16.mxu0 %v2648
        %3903 = vmatpush2.bf16.msra.mxu0 %v2647
        %3904 = vmatprep.subr.bf16.mxu0 %v2644
        %3905 = vmatpush2.bf16.msra.mxu0 %v2643
        %3906 = vmatprep.subr.bf16.mxu0 %v2640
        %3907 = vmatpush2.bf16.msra.mxu0 %v2639
        %3908 = vmatprep.subr.bf16.mxu0 %v2636
        %3909 = vmatpush2.bf16.msra.mxu0 %v2635
        %3910 = vmatprep.subr.bf16.mxu0 %v2632
        %3911 = vmatpush2.bf16.msra.mxu0 %v2631
        %3912 = vmatprep.mubr.bf16.mxu0 %v844
        %3913 = vmatmul.mubr.bf16.gmra.mxu0 %v843
        %v3914 = vpop.f32.mrf.mxu0
        %v3915 = vadd.f32 %v3874, %v3914
        %v3916 = vpop.f32.mrf.mxu0
        %v3917 = vadd.f32 %v3876, %v3916
        %v3918 = vpop.f32.mrf.mxu0
        %v3919 = vpop.f32.mrf.mxu0
        %3920 = vdwg.mxu0
        %3921 = vmatprep.subr.bf16.mxu0 %v2692
        %3922 = vmatpush1.bf16.msra.mxu0 %v2691
        %3923 = vmatprep.subr.bf16.mxu0 %v2688
        %3924 = vmatpush1.bf16.msra.mxu0 %v2687
        %3925 = vmatprep.subr.bf16.mxu0 %v2684
        %3926 = vmatpush1.bf16.msra.mxu0 %v2683
        %3927 = vmatprep.subr.bf16.mxu0 %v2680
        %3928 = vmatpush1.bf16.msra.mxu0 %v2679
        %3929 = vmatprep.subr.bf16.mxu0 %v2676
        %3930 = vmatpush1.bf16.msra.mxu0 %v2675
        %3931 = vmatprep.subr.bf16.mxu0 %v2672
        %3932 = vmatpush1.bf16.msra.mxu0 %v2671
        %3933 = vmatprep.subr.bf16.mxu0 %v2668
        %3934 = vmatpush1.bf16.msra.mxu0 %v2667
        %3935 = vmatprep.subr.bf16.mxu0 %v2664
        %3936 = vmatpush1.bf16.msra.mxu0 %v2663
        %3937 = vmatprep.subr.bf16.mxu0 %v2724
        %3938 = vmatpush2.bf16.msra.mxu0 %v2723
        %3939 = vmatprep.subr.bf16.mxu0 %v2720
        %3940 = vmatpush2.bf16.msra.mxu0 %v2719
        %3941 = vmatprep.subr.bf16.mxu0 %v2716
        %3942 = vmatpush2.bf16.msra.mxu0 %v2715
        %3943 = vmatprep.subr.bf16.mxu0 %v2712
        %3944 = vmatpush2.bf16.msra.mxu0 %v2711
        %3945 = vmatprep.subr.bf16.mxu0 %v2708
        %3946 = vmatpush2.bf16.msra.mxu0 %v2707
        %3947 = vmatprep.subr.bf16.mxu0 %v2704
        %3948 = vmatpush2.bf16.msra.mxu0 %v2703
        %3949 = vmatprep.subr.bf16.mxu0 %v2700
        %3950 = vmatpush2.bf16.msra.mxu0 %v2699
        %3951 = vmatprep.subr.bf16.mxu0 %v2696
        %3952 = vmatpush2.bf16.msra.mxu0 %v2695
        %3953 = vmatprep.mubr.bf16.mxu0 %v846
        %3954 = vmatmul.mubr.bf16.gmra.mxu0 %v845
        %v3955 = vpop.f32.mrf.mxu0
        %v3956 = vadd.f32 %v3915, %v3955
        %v3957 = vpop.f32.mrf.mxu0
        %v3958 = vadd.f32 %v3917, %v3957
        %v3959 = vpop.f32.mrf.mxu0
        %v3960 = vpop.f32.mrf.mxu0
        %3961 = vdwg.mxu0
        %3962 = vmatprep.subr.bf16.mxu0 %v2756
        %3963 = vmatpush1.bf16.msra.mxu0 %v2755
        %3964 = vmatprep.subr.bf16.mxu0 %v2752
        %3965 = vmatpush1.bf16.msra.mxu0 %v2751
        %3966 = vmatprep.subr.bf16.mxu0 %v2748
        %3967 = vmatpush1.bf16.msra.mxu0 %v2747
        %3968 = vmatprep.subr.bf16.mxu0 %v2744
        %3969 = vmatpush1.bf16.msra.mxu0 %v2743
        %3970 = vmatprep.subr.bf16.mxu0 %v2740
        %3971 = vmatpush1.bf16.msra.mxu0 %v2739
        %3972 = vmatprep.subr.bf16.mxu0 %v2736
        %3973 = vmatpush1.bf16.msra.mxu0 %v2735
        %3974 = vmatprep.subr.bf16.mxu0 %v2732
        %3975 = vmatpush1.bf16.msra.mxu0 %v2731
        %3976 = vmatprep.subr.bf16.mxu0 %v2728
        %3977 = vmatpush1.bf16.msra.mxu0 %v2727
        %3978 = vmatprep.subr.bf16.mxu0 %v2788
        %3979 = vmatpush2.bf16.msra.mxu0 %v2787
        %3980 = vmatprep.subr.bf16.mxu0 %v2784
        %3981 = vmatpush2.bf16.msra.mxu0 %v2783
        %3982 = vmatprep.subr.bf16.mxu0 %v2780
        %3983 = vmatpush2.bf16.msra.mxu0 %v2779
        %3984 = vmatprep.subr.bf16.mxu0 %v2776
        %3985 = vmatpush2.bf16.msra.mxu0 %v2775
        %3986 = vmatprep.subr.bf16.mxu0 %v2772
        %3987 = vmatpush2.bf16.msra.mxu0 %v2771
        %3988 = vmatprep.subr.bf16.mxu0 %v2768
        %3989 = vmatpush2.bf16.msra.mxu0 %v2767
        %3990 = vmatprep.subr.bf16.mxu0 %v2764
        %3991 = vmatpush2.bf16.msra.mxu0 %v2763
        %3992 = vmatprep.subr.bf16.mxu0 %v2760
        %3993 = vmatpush2.bf16.msra.mxu0 %v2759
        %3994 = vmatprep.mubr.bf16.mxu0 %v848
        %3995 = vmatmul.mubr.bf16.gmra.mxu0 %v847
        %v3996 = vpop.f32.mrf.mxu0
        %v3997 = vadd.f32 %v3956, %v3996
        %v3998 = vpop.f32.mrf.mxu0
        %v3999 = vadd.f32 %v3958, %v3998
        %v4000 = vpop.f32.mrf.mxu0
        %v4001 = vpop.f32.mrf.mxu0
        %4002 = vdwg.mxu0
        %4003 = vmatprep.subr.bf16.mxu0 %v2820
        %4004 = vmatpush1.bf16.msra.mxu0 %v2819
        %4005 = vmatprep.subr.bf16.mxu0 %v2816
        %4006 = vmatpush1.bf16.msra.mxu0 %v2815
        %4007 = vmatprep.subr.bf16.mxu0 %v2812
        %4008 = vmatpush1.bf16.msra.mxu0 %v2811
        %4009 = vmatprep.subr.bf16.mxu0 %v2808
        %4010 = vmatpush1.bf16.msra.mxu0 %v2807
        %4011 = vmatprep.subr.bf16.mxu0 %v2804
        %4012 = vmatpush1.bf16.msra.mxu0 %v2803
        %4013 = vmatprep.subr.bf16.mxu0 %v2800
        %4014 = vmatpush1.bf16.msra.mxu0 %v2799
        %4015 = vmatprep.subr.bf16.mxu0 %v2796
        %4016 = vmatpush1.bf16.msra.mxu0 %v2795
        %4017 = vmatprep.subr.bf16.mxu0 %v2792
        %4018 = vmatpush1.bf16.msra.mxu0 %v2791
        %4019 = vmatprep.subr.bf16.mxu0 %v2852
        %4020 = vmatpush2.bf16.msra.mxu0 %v2851
        %4021 = vmatprep.subr.bf16.mxu0 %v2848
        %4022 = vmatpush2.bf16.msra.mxu0 %v2847
        %4023 = vmatprep.subr.bf16.mxu0 %v2844
        %4024 = vmatpush2.bf16.msra.mxu0 %v2843
        %4025 = vmatprep.subr.bf16.mxu0 %v2840
        %4026 = vmatpush2.bf16.msra.mxu0 %v2839
        %4027 = vmatprep.subr.bf16.mxu0 %v2836
        %4028 = vmatpush2.bf16.msra.mxu0 %v2835
        %4029 = vmatprep.subr.bf16.mxu0 %v2832
        %4030 = vmatpush2.bf16.msra.mxu0 %v2831
        %4031 = vmatprep.subr.bf16.mxu0 %v2828
        %4032 = vmatpush2.bf16.msra.mxu0 %v2827
        %4033 = vmatprep.subr.bf16.mxu0 %v2824
        %4034 = vmatpush2.bf16.msra.mxu0 %v2823
        %4035 = vmatprep.mubr.bf16.mxu0 %v850
        %4036 = vmatmul.mubr.bf16.gmra.mxu0 %v849
        %v4037 = vpop.f32.mrf.mxu0
        %v4038 = vadd.f32 %v3997, %v4037
        %v4039 = vpop.f32.mrf.mxu0
        %v4040 = vadd.f32 %v3999, %v4039
        %v4041 = vpop.f32.mrf.mxu0
        %v4042 = vpop.f32.mrf.mxu0
        %4043 = vdwg.mxu0
        %4044 = vmatprep.subr.bf16.mxu0 %v2884
        %4045 = vmatpush1.bf16.msra.mxu0 %v2883
        %4046 = vmatprep.subr.bf16.mxu0 %v2880
        %4047 = vmatpush1.bf16.msra.mxu0 %v2879
        %4048 = vmatprep.subr.bf16.mxu0 %v2876
        %4049 = vmatpush1.bf16.msra.mxu0 %v2875
        %4050 = vmatprep.subr.bf16.mxu0 %v2872
        %4051 = vmatpush1.bf16.msra.mxu0 %v2871
        %4052 = vmatprep.subr.bf16.mxu0 %v2868
        %4053 = vmatpush1.bf16.msra.mxu0 %v2867
        %4054 = vmatprep.subr.bf16.mxu0 %v2864
        %4055 = vmatpush1.bf16.msra.mxu0 %v2863
        %4056 = vmatprep.subr.bf16.mxu0 %v2860
        %4057 = vmatpush1.bf16.msra.mxu0 %v2859
        %4058 = vmatprep.subr.bf16.mxu0 %v2856
        %4059 = vmatpush1.bf16.msra.mxu0 %v2855
        %4060 = vmatprep.subr.bf16.mxu0 %v2916
        %4061 = vmatpush2.bf16.msra.mxu0 %v2915
        %4062 = vmatprep.subr.bf16.mxu0 %v2912
        %4063 = vmatpush2.bf16.msra.mxu0 %v2911
        %4064 = vmatprep.subr.bf16.mxu0 %v2908
        %4065 = vmatpush2.bf16.msra.mxu0 %v2907
        %4066 = vmatprep.subr.bf16.mxu0 %v2904
        %4067 = vmatpush2.bf16.msra.mxu0 %v2903
        %4068 = vmatprep.subr.bf16.mxu0 %v2900
        %4069 = vmatpush2.bf16.msra.mxu0 %v2899
        %4070 = vmatprep.subr.bf16.mxu0 %v2896
        %4071 = vmatpush2.bf16.msra.mxu0 %v2895
        %4072 = vmatprep.subr.bf16.mxu0 %v2892
        %4073 = vmatpush2.bf16.msra.mxu0 %v2891
        %4074 = vmatprep.subr.bf16.mxu0 %v2888
        %4075 = vmatpush2.bf16.msra.mxu0 %v2887
        %4076 = vmatprep.mubr.bf16.mxu0 %v852
        %4077 = vmatmul.mubr.bf16.gmra.mxu0 %v851
        %v4078 = vpop.f32.mrf.mxu0
        %v4079 = vadd.f32 %v4038, %v4078
        %v4080 = vpop.f32.mrf.mxu0
        %v4081 = vadd.f32 %v4040, %v4080
        %v4082 = vpop.f32.mrf.mxu0
        %v4083 = vpop.f32.mrf.mxu0
        %4084 = vdwg.mxu0
        %v4085 = vmax.f32 %v3751, 0.0
        %v4086 = vmax.f32 %v3753, 0.0
        %v4087 = vmax.f32 %v4079, 0.0
        %v4088 = vmax.f32 %v4081, 0.0
        %v4089 = vpack.c.bf16 %v4085, %v4085
        %v4090 = vpack.c.bf16 %v4086, %v4086
        %v4091 = vpack.c.bf16 %v4087, %v4087
        %v4092 = vpack.c.bf16 %v4088, %v4088
        %v4097 = vunpack.c.l.b16 %v4089
        %v4098 = vunpack.c.l.b16 %v4090
        %v4099 = vunpack.c.l.b16 %v4091
        %v4100 = vunpack.c.l.b16 %v4092
        %v4101 = vpack.c.b16 %v4098, %v4097
        %v4102 = vpack.c.b16 %v4100, %v4099
        %4105 = vst [vmem:[%s269] sm:$0xff] %v4101
        %4106 = vst [vmem:[%s269 + $0x8] sm:$0xff] %v4102
        %s4107 = smul.u32 4, %s22
        %p4108 = scmp.lt.s32.totalorder %s21, 1
        %s4109 = scalar_select %p4108, %s21, 1
        %p4110 = scmp.lt.s32.totalorder %s4107, 15
        %s4111 = scalar_select %p4110, %s4107, 15
        %s4112 = smul.addr %s4109, 16
        %s4113 = sadd.s32 %s4111, %s4112
        %s4114 = smul.addr %s4113, 4
        %s4115 = scalar_lea.vmem %s3, %s4114
        // Predicated region
        $region37: #{actor_critic_forward.8} parent=31 // pred_check
          %p4116 = pneg %p131
        $region38: #{actor_critic_forward.8} parent=31 // pred_check_branch
          %4118 = sbr.rel (%p4116) target = $region40
        $region39: #{actor_critic_forward.8} parent=31 // pred_region
          %s4119 = smul.u32 4, %s22
        $region40: #{actor_critic_forward.8} parent=31 // pred_fallthru
          _
      $region32: #{actor_critic_forward.8} parent=5 // pred_fallthru
        _
      %p4120 = scmp.le.s32.totalorder 2, %s12
      // Predicated region
      $region41: #{actor_critic_forward.8} parent=5 // pred_check
        %p4121 = pneg %p4120
      $region42: #{actor_critic_forward.8} parent=5 // pred_check_branch
        %4123 = sbr.rel (%p4121) target = $region44
      $region43: #{actor_critic_forward.8} parent=5 // pred_region
        %s4124 = ssub.s32 %s12, 2
        // Predicated region
        $region45: #{actor_critic_forward.8} parent=43 // pred_check
          %p4125 = pneg %p137
        $region46: #{actor_critic_forward.8} parent=43 // pred_check_branch
          %4127 = sbr.rel (%p4125) target = $region48
        $region47: #{actor_critic_forward.8} parent=43 // pred_region
          %s4128 = smul.u32 4, %s24
          %p4129 = scmp.lt.s32.totalorder %s23, 1
          %s4130 = scalar_select %p4129, %s23, 1
          %p4131 = scmp.lt.s32.totalorder %s4128, 15
          %s4132 = scalar_select %p4131, %s4128, 15
          %s4133 = smul.addr %s4130, 16
          %s4134 = sadd.s32 %s4132, %s4133
          %s4135 = smul.addr %s4134, 4
          %s4136 = scalar_lea.vmem %s3, %s4135
        $region48: #{actor_critic_forward.8} parent=43 // pred_fallthru
          _
      $region44: #{actor_critic_forward.8} parent=5 // pred_fallthru
        _
    $region6: #{actor_critic_forward.8} parent=1 // loop_footer
      %s16 = sadd.s32 1, %s12
    $region7: #{actor_critic_forward.8} parent=1 // loop_footer_branch
      %11 = sbr.rel target = $region3
    $region8: #{actor_critic_forward.8} parent=1 // loop_exit
      _
    %4137 = vsyncpa [#allocation3], 1
    %s4138 = scalar_lea.sflag [#allocation3], 1
    %4139 = vsyncpa %s4138, 1

</llo_original>
